<compile_context>
chip_gen: v7x
topology: tpu7x:2x2x1
jax: 0.10.0
libtpu: 0.0.40
codegen_flags: <defaults>
</compile_context>

<pallas_src>
import functools

import jax
import jax.numpy as jnp
from jax import lax
from jax.experimental import pallas as pl
from jax.experimental.pallas import tpu as pltpu

EPS = 1e-5
LANE = 128
_FALLBACK_VMEM = 48 * 1024 * 1024  # safe on every generation (<= 64 MiB phys)


def _round_up(x, m):
    return (x + m - 1) // m * m


def _vmem_limit_bytes():
    # Generation-aware scoped-VMEM limit: ~3/4 of physical capacity
    # (96 MiB on v5e/v6e's 128 MiB, 48 MiB on v7x's 64 MiB).
    try:
        cap = int(pltpu.get_tpu_info().vmem_capacity_bytes)
        return max(cap * 3 // 4, 32 * 1024 * 1024)
    except Exception:
        return _FALLBACK_VMEM


# --------------------------- kernel helpers ---------------------------------

def _write_stats(st_ref, acc):
    # acc: (M, C) f32 conv output for this image -> single-sweep sum / sumsq.
    st_ref[0:1, :] = jnp.sum(acc, axis=0, keepdims=True)
    st_ref[1:2, :] = jnp.sum(acc * acc, axis=0, keepdims=True)


def _conv3x3_body(src, w_ref, pad_ref, col_ref, acc_ref, n_groups):
    """3x3 same-padded conv of `src` (h, w, c) bf16 via im2col + MXU.

    pad_ref: (h+2, wpad, c) bf16 scratch (wpad >= w+2, sublane aligned)
    col_ref: (h*w, (9//n_groups)*c) bf16 scratch
    acc_ref: (h*w, c) f32 scratch (only when n_groups > 1)
    Returns the (h*w, c) f32 conv result.
    """
    h, w, c = src.shape
    hp, wpad = pad_ref.shape[0], pad_ref.shape[1]
    m = h * w

    # Zero ONLY the halo strips; write the interior exactly once.
    zrow = jnp.zeros((1, wpad, c), pad_ref.dtype)
    pad_ref[0:1, :, :] = zrow
    pad_ref[hp - 1:hp, :, :] = zrow
    pad_ref[1:h + 1, 0:1, :] = jnp.zeros((h, 1, c), pad_ref.dtype)
    pad_ref[1:h + 1, w + 1:wpad, :] = jnp.zeros((h, wpad - w - 1, c),
                                                pad_ref.dtype)
    pad_ref[1:h + 1, 1:w + 1, :] = src

    taps_per_group = 9 // n_groups
    for g in range(n_groups):
        for t in range(taps_per_group):
            dy, dx = divmod(g * taps_per_group + t, 3)
            col_ref[:, t * c:(t + 1) * c] = (
                pad_ref[dy:dy + h, dx:dx + w, :].reshape(m, c))
        part = jnp.dot(
            col_ref[...],
            w_ref[g * taps_per_group * c:(g + 1) * taps_per_group * c, :],
            preferred_element_type=jnp.float32)
        if n_groups == 1:
            return part
        if g == 0:
            acc_ref[...] = part
        else:
            acc_ref[...] = acc_ref[...] + part
    return acc_ref[...]


# ------------------------------- kernels -------------------------------------

def _conv1_kernel(n_groups, x_ref, w_ref, y_ref, st_ref, pad_ref, col_ref,
                  *acc):
    # x_ref: (H, W, C) bf16 (un-padded interior; halo zeroed in VMEM scratch)
    # w_ref: (9C, C) bf16 taps-major weights
    # y_ref: (H, W, C) bf16 raw conv output ; st_ref: (2, C) f32 stats
    acc_ref = acc[0] if acc else None
    out = _conv3x3_body(x_ref[...], w_ref, pad_ref, col_ref, acc_ref, n_groups)
    _write_stats(st_ref, out)
    y_ref[...] = out.reshape(y_ref.shape).astype(y_ref.dtype)


def _conv2_kernel(n_groups, y1_ref, s1_ref, b1_ref, w_ref, y2_ref, st_ref,
                  pad_ref, col_ref, *acc):
    # y1_ref: (H, W, C) bf16 raw conv1 output
    # s1/b1:  (1, C) f32 folded BN1 scale / bias (global batch stats)
    # y2_ref: (H*W, C) bf16 raw conv2 output ; st_ref: (2, C) f32 stats
    acc_ref = acc[0] if acc else None
    # BN1 (affine) + ReLU in f32, cast to bf16 for the MXU.
    y1n = jnp.maximum(
        y1_ref[...].astype(jnp.float32) * s1_ref[...] + b1_ref[...], 0.0)
    out = _conv3x3_body(y1n.astype(pad_ref.dtype), w_ref, pad_ref, col_ref,
                        acc_ref, n_groups)
    _write_stats(st_ref, out)
    y2_ref[...] = out.astype(y2_ref.dtype)


def _proj_kernel(y2_ref, x_ref, s2_ref, b2_ref, wc_ref, o_ref):
    # y2_ref / x_ref: (TM, C) bf16 ; s2/b2: (1, C) f32 ; wc: (C, CoutP) bf16
    # o_ref: (TM, out_cols) f32 (out_cols == true Cout when Cout < 128)
    z = (y2_ref[...].astype(jnp.float32) * s2_ref[...] + b2_ref[...]
         + x_ref[...].astype(jnp.float32))                     # BN2 + residual
    acc = jnp.dot(z.astype(wc_ref.dtype), wc_ref[...],
                  preferred_element_type=jnp.float32)
    o_ref[...] = acc[:, :o_ref.shape[-1]]


# ------------------------------- wrapper --------------------------------------

def _bn_affine(stats, gamma, beta, count):
    # stats: (N, 2, C) per-image [sum, sumsq] -> folded scale / bias (f32).
    tot = jnp.sum(stats, axis=0)                               # (2, C)
    mean = tot[0] / count
    var = jnp.maximum(tot[1] / count - mean * mean, 0.0)       # biased variance
    scale = gamma * lax.rsqrt(var + EPS)
    bias = beta - mean * scale
    return scale[None, :], bias[None, :]


def _pick_tile_m(m):
    # Pass 3 is memory-bound: prefer large lane-dense tiles (>=512).
    for t in (2048, 1024, 512, 256, 128, 64, 32, 16, 8):
        if m % t == 0:
            return t
    return m  # TODO(synk): pad m for awkward sizes instead of one giant block


def tresblock_forward(x_nchw, params):
    """x_nchw: (N, Cin, H, W) float32. Returns (N, Cout, H, W) float32."""
    w1, g1, b1, w2, g2, b2, wc = params
    n, cin, h, w = x_nchw.shape
    cout = wc.shape[-1]
    cp = _round_up(cin, LANE)
    coutp = _round_up(cout, LANE)
    m = n * h * w
    hw = h * w
    wpad = _round_up(w + 2, 8)          # sublane-aligned padded-source width

    vmem_limit = _vmem_limit_bytes()
    # Single K=9C matmul when the 9-wide col buffer fits comfortably; else
    # group taps by dy (3 accumulating K=3C matmuls, 3x smaller col scratch).
    n_groups = 1 if hw * 9 * cp * 2 <= vmem_limit // 4 else 3

    # ---- host-side layout: NCHW -> NHWC, lane-dense channel pad, bf16.
    # ONE copy of x in HBM, shared by pass 1 (conv) and pass 3 (residual). ----
    x = jnp.transpose(x_nchw, (0, 2, 3, 1))
    x = jnp.pad(x, ((0, 0), (0, 0), (0, 0), (0, cp - cin))).astype(jnp.bfloat16)

    def pad3x3(wk):  # (3,3,cin,cin) HWIO -> (9*cp, cp) taps-major, bf16
        wk = jnp.pad(wk, ((0, 0), (0, 0), (0, cp - cin), (0, cp - cin)))
        return wk.reshape(9 * cp, cp).astype(jnp.bfloat16)

    w1p, w2p = pad3x3(w1), pad3x3(w2)
    wcp = jnp.pad(wc, ((0, cp - cin), (0, coutp - cout))).astype(jnp.bfloat16)
    # Pad gammas with 0 so padded channels normalize to exactly 0 (robust
    # against any stale/non-zero padded activations).
    g1p = jnp.pad(g1.astype(jnp.float32), (0, cp - cin))
    b1p = jnp.pad(b1.astype(jnp.float32), (0, cp - cin))
    g2p = jnp.pad(g2.astype(jnp.float32), (0, cp - cin))
    b2p = jnp.pad(b2.astype(jnp.float32), (0, cp - cin))

    cparams = pltpu.CompilerParams(dimension_semantics=("parallel",),
                                   vmem_limit_bytes=vmem_limit)

    conv_scratch = [
        pltpu.VMEM((h + 2, wpad, cp), jnp.bfloat16),             # pad scratch
        pltpu.VMEM((hw, (9 // n_groups) * cp), jnp.bfloat16),    # im2col cols
    ]
    if n_groups > 1:
        conv_scratch.append(pltpu.VMEM((hw, cp), jnp.float32))   # f32 acc

    # ---- pass 1: conv3x3 #1 + BN1 batch statistics (grid over images) ----
    y1_raw, st1 = pl.pallas_call(
        functools.partial(_conv1_kernel, n_groups),
        grid=(n,),
        in_specs=[
            pl.BlockSpec((None, h, w, cp), lambda i: (i, 0, 0, 0)),
            pl.BlockSpec((9 * cp, cp), lambda i: (0, 0)),
        ],
        out_specs=(
            pl.BlockSpec((None, h, w, cp), lambda i: (i, 0, 0, 0)),
            pl.BlockSpec((None, 2, cp), lambda i: (i, 0, 0)),
        ),
        out_shape=(
            jax.ShapeDtypeStruct((n, h, w, cp), jnp.bfloat16),
            jax.ShapeDtypeStruct((n, 2, cp), jnp.float32),
        ),
        scratch_shapes=conv_scratch,
        compiler_params=cparams,
    )(x, w1p)
    s1, bb1 = _bn_affine(st1, g1p, b1p, float(m))

    # ---- pass 2: BN1 + ReLU + conv3x3 #2 + BN2 batch statistics ----
    y2_raw, st2 = pl.pallas_call(
        functools.partial(_conv2_kernel, n_groups),
        grid=(n,),
        in_specs=[
            pl.BlockSpec((None, h, w, cp), lambda i: (i, 0, 0, 0)),
            pl.BlockSpec((1, cp), lambda i: (0, 0)),
            pl.BlockSpec((1, cp), lambda i: (0, 0)),
            pl.BlockSpec((9 * cp, cp), lambda i: (0, 0)),
        ],
        out_specs=(
            pl.BlockSpec((None, hw, cp), lambda i: (i, 0, 0)),
            pl.BlockSpec((None, 2, cp), lambda i: (i, 0, 0)),
        ),
        out_shape=(
            jax.ShapeDtypeStruct((n, hw, cp), jnp.bfloat16),
            jax.ShapeDtypeStruct((n, 2, cp), jnp.float32),
        ),
        scratch_shapes=conv_scratch,
        compiler_params=cparams,
    )(y1_raw, s1, bb1, w2p)
    s2, bb2 = _bn_affine(st2, g2p, b2p, float(m))

    # ---- pass 3: BN2 + residual + 1x1 projection, tiled over N*H*W ----
    tm = _pick_tile_m(m)
    out_cols = cout if cout < LANE else coutp   # narrow output when Cout small
    out_flat = pl.pallas_call(
        _proj_kernel,
        grid=(m // tm,),
        in_specs=[
            pl.BlockSpec((tm, cp), lambda i: (i, 0)),
            pl.BlockSpec((tm, cp), lambda i: (i, 0)),
            pl.BlockSpec((1, cp), lambda i: (0, 0)),
            pl.BlockSpec((1, cp), lambda i: (0, 0)),
            pl.BlockSpec((cp, coutp), lambda i: (0, 0)),
        ],
        out_specs=pl.BlockSpec((tm, out_cols), lambda i: (i, 0)),
        out_shape=jax.ShapeDtypeStruct((m, out_cols), jnp.float32),
        compiler_params=cparams,
    )(y2_raw.reshape(m, cp), x.reshape(m, cp), s2, bb2, wcp)

    out = out_flat.reshape(n, h, w, out_cols)
    if out_cols != cout:
        out = out[..., :cout]
    return jnp.transpose(out, (0, 3, 1, 2))


# ------------------------------ reference -------------------------------------

def tresblock_reference(x_nchw, params):
    """Pure-JAX f32 reference of the PyTorch forward (training-mode BN)."""
    w1, g1, b1, w2, g2, b2, wc = params
    x = jnp.transpose(x_nchw, (0, 2, 3, 1))

    def conv3(a, wk):
        return lax.conv_general_dilated(
            a, wk, window_strides=(1, 1), padding=((1, 1), (1, 1)),
            dimension_numbers=("NHWC", "HWIO", "NHWC"))

    def bn(y, g, b):
        mu = jnp.mean(y, axis=(0, 1, 2), keepdims=True)
        v = jnp.mean((y - mu) ** 2, axis=(0, 1, 2), keepdims=True)
        return (y - mu) * lax.rsqrt(v + EPS) * g + b

    y = jnp.maximum(bn(conv3(x, w1), g1, b1), 0.0)
    y = bn(conv3(y, w2), g2, b2)
    z = y + x
    out = jnp.einsum("nhwc,cd->nhwd", z, wc)
    return jnp.transpose(out, (0, 3, 1, 2))


def init_params(key, cin, cout):
    k1, k2, k3 = jax.random.split(key, 3)
    scale3 = 1.0 / jnp.sqrt(9.0 * cin)
    scale1 = 1.0 / jnp.sqrt(1.0 * cin)
    w1 = jax.random.uniform(k1, (3, 3, cin, cin), jnp.float32, -scale3, scale3)
    w2 = jax.random.uniform(k2, (3, 3, cin, cin), jnp.float32, -scale3, scale3)
    wc = jax.random.uniform(k3, (cin, cout), jnp.float32, -scale1, scale1)
    g1 = jnp.ones((cin,), jnp.float32)
    b1 = jnp.zeros((cin,), jnp.float32)
    g2 = jnp.ones((cin,), jnp.float32)
    b2 = jnp.zeros((cin,), jnp.float32)
    return (w1, g1, b1, w2, g2, b2, wc)


if __name__ == "__main__":
    key = jax.random.PRNGKey(0)
    kx, kp = jax.random.split(key)
    N, Cin, Cout, S = 2, 4, 8, 16

    x = jax.random.normal(kx, (N, Cin, S, S), jnp.float32)  # NCHW, like PyTorch
    params = init_params(kp, Cin, Cout)

    fwd = jax.jit(tresblock_forward)
    out = jax.block_until_ready(fwd(x, params))
    ref = jax.block_until_ready(tresblock_reference(x, params))

    assert out.shape == (N, Cout, S, S), out.shape
    # Tolerance sized for bf16 matmul inputs / bf16 stored intermediates
    # (f32 accumulation and f32 BN statistics).
    max_err = float(jnp.max(jnp.abs(out - ref)))
    assert jnp.allclose(out, ref, rtol=5e-2, atol=8e-2), max_err
    print("KERNEL_OK")
</pallas_src>

<mosaic_0001>
module attributes {stable_mosaic.version = 11 : i64} {
  func.func @_conv1_kernel(%arg0: i32, %arg1: memref<1x16x16x128xbf16, #tpu.memory_space<vmem>>, %arg2: memref<1152x128xbf16, #tpu.memory_space<vmem>>, %arg3: memref<1x16x16x128xbf16, #tpu.memory_space<vmem>>, %arg4: memref<1x2x128xf32, #tpu.memory_space<vmem>>, %arg5: memref<18x24x128xbf16, #tpu.memory_space<vmem>>, %arg6: memref<256x1152xbf16, #tpu.memory_space<vmem>>) attributes {dimension_semantics = [#tpu.dimension_semantics<parallel>], iteration_bounds = array<i64: 2>, scalar_prefetch = 0 : i64, scratch_operands = 2 : i64, tpu.core_type = #tpu.core_type<tc>, window_params = [{transform_indices = @transform_0, window_bounds = array<i64: 1, 16, 16, 128>}, {pipeline_mode = #tpu.pipeline_mode<synchronous>, transform_indices = @transform_1, window_bounds = array<i64: 1152, 128>}, {transform_indices = @transform_2, window_bounds = array<i64: 1, 16, 16, 128>}, {transform_indices = @transform_3, window_bounds = array<i64: 1, 2, 128>}]} {
    %c0 = arith.constant 0 : index
    %c0_0 = arith.constant 0 : index
    %c0_1 = arith.constant 0 : index
    %c0_2 = arith.constant 0 : index
    %0 = vector.load %arg1[%c0, %c0_0, %c0_1, %c0_2] : memref<1x16x16x128xbf16, #tpu.memory_space<vmem>>, vector<1x16x16x128xbf16>
    %1 = vector.shape_cast %0 : vector<1x16x16x128xbf16> to vector<16x16x128xbf16>
    %cst = arith.constant 0.000000e+00 : bf16
    %2 = vector.broadcast %cst : bf16 to vector<1x24x128xbf16>
    %c0_3 = arith.constant 0 : index
    %c0_4 = arith.constant 0 : index
    %c0_5 = arith.constant 0 : index
    %3 = vector.load %arg5[%c0_3, %c0_4, %c0_5] : memref<18x24x128xbf16, #tpu.memory_space<vmem>>, vector<1x24x128xbf16>
    tpu.vector_store %arg5[%c0_3, %c0_4, %c0_5], %2 {strides = array<i32>} : memref<18x24x128xbf16, #tpu.memory_space<vmem>>, vector<1x24x128xbf16>,
    %c17 = arith.constant 17 : index
    %c0_6 = arith.constant 0 : index
    %c0_7 = arith.constant 0 : index
    %4 = vector.load %arg5[%c17, %c0_6, %c0_7] : memref<18x24x128xbf16, #tpu.memory_space<vmem>>, vector<1x24x128xbf16>
    tpu.vector_store %arg5[%c17, %c0_6, %c0_7], %2 {strides = array<i32>} : memref<18x24x128xbf16, #tpu.memory_space<vmem>>, vector<1x24x128xbf16>,
    %cst_8 = arith.constant 0.000000e+00 : bf16
    %5 = vector.broadcast %cst_8 : bf16 to vector<16x1x128xbf16>
    %c1 = arith.constant 1 : index
    %c0_9 = arith.constant 0 : index
    %c0_10 = arith.constant 0 : index
    %6 = vector.load %arg5[%c1, %c0_9, %c0_10] : memref<18x24x128xbf16, #tpu.memory_space<vmem>>, vector<16x1x128xbf16>
    tpu.vector_store %arg5[%c1, %c0_9, %c0_10], %5 {strides = array<i32>} : memref<18x24x128xbf16, #tpu.memory_space<vmem>>, vector<16x1x128xbf16>,
    %cst_11 = arith.constant 0.000000e+00 : bf16
    %7 = vector.broadcast %cst_11 : bf16 to vector<16x7x128xbf16>
    %c1_12 = arith.constant 1 : index
    %c17_13 = arith.constant 17 : index
    %c0_14 = arith.constant 0 : index
    %8 = vector.load %arg5[%c1_12, %c17_13, %c0_14] : memref<18x24x128xbf16, #tpu.memory_space<vmem>>, vector<16x7x128xbf16>
    tpu.vector_store %arg5[%c1_12, %c17_13, %c0_14], %7 {strides = array<i32>} : memref<18x24x128xbf16, #tpu.memory_space<vmem>>, vector<16x7x128xbf16>,
    %c1_15 = arith.constant 1 : index
    %c1_16 = arith.constant 1 : index
    %c0_17 = arith.constant 0 : index
    %9 = vector.load %arg5[%c1_15, %c1_16, %c0_17] : memref<18x24x128xbf16, #tpu.memory_space<vmem>>, vector<16x16x128xbf16>
    tpu.vector_store %arg5[%c1_15, %c1_16, %c0_17], %1 {strides = array<i32>} : memref<18x24x128xbf16, #tpu.memory_space<vmem>>, vector<16x16x128xbf16>,
    %c0_18 = arith.constant 0 : index
    %c0_19 = arith.constant 0 : index
    %c0_20 = arith.constant 0 : index
    %10 = vector.load %arg5[%c0_18, %c0_19, %c0_20] : memref<18x24x128xbf16, #tpu.memory_space<vmem>>, vector<16x16x128xbf16>
    %11 = vector.shape_cast %10 : vector<16x16x128xbf16> to vector<256x128xbf16>
    %c0_21 = arith.constant 0 : index
    %c0_22 = arith.constant 0 : index
    %12 = vector.load %arg6[%c0_21, %c0_22] : memref<256x1152xbf16, #tpu.memory_space<vmem>>, vector<256x128xbf16>
    tpu.vector_store %arg6[%c0_21, %c0_22], %11 {strides = array<i32>} : memref<256x1152xbf16, #tpu.memory_space<vmem>>, vector<256x128xbf16>,
    %c0_23 = arith.constant 0 : index
    %c1_24 = arith.constant 1 : index
    %c0_25 = arith.constant 0 : index
    %13 = vector.load %arg5[%c0_23, %c1_24, %c0_25] : memref<18x24x128xbf16, #tpu.memory_space<vmem>>, vector<16x16x128xbf16>
    %14 = vector.shape_cast %13 : vector<16x16x128xbf16> to vector<256x128xbf16>
    %c0_26 = arith.constant 0 : index
    %c128 = arith.constant 128 : index
    %15 = vector.load %arg6[%c0_26, %c128] : memref<256x1152xbf16, #tpu.memory_space<vmem>>, vector<256x128xbf16>
    tpu.vector_store %arg6[%c0_26, %c128], %14 {strides = array<i32>} : memref<256x1152xbf16, #tpu.memory_space<vmem>>, vector<256x128xbf16>,
    %c0_27 = arith.constant 0 : index
    %c2 = arith.constant 2 : index
    %c0_28 = arith.constant 0 : index
    %16 = vector.load %arg5[%c0_27, %c2, %c0_28] : memref<18x24x128xbf16, #tpu.memory_space<vmem>>, vector<16x16x128xbf16>
    %17 = vector.shape_cast %16 : vector<16x16x128xbf16> to vector<256x128xbf16>
    %c0_29 = arith.constant 0 : index
    %c256 = arith.constant 256 : index
    %18 = vector.load %arg6[%c0_29, %c256] : memref<256x1152xbf16, #tpu.memory_space<vmem>>, vector<256x128xbf16>
    tpu.vector_store %arg6[%c0_29, %c256], %17 {strides = array<i32>} : memref<256x1152xbf16, #tpu.memory_space<vmem>>, vector<256x128xbf16>,
    %c1_30 = arith.constant 1 : index
    %c0_31 = arith.constant 0 : index
    %c0_32 = arith.constant 0 : index
    %19 = vector.load %arg5[%c1_30, %c0_31, %c0_32] : memref<18x24x128xbf16, #tpu.memory_space<vmem>>, vector<16x16x128xbf16>
    %20 = vector.shape_cast %19 : vector<16x16x128xbf16> to vector<256x128xbf16>
    %c0_33 = arith.constant 0 : index
    %c384 = arith.constant 384 : index
    %21 = vector.load %arg6[%c0_33, %c384] : memref<256x1152xbf16, #tpu.memory_space<vmem>>, vector<256x128xbf16>
    tpu.vector_store %arg6[%c0_33, %c384], %20 {strides = array<i32>} : memref<256x1152xbf16, #tpu.memory_space<vmem>>, vector<256x128xbf16>,
    %c1_34 = arith.constant 1 : index
    %c1_35 = arith.constant 1 : index
    %c0_36 = arith.constant 0 : index
    %22 = vector.load %arg5[%c1_34, %c1_35, %c0_36] : memref<18x24x128xbf16, #tpu.memory_space<vmem>>, vector<16x16x128xbf16>
    %23 = vector.shape_cast %22 : vector<16x16x128xbf16> to vector<256x128xbf16>
    %c0_37 = arith.constant 0 : index
    %c512 = arith.constant 512 : index
    %24 = vector.load %arg6[%c0_37, %c512] : memref<256x1152xbf16, #tpu.memory_space<vmem>>, vector<256x128xbf16>
    tpu.vector_store %arg6[%c0_37, %c512], %23 {strides = array<i32>} : memref<256x1152xbf16, #tpu.memory_space<vmem>>, vector<256x128xbf16>,
    %c1_38 = arith.constant 1 : index
    %c2_39 = arith.constant 2 : index
    %c0_40 = arith.constant 0 : index
    %25 = vector.load %arg5[%c1_38, %c2_39, %c0_40] : memref<18x24x128xbf16, #tpu.memory_space<vmem>>, vector<16x16x128xbf16>
    %26 = vector.shape_cast %25 : vector<16x16x128xbf16> to vector<256x128xbf16>
    %c0_41 = arith.constant 0 : index
    %c640 = arith.constant 640 : index
    %27 = vector.load %arg6[%c0_41, %c640] : memref<256x1152xbf16, #tpu.memory_space<vmem>>, vector<256x128xbf16>
    tpu.vector_store %arg6[%c0_41, %c640], %26 {strides = array<i32>} : memref<256x1152xbf16, #tpu.memory_space<vmem>>, vector<256x128xbf16>,
    %c2_42 = arith.constant 2 : index
    %c0_43 = arith.constant 0 : index
    %c0_44 = arith.constant 0 : index
    %28 = vector.load %arg5[%c2_42, %c0_43, %c0_44] : memref<18x24x128xbf16, #tpu.memory_space<vmem>>, vector<16x16x128xbf16>
    %29 = vector.shape_cast %28 : vector<16x16x128xbf16> to vector<256x128xbf16>
    %c0_45 = arith.constant 0 : index
    %c768 = arith.constant 768 : index
    %30 = vector.load %arg6[%c0_45, %c768] : memref<256x1152xbf16, #tpu.memory_space<vmem>>, vector<256x128xbf16>
    tpu.vector_store %arg6[%c0_45, %c768], %29 {strides = array<i32>} : memref<256x1152xbf16, #tpu.memory_space<vmem>>, vector<256x128xbf16>,
    %c2_46 = arith.constant 2 : index
    %c1_47 = arith.constant 1 : index
    %c0_48 = arith.constant 0 : index
    %31 = vector.load %arg5[%c2_46, %c1_47, %c0_48] : memref<18x24x128xbf16, #tpu.memory_space<vmem>>, vector<16x16x128xbf16>
    %32 = vector.shape_cast %31 : vector<16x16x128xbf16> to vector<256x128xbf16>
    %c0_49 = arith.constant 0 : index
    %c896 = arith.constant 896 : index
    %33 = vector.load %arg6[%c0_49, %c896] : memref<256x1152xbf16, #tpu.memory_space<vmem>>, vector<256x128xbf16>
    tpu.vector_store %arg6[%c0_49, %c896], %32 {strides = array<i32>} : memref<256x1152xbf16, #tpu.memory_space<vmem>>, vector<256x128xbf16>,
    %c2_50 = arith.constant 2 : index
    %c2_51 = arith.constant 2 : index
    %c0_52 = arith.constant 0 : index
    %34 = vector.load %arg5[%c2_50, %c2_51, %c0_52] : memref<18x24x128xbf16, #tpu.memory_space<vmem>>, vector<16x16x128xbf16>
    %35 = vector.shape_cast %34 : vector<16x16x128xbf16> to vector<256x128xbf16>
    %c0_53 = arith.constant 0 : index
    %c1024 = arith.constant 1024 : index
    %36 = vector.load %arg6[%c0_53, %c1024] : memref<256x1152xbf16, #tpu.memory_space<vmem>>, vector<256x128xbf16>
    tpu.vector_store %arg6[%c0_53, %c1024], %35 {strides = array<i32>} : memref<256x1152xbf16, #tpu.memory_space<vmem>>, vector<256x128xbf16>,
    %c0_54 = arith.constant 0 : index
    %c0_55 = arith.constant 0 : index
    %37 = vector.load %arg6[%c0_54, %c0_55] : memref<256x1152xbf16, #tpu.memory_space<vmem>>, vector<256x1152xbf16>
    %c0_56 = arith.constant 0 : index
    %c0_57 = arith.constant 0 : index
    %38 = vector.load %arg2[%c0_56, %c0_57] : memref<1152x128xbf16, #tpu.memory_space<vmem>>, vector<1152x128xbf16>
    %cst_58 = arith.constant dense<0.000000e+00> : vector<256x128xf32>
    %39 = tpu.matmul %37, %38, %cst_58 {dimension_numbers = #tpu.dot_dimension_numbers<[1], [0], [0], [1], [0, 0, 1, 1], [], []>} : vector<256x1152xbf16>, vector<1152x128xbf16>, vector<256x128xf32> -> vector<256x128xf32>
    %cst_59 = arith.constant dense<0.000000e+00> : vector<128xf32>
    %40 = vector.multi_reduction <add>, %39, %cst_59 [0] : vector<256x128xf32> to vector<128xf32>
    %41 = vector.shape_cast %40 : vector<128xf32> to vector<1x128xf32>
    %c0_60 = arith.constant 0 : index
    %c0_61 = arith.constant 0 : index
    %c0_62 = arith.constant 0 : index
    %42 = vector.load %arg4[%c0_60, %c0_61, %c0_62] : memref<1x2x128xf32, #tpu.memory_space<vmem>>, vector<1x1x128xf32>
    %43 = vector.shape_cast %42 : vector<1x1x128xf32> to vector<1x128xf32>
    %44 = vector.shape_cast %41 : vector<1x128xf32> to vector<1x1x128xf32>
    tpu.vector_store %arg4[%c0_60, %c0_61, %c0_62], %44 {strides = array<i32>} : memref<1x2x128xf32, #tpu.memory_space<vmem>>, vector<1x1x128xf32>,
    %45 = arith.mulf %39, %39 : vector<256x128xf32>
    %cst_63 = arith.constant dense<0.000000e+00> : vector<128xf32>
    %46 = vector.multi_reduction <add>, %45, %cst_63 [0] : vector<256x128xf32> to vector<128xf32>
    %47 = vector.shape_cast %46 : vector<128xf32> to vector<1x128xf32>
    %c0_64 = arith.constant 0 : index
    %c1_65 = arith.constant 1 : index
    %c0_66 = arith.constant 0 : index
    %48 = vector.load %arg4[%c0_64, %c1_65, %c0_66] : memref<1x2x128xf32, #tpu.memory_space<vmem>>, vector<1x1x128xf32>
    %49 = vector.shape_cast %48 : vector<1x1x128xf32> to vector<1x128xf32>
    %50 = vector.shape_cast %47 : vector<1x128xf32> to vector<1x1x128xf32>
    tpu.vector_store %arg4[%c0_64, %c1_65, %c0_66], %50 {strides = array<i32>} : memref<1x2x128xf32, #tpu.memory_space<vmem>>, vector<1x1x128xf32>,
    %51 = vector.shape_cast %39 : vector<256x128xf32> to vector<16x16x128xf32>
    %52 = arith.truncf %51 : vector<16x16x128xf32> to vector<16x16x128xbf16>
    %c0_67 = arith.constant 0 : index
    %c0_68 = arith.constant 0 : index
    %c0_69 = arith.constant 0 : index
    %c0_70 = arith.constant 0 : index
    %53 = vector.load %arg3[%c0_67, %c0_68, %c0_69, %c0_70] : memref<1x16x16x128xbf16, #tpu.memory_space<vmem>>, vector<1x16x16x128xbf16>
    %54 = vector.shape_cast %53 : vector<1x16x16x128xbf16> to vector<16x16x128xbf16>
    %55 = vector.shape_cast %52 : vector<16x16x128xbf16> to vector<1x16x16x128xbf16>
    tpu.vector_store %arg3[%c0_67, %c0_68, %c0_69, %c0_70], %55 {strides = array<i32>} : memref<1x16x16x128xbf16, #tpu.memory_space<vmem>>, vector<1x16x16x128xbf16>,
    return
  }
  func.func @transform_0(%arg0: i32) -> (i32, i32, i32, i32) {
    %c0_i32 = arith.constant 0 : i32
    %c0_i32_0 = arith.constant 0 : i32
    %c0_i32_1 = arith.constant 0 : i32
    %c0_i32_2 = arith.constant 0 : i32
    return %arg0, %c0_i32, %c0_i32_0, %c0_i32_1 : i32, i32, i32, i32
  }
  func.func @transform_1(%arg0: i32) -> (i32, i32) {
    %c0_i32 = arith.constant 0 : i32
    %c0_i32_0 = arith.constant 0 : i32
    %c0_i32_1 = arith.constant 0 : i32
    return %c0_i32, %c0_i32_0 : i32, i32
  }
  func.func @transform_2(%arg0: i32) -> (i32, i32, i32, i32) {
    %c0_i32 = arith.constant 0 : i32
    %c0_i32_0 = arith.constant 0 : i32
    %c0_i32_1 = arith.constant 0 : i32
    %c0_i32_2 = arith.constant 0 : i32
    return %arg0, %c0_i32, %c0_i32_0, %c0_i32_1 : i32, i32, i32, i32
  }
  func.func @transform_3(%arg0: i32) -> (i32, i32, i32) {
    %c0_i32 = arith.constant 0 : i32
    %c0_i32_0 = arith.constant 0 : i32
    %c0_i32_1 = arith.constant 0 : i32
    return %arg0, %c0_i32, %c0_i32_0 : i32, i32, i32
  }
}

module attributes {stable_mosaic.version = 11 : i64} {
  func.func @_proj_kernel(%arg0: i32, %arg1: memref<512x128xbf16, #tpu.memory_space<vmem>>, %arg2: memref<512x128xbf16, #tpu.memory_space<vmem>>, %arg3: memref<1x128xf32, #tpu.memory_space<vmem>>, %arg4: memref<1x128xf32, #tpu.memory_space<vmem>>, %arg5: memref<128x128xbf16, #tpu.memory_space<vmem>>, %arg6: memref<512x8xf32, #tpu.memory_space<vmem>>) attributes {dimension_semantics = [#tpu.dimension_semantics<parallel>], iteration_bounds = array<i64: 1>, scalar_prefetch = 0 : i64, scratch_operands = 0 : i64, tpu.core_type = #tpu.core_type<tc>, window_params = [{transform_indices = @transform_0, window_bounds = array<i64: 512, 128>}, {transform_indices = @transform_1, window_bounds = array<i64: 512, 128>}, {pipeline_mode = #tpu.pipeline_mode<synchronous>, transform_indices = @transform_2, window_bounds = array<i64: 1, 128>}, {pipeline_mode = #tpu.pipeline_mode<synchronous>, transform_indices = @transform_3, window_bounds = array<i64: 1, 128>}, {pipeline_mode = #tpu.pipeline_mode<synchronous>, transform_indices = @transform_4, window_bounds = array<i64: 128, 128>}, {transform_indices = @transform_5, window_bounds = array<i64: 512, 8>}]} {
    %c0 = arith.constant 0 : index
    %c0_0 = arith.constant 0 : index
    %0 = vector.load %arg1[%c0, %c0_0] : memref<512x128xbf16, #tpu.memory_space<vmem>>, vector<512x128xbf16>
    %1 = arith.extf %0 : vector<512x128xbf16> to vector<512x128xf32>
    %c0_1 = arith.constant 0 : index
    %c0_2 = arith.constant 0 : index
    %2 = vector.load %arg3[%c0_1, %c0_2] : memref<1x128xf32, #tpu.memory_space<vmem>>, vector<1x128xf32>
    %3 = vector.broadcast %2 : vector<1x128xf32> to vector<512x128xf32>
    %4 = arith.mulf %1, %3 : vector<512x128xf32>
    %c0_3 = arith.constant 0 : index
    %c0_4 = arith.constant 0 : index
    %5 = vector.load %arg4[%c0_3, %c0_4] : memref<1x128xf32, #tpu.memory_space<vmem>>, vector<1x128xf32>
    %6 = vector.broadcast %5 : vector<1x128xf32> to vector<512x128xf32>
    %7 = arith.addf %4, %6 : vector<512x128xf32>
    %c0_5 = arith.constant 0 : index
    %c0_6 = arith.constant 0 : index
    %8 = vector.load %arg2[%c0_5, %c0_6] : memref<512x128xbf16, #tpu.memory_space<vmem>>, vector<512x128xbf16>
    %9 = arith.extf %8 : vector<512x128xbf16> to vector<512x128xf32>
    %10 = arith.addf %7, %9 : vector<512x128xf32>
    %11 = arith.truncf %10 : vector<512x128xf32> to vector<512x128xbf16>
    %c0_7 = arith.constant 0 : index
    %c0_8 = arith.constant 0 : index
    %12 = vector.load %arg5[%c0_7, %c0_8] : memref<128x128xbf16, #tpu.memory_space<vmem>>, vector<128x128xbf16>
    %cst = arith.constant dense<0.000000e+00> : vector<512x128xf32>
    %13 = tpu.matmul %11, %12, %cst {dimension_numbers = #tpu.dot_dimension_numbers<[1], [0], [0], [1], [0, 0, 1, 1], [], []>} : vector<512x128xbf16>, vector<128x128xbf16>, vector<512x128xf32> -> vector<512x128xf32>
    %14 = vector.extract_strided_slice %13 {offsets = [0, 0], sizes = [512, 8], strides = [1, 1]} : vector<512x128xf32> to vector<512x8xf32>
    %c0_9 = arith.constant 0 : index
    %c0_10 = arith.constant 0 : index
    %15 = vector.load %arg6[%c0_9, %c0_10] : memref<512x8xf32, #tpu.memory_space<vmem>>, vector<512x8xf32>
    tpu.vector_store %arg6[%c0_9, %c0_10], %14 {strides = array<i32>} : memref<512x8xf32, #tpu.memory_space<vmem>>, vector<512x8xf32>,
    return
  }
  func.func @transform_0(%arg0: i32) -> (i32, i32) {
    %c0_i32 = arith.constant 0 : i32
    %c0_i32_0 = arith.constant 0 : i32
    return %arg0, %c0_i32 : i32, i32
  }
  func.func @transform_1(%arg0: i32) -> (i32, i32) {
    %c0_i32 = arith.constant 0 : i32
    %c0_i32_0 = arith.constant 0 : i32
    return %arg0, %c0_i32 : i32, i32
  }
  func.func @transform_2(%arg0: i32) -> (i32, i32) {
    %c0_i32 = arith.constant 0 : i32
    %c0_i32_0 = arith.constant 0 : i32
    %c0_i32_1 = arith.constant 0 : i32
    return %c0_i32, %c0_i32_0 : i32, i32
  }
  func.func @transform_3(%arg0: i32) -> (i32, i32) {
    %c0_i32 = arith.constant 0 : i32
    %c0_i32_0 = arith.constant 0 : i32
    %c0_i32_1 = arith.constant 0 : i32
    return %c0_i32, %c0_i32_0 : i32, i32
  }
  func.func @transform_4(%arg0: i32) -> (i32, i32) {
    %c0_i32 = arith.constant 0 : i32
    %c0_i32_0 = arith.constant 0 : i32
    %c0_i32_1 = arith.constant 0 : i32
    return %c0_i32, %c0_i32_0 : i32, i32
  }
  func.func @transform_5(%arg0: i32) -> (i32, i32) {
    %c0_i32 = arith.constant 0 : i32
    %c0_i32_0 = arith.constant 0 : i32
    return %arg0, %c0_i32 : i32, i32
  }
}

module attributes {stable_mosaic.version = 11 : i64} {
  func.func @_conv2_kernel(%arg0: i32, %arg1: memref<1x16x16x128xbf16, #tpu.memory_space<vmem>>, %arg2: memref<1x128xf32, #tpu.memory_space<vmem>>, %arg3: memref<1x128xf32, #tpu.memory_space<vmem>>, %arg4: memref<1152x128xbf16, #tpu.memory_space<vmem>>, %arg5: memref<1x256x128xbf16, #tpu.memory_space<vmem>>, %arg6: memref<1x2x128xf32, #tpu.memory_space<vmem>>, %arg7: memref<18x24x128xbf16, #tpu.memory_space<vmem>>, %arg8: memref<256x1152xbf16, #tpu.memory_space<vmem>>) attributes {dimension_semantics = [#tpu.dimension_semantics<parallel>], iteration_bounds = array<i64: 2>, scalar_prefetch = 0 : i64, scratch_operands = 2 : i64, tpu.core_type = #tpu.core_type<tc>, window_params = [{transform_indices = @transform_0, window_bounds = array<i64: 1, 16, 16, 128>}, {pipeline_mode = #tpu.pipeline_mode<synchronous>, transform_indices = @transform_1, window_bounds = array<i64: 1, 128>}, {pipeline_mode = #tpu.pipeline_mode<synchronous>, transform_indices = @transform_2, window_bounds = array<i64: 1, 128>}, {pipeline_mode = #tpu.pipeline_mode<synchronous>, transform_indices = @transform_3, window_bounds = array<i64: 1152, 128>}, {transform_indices = @transform_4, window_bounds = array<i64: 1, 256, 128>}, {transform_indices = @transform_5, window_bounds = array<i64: 1, 2, 128>}]} {
    %c0 = arith.constant 0 : index
    %c0_0 = arith.constant 0 : index
    %c0_1 = arith.constant 0 : index
    %c0_2 = arith.constant 0 : index
    %0 = vector.load %arg1[%c0, %c0_0, %c0_1, %c0_2] : memref<1x16x16x128xbf16, #tpu.memory_space<vmem>>, vector<1x16x16x128xbf16>
    %1 = vector.shape_cast %0 : vector<1x16x16x128xbf16> to vector<16x16x128xbf16>
    %2 = arith.extf %1 : vector<16x16x128xbf16> to vector<16x16x128xf32>
    %c0_3 = arith.constant 0 : index
    %c0_4 = arith.constant 0 : index
    %3 = vector.load %arg2[%c0_3, %c0_4] : memref<1x128xf32, #tpu.memory_space<vmem>>, vector<1x128xf32>
    %4 = vector.shape_cast %3 : vector<1x128xf32> to vector<1x1x128xf32>
    %5 = vector.broadcast %4 : vector<1x1x128xf32> to vector<16x16x128xf32>
    %6 = arith.mulf %2, %5 : vector<16x16x128xf32>
    %c0_5 = arith.constant 0 : index
    %c0_6 = arith.constant 0 : index
    %7 = vector.load %arg3[%c0_5, %c0_6] : memref<1x128xf32, #tpu.memory_space<vmem>>, vector<1x128xf32>
    %8 = vector.shape_cast %7 : vector<1x128xf32> to vector<1x1x128xf32>
    %9 = vector.broadcast %8 : vector<1x1x128xf32> to vector<16x16x128xf32>
    %10 = arith.addf %6, %9 : vector<16x16x128xf32>
    %cst = arith.constant 0.000000e+00 : f32
    %11 = vector.broadcast %cst : f32 to vector<16x16x128xf32>
    %12 = arith.maximumf %10, %11 : vector<16x16x128xf32>
    %13 = arith.truncf %12 : vector<16x16x128xf32> to vector<16x16x128xbf16>
    %cst_7 = arith.constant 0.000000e+00 : bf16
    %14 = vector.broadcast %cst_7 : bf16 to vector<1x24x128xbf16>
    %c0_8 = arith.constant 0 : index
    %c0_9 = arith.constant 0 : index
    %c0_10 = arith.constant 0 : index
    %15 = vector.load %arg7[%c0_8, %c0_9, %c0_10] : memref<18x24x128xbf16, #tpu.memory_space<vmem>>, vector<1x24x128xbf16>
    tpu.vector_store %arg7[%c0_8, %c0_9, %c0_10], %14 {strides = array<i32>} : memref<18x24x128xbf16, #tpu.memory_space<vmem>>, vector<1x24x128xbf16>,
    %c17 = arith.constant 17 : index
    %c0_11 = arith.constant 0 : index
    %c0_12 = arith.constant 0 : index
    %16 = vector.load %arg7[%c17, %c0_11, %c0_12] : memref<18x24x128xbf16, #tpu.memory_space<vmem>>, vector<1x24x128xbf16>
    tpu.vector_store %arg7[%c17, %c0_11, %c0_12], %14 {strides = array<i32>} : memref<18x24x128xbf16, #tpu.memory_space<vmem>>, vector<1x24x128xbf16>,
    %cst_13 = arith.constant 0.000000e+00 : bf16
    %17 = vector.broadcast %cst_13 : bf16 to vector<16x1x128xbf16>
    %c1 = arith.constant 1 : index
    %c0_14 = arith.constant 0 : index
    %c0_15 = arith.constant 0 : index
    %18 = vector.load %arg7[%c1, %c0_14, %c0_15] : memref<18x24x128xbf16, #tpu.memory_space<vmem>>, vector<16x1x128xbf16>
    tpu.vector_store %arg7[%c1, %c0_14, %c0_15], %17 {strides = array<i32>} : memref<18x24x128xbf16, #tpu.memory_space<vmem>>, vector<16x1x128xbf16>,
    %cst_16 = arith.constant 0.000000e+00 : bf16
    %19 = vector.broadcast %cst_16 : bf16 to vector<16x7x128xbf16>
    %c1_17 = arith.constant 1 : index
    %c17_18 = arith.constant 17 : index
    %c0_19 = arith.constant 0 : index
    %20 = vector.load %arg7[%c1_17, %c17_18, %c0_19] : memref<18x24x128xbf16, #tpu.memory_space<vmem>>, vector<16x7x128xbf16>
    tpu.vector_store %arg7[%c1_17, %c17_18, %c0_19], %19 {strides = array<i32>} : memref<18x24x128xbf16, #tpu.memory_space<vmem>>, vector<16x7x128xbf16>,
    %c1_20 = arith.constant 1 : index
    %c1_21 = arith.constant 1 : index
    %c0_22 = arith.constant 0 : index
    %21 = vector.load %arg7[%c1_20, %c1_21, %c0_22] : memref<18x24x128xbf16, #tpu.memory_space<vmem>>, vector<16x16x128xbf16>
    tpu.vector_store %arg7[%c1_20, %c1_21, %c0_22], %13 {strides = array<i32>} : memref<18x24x128xbf16, #tpu.memory_space<vmem>>, vector<16x16x128xbf16>,
    %c0_23 = arith.constant 0 : index
    %c0_24 = arith.constant 0 : index
    %c0_25 = arith.constant 0 : index
    %22 = vector.load %arg7[%c0_23, %c0_24, %c0_25] : memref<18x24x128xbf16, #tpu.memory_space<vmem>>, vector<16x16x128xbf16>
    %23 = vector.shape_cast %22 : vector<16x16x128xbf16> to vector<256x128xbf16>
    %c0_26 = arith.constant 0 : index
    %c0_27 = arith.constant 0 : index
    %24 = vector.load %arg8[%c0_26, %c0_27] : memref<256x1152xbf16, #tpu.memory_space<vmem>>, vector<256x128xbf16>
    tpu.vector_store %arg8[%c0_26, %c0_27], %23 {strides = array<i32>} : memref<256x1152xbf16, #tpu.memory_space<vmem>>, vector<256x128xbf16>,
    %c0_28 = arith.constant 0 : index
    %c1_29 = arith.constant 1 : index
    %c0_30 = arith.constant 0 : index
    %25 = vector.load %arg7[%c0_28, %c1_29, %c0_30] : memref<18x24x128xbf16, #tpu.memory_space<vmem>>, vector<16x16x128xbf16>
    %26 = vector.shape_cast %25 : vector<16x16x128xbf16> to vector<256x128xbf16>
    %c0_31 = arith.constant 0 : index
    %c128 = arith.constant 128 : index
    %27 = vector.load %arg8[%c0_31, %c128] : memref<256x1152xbf16, #tpu.memory_space<vmem>>, vector<256x128xbf16>
    tpu.vector_store %arg8[%c0_31, %c128], %26 {strides = array<i32>} : memref<256x1152xbf16, #tpu.memory_space<vmem>>, vector<256x128xbf16>,
    %c0_32 = arith.constant 0 : index
    %c2 = arith.constant 2 : index
    %c0_33 = arith.constant 0 : index
    %28 = vector.load %arg7[%c0_32, %c2, %c0_33] : memref<18x24x128xbf16, #tpu.memory_space<vmem>>, vector<16x16x128xbf16>
    %29 = vector.shape_cast %28 : vector<16x16x128xbf16> to vector<256x128xbf16>
    %c0_34 = arith.constant 0 : index
    %c256 = arith.constant 256 : index
    %30 = vector.load %arg8[%c0_34, %c256] : memref<256x1152xbf16, #tpu.memory_space<vmem>>, vector<256x128xbf16>
    tpu.vector_store %arg8[%c0_34, %c256], %29 {strides = array<i32>} : memref<256x1152xbf16, #tpu.memory_space<vmem>>, vector<256x128xbf16>,
    %c1_35 = arith.constant 1 : index
    %c0_36 = arith.constant 0 : index
    %c0_37 = arith.constant 0 : index
    %31 = vector.load %arg7[%c1_35, %c0_36, %c0_37] : memref<18x24x128xbf16, #tpu.memory_space<vmem>>, vector<16x16x128xbf16>
    %32 = vector.shape_cast %31 : vector<16x16x128xbf16> to vector<256x128xbf16>
    %c0_38 = arith.constant 0 : index
    %c384 = arith.constant 384 : index
    %33 = vector.load %arg8[%c0_38, %c384] : memref<256x1152xbf16, #tpu.memory_space<vmem>>, vector<256x128xbf16>
    tpu.vector_store %arg8[%c0_38, %c384], %32 {strides = array<i32>} : memref<256x1152xbf16, #tpu.memory_space<vmem>>, vector<256x128xbf16>,
    %c1_39 = arith.constant 1 : index
    %c1_40 = arith.constant 1 : index
    %c0_41 = arith.constant 0 : index
    %34 = vector.load %arg7[%c1_39, %c1_40, %c0_41] : memref<18x24x128xbf16, #tpu.memory_space<vmem>>, vector<16x16x128xbf16>
    %35 = vector.shape_cast %34 : vector<16x16x128xbf16> to vector<256x128xbf16>
    %c0_42 = arith.constant 0 : index
    %c512 = arith.constant 512 : index
    %36 = vector.load %arg8[%c0_42, %c512] : memref<256x1152xbf16, #tpu.memory_space<vmem>>, vector<256x128xbf16>
    tpu.vector_store %arg8[%c0_42, %c512], %35 {strides = array<i32>} : memref<256x1152xbf16, #tpu.memory_space<vmem>>, vector<256x128xbf16>,
    %c1_43 = arith.constant 1 : index
    %c2_44 = arith.constant 2 : index
    %c0_45 = arith.constant 0 : index
    %37 = vector.load %arg7[%c1_43, %c2_44, %c0_45] : memref<18x24x128xbf16, #tpu.memory_space<vmem>>, vector<16x16x128xbf16>
    %38 = vector.shape_cast %37 : vector<16x16x128xbf16> to vector<256x128xbf16>
    %c0_46 = arith.constant 0 : index
    %c640 = arith.constant 640 : index
    %39 = vector.load %arg8[%c0_46, %c640] : memref<256x1152xbf16, #tpu.memory_space<vmem>>, vector<256x128xbf16>
    tpu.vector_store %arg8[%c0_46, %c640], %38 {strides = array<i32>} : memref<256x1152xbf16, #tpu.memory_space<vmem>>, vector<256x128xbf16>,
    %c2_47 = arith.constant 2 : index
    %c0_48 = arith.constant 0 : index
    %c0_49 = arith.constant 0 : index
    %40 = vector.load %arg7[%c2_47, %c0_48, %c0_49] : memref<18x24x128xbf16, #tpu.memory_space<vmem>>, vector<16x16x128xbf16>
    %41 = vector.shape_cast %40 : vector<16x16x128xbf16> to vector<256x128xbf16>
    %c0_50 = arith.constant 0 : index
    %c768 = arith.constant 768 : index
    %42 = vector.load %arg8[%c0_50, %c768] : memref<256x1152xbf16, #tpu.memory_space<vmem>>, vector<256x128xbf16>
    tpu.vector_store %arg8[%c0_50, %c768], %41 {strides = array<i32>} : memref<256x1152xbf16, #tpu.memory_space<vmem>>, vector<256x128xbf16>,
    %c2_51 = arith.constant 2 : index
    %c1_52 = arith.constant 1 : index
    %c0_53 = arith.constant 0 : index
    %43 = vector.load %arg7[%c2_51, %c1_52, %c0_53] : memref<18x24x128xbf16, #tpu.memory_space<vmem>>, vector<16x16x128xbf16>
    %44 = vector.shape_cast %43 : vector<16x16x128xbf16> to vector<256x128xbf16>
    %c0_54 = arith.constant 0 : index
    %c896 = arith.constant 896 : index
    %45 = vector.load %arg8[%c0_54, %c896] : memref<256x1152xbf16, #tpu.memory_space<vmem>>, vector<256x128xbf16>
    tpu.vector_store %arg8[%c0_54, %c896], %44 {strides = array<i32>} : memref<256x1152xbf16, #tpu.memory_space<vmem>>, vector<256x128xbf16>,
    %c2_55 = arith.constant 2 : index
    %c2_56 = arith.constant 2 : index
    %c0_57 = arith.constant 0 : index
    %46 = vector.load %arg7[%c2_55, %c2_56, %c0_57] : memref<18x24x128xbf16, #tpu.memory_space<vmem>>, vector<16x16x128xbf16>
    %47 = vector.shape_cast %46 : vector<16x16x128xbf16> to vector<256x128xbf16>
    %c0_58 = arith.constant 0 : index
    %c1024 = arith.constant 1024 : index
    %48 = vector.load %arg8[%c0_58, %c1024] : memref<256x1152xbf16, #tpu.memory_space<vmem>>, vector<256x128xbf16>
    tpu.vector_store %arg8[%c0_58, %c1024], %47 {strides = array<i32>} : memref<256x1152xbf16, #tpu.memory_space<vmem>>, vector<256x128xbf16>,
    %c0_59 = arith.constant 0 : index
    %c0_60 = arith.constant 0 : index
    %49 = vector.load %arg8[%c0_59, %c0_60] : memref<256x1152xbf16, #tpu.memory_space<vmem>>, vector<256x1152xbf16>
    %c0_61 = arith.constant 0 : index
    %c0_62 = arith.constant 0 : index
    %50 = vector.load %arg4[%c0_61, %c0_62] : memref<1152x128xbf16, #tpu.memory_space<vmem>>, vector<1152x128xbf16>
    %cst_63 = arith.constant dense<0.000000e+00> : vector<256x128xf32>
    %51 = tpu.matmul %49, %50, %cst_63 {dimension_numbers = #tpu.dot_dimension_numbers<[1], [0], [0], [1], [0, 0, 1, 1], [], []>} : vector<256x1152xbf16>, vector<1152x128xbf16>, vector<256x128xf32> -> vector<256x128xf32>
    %cst_64 = arith.constant dense<0.000000e+00> : vector<128xf32>
    %52 = vector.multi_reduction <add>, %51, %cst_64 [0] : vector<256x128xf32> to vector<128xf32>
    %53 = vector.shape_cast %52 : vector<128xf32> to vector<1x128xf32>
    %c0_65 = arith.constant 0 : index
    %c0_66 = arith.constant 0 : index
    %c0_67 = arith.constant 0 : index
    %54 = vector.load %arg6[%c0_65, %c0_66, %c0_67] : memref<1x2x128xf32, #tpu.memory_space<vmem>>, vector<1x1x128xf32>
    %55 = vector.shape_cast %54 : vector<1x1x128xf32> to vector<1x128xf32>
    %56 = vector.shape_cast %53 : vector<1x128xf32> to vector<1x1x128xf32>
    tpu.vector_store %arg6[%c0_65, %c0_66, %c0_67], %56 {strides = array<i32>} : memref<1x2x128xf32, #tpu.memory_space<vmem>>, vector<1x1x128xf32>,
    %57 = arith.mulf %51, %51 : vector<256x128xf32>
    %cst_68 = arith.constant dense<0.000000e+00> : vector<128xf32>
    %58 = vector.multi_reduction <add>, %57, %cst_68 [0] : vector<256x128xf32> to vector<128xf32>
    %59 = vector.shape_cast %58 : vector<128xf32> to vector<1x128xf32>
    %c0_69 = arith.constant 0 : index
    %c1_70 = arith.constant 1 : index
    %c0_71 = arith.constant 0 : index
    %60 = vector.load %arg6[%c0_69, %c1_70, %c0_71] : memref<1x2x128xf32, #tpu.memory_space<vmem>>, vector<1x1x128xf32>
    %61 = vector.shape_cast %60 : vector<1x1x128xf32> to vector<1x128xf32>
    %62 = vector.shape_cast %59 : vector<1x128xf32> to vector<1x1x128xf32>
    tpu.vector_store %arg6[%c0_69, %c1_70, %c0_71], %62 {strides = array<i32>} : memref<1x2x128xf32, #tpu.memory_space<vmem>>, vector<1x1x128xf32>,
    %63 = arith.truncf %51 : vector<256x128xf32> to vector<256x128xbf16>
    %c0_72 = arith.constant 0 : index
    %c0_73 = arith.constant 0 : index
    %c0_74 = arith.constant 0 : index
    %64 = vector.load %arg5[%c0_72, %c0_73, %c0_74] : memref<1x256x128xbf16, #tpu.memory_space<vmem>>, vector<1x256x128xbf16>
    %65 = vector.shape_cast %64 : vector<1x256x128xbf16> to vector<256x128xbf16>
    %66 = vector.shape_cast %63 : vector<256x128xbf16> to vector<1x256x128xbf16>
    tpu.vector_store %arg5[%c0_72, %c0_73, %c0_74], %66 {strides = array<i32>} : memref<1x256x128xbf16, #tpu.memory_space<vmem>>, vector<1x256x128xbf16>,
    return
  }
  func.func @transform_0(%arg0: i32) -> (i32, i32, i32, i32) {
    %c0_i32 = arith.constant 0 : i32
    %c0_i32_0 = arith.constant 0 : i32
    %c0_i32_1 = arith.constant 0 : i32
    %c0_i32_2 = arith.constant 0 : i32
    return %arg0, %c0_i32, %c0_i32_0, %c0_i32_1 : i32, i32, i32, i32
  }
  func.func @transform_1(%arg0: i32) -> (i32, i32) {
    %c0_i32 = arith.constant 0 : i32
    %c0_i32_0 = arith.constant 0 : i32
    %c0_i32_1 = arith.constant 0 : i32
    return %c0_i32, %c0_i32_0 : i32, i32
  }
  func.func @transform_2(%arg0: i32) -> (i32, i32) {
    %c0_i32 = arith.constant 0 : i32
    %c0_i32_0 = arith.constant 0 : i32
    %c0_i32_1 = arith.constant 0 : i32
    return %c0_i32, %c0_i32_0 : i32, i32
  }
  func.func @transform_3(%arg0: i32) -> (i32, i32) {
    %c0_i32 = arith.constant 0 : i32
    %c0_i32_0 = arith.constant 0 : i32
    %c0_i32_1 = arith.constant 0 : i32
    return %c0_i32, %c0_i32_0 : i32, i32
  }
  func.func @transform_4(%arg0: i32) -> (i32, i32, i32) {
    %c0_i32 = arith.constant 0 : i32
    %c0_i32_0 = arith.constant 0 : i32
    %c0_i32_1 = arith.constant 0 : i32
    return %arg0, %c0_i32, %c0_i32_0 : i32, i32, i32
  }
  func.func @transform_5(%arg0: i32) -> (i32, i32, i32) {
    %c0_i32 = arith.constant 0 : i32
    %c0_i32_0 = arith.constant 0 : i32
    %c0_i32_1 = arith.constant 0 : i32
    return %arg0, %c0_i32, %c0_i32_0 : i32, i32, i32
  }
}

</mosaic_0001>

<llo_original>
// kernel: tresblock_forward.5
$region0: #{tresblock_forward.5}
  #allocation0 [shape = 'u32[]', space=smem, size = 0x4, offset = 0x4, fixed_abs, tag = 'smem constant byte address 0x4 - core index']
  #allocation1 [shape = 'u32[144,128]{1,0:T(1,128)}', space=vmem, size = 0x12000, scoped, tag = 'internal scratch']
  %s0 = inlined_call_operand.vmem [shape: bf16[512,128], index: 0, kind: input, shape index: {}]
  %s1 = inlined_call_operand.vmem [shape: bf16[512,128], index: 1, kind: input, shape index: {}]
  %s2 = inlined_call_operand.vmem [shape: f32[1,128], index: 2, kind: input, shape index: {}]
  %s3 = inlined_call_operand.vmem [shape: f32[1,128], index: 3, kind: input, shape index: {}]
  %s4 = inlined_call_operand.vmem [shape: bf16[128,128], index: 4, kind: input, shape index: {}]
  %s5 = inlined_call_operand.vmem [shape: f32[512,8], index: 5, kind: output, shape index: {}]
  %s6 = sld [smem:[#allocation0]]
  $region30: #{tresblock_forward.5} parent=0
    _
  %s8 = ssub.s32 1, %s6
  %s9 = scalar_select 0, %s8, %s6
  // Predicated region
  $region2: #{tresblock_forward.5} parent=0 // pred_check
    _
  $region3: #{tresblock_forward.5} parent=0 // pred_check_branch
    %11 = sbr.rel (0) target = $region5
  $region4: #{tresblock_forward.5} parent=0 // pred_region
    _
  $region5: #{tresblock_forward.5} parent=0 // pred_fallthru
    _
  // Predicated region
  $region6: #{tresblock_forward.5} parent=0 // pred_check
    _
  $region7: #{tresblock_forward.5} parent=0 // pred_check_branch
    %13 = sbr.rel (0) target = $region9
  $region8: #{tresblock_forward.5} parent=0 // pred_region
    _
  $region9: #{tresblock_forward.5} parent=0 // pred_fallthru
    _
  // Predicated region
  $region10: #{tresblock_forward.5} parent=0 // pred_check
    _
  $region11: #{tresblock_forward.5} parent=0 // pred_check_branch
    %15 = sbr.rel (0) target = $region13
  $region12: #{tresblock_forward.5} parent=0 // pred_region
    _
  $region13: #{tresblock_forward.5} parent=0 // pred_fallthru
    _
  // Predicated region
  $region14: #{tresblock_forward.5} parent=0 // pred_check
    _
  $region15: #{tresblock_forward.5} parent=0 // pred_check_branch
    %17 = sbr.rel (0) target = $region17
  $region16: #{tresblock_forward.5} parent=0 // pred_region
    _
  $region17: #{tresblock_forward.5} parent=0 // pred_fallthru
    _
  // Predicated region
  $region18: #{tresblock_forward.5} parent=0 // pred_check
    _
  $region19: #{tresblock_forward.5} parent=0 // pred_check_branch
    %19 = sbr.rel (0) target = $region21
  $region20: #{tresblock_forward.5} parent=0 // pred_region
    _
  $region21: #{tresblock_forward.5} parent=0 // pred_fallthru
    _
  %v21 = vld [vmem:[%s0] sm:$0xf]
  %v22 = vld [vmem:[%s0 + $0x4] sm:$0xf]
  %v23 = vld [vmem:[%s0 + $0x8] sm:$0xf]
  %v24 = vld [vmem:[%s0 + $0xc] sm:$0xf]
  %v25 = vld [vmem:[%s0 + $0x10] sm:$0xf]
  %v26 = vld [vmem:[%s0 + $0x14] sm:$0xf]
  %v27 = vld [vmem:[%s0 + $0x18] sm:$0xf]
  %v28 = vld [vmem:[%s0 + $0x1c] sm:$0xf]
  %v29 = vld [vmem:[%s0 + $0x20] sm:$0xf]
  %v30 = vld [vmem:[%s0 + $0x24] sm:$0xf]
  %v31 = vld [vmem:[%s0 + $0x28] sm:$0xf]
  %v32 = vld [vmem:[%s0 + $0x2c] sm:$0xf]
  %v33 = vld [vmem:[%s0 + $0x30] sm:$0xf]
  %v34 = vld [vmem:[%s0 + $0x34] sm:$0xf]
  %v35 = vld [vmem:[%s0 + $0x38] sm:$0xf]
  %v36 = vld [vmem:[%s0 + $0x3c] sm:$0xf]
  %v37 = vld [vmem:[%s0 + $0x40] sm:$0xf]
  %v38 = vld [vmem:[%s0 + $0x44] sm:$0xf]
  %v39 = vld [vmem:[%s0 + $0x48] sm:$0xf]
  %v40 = vld [vmem:[%s0 + $0x4c] sm:$0xf]
  %v41 = vld [vmem:[%s0 + $0x50] sm:$0xf]
  %v42 = vld [vmem:[%s0 + $0x54] sm:$0xf]
  %v43 = vld [vmem:[%s0 + $0x58] sm:$0xf]
  %v44 = vld [vmem:[%s0 + $0x5c] sm:$0xf]
  %v45 = vld [vmem:[%s0 + $0x60] sm:$0xf]
  %v46 = vld [vmem:[%s0 + $0x64] sm:$0xf]
  %v47 = vld [vmem:[%s0 + $0x68] sm:$0xf]
  %v48 = vld [vmem:[%s0 + $0x6c] sm:$0xf]
  %v49 = vld [vmem:[%s0 + $0x70] sm:$0xf]
  %v50 = vld [vmem:[%s0 + $0x74] sm:$0xf]
  %v51 = vld [vmem:[%s0 + $0x78] sm:$0xf]
  %v52 = vld [vmem:[%s0 + $0x7c] sm:$0xf]
  %v53 = vld [vmem:[%s0 + $0x80] sm:$0xf]
  %v54 = vld [vmem:[%s0 + $0x84] sm:$0xf]
  %v55 = vld [vmem:[%s0 + $0x88] sm:$0xf]
  %v56 = vld [vmem:[%s0 + $0x8c] sm:$0xf]
  %v57 = vld [vmem:[%s0 + $0x90] sm:$0xf]
  %v58 = vld [vmem:[%s0 + $0x94] sm:$0xf]
  %v59 = vld [vmem:[%s0 + $0x98] sm:$0xf]
  %v60 = vld [vmem:[%s0 + $0x9c] sm:$0xf]
  %v61 = vld [vmem:[%s0 + $0xa0] sm:$0xf]
  %v62 = vld [vmem:[%s0 + $0xa4] sm:$0xf]
  %v63 = vld [vmem:[%s0 + $0xa8] sm:$0xf]
  %v64 = vld [vmem:[%s0 + $0xac] sm:$0xf]
  %v65 = vld [vmem:[%s0 + $0xb0] sm:$0xf]
  %v66 = vld [vmem:[%s0 + $0xb4] sm:$0xf]
  %v67 = vld [vmem:[%s0 + $0xb8] sm:$0xf]
  %v68 = vld [vmem:[%s0 + $0xbc] sm:$0xf]
  %v69 = vld [vmem:[%s0 + $0xc0] sm:$0xf]
  %v70 = vld [vmem:[%s0 + $0xc4] sm:$0xf]
  %v71 = vld [vmem:[%s0 + $0xc8] sm:$0xf]
  %v72 = vld [vmem:[%s0 + $0xcc] sm:$0xf]
  %v73 = vld [vmem:[%s0 + $0xd0] sm:$0xf]
  %v74 = vld [vmem:[%s0 + $0xd4] sm:$0xf]
  %v75 = vld [vmem:[%s0 + $0xd8] sm:$0xf]
  %v76 = vld [vmem:[%s0 + $0xdc] sm:$0xf]
  %v77 = vld [vmem:[%s0 + $0xe0] sm:$0xf]
  %v78 = vld [vmem:[%s0 + $0xe4] sm:$0xf]
  %v79 = vld [vmem:[%s0 + $0xe8] sm:$0xf]
  %v80 = vld [vmem:[%s0 + $0xec] sm:$0xf]
  %v81 = vld [vmem:[%s0 + $0xf0] sm:$0xf]
  %v82 = vld [vmem:[%s0 + $0xf4] sm:$0xf]
  %v83 = vld [vmem:[%s0 + $0xf8] sm:$0xf]
  %v84 = vld [vmem:[%s0 + $0xfc] sm:$0xf]
  %v85 = vunpack.c.l.bf16 %v21
  %v86 = vunpack.c.l.bf16 %v22
  %v87 = vunpack.c.l.bf16 %v23
  %v88 = vunpack.c.l.bf16 %v24
  %v89 = vunpack.c.l.bf16 %v25
  %v90 = vunpack.c.l.bf16 %v26
  %v91 = vunpack.c.l.bf16 %v27
  %v92 = vunpack.c.l.bf16 %v28
  %v93 = vunpack.c.l.bf16 %v29
  %v94 = vunpack.c.l.bf16 %v30
  %v95 = vunpack.c.l.bf16 %v31
  %v96 = vunpack.c.l.bf16 %v32
  %v97 = vunpack.c.l.bf16 %v33
  %v98 = vunpack.c.l.bf16 %v34
  %v99 = vunpack.c.l.bf16 %v35
  %v100 = vunpack.c.l.bf16 %v36
  %v101 = vunpack.c.l.bf16 %v37
  %v102 = vunpack.c.l.bf16 %v38
  %v103 = vunpack.c.l.bf16 %v39
  %v104 = vunpack.c.l.bf16 %v40
  %v105 = vunpack.c.l.bf16 %v41
  %v106 = vunpack.c.l.bf16 %v42
  %v107 = vunpack.c.l.bf16 %v43
  %v108 = vunpack.c.l.bf16 %v44
  %v109 = vunpack.c.l.bf16 %v45
  %v110 = vunpack.c.l.bf16 %v46
  %v111 = vunpack.c.l.bf16 %v47
  %v112 = vunpack.c.l.bf16 %v48
  %v113 = vunpack.c.l.bf16 %v49
  %v114 = vunpack.c.l.bf16 %v50
  %v115 = vunpack.c.l.bf16 %v51
  %v116 = vunpack.c.l.bf16 %v52
  %v117 = vunpack.c.l.bf16 %v53
  %v118 = vunpack.c.l.bf16 %v54
  %v119 = vunpack.c.l.bf16 %v55
  %v120 = vunpack.c.l.bf16 %v56
  %v121 = vunpack.c.l.bf16 %v57
  %v122 = vunpack.c.l.bf16 %v58
  %v123 = vunpack.c.l.bf16 %v59
  %v124 = vunpack.c.l.bf16 %v60
  %v125 = vunpack.c.l.bf16 %v61
  %v126 = vunpack.c.l.bf16 %v62
  %v127 = vunpack.c.l.bf16 %v63
  %v128 = vunpack.c.l.bf16 %v64
  %v129 = vunpack.c.l.bf16 %v65
  %v130 = vunpack.c.l.bf16 %v66
  %v131 = vunpack.c.l.bf16 %v67
  %v132 = vunpack.c.l.bf16 %v68
  %v133 = vunpack.c.l.bf16 %v69
  %v134 = vunpack.c.l.bf16 %v70
  %v135 = vunpack.c.l.bf16 %v71
  %v136 = vunpack.c.l.bf16 %v72
  %v137 = vunpack.c.l.bf16 %v73
  %v138 = vunpack.c.l.bf16 %v74
  %v139 = vunpack.c.l.bf16 %v75
  %v140 = vunpack.c.l.bf16 %v76
  %v141 = vunpack.c.l.bf16 %v77
  %v142 = vunpack.c.l.bf16 %v78
  %v143 = vunpack.c.l.bf16 %v79
  %v144 = vunpack.c.l.bf16 %v80
  %v145 = vunpack.c.l.bf16 %v81
  %v146 = vunpack.c.l.bf16 %v82
  %v147 = vunpack.c.l.bf16 %v83
  %v148 = vunpack.c.l.bf16 %v84
  %v149 = vld [vmem:[%s2] sm:$0x1]
  %v151 = vlaneseq
  %v152 = vshrl.u32 %v151, 7
  %v153 = vsub.s32 0, %v152
  %v154 = vrot.slane %v149, %v153
  %v156 = vmul.f32 %v85, %v154
  %v157 = vmul.f32 %v86, %v154
  %v158 = vmul.f32 %v87, %v154
  %v159 = vmul.f32 %v88, %v154
  %v160 = vmul.f32 %v89, %v154
  %v161 = vmul.f32 %v90, %v154
  %v162 = vmul.f32 %v91, %v154
  %v163 = vmul.f32 %v92, %v154
  %v164 = vmul.f32 %v93, %v154
  %v165 = vmul.f32 %v94, %v154
  %v166 = vmul.f32 %v95, %v154
  %v167 = vmul.f32 %v96, %v154
  %v168 = vmul.f32 %v97, %v154
  %v169 = vmul.f32 %v98, %v154
  %v170 = vmul.f32 %v99, %v154
  %v171 = vmul.f32 %v100, %v154
  %v172 = vmul.f32 %v101, %v154
  %v173 = vmul.f32 %v102, %v154
  %v174 = vmul.f32 %v103, %v154
  %v175 = vmul.f32 %v104, %v154
  %v176 = vmul.f32 %v105, %v154
  %v177 = vmul.f32 %v106, %v154
  %v178 = vmul.f32 %v107, %v154
  %v179 = vmul.f32 %v108, %v154
  %v180 = vmul.f32 %v109, %v154
  %v181 = vmul.f32 %v110, %v154
  %v182 = vmul.f32 %v111, %v154
  %v183 = vmul.f32 %v112, %v154
  %v184 = vmul.f32 %v113, %v154
  %v185 = vmul.f32 %v114, %v154
  %v186 = vmul.f32 %v115, %v154
  %v187 = vmul.f32 %v116, %v154
  %v188 = vmul.f32 %v117, %v154
  %v189 = vmul.f32 %v118, %v154
  %v190 = vmul.f32 %v119, %v154
  %v191 = vmul.f32 %v120, %v154
  %v192 = vmul.f32 %v121, %v154
  %v193 = vmul.f32 %v122, %v154
  %v194 = vmul.f32 %v123, %v154
  %v195 = vmul.f32 %v124, %v154
  %v196 = vmul.f32 %v125, %v154
  %v197 = vmul.f32 %v126, %v154
  %v198 = vmul.f32 %v127, %v154
  %v199 = vmul.f32 %v128, %v154
  %v200 = vmul.f32 %v129, %v154
  %v201 = vmul.f32 %v130, %v154
  %v202 = vmul.f32 %v131, %v154
  %v203 = vmul.f32 %v132, %v154
  %v204 = vmul.f32 %v133, %v154
  %v205 = vmul.f32 %v134, %v154
  %v206 = vmul.f32 %v135, %v154
  %v207 = vmul.f32 %v136, %v154
  %v208 = vmul.f32 %v137, %v154
  %v209 = vmul.f32 %v138, %v154
  %v210 = vmul.f32 %v139, %v154
  %v211 = vmul.f32 %v140, %v154
  %v212 = vmul.f32 %v141, %v154
  %v213 = vmul.f32 %v142, %v154
  %v214 = vmul.f32 %v143, %v154
  %v215 = vmul.f32 %v144, %v154
  %v216 = vmul.f32 %v145, %v154
  %v217 = vmul.f32 %v146, %v154
  %v218 = vmul.f32 %v147, %v154
  %v219 = vmul.f32 %v148, %v154
  %v220 = vld [vmem:[%s3] sm:$0x1]
  %v222 = vlaneseq
  %v223 = vshrl.u32 %v222, 7
  %v224 = vsub.s32 0, %v223
  %v225 = vrot.slane %v220, %v224
  %v227 = vadd.f32 %v156, %v225
  %v228 = vadd.f32 %v157, %v225
  %v229 = vadd.f32 %v158, %v225
  %v230 = vadd.f32 %v159, %v225
  %v231 = vadd.f32 %v160, %v225
  %v232 = vadd.f32 %v161, %v225
  %v233 = vadd.f32 %v162, %v225
  %v234 = vadd.f32 %v163, %v225
  %v235 = vadd.f32 %v164, %v225
  %v236 = vadd.f32 %v165, %v225
  %v237 = vadd.f32 %v166, %v225
  %v238 = vadd.f32 %v167, %v225
  %v239 = vadd.f32 %v168, %v225
  %v240 = vadd.f32 %v169, %v225
  %v241 = vadd.f32 %v170, %v225
  %v242 = vadd.f32 %v171, %v225
  %v243 = vadd.f32 %v172, %v225
  %v244 = vadd.f32 %v173, %v225
  %v245 = vadd.f32 %v174, %v225
  %v246 = vadd.f32 %v175, %v225
  %v247 = vadd.f32 %v176, %v225
  %v248 = vadd.f32 %v177, %v225
  %v249 = vadd.f32 %v178, %v225
  %v250 = vadd.f32 %v179, %v225
  %v251 = vadd.f32 %v180, %v225
  %v252 = vadd.f32 %v181, %v225
  %v253 = vadd.f32 %v182, %v225
  %v254 = vadd.f32 %v183, %v225
  %v255 = vadd.f32 %v184, %v225
  %v256 = vadd.f32 %v185, %v225
  %v257 = vadd.f32 %v186, %v225
  %v258 = vadd.f32 %v187, %v225
  %v259 = vadd.f32 %v188, %v225
  %v260 = vadd.f32 %v189, %v225
  %v261 = vadd.f32 %v190, %v225
  %v262 = vadd.f32 %v191, %v225
  %v263 = vadd.f32 %v192, %v225
  %v264 = vadd.f32 %v193, %v225
  %v265 = vadd.f32 %v194, %v225
  %v266 = vadd.f32 %v195, %v225
  %v267 = vadd.f32 %v196, %v225
  %v268 = vadd.f32 %v197, %v225
  %v269 = vadd.f32 %v198, %v225
  %v270 = vadd.f32 %v199, %v225
  %v271 = vadd.f32 %v200, %v225
  %v272 = vadd.f32 %v201, %v225
  %v273 = vadd.f32 %v202, %v225
  %v274 = vadd.f32 %v203, %v225
  %v275 = vadd.f32 %v204, %v225
  %v276 = vadd.f32 %v205, %v225
  %v277 = vadd.f32 %v206, %v225
  %v278 = vadd.f32 %v207, %v225
  %v279 = vadd.f32 %v208, %v225
  %v280 = vadd.f32 %v209, %v225
  %v281 = vadd.f32 %v210, %v225
  %v282 = vadd.f32 %v211, %v225
  %v283 = vadd.f32 %v212, %v225
  %v284 = vadd.f32 %v213, %v225
  %v285 = vadd.f32 %v214, %v225
  %v286 = vadd.f32 %v215, %v225
  %v287 = vadd.f32 %v216, %v225
  %v288 = vadd.f32 %v217, %v225
  %v289 = vadd.f32 %v218, %v225
  %v290 = vadd.f32 %v219, %v225
  %v291 = vld [vmem:[%s1] sm:$0xf]
  %v292 = vld [vmem:[%s1 + $0x4] sm:$0xf]
  %v293 = vld [vmem:[%s1 + $0x8] sm:$0xf]
  %v294 = vld [vmem:[%s1 + $0xc] sm:$0xf]
  %v295 = vld [vmem:[%s1 + $0x10] sm:$0xf]
  %v296 = vld [vmem:[%s1 + $0x14] sm:$0xf]
  %v297 = vld [vmem:[%s1 + $0x18] sm:$0xf]
  %v298 = vld [vmem:[%s1 + $0x1c] sm:$0xf]
  %v299 = vld [vmem:[%s1 + $0x20] sm:$0xf]
  %v300 = vld [vmem:[%s1 + $0x24] sm:$0xf]
  %v301 = vld [vmem:[%s1 + $0x28] sm:$0xf]
  %v302 = vld [vmem:[%s1 + $0x2c] sm:$0xf]
  %v303 = vld [vmem:[%s1 + $0x30] sm:$0xf]
  %v304 = vld [vmem:[%s1 + $0x34] sm:$0xf]
  %v305 = vld [vmem:[%s1 + $0x38] sm:$0xf]
  %v306 = vld [vmem:[%s1 + $0x3c] sm:$0xf]
  %v307 = vld [vmem:[%s1 + $0x40] sm:$0xf]
  %v308 = vld [vmem:[%s1 + $0x44] sm:$0xf]
  %v309 = vld [vmem:[%s1 + $0x48] sm:$0xf]
  %v310 = vld [vmem:[%s1 + $0x4c] sm:$0xf]
  %v311 = vld [vmem:[%s1 + $0x50] sm:$0xf]
  %v312 = vld [vmem:[%s1 + $0x54] sm:$0xf]
  %v313 = vld [vmem:[%s1 + $0x58] sm:$0xf]
  %v314 = vld [vmem:[%s1 + $0x5c] sm:$0xf]
  %v315 = vld [vmem:[%s1 + $0x60] sm:$0xf]
  %v316 = vld [vmem:[%s1 + $0x64] sm:$0xf]
  %v317 = vld [vmem:[%s1 + $0x68] sm:$0xf]
  %v318 = vld [vmem:[%s1 + $0x6c] sm:$0xf]
  %v319 = vld [vmem:[%s1 + $0x70] sm:$0xf]
  %v320 = vld [vmem:[%s1 + $0x74] sm:$0xf]
  %v321 = vld [vmem:[%s1 + $0x78] sm:$0xf]
  %v322 = vld [vmem:[%s1 + $0x7c] sm:$0xf]
  %v323 = vld [vmem:[%s1 + $0x80] sm:$0xf]
  %v324 = vld [vmem:[%s1 + $0x84] sm:$0xf]
  %v325 = vld [vmem:[%s1 + $0x88] sm:$0xf]
  %v326 = vld [vmem:[%s1 + $0x8c] sm:$0xf]
  %v327 = vld [vmem:[%s1 + $0x90] sm:$0xf]
  %v328 = vld [vmem:[%s1 + $0x94] sm:$0xf]
  %v329 = vld [vmem:[%s1 + $0x98] sm:$0xf]
  %v330 = vld [vmem:[%s1 + $0x9c] sm:$0xf]
  %v331 = vld [vmem:[%s1 + $0xa0] sm:$0xf]
  %v332 = vld [vmem:[%s1 + $0xa4] sm:$0xf]
  %v333 = vld [vmem:[%s1 + $0xa8] sm:$0xf]
  %v334 = vld [vmem:[%s1 + $0xac] sm:$0xf]
  %v335 = vld [vmem:[%s1 + $0xb0] sm:$0xf]
  %v336 = vld [vmem:[%s1 + $0xb4] sm:$0xf]
  %v337 = vld [vmem:[%s1 + $0xb8] sm:$0xf]
  %v338 = vld [vmem:[%s1 + $0xbc] sm:$0xf]
  %v339 = vld [vmem:[%s1 + $0xc0] sm:$0xf]
  %v340 = vld [vmem:[%s1 + $0xc4] sm:$0xf]
  %v341 = vld [vmem:[%s1 + $0xc8] sm:$0xf]
  %v342 = vld [vmem:[%s1 + $0xcc] sm:$0xf]
  %v343 = vld [vmem:[%s1 + $0xd0] sm:$0xf]
  %v344 = vld [vmem:[%s1 + $0xd4] sm:$0xf]
  %v345 = vld [vmem:[%s1 + $0xd8] sm:$0xf]
  %v346 = vld [vmem:[%s1 + $0xdc] sm:$0xf]
  %v347 = vld [vmem:[%s1 + $0xe0] sm:$0xf]
  %v348 = vld [vmem:[%s1 + $0xe4] sm:$0xf]
  %v349 = vld [vmem:[%s1 + $0xe8] sm:$0xf]
  %v350 = vld [vmem:[%s1 + $0xec] sm:$0xf]
  %v351 = vld [vmem:[%s1 + $0xf0] sm:$0xf]
  %v352 = vld [vmem:[%s1 + $0xf4] sm:$0xf]
  %v353 = vld [vmem:[%s1 + $0xf8] sm:$0xf]
  %v354 = vld [vmem:[%s1 + $0xfc] sm:$0xf]
  %v355 = vunpack.c.l.bf16 %v291
  %v356 = vunpack.c.l.bf16 %v292
  %v357 = vunpack.c.l.bf16 %v293
  %v358 = vunpack.c.l.bf16 %v294
  %v359 = vunpack.c.l.bf16 %v295
  %v360 = vunpack.c.l.bf16 %v296
  %v361 = vunpack.c.l.bf16 %v297
  %v362 = vunpack.c.l.bf16 %v298
  %v363 = vunpack.c.l.bf16 %v299
  %v364 = vunpack.c.l.bf16 %v300
  %v365 = vunpack.c.l.bf16 %v301
  %v366 = vunpack.c.l.bf16 %v302
  %v367 = vunpack.c.l.bf16 %v303
  %v368 = vunpack.c.l.bf16 %v304
  %v369 = vunpack.c.l.bf16 %v305
  %v370 = vunpack.c.l.bf16 %v306
  %v371 = vunpack.c.l.bf16 %v307
  %v372 = vunpack.c.l.bf16 %v308
  %v373 = vunpack.c.l.bf16 %v309
  %v374 = vunpack.c.l.bf16 %v310
  %v375 = vunpack.c.l.bf16 %v311
  %v376 = vunpack.c.l.bf16 %v312
  %v377 = vunpack.c.l.bf16 %v313
  %v378 = vunpack.c.l.bf16 %v314
  %v379 = vunpack.c.l.bf16 %v315
  %v380 = vunpack.c.l.bf16 %v316
  %v381 = vunpack.c.l.bf16 %v317
  %v382 = vunpack.c.l.bf16 %v318
  %v383 = vunpack.c.l.bf16 %v319
  %v384 = vunpack.c.l.bf16 %v320
  %v385 = vunpack.c.l.bf16 %v321
  %v386 = vunpack.c.l.bf16 %v322
  %v387 = vunpack.c.l.bf16 %v323
  %v388 = vunpack.c.l.bf16 %v324
  %v389 = vunpack.c.l.bf16 %v325
  %v390 = vunpack.c.l.bf16 %v326
  %v391 = vunpack.c.l.bf16 %v327
  %v392 = vunpack.c.l.bf16 %v328
  %v393 = vunpack.c.l.bf16 %v329
  %v394 = vunpack.c.l.bf16 %v330
  %v395 = vunpack.c.l.bf16 %v331
  %v396 = vunpack.c.l.bf16 %v332
  %v397 = vunpack.c.l.bf16 %v333
  %v398 = vunpack.c.l.bf16 %v334
  %v399 = vunpack.c.l.bf16 %v335
  %v400 = vunpack.c.l.bf16 %v336
  %v401 = vunpack.c.l.bf16 %v337
  %v402 = vunpack.c.l.bf16 %v338
  %v403 = vunpack.c.l.bf16 %v339
  %v404 = vunpack.c.l.bf16 %v340
  %v405 = vunpack.c.l.bf16 %v341
  %v406 = vunpack.c.l.bf16 %v342
  %v407 = vunpack.c.l.bf16 %v343
  %v408 = vunpack.c.l.bf16 %v344
  %v409 = vunpack.c.l.bf16 %v345
  %v410 = vunpack.c.l.bf16 %v346
  %v411 = vunpack.c.l.bf16 %v347
  %v412 = vunpack.c.l.bf16 %v348
  %v413 = vunpack.c.l.bf16 %v349
  %v414 = vunpack.c.l.bf16 %v350
  %v415 = vunpack.c.l.bf16 %v351
  %v416 = vunpack.c.l.bf16 %v352
  %v417 = vunpack.c.l.bf16 %v353
  %v418 = vunpack.c.l.bf16 %v354
  %v419 = vadd.f32 %v227, %v355
  %v420 = vadd.f32 %v228, %v356
  %v421 = vadd.f32 %v229, %v357
  %v422 = vadd.f32 %v230, %v358
  %v423 = vadd.f32 %v231, %v359
  %v424 = vadd.f32 %v232, %v360
  %v425 = vadd.f32 %v233, %v361
  %v426 = vadd.f32 %v234, %v362
  %v427 = vadd.f32 %v235, %v363
  %v428 = vadd.f32 %v236, %v364
  %v429 = vadd.f32 %v237, %v365
  %v430 = vadd.f32 %v238, %v366
  %v431 = vadd.f32 %v239, %v367
  %v432 = vadd.f32 %v240, %v368
  %v433 = vadd.f32 %v241, %v369
  %v434 = vadd.f32 %v242, %v370
  %v435 = vadd.f32 %v243, %v371
  %v436 = vadd.f32 %v244, %v372
  %v437 = vadd.f32 %v245, %v373
  %v438 = vadd.f32 %v246, %v374
  %v439 = vadd.f32 %v247, %v375
  %v440 = vadd.f32 %v248, %v376
  %v441 = vadd.f32 %v249, %v377
  %v442 = vadd.f32 %v250, %v378
  %v443 = vadd.f32 %v251, %v379
  %v444 = vadd.f32 %v252, %v380
  %v445 = vadd.f32 %v253, %v381
  %v446 = vadd.f32 %v254, %v382
  %v447 = vadd.f32 %v255, %v383
  %v448 = vadd.f32 %v256, %v384
  %v449 = vadd.f32 %v257, %v385
  %v450 = vadd.f32 %v258, %v386
  %v451 = vadd.f32 %v259, %v387
  %v452 = vadd.f32 %v260, %v388
  %v453 = vadd.f32 %v261, %v389
  %v454 = vadd.f32 %v262, %v390
  %v455 = vadd.f32 %v263, %v391
  %v456 = vadd.f32 %v264, %v392
  %v457 = vadd.f32 %v265, %v393
  %v458 = vadd.f32 %v266, %v394
  %v459 = vadd.f32 %v267, %v395
  %v460 = vadd.f32 %v268, %v396
  %v461 = vadd.f32 %v269, %v397
  %v462 = vadd.f32 %v270, %v398
  %v463 = vadd.f32 %v271, %v399
  %v464 = vadd.f32 %v272, %v400
  %v465 = vadd.f32 %v273, %v401
  %v466 = vadd.f32 %v274, %v402
  %v467 = vadd.f32 %v275, %v403
  %v468 = vadd.f32 %v276, %v404
  %v469 = vadd.f32 %v277, %v405
  %v470 = vadd.f32 %v278, %v406
  %v471 = vadd.f32 %v279, %v407
  %v472 = vadd.f32 %v280, %v408
  %v473 = vadd.f32 %v281, %v409
  %v474 = vadd.f32 %v282, %v410
  %v475 = vadd.f32 %v283, %v411
  %v476 = vadd.f32 %v284, %v412
  %v477 = vadd.f32 %v285, %v413
  %v478 = vadd.f32 %v286, %v414
  %v479 = vadd.f32 %v287, %v415
  %v480 = vadd.f32 %v288, %v416
  %v481 = vadd.f32 %v289, %v417
  %v482 = vadd.f32 %v290, %v418
  %v483 = vpack.c.bf16 %v420, %v419
  %v484 = vpack.c.bf16 %v422, %v421
  %v485 = vpack.c.bf16 %v424, %v423
  %v486 = vpack.c.bf16 %v426, %v425
  %v487 = vpack.c.bf16 %v428, %v427
  %v488 = vpack.c.bf16 %v430, %v429
  %v489 = vpack.c.bf16 %v432, %v431
  %v490 = vpack.c.bf16 %v434, %v433
  %v491 = vpack.c.bf16 %v436, %v435
  %v492 = vpack.c.bf16 %v438, %v437
  %v493 = vpack.c.bf16 %v440, %v439
  %v494 = vpack.c.bf16 %v442, %v441
  %v495 = vpack.c.bf16 %v444, %v443
  %v496 = vpack.c.bf16 %v446, %v445
  %v497 = vpack.c.bf16 %v448, %v447
  %v498 = vpack.c.bf16 %v450, %v449
  %v499 = vpack.c.bf16 %v452, %v451
  %v500 = vpack.c.bf16 %v454, %v453
  %v501 = vpack.c.bf16 %v456, %v455
  %v502 = vpack.c.bf16 %v458, %v457
  %v503 = vpack.c.bf16 %v460, %v459
  %v504 = vpack.c.bf16 %v462, %v461
  %v505 = vpack.c.bf16 %v464, %v463
  %v506 = vpack.c.bf16 %v466, %v465
  %v507 = vpack.c.bf16 %v468, %v467
  %v508 = vpack.c.bf16 %v470, %v469
  %v509 = vpack.c.bf16 %v472, %v471
  %v510 = vpack.c.bf16 %v474, %v473
  %v511 = vpack.c.bf16 %v476, %v475
  %v512 = vpack.c.bf16 %v478, %v477
  %v513 = vpack.c.bf16 %v480, %v479
  %v514 = vpack.c.bf16 %v482, %v481
  %v515 = vld [vmem:[%s4] sm:$0xf]
  %v516 = vld [vmem:[%s4 + $0x4] sm:$0xf]
  %v517 = vld [vmem:[%s4 + $0x8] sm:$0xf]
  %v518 = vld [vmem:[%s4 + $0xc] sm:$0xf]
  %v519 = vld [vmem:[%s4 + $0x10] sm:$0xf]
  %v520 = vld [vmem:[%s4 + $0x14] sm:$0xf]
  %v521 = vld [vmem:[%s4 + $0x18] sm:$0xf]
  %v522 = vld [vmem:[%s4 + $0x1c] sm:$0xf]
  %v523 = vld [vmem:[%s4 + $0x20] sm:$0xf]
  %v524 = vld [vmem:[%s4 + $0x24] sm:$0xf]
  %v525 = vld [vmem:[%s4 + $0x28] sm:$0xf]
  %v526 = vld [vmem:[%s4 + $0x2c] sm:$0xf]
  %v527 = vld [vmem:[%s4 + $0x30] sm:$0xf]
  %v528 = vld [vmem:[%s4 + $0x34] sm:$0xf]
  %v529 = vld [vmem:[%s4 + $0x38] sm:$0xf]
  %v530 = vld [vmem:[%s4 + $0x3c] sm:$0xf]
  %v547 = vunpack.c.l.b16 %v515
  %v548 = vunpack.c.l.b16 %v516
  %v549 = vunpack.c.l.b16 %v517
  %v550 = vunpack.c.l.b16 %v518
  %v551 = vunpack.c.l.b16 %v519
  %v552 = vunpack.c.l.b16 %v520
  %v553 = vunpack.c.l.b16 %v521
  %v554 = vunpack.c.l.b16 %v522
  %v555 = vunpack.c.l.b16 %v523
  %v556 = vunpack.c.l.b16 %v524
  %v557 = vunpack.c.l.b16 %v525
  %v558 = vunpack.c.l.b16 %v526
  %v559 = vunpack.c.l.b16 %v527
  %v560 = vunpack.c.l.b16 %v528
  %v561 = vunpack.c.l.b16 %v529
  %v562 = vunpack.c.l.b16 %v530
  %v563 = vpack.c.b16 %v548, %v547
  %v564 = vpack.c.b16 %v550, %v549
  %v565 = vpack.c.b16 %v552, %v551
  %v566 = vpack.c.b16 %v554, %v553
  %v567 = vpack.c.b16 %v556, %v555
  %v568 = vpack.c.b16 %v558, %v557
  %v569 = vpack.c.b16 %v560, %v559
  %v570 = vpack.c.b16 %v562, %v561
  %579 = vmatprep.subr.bf16.mxu0 0
  %580 = vmatpush1.bf16.msra.mxu0 %v563
  %581 = vmatprep.subr.bf16.mxu0 0
  %582 = vmatpush1.bf16.msra.mxu0 %v564
  %583 = vmatprep.subr.bf16.mxu0 0
  %584 = vmatpush1.bf16.msra.mxu0 %v565
  %585 = vmatprep.subr.bf16.mxu0 0
  %586 = vmatpush1.bf16.msra.mxu0 %v566
  %587 = vmatprep.subr.bf16.mxu0 0
  %588 = vmatpush1.bf16.msra.mxu0 %v567
  %589 = vmatprep.subr.bf16.mxu0 0
  %590 = vmatpush1.bf16.msra.mxu0 %v568
  %591 = vmatprep.subr.bf16.mxu0 0
  %592 = vmatpush1.bf16.msra.mxu0 %v569
  %593 = vmatprep.subr.bf16.mxu0 0
  %594 = vmatpush1.bf16.msra.mxu0 %v570
  %595 = vmatprep.subr.bf16.mxu0 0
  %596 = vmatpush1.bf16.msra.mxu0 0
  %597 = vmatprep.subr.bf16.mxu0 0
  %598 = vmatpush1.bf16.msra.mxu0 0
  %599 = vmatprep.subr.bf16.mxu0 0
  %600 = vmatpush1.bf16.msra.mxu0 0
  %601 = vmatprep.subr.bf16.mxu0 0
  %602 = vmatpush1.bf16.msra.mxu0 0
  %603 = vmatprep.subr.bf16.mxu0 0
  %604 = vmatpush1.bf16.msra.mxu0 0
  %605 = vmatprep.subr.bf16.mxu0 0
  %606 = vmatpush1.bf16.msra.mxu0 0
  %607 = vmatprep.subr.bf16.mxu0 0
  %608 = vmatpush1.bf16.msra.mxu0 0
  %609 = vmatprep.subr.bf16.mxu0 0
  %610 = vmatpush1.bf16.msra.mxu0 0
  %611 = vmatprep.mubr.bf16.mxu0 0
  %612 = vmatmul.mubr.bf16.gmra.mrb[0].mxu0 %v483
  %v613 = vpop.f32.mrb[0].mxu0
  %v614 = vadd.f32 0.0, %v613
  %v615 = vpop.f32.mrb[0].mxu0
  %v616 = vpop.f32.mrb[0].mxu0
  %v617 = vadd.f32 0.0, %v616
  %v618 = vpop.f32.mrb[0].mxu0
  %619 = vmatprep.mubr.bf16.mxu0 0
  %620 = vmatmul.mubr.bf16.gmra.mrb[0].mxu0 %v484
  %v621 = vpop.f32.mrb[0].mxu0
  %v622 = vadd.f32 0.0, %v621
  %v623 = vpop.f32.mrb[0].mxu0
  %v624 = vpop.f32.mrb[0].mxu0
  %v625 = vadd.f32 0.0, %v624
  %v626 = vpop.f32.mrb[0].mxu0
  %627 = vmatprep.mubr.bf16.mxu0 0
  %628 = vmatmul.mubr.bf16.gmra.mrb[0].mxu0 %v485
  %v629 = vpop.f32.mrb[0].mxu0
  %v630 = vadd.f32 0.0, %v629
  %v631 = vpop.f32.mrb[0].mxu0
  %v632 = vpop.f32.mrb[0].mxu0
  %v633 = vadd.f32 0.0, %v632
  %v634 = vpop.f32.mrb[0].mxu0
  %635 = vmatprep.mubr.bf16.mxu0 0
  %636 = vmatmul.mubr.bf16.gmra.mrb[0].mxu0 %v486
  %v637 = vpop.f32.mrb[0].mxu0
  %v638 = vadd.f32 0.0, %v637
  %v639 = vpop.f32.mrb[0].mxu0
  %v640 = vpop.f32.mrb[0].mxu0
  %v641 = vadd.f32 0.0, %v640
  %v642 = vpop.f32.mrb[0].mxu0
  %643 = vmatprep.mubr.bf16.mxu0 0
  %644 = vmatmul.mubr.bf16.gmra.mrb[0].mxu0 %v487
  %v645 = vpop.f32.mrb[0].mxu0
  %v646 = vadd.f32 0.0, %v645
  %v647 = vpop.f32.mrb[0].mxu0
  %v648 = vpop.f32.mrb[0].mxu0
  %v649 = vadd.f32 0.0, %v648
  %v650 = vpop.f32.mrb[0].mxu0
  %651 = vmatprep.mubr.bf16.mxu0 0
  %652 = vmatmul.mubr.bf16.gmra.mrb[0].mxu0 %v488
  %v653 = vpop.f32.mrb[0].mxu0
  %v654 = vadd.f32 0.0, %v653
  %v655 = vpop.f32.mrb[0].mxu0
  %v656 = vpop.f32.mrb[0].mxu0
  %v657 = vadd.f32 0.0, %v656
  %v658 = vpop.f32.mrb[0].mxu0
  %659 = vmatprep.mubr.bf16.mxu0 0
  %660 = vmatmul.mubr.bf16.gmra.mrb[0].mxu0 %v489
  %v661 = vpop.f32.mrb[0].mxu0
  %v662 = vadd.f32 0.0, %v661
  %v663 = vpop.f32.mrb[0].mxu0
  %v664 = vpop.f32.mrb[0].mxu0
  %v665 = vadd.f32 0.0, %v664
  %v666 = vpop.f32.mrb[0].mxu0
  %667 = vmatprep.mubr.bf16.mxu0 0
  %668 = vmatmul.mubr.bf16.gmra.mrb[0].mxu0 %v490
  %v669 = vpop.f32.mrb[0].mxu0
  %v670 = vadd.f32 0.0, %v669
  %v671 = vpop.f32.mrb[0].mxu0
  %v672 = vpop.f32.mrb[0].mxu0
  %v673 = vadd.f32 0.0, %v672
  %v674 = vpop.f32.mrb[0].mxu0
  %675 = vmatprep.mubr.bf16.mxu0 0
  %676 = vmatmul.mubr.bf16.gmra.mrb[0].mxu0 %v491
  %v677 = vpop.f32.mrb[0].mxu0
  %v678 = vadd.f32 0.0, %v677
  %v679 = vpop.f32.mrb[0].mxu0
  %v680 = vpop.f32.mrb[0].mxu0
  %v681 = vadd.f32 0.0, %v680
  %v682 = vpop.f32.mrb[0].mxu0
  %683 = vmatprep.mubr.bf16.mxu0 0
  %684 = vmatmul.mubr.bf16.gmra.mrb[0].mxu0 %v492
  %v685 = vpop.f32.mrb[0].mxu0
  %v686 = vadd.f32 0.0, %v685
  %v687 = vpop.f32.mrb[0].mxu0
  %v688 = vpop.f32.mrb[0].mxu0
  %v689 = vadd.f32 0.0, %v688
  %v690 = vpop.f32.mrb[0].mxu0
  %691 = vmatprep.mubr.bf16.mxu0 0
  %692 = vmatmul.mubr.bf16.gmra.mrb[0].mxu0 %v493
  %v693 = vpop.f32.mrb[0].mxu0
  %v694 = vadd.f32 0.0, %v693
  %v695 = vpop.f32.mrb[0].mxu0
  %v696 = vpop.f32.mrb[0].mxu0
  %v697 = vadd.f32 0.0, %v696
  %v698 = vpop.f32.mrb[0].mxu0
  %699 = vmatprep.mubr.bf16.mxu0 0
  %700 = vmatmul.mubr.bf16.gmra.mrb[0].mxu0 %v494
  %v701 = vpop.f32.mrb[0].mxu0
  %v702 = vadd.f32 0.0, %v701
  %v703 = vpop.f32.mrb[0].mxu0
  %v704 = vpop.f32.mrb[0].mxu0
  %v705 = vadd.f32 0.0, %v704
  %v706 = vpop.f32.mrb[0].mxu0
  %707 = vmatprep.mubr.bf16.mxu0 0
  %708 = vmatmul.mubr.bf16.gmra.mrb[0].mxu0 %v495
  %v709 = vpop.f32.mrb[0].mxu0
  %v710 = vadd.f32 0.0, %v709
  %v711 = vpop.f32.mrb[0].mxu0
  %v712 = vpop.f32.mrb[0].mxu0
  %v713 = vadd.f32 0.0, %v712
  %v714 = vpop.f32.mrb[0].mxu0
  %715 = vmatprep.mubr.bf16.mxu0 0
  %716 = vmatmul.mubr.bf16.gmra.mrb[0].mxu0 %v496
  %v717 = vpop.f32.mrb[0].mxu0
  %v718 = vadd.f32 0.0, %v717
  %v719 = vpop.f32.mrb[0].mxu0
  %v720 = vpop.f32.mrb[0].mxu0
  %v721 = vadd.f32 0.0, %v720
  %v722 = vpop.f32.mrb[0].mxu0
  %723 = vmatprep.mubr.bf16.mxu0 0
  %724 = vmatmul.mubr.bf16.gmra.mrb[0].mxu0 %v497
  %v725 = vpop.f32.mrb[0].mxu0
  %v726 = vadd.f32 0.0, %v725
  %v727 = vpop.f32.mrb[0].mxu0
  %v728 = vpop.f32.mrb[0].mxu0
  %v729 = vadd.f32 0.0, %v728
  %v730 = vpop.f32.mrb[0].mxu0
  %731 = vmatprep.mubr.bf16.mxu0 0
  %732 = vmatmul.mubr.bf16.gmra.mrb[0].mxu0 %v498
  %v733 = vpop.f32.mrb[0].mxu0
  %v734 = vadd.f32 0.0, %v733
  %v735 = vpop.f32.mrb[0].mxu0
  %v736 = vpop.f32.mrb[0].mxu0
  %v737 = vadd.f32 0.0, %v736
  %v738 = vpop.f32.mrb[0].mxu0
  %739 = vmatprep.mubr.bf16.mxu0 0
  %740 = vmatmul.mubr.bf16.gmra.mrb[0].mxu0 %v499
  %v741 = vpop.f32.mrb[0].mxu0
  %v742 = vadd.f32 0.0, %v741
  %v743 = vpop.f32.mrb[0].mxu0
  %v744 = vpop.f32.mrb[0].mxu0
  %v745 = vadd.f32 0.0, %v744
  %v746 = vpop.f32.mrb[0].mxu0
  %747 = vmatprep.mubr.bf16.mxu0 0
  %748 = vmatmul.mubr.bf16.gmra.mrb[0].mxu0 %v500
  %v749 = vpop.f32.mrb[0].mxu0
  %v750 = vadd.f32 0.0, %v749
  %v751 = vpop.f32.mrb[0].mxu0
  %v752 = vpop.f32.mrb[0].mxu0
  %v753 = vadd.f32 0.0, %v752
  %v754 = vpop.f32.mrb[0].mxu0
  %755 = vmatprep.mubr.bf16.mxu0 0
  %756 = vmatmul.mubr.bf16.gmra.mrb[0].mxu0 %v501
  %v757 = vpop.f32.mrb[0].mxu0
  %v758 = vadd.f32 0.0, %v757
  %v759 = vpop.f32.mrb[0].mxu0
  %v760 = vpop.f32.mrb[0].mxu0
  %v761 = vadd.f32 0.0, %v760
  %v762 = vpop.f32.mrb[0].mxu0
  %763 = vmatprep.mubr.bf16.mxu0 0
  %764 = vmatmul.mubr.bf16.gmra.mrb[0].mxu0 %v502
  %v765 = vpop.f32.mrb[0].mxu0
  %v766 = vadd.f32 0.0, %v765
  %v767 = vpop.f32.mrb[0].mxu0
  %v768 = vpop.f32.mrb[0].mxu0
  %v769 = vadd.f32 0.0, %v768
  %v770 = vpop.f32.mrb[0].mxu0
  %771 = vmatprep.mubr.bf16.mxu0 0
  %772 = vmatmul.mubr.bf16.gmra.mrb[0].mxu0 %v503
  %v773 = vpop.f32.mrb[0].mxu0
  %v774 = vadd.f32 0.0, %v773
  %v775 = vpop.f32.mrb[0].mxu0
  %v776 = vpop.f32.mrb[0].mxu0
  %v777 = vadd.f32 0.0, %v776
  %v778 = vpop.f32.mrb[0].mxu0
  %779 = vmatprep.mubr.bf16.mxu0 0
  %780 = vmatmul.mubr.bf16.gmra.mrb[0].mxu0 %v504
  %v781 = vpop.f32.mrb[0].mxu0
  %v782 = vadd.f32 0.0, %v781
  %v783 = vpop.f32.mrb[0].mxu0
  %v784 = vpop.f32.mrb[0].mxu0
  %v785 = vadd.f32 0.0, %v784
  %v786 = vpop.f32.mrb[0].mxu0
  %787 = vmatprep.mubr.bf16.mxu0 0
  %788 = vmatmul.mubr.bf16.gmra.mrb[0].mxu0 %v505
  %v789 = vpop.f32.mrb[0].mxu0
  %v790 = vadd.f32 0.0, %v789
  %v791 = vpop.f32.mrb[0].mxu0
  %v792 = vpop.f32.mrb[0].mxu0
  %v793 = vadd.f32 0.0, %v792
  %v794 = vpop.f32.mrb[0].mxu0
  %795 = vmatprep.mubr.bf16.mxu0 0
  %796 = vmatmul.mubr.bf16.gmra.mrb[0].mxu0 %v506
  %v797 = vpop.f32.mrb[0].mxu0
  %v798 = vadd.f32 0.0, %v797
  %v799 = vpop.f32.mrb[0].mxu0
  %v800 = vpop.f32.mrb[0].mxu0
  %v801 = vadd.f32 0.0, %v800
  %v802 = vpop.f32.mrb[0].mxu0
  %803 = vmatprep.mubr.bf16.mxu0 0
  %804 = vmatmul.mubr.bf16.gmra.mrb[0].mxu0 %v507
  %v805 = vpop.f32.mrb[0].mxu0
  %v806 = vadd.f32 0.0, %v805
  %v807 = vpop.f32.mrb[0].mxu0
  %v808 = vpop.f32.mrb[0].mxu0
  %v809 = vadd.f32 0.0, %v808
  %v810 = vpop.f32.mrb[0].mxu0
  %811 = vmatprep.mubr.bf16.mxu0 0
  %812 = vmatmul.mubr.bf16.gmra.mrb[0].mxu0 %v508
  %v813 = vpop.f32.mrb[0].mxu0
  %v814 = vadd.f32 0.0, %v813
  %v815 = vpop.f32.mrb[0].mxu0
  %v816 = vpop.f32.mrb[0].mxu0
  %v817 = vadd.f32 0.0, %v816
  %v818 = vpop.f32.mrb[0].mxu0
  %819 = vmatprep.mubr.bf16.mxu0 0
  %820 = vmatmul.mubr.bf16.gmra.mrb[0].mxu0 %v509
  %v821 = vpop.f32.mrb[0].mxu0
  %v822 = vadd.f32 0.0, %v821
  %v823 = vpop.f32.mrb[0].mxu0
  %v824 = vpop.f32.mrb[0].mxu0
  %v825 = vadd.f32 0.0, %v824
  %v826 = vpop.f32.mrb[0].mxu0
  %827 = vmatprep.mubr.bf16.mxu0 0
  %828 = vmatmul.mubr.bf16.gmra.mrb[0].mxu0 %v510
  %v829 = vpop.f32.mrb[0].mxu0
  %v830 = vadd.f32 0.0, %v829
  %v831 = vpop.f32.mrb[0].mxu0
  %v832 = vpop.f32.mrb[0].mxu0
  %v833 = vadd.f32 0.0, %v832
  %v834 = vpop.f32.mrb[0].mxu0
  %835 = vmatprep.mubr.bf16.mxu0 0
  %836 = vmatmul.mubr.bf16.gmra.mrb[0].mxu0 %v511
  %v837 = vpop.f32.mrb[0].mxu0
  %v838 = vadd.f32 0.0, %v837
  %v839 = vpop.f32.mrb[0].mxu0
  %v840 = vpop.f32.mrb[0].mxu0
  %v841 = vadd.f32 0.0, %v840
  %v842 = vpop.f32.mrb[0].mxu0
  %843 = vmatprep.mubr.bf16.mxu0 0
  %844 = vmatmul.mubr.bf16.gmra.mrb[0].mxu0 %v512
  %v845 = vpop.f32.mrb[0].mxu0
  %v846 = vadd.f32 0.0, %v845
  %v847 = vpop.f32.mrb[0].mxu0
  %v848 = vpop.f32.mrb[0].mxu0
  %v849 = vadd.f32 0.0, %v848
  %v850 = vpop.f32.mrb[0].mxu0
  %851 = vmatprep.mubr.bf16.mxu0 0
  %852 = vmatmul.mubr.bf16.gmra.mrb[0].mxu0 %v513
  %v853 = vpop.f32.mrb[0].mxu0
  %v854 = vadd.f32 0.0, %v853
  %v855 = vpop.f32.mrb[0].mxu0
  %v856 = vpop.f32.mrb[0].mxu0
  %v857 = vadd.f32 0.0, %v856
  %v858 = vpop.f32.mrb[0].mxu0
  %859 = vmatprep.mubr.bf16.mxu0 0
  %860 = vmatmul.mubr.bf16.gmra.mrb[0].mxu0 %v514
  %v861 = vpop.f32.mrb[0].mxu0
  %v862 = vadd.f32 0.0, %v861
  %v863 = vpop.f32.mrb[0].mxu0
  %v864 = vpop.f32.mrb[0].mxu0
  %v865 = vadd.f32 0.0, %v864
  %v866 = vpop.f32.mrb[0].mxu0
  %867 = vdwg.mxu0
  %vm868 = vcmask 64512
  %869 = vst.msk [vmem:[%s5] sm:$0xff] %vm868, %v614
  %870 = vst.msk [vmem:[%s5 + $0x8] sm:$0xff] %vm868, %v617
  %871 = vst.msk [vmem:[%s5 + $0x10] sm:$0xff] %vm868, %v622
  %872 = vst.msk [vmem:[%s5 + $0x18] sm:$0xff] %vm868, %v625
  %873 = vst.msk [vmem:[%s5 + $0x20] sm:$0xff] %vm868, %v630
  %874 = vst.msk [vmem:[%s5 + $0x28] sm:$0xff] %vm868, %v633
  %875 = vst.msk [vmem:[%s5 + $0x30] sm:$0xff] %vm868, %v638
  %876 = vst.msk [vmem:[%s5 + $0x38] sm:$0xff] %vm868, %v641
  %877 = vst.msk [vmem:[%s5 + $0x40] sm:$0xff] %vm868, %v646
  %878 = vst.msk [vmem:[%s5 + $0x48] sm:$0xff] %vm868, %v649
  %879 = vst.msk [vmem:[%s5 + $0x50] sm:$0xff] %vm868, %v654
  %880 = vst.msk [vmem:[%s5 + $0x58] sm:$0xff] %vm868, %v657
  %881 = vst.msk [vmem:[%s5 + $0x60] sm:$0xff] %vm868, %v662
  %882 = vst.msk [vmem:[%s5 + $0x68] sm:$0xff] %vm868, %v665
  %883 = vst.msk [vmem:[%s5 + $0x70] sm:$0xff] %vm868, %v670
  %884 = vst.msk [vmem:[%s5 + $0x78] sm:$0xff] %vm868, %v673
  %885 = vst.msk [vmem:[%s5 + $0x80] sm:$0xff] %vm868, %v678
  %886 = vst.msk [vmem:[%s5 + $0x88] sm:$0xff] %vm868, %v681
  %887 = vst.msk [vmem:[%s5 + $0x90] sm:$0xff] %vm868, %v686
  %888 = vst.msk [vmem:[%s5 + $0x98] sm:$0xff] %vm868, %v689
  %889 = vst.msk [vmem:[%s5 + $0xa0] sm:$0xff] %vm868, %v694
  %890 = vst.msk [vmem:[%s5 + $0xa8] sm:$0xff] %vm868, %v697
  %891 = vst.msk [vmem:[%s5 + $0xb0] sm:$0xff] %vm868, %v702
  %892 = vst.msk [vmem:[%s5 + $0xb8] sm:$0xff] %vm868, %v705
  %893 = vst.msk [vmem:[%s5 + $0xc0] sm:$0xff] %vm868, %v710
  %894 = vst.msk [vmem:[%s5 + $0xc8] sm:$0xff] %vm868, %v713
  %895 = vst.msk [vmem:[%s5 + $0xd0] sm:$0xff] %vm868, %v718
  %896 = vst.msk [vmem:[%s5 + $0xd8] sm:$0xff] %vm868, %v721
  %897 = vst.msk [vmem:[%s5 + $0xe0] sm:$0xff] %vm868, %v726
  %898 = vst.msk [vmem:[%s5 + $0xe8] sm:$0xff] %vm868, %v729
  %899 = vst.msk [vmem:[%s5 + $0xf0] sm:$0xff] %vm868, %v734
  %900 = vst.msk [vmem:[%s5 + $0xf8] sm:$0xff] %vm868, %v737
  %901 = vst.msk [vmem:[%s5 + $0x100] sm:$0xff] %vm868, %v742
  %902 = vst.msk [vmem:[%s5 + $0x108] sm:$0xff] %vm868, %v745
  %903 = vst.msk [vmem:[%s5 + $0x110] sm:$0xff] %vm868, %v750
  %904 = vst.msk [vmem:[%s5 + $0x118] sm:$0xff] %vm868, %v753
  %905 = vst.msk [vmem:[%s5 + $0x120] sm:$0xff] %vm868, %v758
  %906 = vst.msk [vmem:[%s5 + $0x128] sm:$0xff] %vm868, %v761
  %907 = vst.msk [vmem:[%s5 + $0x130] sm:$0xff] %vm868, %v766
  %908 = vst.msk [vmem:[%s5 + $0x138] sm:$0xff] %vm868, %v769
  %909 = vst.msk [vmem:[%s5 + $0x140] sm:$0xff] %vm868, %v774
  %910 = vst.msk [vmem:[%s5 + $0x148] sm:$0xff] %vm868, %v777
  %911 = vst.msk [vmem:[%s5 + $0x150] sm:$0xff] %vm868, %v782
  %912 = vst.msk [vmem:[%s5 + $0x158] sm:$0xff] %vm868, %v785
  %913 = vst.msk [vmem:[%s5 + $0x160] sm:$0xff] %vm868, %v790
  %914 = vst.msk [vmem:[%s5 + $0x168] sm:$0xff] %vm868, %v793
  %915 = vst.msk [vmem:[%s5 + $0x170] sm:$0xff] %vm868, %v798
  %916 = vst.msk [vmem:[%s5 + $0x178] sm:$0xff] %vm868, %v801
  %917 = vst.msk [vmem:[%s5 + $0x180] sm:$0xff] %vm868, %v806
  %918 = vst.msk [vmem:[%s5 + $0x188] sm:$0xff] %vm868, %v809
  %919 = vst.msk [vmem:[%s5 + $0x190] sm:$0xff] %vm868, %v814
  %920 = vst.msk [vmem:[%s5 + $0x198] sm:$0xff] %vm868, %v817
  %921 = vst.msk [vmem:[%s5 + $0x1a0] sm:$0xff] %vm868, %v822
  %922 = vst.msk [vmem:[%s5 + $0x1a8] sm:$0xff] %vm868, %v825
  %923 = vst.msk [vmem:[%s5 + $0x1b0] sm:$0xff] %vm868, %v830
  %924 = vst.msk [vmem:[%s5 + $0x1b8] sm:$0xff] %vm868, %v833
  %925 = vst.msk [vmem:[%s5 + $0x1c0] sm:$0xff] %vm868, %v838
  %926 = vst.msk [vmem:[%s5 + $0x1c8] sm:$0xff] %vm868, %v841
  %927 = vst.msk [vmem:[%s5 + $0x1d0] sm:$0xff] %vm868, %v846
  %928 = vst.msk [vmem:[%s5 + $0x1d8] sm:$0xff] %vm868, %v849
  %929 = vst.msk [vmem:[%s5 + $0x1e0] sm:$0xff] %vm868, %v854
  %930 = vst.msk [vmem:[%s5 + $0x1e8] sm:$0xff] %vm868, %v857
  %931 = vst.msk [vmem:[%s5 + $0x1f0] sm:$0xff] %vm868, %v862
  %932 = vst.msk [vmem:[%s5 + $0x1f8] sm:$0xff] %vm868, %v865
  // Predicated region
  $region22: #{tresblock_forward.5} parent=0 // pred_check
    _
  $region23: #{tresblock_forward.5} parent=0 // pred_check_branch
    %934 = sbr.rel (0) target = $region25
  $region24: #{tresblock_forward.5} parent=0 // pred_region
    _
  $region25: #{tresblock_forward.5} parent=0 // pred_fallthru
    _
  // Predicated region
  $region26: #{tresblock_forward.5} parent=0 // pred_check
    _
  $region27: #{tresblock_forward.5} parent=0 // pred_check_branch
    %936 = sbr.rel (0) target = $region29
  $region28: #{tresblock_forward.5} parent=0 // pred_region
    _
  $region29: #{tresblock_forward.5} parent=0 // pred_fallthru
    _

// kernel: tresblock_forward.3
$region0: #{tresblock_forward.3}
  #allocation0 [shape = 'u32[]', space=smem, size = 0x4, offset = 0x4, fixed_abs, tag = 'smem constant byte address 0x4 - core index']
  #allocation1 [shape = 'u32[144,128]{1,0:T(1,128)}', space=vmem, size = 0x12000, scoped, tag = 'internal scratch']
  #allocation2 [shape = 'bf16[18,24,128]{2,1,0:T(8,128)(2,1)}', space=vmem, size = 0x1b000, scoped, tag = 'scratch operand']
  #allocation3 [shape = 'bf16[256,1152]{1,0:T(16,128)(2,1)}', space=vmem, size = 0x90000, scoped, tag = 'scratch operand']
  %s0 = inlined_call_operand.vmem [shape: bf16[2,16,16,128], index: 0, kind: input, shape index: {}]
  %s1 = inlined_call_operand.vmem [shape: bf16[1152,128], index: 1, kind: input, shape index: {}]
  %s2 = inlined_call_operand.vmem [shape: bf16[2,16,16,128], index: 2, kind: output, shape index: {0}]
  %s3 = inlined_call_operand.vmem [shape: f32[2,2,128], index: 3, kind: output, shape index: {1}]
  %4 = xla_tuple %s2, %s3
  %s5 = sld [smem:[#allocation0]]
  $region49: #{tresblock_forward.3} parent=0
    _
  %s7 = ssub.s32 1, %s5
  %s8 = scalar_select 0, %s7, %s5
  loop: start=0, step=1, limit=4
  $region2: #{tresblock_forward.3} parent=0 // loop_pre_header
    _
  $region3: #{tresblock_forward.3} parent=0 // loop_header
    %s10 = sphi 0, %s14
    %p11 = scmp.ge.s32.totalorder %s10, 4
    %s20 = sphi 0, %s22
    %s23 = sphi 0, %s20
    %s24 = sphi 0, %s23
    %s40 = sphi 0, %s24
    %s44 = sphi 0, %s44
    %s46 = sphi 0, %s44
    %s47 = sphi 0, %s46
    %s61 = sphi 0, %s47
    %s67 = sphi 0, %s69
    %s70 = sphi 0, %s67
    %s71 = sphi 0, %s70
    %s87 = sphi 0, %s71
    %s93 = sphi 0, %s95
    %s96 = sphi 0, %s93
    %s97 = sphi 0, %s96
    %s113 = sphi 0, %s97
  $region4: #{tresblock_forward.3} parent=0 // loop_header_branch
    %13 = sbr.rel (%p11) target = $region8
  $region5: #{tresblock_forward.3} parent=0 // loop_body
    %s15 = ssub.s32 %s10, 1
    %s16 = ssub.s32 %s10, 2
    %s17 = sadd.s32 %s10, 1
    %s18 = ssub.s32 %s10, %s17
    %p19 = scmp.eq.s32.totalorder %s18, 0
    %s21 = sadd.s32 %s20, 1
    %s22 = scalar_select %p19, %s20, %s21
    %p25 = pneg %p19
    %p26 = scmp.eq.s32.totalorder %s10, 1
    %p27 = por %p25, %p26
    %p28 = scmp.ne.s32.totalorder %s20, %s23
    %p29 = scmp.eq.s32.totalorder %s10, 0
    %p30 = por %p28, %p29
    %p31 = scmp.ne.s32.totalorder %s20, %s23
    %p32 = scmp.eq.s32.totalorder %s15, 1
    %p33 = por %p31, %p32
    %p34 = scmp.ne.s32.totalorder %s23, %s24
    %p35 = scmp.eq.s32.totalorder %s15, 0
    %p36 = por %p34, %p35
    %p37 = scmp.ne.s32.totalorder %s23, %s24
    %p38 = scmp.eq.s32.totalorder %s16, 1
    %p39 = por %p37, %p38
    %p41 = scmp.ne.s32.totalorder %s24, %s40
    %p42 = scmp.eq.s32.totalorder %s16, 0
    %p43 = por %p41, %p42
    %s45 = sadd.s32 %s44, 1
    %p48 = scmp.eq.s32.totalorder %s10, 1
    %p49 = scmp.ne.s32.totalorder %s44, %s46
    %p50 = scmp.eq.s32.totalorder %s10, 0
    %p51 = por %p49, %p50
    %p52 = scmp.ne.s32.totalorder %s44, %s46
    %p53 = scmp.eq.s32.totalorder %s15, 1
    %p54 = por %p52, %p53
    %p55 = scmp.ne.s32.totalorder %s46, %s47
    %p56 = scmp.eq.s32.totalorder %s15, 0
    %p57 = por %p55, %p56
    %p58 = scmp.ne.s32.totalorder %s46, %s47
    %p59 = scmp.eq.s32.totalorder %s16, 1
    %p60 = por %p58, %p59
    %p62 = scmp.ne.s32.totalorder %s47, %s61
    %p63 = scmp.eq.s32.totalorder %s16, 0
    %p64 = por %p62, %p63
    %s65 = ssub.s32 %s10, %s17
    %p66 = scmp.eq.s32.totalorder %s65, 0
    %s68 = sadd.s32 %s67, 1
    %s69 = scalar_select %p66, %s67, %s68
    %p72 = pneg %p66
    %p73 = scmp.eq.s32.totalorder %s10, 1
    %p74 = por %p72, %p73
    %p75 = scmp.ne.s32.totalorder %s67, %s70
    %p76 = scmp.eq.s32.totalorder %s10, 0
    %p77 = por %p75, %p76
    %p78 = scmp.ne.s32.totalorder %s67, %s70
    %p79 = scmp.eq.s32.totalorder %s15, 1
    %p80 = por %p78, %p79
    %p81 = scmp.ne.s32.totalorder %s70, %s71
    %p82 = scmp.eq.s32.totalorder %s15, 0
    %p83 = por %p81, %p82
    %p84 = scmp.ne.s32.totalorder %s70, %s71
    %p85 = scmp.eq.s32.totalorder %s16, 1
    %p86 = por %p84, %p85
    %p88 = scmp.ne.s32.totalorder %s71, %s87
    %p89 = scmp.eq.s32.totalorder %s16, 0
    %p90 = por %p88, %p89
    %s91 = ssub.s32 %s10, %s17
    %p92 = scmp.eq.s32.totalorder %s91, 0
    %s94 = sadd.s32 %s93, 1
    %s95 = scalar_select %p92, %s93, %s94
    %p98 = pneg %p92
    %p99 = scmp.eq.s32.totalorder %s10, 1
    %p100 = por %p98, %p99
    %p101 = scmp.ne.s32.totalorder %s93, %s96
    %p102 = scmp.eq.s32.totalorder %s10, 0
    %p103 = por %p101, %p102
    %p104 = scmp.ne.s32.totalorder %s93, %s96
    %p105 = scmp.eq.s32.totalorder %s15, 1
    %p106 = por %p104, %p105
    %p107 = scmp.ne.s32.totalorder %s96, %s97
    %p108 = scmp.eq.s32.totalorder %s15, 0
    %p109 = por %p107, %p108
    %p110 = scmp.ne.s32.totalorder %s96, %s97
    %p111 = scmp.eq.s32.totalorder %s16, 1
    %p112 = por %p110, %p111
    %p114 = scmp.ne.s32.totalorder %s97, %s113
    %p115 = scmp.eq.s32.totalorder %s16, 0
    %p116 = por %p114, %p115
    %p117 = scmp.le.s32.totalorder 1, %s10
    %p118 = scmp.lt.s32.totalorder %s10, 3
    %p119 = pnand %p117, %p118
    %p120 = pneg %p119
    // Predicated region
    $region9: #{tresblock_forward.3} parent=5 // pred_check
      _
    $region10: #{tresblock_forward.3} parent=5 // pred_check_branch
      %122 = sbr.rel (%p119) target = $region12
    $region11: #{tresblock_forward.3} parent=5 // pred_region
      %s123 = ssub.s32 %s10, 1
      // Predicated region
      $region13: #{tresblock_forward.3} parent=11 // pred_check
        %p124 = pneg %p57
      $region14: #{tresblock_forward.3} parent=11 // pred_check_branch
        %126 = sbr.rel (%p124) target = $region16
      $region15: #{tresblock_forward.3} parent=11 // pred_region
        _
      $region16: #{tresblock_forward.3} parent=11 // pred_fallthru
        _
    $region12: #{tresblock_forward.3} parent=5 // pred_fallthru
      _
    %p127 = scmp.lt.s32.totalorder %s10, 2
    // Predicated region
    $region17: #{tresblock_forward.3} parent=5 // pred_check
      %p128 = pneg %p127
    $region18: #{tresblock_forward.3} parent=5 // pred_check_branch
      %130 = sbr.rel (%p128) target = $region20
    $region19: #{tresblock_forward.3} parent=5 // pred_region
      // Predicated region
      $region21: #{tresblock_forward.3} parent=19 // pred_check
        %p131 = pneg %p30
      $region22: #{tresblock_forward.3} parent=19 // pred_check_branch
        %133 = sbr.rel (%p131) target = $region24
      $region23: #{tresblock_forward.3} parent=19 // pred_region
        %p134 = scmp.lt.s32.totalorder %s10, 1
        %s135 = scalar_select %p134, %s10, 1
        %s136 = smul.addr %s135, 32
        %s137 = smul.addr %s136, 4
        %s138 = scalar_lea.vmem %s0, %s137
      $region24: #{tresblock_forward.3} parent=19 // pred_fallthru
        _
    $region20: #{tresblock_forward.3} parent=5 // pred_fallthru
      _
    %p139 = scmp.le.s32.totalorder 1, %s10
    %p140 = scmp.lt.s32.totalorder %s10, 3
    %p141 = pnand %p139, %p140
    %p142 = pneg %p141
    // Predicated region
    $region25: #{tresblock_forward.3} parent=5 // pred_check
      _
    $region26: #{tresblock_forward.3} parent=5 // pred_check_branch
      %144 = sbr.rel (%p141) target = $region28
    $region27: #{tresblock_forward.3} parent=5 // pred_region
      %s145 = ssub.s32 %s10, 1
      %p146 = scmp.lt.s32.totalorder %s15, 1
      %s147 = scalar_select %p146, %s15, 1
      %s148 = smul.addr %s147, 32
      %s149 = smul.addr %s148, 4
      %s150 = scalar_lea.vmem %s0, %s149
      %p151 = pneg %p36
      %p152 = pneg %p33
      %p153 = pneg %p57
      %p154 = pneg %p54
      %p155 = pneg %p83
      %p156 = pneg %p80
      %p157 = scmp.lt.s32.totalorder %s15, 1
      %s158 = scalar_select %p157, %s15, 1
      %s159 = smul.addr %s158, 32
      %s160 = smul.addr %s159, 4
      %s161 = scalar_lea.vmem %s2, %s160
      %p162 = pneg %p109
      %p163 = pneg %p106
      %p164 = scmp.lt.s32.totalorder %s15, 1
      %s165 = scalar_select %p164, %s15, 1
      %s166 = smul.addr %s165, 2
      %s167 = scalar_lea.vmem %s3, %s166
      %p168 = scmp.lt.s32.totalorder %s15, 1
      %s169 = scalar_select %p168, %s15, 1
      %s170 = smul.addr %s169, 32
      %s171 = smul.addr %s170, 4
      %s172 = scalar_lea.vmem %s0, %s171
      %p173 = scmp.lt.s32.totalorder %s15, 1
      %s174 = scalar_select %p173, %s15, 1
      %s175 = smul.addr %s174, 32
      %s176 = smul.addr %s175, 4
      %s177 = scalar_lea.vmem %s2, %s176
      %p178 = scmp.lt.s32.totalorder %s15, 1
      %s179 = scalar_select %p178, %s15, 1
      %s180 = smul.addr %s179, 2
      %s181 = scalar_lea.vmem %s3, %s180
      %v183 = vld [vmem:[%s172] sm:$0xf]
      %v184 = vld [vmem:[%s172 + $0x4] sm:$0xf]
      %v185 = vld [vmem:[%s172 + $0x8] sm:$0xf]
      %v186 = vld [vmem:[%s172 + $0xc] sm:$0xf]
      %v187 = vld [vmem:[%s172 + $0x10] sm:$0xf]
      %v188 = vld [vmem:[%s172 + $0x14] sm:$0xf]
      %v189 = vld [vmem:[%s172 + $0x18] sm:$0xf]
      %v190 = vld [vmem:[%s172 + $0x1c] sm:$0xf]
      %v191 = vld [vmem:[%s172 + $0x20] sm:$0xf]
      %v192 = vld [vmem:[%s172 + $0x24] sm:$0xf]
      %v193 = vld [vmem:[%s172 + $0x28] sm:$0xf]
      %v194 = vld [vmem:[%s172 + $0x2c] sm:$0xf]
      %v195 = vld [vmem:[%s172 + $0x30] sm:$0xf]
      %v196 = vld [vmem:[%s172 + $0x34] sm:$0xf]
      %v197 = vld [vmem:[%s172 + $0x38] sm:$0xf]
      %v198 = vld [vmem:[%s172 + $0x3c] sm:$0xf]
      %v199 = vld [vmem:[%s172 + $0x40] sm:$0xf]
      %v200 = vld [vmem:[%s172 + $0x44] sm:$0xf]
      %v201 = vld [vmem:[%s172 + $0x48] sm:$0xf]
      %v202 = vld [vmem:[%s172 + $0x4c] sm:$0xf]
      %v203 = vld [vmem:[%s172 + $0x50] sm:$0xf]
      %v204 = vld [vmem:[%s172 + $0x54] sm:$0xf]
      %v205 = vld [vmem:[%s172 + $0x58] sm:$0xf]
      %v206 = vld [vmem:[%s172 + $0x5c] sm:$0xf]
      %v207 = vld [vmem:[%s172 + $0x60] sm:$0xf]
      %v208 = vld [vmem:[%s172 + $0x64] sm:$0xf]
      %v209 = vld [vmem:[%s172 + $0x68] sm:$0xf]
      %v210 = vld [vmem:[%s172 + $0x6c] sm:$0xf]
      %v211 = vld [vmem:[%s172 + $0x70] sm:$0xf]
      %v212 = vld [vmem:[%s172 + $0x74] sm:$0xf]
      %v213 = vld [vmem:[%s172 + $0x78] sm:$0xf]
      %v214 = vld [vmem:[%s172 + $0x7c] sm:$0xf]
      %215 = vst [vmem:[#allocation2] sm:$0xf] 0
      %216 = vst [vmem:[#allocation2 + $0x4] sm:$0xf] 0
      %217 = vst [vmem:[#allocation2 + $0x8] sm:$0xf] 0
      %s218 = scalar_lea.vmem [#allocation2], 204
      %219 = vst [vmem:[%s218] sm:$0xf] 0
      %220 = vst [vmem:[%s218 + $0x4] sm:$0xf] 0
      %221 = vst [vmem:[%s218 + $0x8] sm:$0xf] 0
      %s222 = scalar_lea.vmem [#allocation2], 12
      %vm223 = vcmask 1040384
      %vm224 = vsmask.f32 256
      %vm225 = vmand %vm223, %vm224
      %v226 = vld [vmem:[%s222] sm:$0x1]
      %v227 = vsel %vm225, 0, %v226
      %228 = vst [vmem:[%s222] sm:$0x1] %v227
      %v229 = vld [vmem:[%s222 + $0xc] sm:$0x1]
      %v230 = vsel %vm225, 0, %v229
      %231 = vst [vmem:[%s222 + $0xc] sm:$0x1] %v230
      %v232 = vld [vmem:[%s222 + $0x18] sm:$0x1]
      %v233 = vsel %vm225, 0, %v232
      %234 = vst [vmem:[%s222 + $0x18] sm:$0x1] %v233
      %v235 = vld [vmem:[%s222 + $0x24] sm:$0x1]
      %v236 = vsel %vm225, 0, %v235
      %237 = vst [vmem:[%s222 + $0x24] sm:$0x1] %v236
      %v238 = vld [vmem:[%s222 + $0x30] sm:$0x1]
      %v239 = vsel %vm225, 0, %v238
      %240 = vst [vmem:[%s222 + $0x30] sm:$0x1] %v239
      %v241 = vld [vmem:[%s222 + $0x3c] sm:$0x1]
      %v242 = vsel %vm225, 0, %v241
      %243 = vst [vmem:[%s222 + $0x3c] sm:$0x1] %v242
      %v244 = vld [vmem:[%s222 + $0x48] sm:$0x1]
      %v245 = vsel %vm225, 0, %v244
      %246 = vst [vmem:[%s222 + $0x48] sm:$0x1] %v245
      %v247 = vld [vmem:[%s222 + $0x54] sm:$0x1]
      %v248 = vsel %vm225, 0, %v247
      %249 = vst [vmem:[%s222 + $0x54] sm:$0x1] %v248
      %v250 = vld [vmem:[%s222 + $0x60] sm:$0x1]
      %v251 = vsel %vm225, 0, %v250
      %252 = vst [vmem:[%s222 + $0x60] sm:$0x1] %v251
      %v253 = vld [vmem:[%s222 + $0x6c] sm:$0x1]
      %v254 = vsel %vm225, 0, %v253
      %255 = vst [vmem:[%s222 + $0x6c] sm:$0x1] %v254
      %v256 = vld [vmem:[%s222 + $0x78] sm:$0x1]
      %v257 = vsel %vm225, 0, %v256
      %258 = vst [vmem:[%s222 + $0x78] sm:$0x1] %v257
      %v259 = vld [vmem:[%s222 + $0x84] sm:$0x1]
      %v260 = vsel %vm225, 0, %v259
      %261 = vst [vmem:[%s222 + $0x84] sm:$0x1] %v260
      %v262 = vld [vmem:[%s222 + $0x90] sm:$0x1]
      %v263 = vsel %vm225, 0, %v262
      %264 = vst [vmem:[%s222 + $0x90] sm:$0x1] %v263
      %v265 = vld [vmem:[%s222 + $0x9c] sm:$0x1]
      %v266 = vsel %vm225, 0, %v265
      %267 = vst [vmem:[%s222 + $0x9c] sm:$0x1] %v266
      %v268 = vld [vmem:[%s222 + $0xa8] sm:$0x1]
      %v269 = vsel %vm225, 0, %v268
      %270 = vst [vmem:[%s222 + $0xa8] sm:$0x1] %v269
      %v271 = vld [vmem:[%s222 + $0xb4] sm:$0x1]
      %v272 = vsel %vm225, 0, %v271
      %273 = vst [vmem:[%s222 + $0xb4] sm:$0x1] %v272
      %vm274 = vcmask 1043456
      %vm275 = vsmask.f32 7938
      %vm276 = vmand %vm274, %vm275
      %v277 = vld [vmem:[%s222 + $0x8] sm:$0xf]
      %v278 = vsel %vm276, 0, %v277
      %279 = vst [vmem:[%s222 + $0x8] sm:$0xf] %v278
      %v280 = vld [vmem:[%s222 + $0x14] sm:$0xf]
      %v281 = vsel %vm276, 0, %v280
      %282 = vst [vmem:[%s222 + $0x14] sm:$0xf] %v281
      %v283 = vld [vmem:[%s222 + $0x20] sm:$0xf]
      %v284 = vsel %vm276, 0, %v283
      %285 = vst [vmem:[%s222 + $0x20] sm:$0xf] %v284
      %v286 = vld [vmem:[%s222 + $0x2c] sm:$0xf]
      %v287 = vsel %vm276, 0, %v286
      %288 = vst [vmem:[%s222 + $0x2c] sm:$0xf] %v287
      %v289 = vld [vmem:[%s222 + $0x38] sm:$0xf]
      %v290 = vsel %vm276, 0, %v289
      %291 = vst [vmem:[%s222 + $0x38] sm:$0xf] %v290
      %v292 = vld [vmem:[%s222 + $0x44] sm:$0xf]
      %v293 = vsel %vm276, 0, %v292
      %294 = vst [vmem:[%s222 + $0x44] sm:$0xf] %v293
      %v295 = vld [vmem:[%s222 + $0x50] sm:$0xf]
      %v296 = vsel %vm276, 0, %v295
      %297 = vst [vmem:[%s222 + $0x50] sm:$0xf] %v296
      %v298 = vld [vmem:[%s222 + $0x5c] sm:$0xf]
      %v299 = vsel %vm276, 0, %v298
      %300 = vst [vmem:[%s222 + $0x5c] sm:$0xf] %v299
      %v301 = vld [vmem:[%s222 + $0x68] sm:$0xf]
      %v302 = vsel %vm276, 0, %v301
      %303 = vst [vmem:[%s222 + $0x68] sm:$0xf] %v302
      %v304 = vld [vmem:[%s222 + $0x74] sm:$0xf]
      %v305 = vsel %vm276, 0, %v304
      %306 = vst [vmem:[%s222 + $0x74] sm:$0xf] %v305
      %v307 = vld [vmem:[%s222 + $0x80] sm:$0xf]
      %v308 = vsel %vm276, 0, %v307
      %309 = vst [vmem:[%s222 + $0x80] sm:$0xf] %v308
      %v310 = vld [vmem:[%s222 + $0x8c] sm:$0xf]
      %v311 = vsel %vm276, 0, %v310
      %312 = vst [vmem:[%s222 + $0x8c] sm:$0xf] %v311
      %v313 = vld [vmem:[%s222 + $0x98] sm:$0xf]
      %v314 = vsel %vm276, 0, %v313
      %315 = vst [vmem:[%s222 + $0x98] sm:$0xf] %v314
      %v316 = vld [vmem:[%s222 + $0xa4] sm:$0xf]
      %v317 = vsel %vm276, 0, %v316
      %318 = vst [vmem:[%s222 + $0xa4] sm:$0xf] %v317
      %v319 = vld [vmem:[%s222 + $0xb0] sm:$0xf]
      %v320 = vsel %vm276, 0, %v319
      %321 = vst [vmem:[%s222 + $0xb0] sm:$0xf] %v320
      %v322 = vld [vmem:[%s222 + $0xbc] sm:$0xf]
      %v323 = vsel %vm276, 0, %v322
      %324 = vst [vmem:[%s222 + $0xbc] sm:$0xf] %v323
      %vm325 = vsmask.f32 4368
      %vm326 = vmor %vm224, %vm325
      %v328 = vshrl.u32 %v183, 16
      %v330 = vrot.slane %v328, 7
      %v331 = vshll.u32 %v183, 16
      %v333 = vor.u32 %v330, %v331
      %v334 = vrot.slane %v330, 4
      %v336 = vshrl.u32 %v184, 16
      %v338 = vrot.slane %v336, 7
      %v339 = vshll.u32 %v184, 16
      %v341 = vor.u32 %v338, %v339
      %v342 = vsel %vm326, %v334, %v341
      %v343 = vrot.slane %v338, 4
      %v345 = vshrl.u32 %v185, 16
      %v347 = vrot.slane %v345, 7
      %v348 = vshll.u32 %v185, 16
      %v350 = vor.u32 %v347, %v348
      %v351 = vrot.slane %v347, 4
      %v353 = vshrl.u32 %v186, 16
      %v355 = vrot.slane %v353, 7
      %v356 = vshll.u32 %v186, 16
      %v358 = vor.u32 %v355, %v356
      %v359 = vsel %vm326, %v351, %v358
      %v360 = vrot.slane %v355, 4
      %v362 = vshrl.u32 %v187, 16
      %v364 = vrot.slane %v362, 7
      %v365 = vshll.u32 %v187, 16
      %v367 = vor.u32 %v364, %v365
      %v368 = vrot.slane %v364, 4
      %v370 = vshrl.u32 %v188, 16
      %v372 = vrot.slane %v370, 7
      %v373 = vshll.u32 %v188, 16
      %v375 = vor.u32 %v372, %v373
      %v376 = vsel %vm326, %v368, %v375
      %v377 = vrot.slane %v372, 4
      %v379 = vshrl.u32 %v189, 16
      %v381 = vrot.slane %v379, 7
      %v382 = vshll.u32 %v189, 16
      %v384 = vor.u32 %v381, %v382
      %v385 = vrot.slane %v381, 4
      %v387 = vshrl.u32 %v190, 16
      %v389 = vrot.slane %v387, 7
      %v390 = vshll.u32 %v190, 16
      %v392 = vor.u32 %v389, %v390
      %v393 = vsel %vm326, %v385, %v392
      %v394 = vrot.slane %v389, 4
      %v396 = vshrl.u32 %v191, 16
      %v398 = vrot.slane %v396, 7
      %v399 = vshll.u32 %v191, 16
      %v401 = vor.u32 %v398, %v399
      %v402 = vrot.slane %v398, 4
      %v404 = vshrl.u32 %v192, 16
      %v406 = vrot.slane %v404, 7
      %v407 = vshll.u32 %v192, 16
      %v409 = vor.u32 %v406, %v407
      %v410 = vsel %vm326, %v402, %v409
      %v411 = vrot.slane %v406, 4
      %v413 = vshrl.u32 %v193, 16
      %v415 = vrot.slane %v413, 7
      %v416 = vshll.u32 %v193, 16
      %v418 = vor.u32 %v415, %v416
      %v419 = vrot.slane %v415, 4
      %v421 = vshrl.u32 %v194, 16
      %v423 = vrot.slane %v421, 7
      %v424 = vshll.u32 %v194, 16
      %v426 = vor.u32 %v423, %v424
      %v427 = vsel %vm326, %v419, %v426
      %v428 = vrot.slane %v423, 4
      %v430 = vshrl.u32 %v195, 16
      %v432 = vrot.slane %v430, 7
      %v433 = vshll.u32 %v195, 16
      %v435 = vor.u32 %v432, %v433
      %v436 = vrot.slane %v432, 4
      %v438 = vshrl.u32 %v196, 16
      %v440 = vrot.slane %v438, 7
      %v441 = vshll.u32 %v196, 16
      %v443 = vor.u32 %v440, %v441
      %v444 = vsel %vm326, %v436, %v443
      %v445 = vrot.slane %v440, 4
      %v447 = vshrl.u32 %v197, 16
      %v449 = vrot.slane %v447, 7
      %v450 = vshll.u32 %v197, 16
      %v452 = vor.u32 %v449, %v450
      %v453 = vrot.slane %v449, 4
      %v455 = vshrl.u32 %v198, 16
      %v457 = vrot.slane %v455, 7
      %v458 = vshll.u32 %v198, 16
      %v460 = vor.u32 %v457, %v458
      %v461 = vsel %vm326, %v453, %v460
      %v462 = vrot.slane %v457, 4
      %v464 = vshrl.u32 %v199, 16
      %v466 = vrot.slane %v464, 7
      %v467 = vshll.u32 %v199, 16
      %v469 = vor.u32 %v466, %v467
      %v470 = vrot.slane %v466, 4
      %v472 = vshrl.u32 %v200, 16
      %v474 = vrot.slane %v472, 7
      %v475 = vshll.u32 %v200, 16
      %v477 = vor.u32 %v474, %v475
      %v478 = vsel %vm326, %v470, %v477
      %v479 = vrot.slane %v474, 4
      %v481 = vshrl.u32 %v201, 16
      %v483 = vrot.slane %v481, 7
      %v484 = vshll.u32 %v201, 16
      %v486 = vor.u32 %v483, %v484
      %v487 = vrot.slane %v483, 4
      %v489 = vshrl.u32 %v202, 16
      %v491 = vrot.slane %v489, 7
      %v492 = vshll.u32 %v202, 16
      %v494 = vor.u32 %v491, %v492
      %v495 = vsel %vm326, %v487, %v494
      %v496 = vrot.slane %v491, 4
      %v498 = vshrl.u32 %v203, 16
      %v500 = vrot.slane %v498, 7
      %v501 = vshll.u32 %v203, 16
      %v503 = vor.u32 %v500, %v501
      %v504 = vrot.slane %v500, 4
      %v506 = vshrl.u32 %v204, 16
      %v508 = vrot.slane %v506, 7
      %v509 = vshll.u32 %v204, 16
      %v511 = vor.u32 %v508, %v509
      %v512 = vsel %vm326, %v504, %v511
      %v513 = vrot.slane %v508, 4
      %v515 = vshrl.u32 %v205, 16
      %v517 = vrot.slane %v515, 7
      %v518 = vshll.u32 %v205, 16
      %v520 = vor.u32 %v517, %v518
      %v521 = vrot.slane %v517, 4
      %v523 = vshrl.u32 %v206, 16
      %v525 = vrot.slane %v523, 7
      %v526 = vshll.u32 %v206, 16
      %v528 = vor.u32 %v525, %v526
      %v529 = vsel %vm326, %v521, %v528
      %v530 = vrot.slane %v525, 4
      %v532 = vshrl.u32 %v207, 16
      %v534 = vrot.slane %v532, 7
      %v535 = vshll.u32 %v207, 16
      %v537 = vor.u32 %v534, %v535
      %v538 = vrot.slane %v534, 4
      %v540 = vshrl.u32 %v208, 16
      %v542 = vrot.slane %v540, 7
      %v543 = vshll.u32 %v208, 16
      %v545 = vor.u32 %v542, %v543
      %v546 = vsel %vm326, %v538, %v545
      %v547 = vrot.slane %v542, 4
      %v549 = vshrl.u32 %v209, 16
      %v551 = vrot.slane %v549, 7
      %v552 = vshll.u32 %v209, 16
      %v554 = vor.u32 %v551, %v552
      %v555 = vrot.slane %v551, 4
      %v557 = vshrl.u32 %v210, 16
      %v559 = vrot.slane %v557, 7
      %v560 = vshll.u32 %v210, 16
      %v562 = vor.u32 %v559, %v560
      %v563 = vsel %vm326, %v555, %v562
      %v564 = vrot.slane %v559, 4
      %v566 = vshrl.u32 %v211, 16
      %v568 = vrot.slane %v566, 7
      %v569 = vshll.u32 %v211, 16
      %v571 = vor.u32 %v568, %v569
      %v572 = vrot.slane %v568, 4
      %v574 = vshrl.u32 %v212, 16
      %v576 = vrot.slane %v574, 7
      %v577 = vshll.u32 %v212, 16
      %v579 = vor.u32 %v576, %v577
      %v580 = vsel %vm326, %v572, %v579
      %v581 = vrot.slane %v576, 4
      %v583 = vshrl.u32 %v213, 16
      %v585 = vrot.slane %v583, 7
      %v586 = vshll.u32 %v213, 16
      %v588 = vor.u32 %v585, %v586
      %v589 = vrot.slane %v585, 4
      %v591 = vshrl.u32 %v214, 16
      %v593 = vrot.slane %v591, 7
      %v594 = vshll.u32 %v214, 16
      %v596 = vor.u32 %v593, %v594
      %v597 = vsel %vm326, %v589, %v596
      %v598 = vrot.slane %v593, 4
      %v647 = vld [vmem:[%s222] sm:$0xf]
      %v648 = vsel %vm276, %v333, %v647
      %649 = vst [vmem:[%s222] sm:$0xf] %v648
      %650 = vst [vmem:[%s222 + $0x4] sm:$0xf] %v342
      %v651 = vld [vmem:[%s222 + $0x8] sm:$0x1]
      %v652 = vsel %vm225, %v343, %v651
      %653 = vst [vmem:[%s222 + $0x8] sm:$0x1] %v652
      %v654 = vld [vmem:[%s222 + $0xc] sm:$0xf]
      %v655 = vsel %vm276, %v350, %v654
      %656 = vst [vmem:[%s222 + $0xc] sm:$0xf] %v655
      %657 = vst [vmem:[%s222 + $0x10] sm:$0xf] %v359
      %v658 = vld [vmem:[%s222 + $0x14] sm:$0x1]
      %v659 = vsel %vm225, %v360, %v658
      %660 = vst [vmem:[%s222 + $0x14] sm:$0x1] %v659
      %v661 = vld [vmem:[%s222 + $0x18] sm:$0xf]
      %v662 = vsel %vm276, %v367, %v661
      %663 = vst [vmem:[%s222 + $0x18] sm:$0xf] %v662
      %664 = vst [vmem:[%s222 + $0x1c] sm:$0xf] %v376
      %v665 = vld [vmem:[%s222 + $0x20] sm:$0x1]
      %v666 = vsel %vm225, %v377, %v665
      %667 = vst [vmem:[%s222 + $0x20] sm:$0x1] %v666
      %v668 = vld [vmem:[%s222 + $0x24] sm:$0xf]
      %v669 = vsel %vm276, %v384, %v668
      %670 = vst [vmem:[%s222 + $0x24] sm:$0xf] %v669
      %671 = vst [vmem:[%s222 + $0x28] sm:$0xf] %v393
      %v672 = vld [vmem:[%s222 + $0x2c] sm:$0x1]
      %v673 = vsel %vm225, %v394, %v672
      %674 = vst [vmem:[%s222 + $0x2c] sm:$0x1] %v673
      %v675 = vld [vmem:[%s222 + $0x30] sm:$0xf]
      %v676 = vsel %vm276, %v401, %v675
      %677 = vst [vmem:[%s222 + $0x30] sm:$0xf] %v676
      %678 = vst [vmem:[%s222 + $0x34] sm:$0xf] %v410
      %v679 = vld [vmem:[%s222 + $0x38] sm:$0x1]
      %v680 = vsel %vm225, %v411, %v679
      %681 = vst [vmem:[%s222 + $0x38] sm:$0x1] %v680
      %v682 = vld [vmem:[%s222 + $0x3c] sm:$0xf]
      %v683 = vsel %vm276, %v418, %v682
      %684 = vst [vmem:[%s222 + $0x3c] sm:$0xf] %v683
      %685 = vst [vmem:[%s222 + $0x40] sm:$0xf] %v427
      %v686 = vld [vmem:[%s222 + $0x44] sm:$0x1]
      %v687 = vsel %vm225, %v428, %v686
      %688 = vst [vmem:[%s222 + $0x44] sm:$0x1] %v687
      %v689 = vld [vmem:[%s222 + $0x48] sm:$0xf]
      %v690 = vsel %vm276, %v435, %v689
      %691 = vst [vmem:[%s222 + $0x48] sm:$0xf] %v690
      %692 = vst [vmem:[%s222 + $0x4c] sm:$0xf] %v444
      %v693 = vld [vmem:[%s222 + $0x50] sm:$0x1]
      %v694 = vsel %vm225, %v445, %v693
      %695 = vst [vmem:[%s222 + $0x50] sm:$0x1] %v694
      %v696 = vld [vmem:[%s222 + $0x54] sm:$0xf]
      %v697 = vsel %vm276, %v452, %v696
      %698 = vst [vmem:[%s222 + $0x54] sm:$0xf] %v697
      %699 = vst [vmem:[%s222 + $0x58] sm:$0xf] %v461
      %v700 = vld [vmem:[%s222 + $0x5c] sm:$0x1]
      %v701 = vsel %vm225, %v462, %v700
      %702 = vst [vmem:[%s222 + $0x5c] sm:$0x1] %v701
      %v703 = vld [vmem:[%s222 + $0x60] sm:$0xf]
      %v704 = vsel %vm276, %v469, %v703
      %705 = vst [vmem:[%s222 + $0x60] sm:$0xf] %v704
      %706 = vst [vmem:[%s222 + $0x64] sm:$0xf] %v478
      %v707 = vld [vmem:[%s222 + $0x68] sm:$0x1]
      %v708 = vsel %vm225, %v479, %v707
      %709 = vst [vmem:[%s222 + $0x68] sm:$0x1] %v708
      %v710 = vld [vmem:[%s222 + $0x6c] sm:$0xf]
      %v711 = vsel %vm276, %v486, %v710
      %712 = vst [vmem:[%s222 + $0x6c] sm:$0xf] %v711
      %713 = vst [vmem:[%s222 + $0x70] sm:$0xf] %v495
      %v714 = vld [vmem:[%s222 + $0x74] sm:$0x1]
      %v715 = vsel %vm225, %v496, %v714
      %716 = vst [vmem:[%s222 + $0x74] sm:$0x1] %v715
      %v717 = vld [vmem:[%s222 + $0x78] sm:$0xf]
      %v718 = vsel %vm276, %v503, %v717
      %719 = vst [vmem:[%s222 + $0x78] sm:$0xf] %v718
      %720 = vst [vmem:[%s222 + $0x7c] sm:$0xf] %v512
      %v721 = vld [vmem:[%s222 + $0x80] sm:$0x1]
      %v722 = vsel %vm225, %v513, %v721
      %723 = vst [vmem:[%s222 + $0x80] sm:$0x1] %v722
      %v724 = vld [vmem:[%s222 + $0x84] sm:$0xf]
      %v725 = vsel %vm276, %v520, %v724
      %726 = vst [vmem:[%s222 + $0x84] sm:$0xf] %v725
      %727 = vst [vmem:[%s222 + $0x88] sm:$0xf] %v529
      %v728 = vld [vmem:[%s222 + $0x8c] sm:$0x1]
      %v729 = vsel %vm225, %v530, %v728
      %730 = vst [vmem:[%s222 + $0x8c] sm:$0x1] %v729
      %v731 = vld [vmem:[%s222 + $0x90] sm:$0xf]
      %v732 = vsel %vm276, %v537, %v731
      %733 = vst [vmem:[%s222 + $0x90] sm:$0xf] %v732
      %734 = vst [vmem:[%s222 + $0x94] sm:$0xf] %v546
      %v735 = vld [vmem:[%s222 + $0x98] sm:$0x1]
      %v736 = vsel %vm225, %v547, %v735
      %737 = vst [vmem:[%s222 + $0x98] sm:$0x1] %v736
      %v738 = vld [vmem:[%s222 + $0x9c] sm:$0xf]
      %v739 = vsel %vm276, %v554, %v738
      %740 = vst [vmem:[%s222 + $0x9c] sm:$0xf] %v739
      %741 = vst [vmem:[%s222 + $0xa0] sm:$0xf] %v563
      %v742 = vld [vmem:[%s222 + $0xa4] sm:$0x1]
      %v743 = vsel %vm225, %v564, %v742
      %744 = vst [vmem:[%s222 + $0xa4] sm:$0x1] %v743
      %v745 = vld [vmem:[%s222 + $0xa8] sm:$0xf]
      %v746 = vsel %vm276, %v571, %v745
      %747 = vst [vmem:[%s222 + $0xa8] sm:$0xf] %v746
      %748 = vst [vmem:[%s222 + $0xac] sm:$0xf] %v580
      %v749 = vld [vmem:[%s222 + $0xb0] sm:$0x1]
      %v750 = vsel %vm225, %v581, %v749
      %751 = vst [vmem:[%s222 + $0xb0] sm:$0x1] %v750
      %v752 = vld [vmem:[%s222 + $0xb4] sm:$0xf]
      %v753 = vsel %vm276, %v588, %v752
      %754 = vst [vmem:[%s222 + $0xb4] sm:$0xf] %v753
      %755 = vst [vmem:[%s222 + $0xb8] sm:$0xf] %v597
      %v756 = vld [vmem:[%s222 + $0xbc] sm:$0x1]
      %v757 = vsel %vm225, %v598, %v756
      %758 = vst [vmem:[%s222 + $0xbc] sm:$0x1] %v757
      %v759 = vld [vmem:[#allocation2] sm:$0xf]
      %v760 = vld [vmem:[#allocation2 + $0x4] sm:$0xf]
      %v761 = vld [vmem:[#allocation2 + $0xc] sm:$0xf]
      %v762 = vld [vmem:[#allocation2 + $0x10] sm:$0xf]
      %v763 = vld [vmem:[#allocation2 + $0x18] sm:$0xf]
      %v764 = vld [vmem:[#allocation2 + $0x1c] sm:$0xf]
      %v765 = vld [vmem:[#allocation2 + $0x24] sm:$0xf]
      %v766 = vld [vmem:[#allocation2 + $0x28] sm:$0xf]
      %v767 = vld [vmem:[#allocation2 + $0x30] sm:$0xf]
      %v768 = vld [vmem:[#allocation2 + $0x34] sm:$0xf]
      %v769 = vld [vmem:[#allocation2 + $0x3c] sm:$0xf]
      %v770 = vld [vmem:[#allocation2 + $0x40] sm:$0xf]
      %v771 = vld [vmem:[#allocation2 + $0x48] sm:$0xf]
      %v772 = vld [vmem:[#allocation2 + $0x4c] sm:$0xf]
      %v773 = vld [vmem:[#allocation2 + $0x54] sm:$0xf]
      %v774 = vld [vmem:[#allocation2 + $0x58] sm:$0xf]
      %v775 = vld [vmem:[#allocation2 + $0x60] sm:$0xf]
      %v776 = vld [vmem:[#allocation2 + $0x64] sm:$0xf]
      %v777 = vld [vmem:[#allocation2 + $0x6c] sm:$0xf]
      %v778 = vld [vmem:[#allocation2 + $0x70] sm:$0xf]
      %v779 = vld [vmem:[#allocation2 + $0x78] sm:$0xf]
      %v780 = vld [vmem:[#allocation2 + $0x7c] sm:$0xf]
      %v781 = vld [vmem:[#allocation2 + $0x84] sm:$0xf]
      %v782 = vld [vmem:[#allocation2 + $0x88] sm:$0xf]
      %v783 = vld [vmem:[#allocation2 + $0x90] sm:$0xf]
      %v784 = vld [vmem:[#allocation2 + $0x94] sm:$0xf]
      %v785 = vld [vmem:[#allocation2 + $0x9c] sm:$0xf]
      %v786 = vld [vmem:[#allocation2 + $0xa0] sm:$0xf]
      %v787 = vld [vmem:[#allocation2 + $0xa8] sm:$0xf]
      %v788 = vld [vmem:[#allocation2 + $0xac] sm:$0xf]
      %v789 = vld [vmem:[#allocation2 + $0xb4] sm:$0xf]
      %v790 = vld [vmem:[#allocation2 + $0xb8] sm:$0xf]
      %v823 = vunpack.c.l.b16 %v759
      %v824 = vunpack.c.l.b16 %v760
      %v825 = vunpack.c.l.b16 %v761
      %v826 = vunpack.c.l.b16 %v762
      %v827 = vunpack.c.l.b16 %v763
      %v828 = vunpack.c.l.b16 %v764
      %v829 = vunpack.c.l.b16 %v765
      %v830 = vunpack.c.l.b16 %v766
      %v831 = vunpack.c.l.b16 %v767
      %v832 = vunpack.c.l.b16 %v768
      %v833 = vunpack.c.l.b16 %v769
      %v834 = vunpack.c.l.b16 %v770
      %v835 = vunpack.c.l.b16 %v771
      %v836 = vunpack.c.l.b16 %v772
      %v837 = vunpack.c.l.b16 %v773
      %v838 = vunpack.c.l.b16 %v774
      %v839 = vunpack.c.l.b16 %v775
      %v840 = vunpack.c.l.b16 %v776
      %v841 = vunpack.c.l.b16 %v777
      %v842 = vunpack.c.l.b16 %v778
      %v843 = vunpack.c.l.b16 %v779
      %v844 = vunpack.c.l.b16 %v780
      %v845 = vunpack.c.l.b16 %v781
      %v846 = vunpack.c.l.b16 %v782
      %v847 = vunpack.c.l.b16 %v783
      %v848 = vunpack.c.l.b16 %v784
      %v849 = vunpack.c.l.b16 %v785
      %v850 = vunpack.c.l.b16 %v786
      %v851 = vunpack.c.l.b16 %v787
      %v852 = vunpack.c.l.b16 %v788
      %v853 = vunpack.c.l.b16 %v789
      %v854 = vunpack.c.l.b16 %v790
      %v855 = vpack.c.b16 %v824, %v823
      %v856 = vpack.c.b16 %v826, %v825
      %v857 = vpack.c.b16 %v828, %v827
      %v858 = vpack.c.b16 %v830, %v829
      %v859 = vpack.c.b16 %v832, %v831
      %v860 = vpack.c.b16 %v834, %v833
      %v861 = vpack.c.b16 %v836, %v835
      %v862 = vpack.c.b16 %v838, %v837
      %v863 = vpack.c.b16 %v840, %v839
      %v864 = vpack.c.b16 %v842, %v841
      %v865 = vpack.c.b16 %v844, %v843
      %v866 = vpack.c.b16 %v846, %v845
      %v867 = vpack.c.b16 %v848, %v847
      %v868 = vpack.c.b16 %v850, %v849
      %v869 = vpack.c.b16 %v852, %v851
      %v870 = vpack.c.b16 %v854, %v853
      %887 = vst [vmem:[#allocation3] sm:$0xff] %v855
      %888 = vst [vmem:[#allocation3 + $0x48] sm:$0xff] %v856
      %889 = vst [vmem:[#allocation3 + $0x90] sm:$0xff] %v857
      %890 = vst [vmem:[#allocation3 + $0xd8] sm:$0xff] %v858
      %891 = vst [vmem:[#allocation3 + $0x120] sm:$0xff] %v859
      %892 = vst [vmem:[#allocation3 + $0x168] sm:$0xff] %v860
      %893 = vst [vmem:[#allocation3 + $0x1b0] sm:$0xff] %v861
      %894 = vst [vmem:[#allocation3 + $0x1f8] sm:$0xff] %v862
      %895 = vst [vmem:[#allocation3 + $0x240] sm:$0xff] %v863
      %896 = vst [vmem:[#allocation3 + $0x288] sm:$0xff] %v864
      %897 = vst [vmem:[#allocation3 + $0x2d0] sm:$0xff] %v865
      %898 = vst [vmem:[#allocation3 + $0x318] sm:$0xff] %v866
      %899 = vst [vmem:[#allocation3 + $0x360] sm:$0xff] %v867
      %900 = vst [vmem:[#allocation3 + $0x3a8] sm:$0xff] %v868
      %901 = vst [vmem:[#allocation3 + $0x3f0] sm:$0xff] %v869
      %902 = vst [vmem:[#allocation3 + $0x438] sm:$0xff] %v870
      %v903 = vld [vmem:[#allocation2] sm:$0xf]
      %v904 = vld [vmem:[#allocation2 + $0x4] sm:$0xf]
      %v905 = vld [vmem:[#allocation2 + $0x8] sm:$0x1]
      %v906 = vld [vmem:[#allocation2 + $0xc] sm:$0xf]
      %v907 = vld [vmem:[#allocation2 + $0x10] sm:$0xf]
      %v908 = vld [vmem:[#allocation2 + $0x14] sm:$0x1]
      %v909 = vld [vmem:[#allocation2 + $0x18] sm:$0xf]
      %v910 = vld [vmem:[#allocation2 + $0x1c] sm:$0xf]
      %v911 = vld [vmem:[#allocation2 + $0x20] sm:$0x1]
      %v912 = vld [vmem:[#allocation2 + $0x24] sm:$0xf]
      %v913 = vld [vmem:[#allocation2 + $0x28] sm:$0xf]
      %v914 = vld [vmem:[#allocation2 + $0x2c] sm:$0x1]
      %v915 = vld [vmem:[#allocation2 + $0x30] sm:$0xf]
      %v916 = vld [vmem:[#allocation2 + $0x34] sm:$0xf]
      %v917 = vld [vmem:[#allocation2 + $0x38] sm:$0x1]
      %v918 = vld [vmem:[#allocation2 + $0x3c] sm:$0xf]
      %v919 = vld [vmem:[#allocation2 + $0x40] sm:$0xf]
      %v920 = vld [vmem:[#allocation2 + $0x44] sm:$0x1]
      %v921 = vld [vmem:[#allocation2 + $0x48] sm:$0xf]
      %v922 = vld [vmem:[#allocation2 + $0x4c] sm:$0xf]
      %v923 = vld [vmem:[#allocation2 + $0x50] sm:$0x1]
      %v924 = vld [vmem:[#allocation2 + $0x54] sm:$0xf]
      %v925 = vld [vmem:[#allocation2 + $0x58] sm:$0xf]
      %v926 = vld [vmem:[#allocation2 + $0x5c] sm:$0x1]
      %v927 = vld [vmem:[#allocation2 + $0x60] sm:$0xf]
      %v928 = vld [vmem:[#allocation2 + $0x64] sm:$0xf]
      %v929 = vld [vmem:[#allocation2 + $0x68] sm:$0x1]
      %v930 = vld [vmem:[#allocation2 + $0x6c] sm:$0xf]
      %v931 = vld [vmem:[#allocation2 + $0x70] sm:$0xf]
      %v932 = vld [vmem:[#allocation2 + $0x74] sm:$0x1]
      %v933 = vld [vmem:[#allocation2 + $0x78] sm:$0xf]
      %v934 = vld [vmem:[#allocation2 + $0x7c] sm:$0xf]
      %v935 = vld [vmem:[#allocation2 + $0x80] sm:$0x1]
      %v936 = vld [vmem:[#allocation2 + $0x84] sm:$0xf]
      %v937 = vld [vmem:[#allocation2 + $0x88] sm:$0xf]
      %v938 = vld [vmem:[#allocation2 + $0x8c] sm:$0x1]
      %v939 = vld [vmem:[#allocation2 + $0x90] sm:$0xf]
      %v940 = vld [vmem:[#allocation2 + $0x94] sm:$0xf]
      %v941 = vld [vmem:[#allocation2 + $0x98] sm:$0x1]
      %v942 = vld [vmem:[#allocation2 + $0x9c] sm:$0xf]
      %v943 = vld [vmem:[#allocation2 + $0xa0] sm:$0xf]
      %v944 = vld [vmem:[#allocation2 + $0xa4] sm:$0x1]
      %v945 = vld [vmem:[#allocation2 + $0xa8] sm:$0xf]
      %v946 = vld [vmem:[#allocation2 + $0xac] sm:$0xf]
      %v947 = vld [vmem:[#allocation2 + $0xb0] sm:$0x1]
      %v948 = vld [vmem:[#allocation2 + $0xb4] sm:$0xf]
      %v949 = vld [vmem:[#allocation2 + $0xb8] sm:$0xf]
      %v950 = vld [vmem:[#allocation2 + $0xbc] sm:$0x1]
      %vm951 = vsmask.f32 3328
      %vm952 = vsmask.f32 7440
      %vm953 = vmor %vm951, %vm952
      %v955 = vshrl.u32 %v903, 16
      %v957 = vrot.slane %v955, 4
      %v958 = vshll.u32 %v903, 16
      %v960 = vrot.slane %v958, 5
      %v961 = vor.u32 %v957, %v960
      %v962 = vrot.slane %v961, 4
      %v964 = vshll.u32 %v904, 16
      %v966 = vrot.slane %v964, 5
      %v967 = vsel %vm953, %v962, %v966
      %v968 = vshrl.u32 %v904, 16
      %v970 = vrot.slane %v968, 4
      %v971 = vor.u32 %v970, %v966
      %v972 = vrot.slane %v971, 4
      %v974 = vshll.u32 %v905, 16
      %v976 = vrot.slane %v974, 5
      %v977 = vsel %vm953, %v972, %v976
      %v979 = vshrl.u32 %v906, 16
      %v981 = vrot.slane %v979, 4
      %v982 = vshll.u32 %v906, 16
      %v984 = vrot.slane %v982, 5
      %v985 = vor.u32 %v981, %v984
      %v986 = vrot.slane %v985, 4
      %v988 = vshll.u32 %v907, 16
      %v990 = vrot.slane %v988, 5
      %v991 = vsel %vm953, %v986, %v990
      %v992 = vshrl.u32 %v907, 16
      %v994 = vrot.slane %v992, 4
      %v995 = vor.u32 %v994, %v990
      %v996 = vrot.slane %v995, 4
      %v998 = vshll.u32 %v908, 16
      %v1000 = vrot.slane %v998, 5
      %v1001 = vsel %vm953, %v996, %v1000
      %v1003 = vshrl.u32 %v909, 16
      %v1005 = vrot.slane %v1003, 4
      %v1006 = vshll.u32 %v909, 16
      %v1008 = vrot.slane %v1006, 5
      %v1009 = vor.u32 %v1005, %v1008
      %v1010 = vrot.slane %v1009, 4
      %v1012 = vshll.u32 %v910, 16
      %v1014 = vrot.slane %v1012, 5
      %v1015 = vsel %vm953, %v1010, %v1014
      %v1016 = vshrl.u32 %v910, 16
      %v1018 = vrot.slane %v1016, 4
      %v1019 = vor.u32 %v1018, %v1014
      %v1020 = vrot.slane %v1019, 4
      %v1022 = vshll.u32 %v911, 16
      %v1024 = vrot.slane %v1022, 5
      %v1025 = vsel %vm953, %v1020, %v1024
      %v1027 = vshrl.u32 %v912, 16
      %v1029 = vrot.slane %v1027, 4
      %v1030 = vshll.u32 %v912, 16
      %v1032 = vrot.slane %v1030, 5
      %v1033 = vor.u32 %v1029, %v1032
      %v1034 = vrot.slane %v1033, 4
      %v1036 = vshll.u32 %v913, 16
      %v1038 = vrot.slane %v1036, 5
      %v1039 = vsel %vm953, %v1034, %v1038
      %v1040 = vshrl.u32 %v913, 16
      %v1042 = vrot.slane %v1040, 4
      %v1043 = vor.u32 %v1042, %v1038
      %v1044 = vrot.slane %v1043, 4
      %v1046 = vshll.u32 %v914, 16
      %v1048 = vrot.slane %v1046, 5
      %v1049 = vsel %vm953, %v1044, %v1048
      %v1051 = vshrl.u32 %v915, 16
      %v1053 = vrot.slane %v1051, 4
      %v1054 = vshll.u32 %v915, 16
      %v1056 = vrot.slane %v1054, 5
      %v1057 = vor.u32 %v1053, %v1056
      %v1058 = vrot.slane %v1057, 4
      %v1060 = vshll.u32 %v916, 16
      %v1062 = vrot.slane %v1060, 5
      %v1063 = vsel %vm953, %v1058, %v1062
      %v1064 = vshrl.u32 %v916, 16
      %v1066 = vrot.slane %v1064, 4
      %v1067 = vor.u32 %v1066, %v1062
      %v1068 = vrot.slane %v1067, 4
      %v1070 = vshll.u32 %v917, 16
      %v1072 = vrot.slane %v1070, 5
      %v1073 = vsel %vm953, %v1068, %v1072
      %v1075 = vshrl.u32 %v918, 16
      %v1077 = vrot.slane %v1075, 4
      %v1078 = vshll.u32 %v918, 16
      %v1080 = vrot.slane %v1078, 5
      %v1081 = vor.u32 %v1077, %v1080
      %v1082 = vrot.slane %v1081, 4
      %v1084 = vshll.u32 %v919, 16
      %v1086 = vrot.slane %v1084, 5
      %v1087 = vsel %vm953, %v1082, %v1086
      %v1088 = vshrl.u32 %v919, 16
      %v1090 = vrot.slane %v1088, 4
      %v1091 = vor.u32 %v1090, %v1086
      %v1092 = vrot.slane %v1091, 4
      %v1094 = vshll.u32 %v920, 16
      %v1096 = vrot.slane %v1094, 5
      %v1097 = vsel %vm953, %v1092, %v1096
      %v1099 = vshrl.u32 %v921, 16
      %v1101 = vrot.slane %v1099, 4
      %v1102 = vshll.u32 %v921, 16
      %v1104 = vrot.slane %v1102, 5
      %v1105 = vor.u32 %v1101, %v1104
      %v1106 = vrot.slane %v1105, 4
      %v1108 = vshll.u32 %v922, 16
      %v1110 = vrot.slane %v1108, 5
      %v1111 = vsel %vm953, %v1106, %v1110
      %v1112 = vshrl.u32 %v922, 16
      %v1114 = vrot.slane %v1112, 4
      %v1115 = vor.u32 %v1114, %v1110
      %v1116 = vrot.slane %v1115, 4
      %v1118 = vshll.u32 %v923, 16
      %v1120 = vrot.slane %v1118, 5
      %v1121 = vsel %vm953, %v1116, %v1120
      %v1123 = vshrl.u32 %v924, 16
      %v1125 = vrot.slane %v1123, 4
      %v1126 = vshll.u32 %v924, 16
      %v1128 = vrot.slane %v1126, 5
      %v1129 = vor.u32 %v1125, %v1128
      %v1130 = vrot.slane %v1129, 4
      %v1132 = vshll.u32 %v925, 16
      %v1134 = vrot.slane %v1132, 5
      %v1135 = vsel %vm953, %v1130, %v1134
      %v1136 = vshrl.u32 %v925, 16
      %v1138 = vrot.slane %v1136, 4
      %v1139 = vor.u32 %v1138, %v1134
      %v1140 = vrot.slane %v1139, 4
      %v1142 = vshll.u32 %v926, 16
      %v1144 = vrot.slane %v1142, 5
      %v1145 = vsel %vm953, %v1140, %v1144
      %v1147 = vshrl.u32 %v927, 16
      %v1149 = vrot.slane %v1147, 4
      %v1150 = vshll.u32 %v927, 16
      %v1152 = vrot.slane %v1150, 5
      %v1153 = vor.u32 %v1149, %v1152
      %v1154 = vrot.slane %v1153, 4
      %v1156 = vshll.u32 %v928, 16
      %v1158 = vrot.slane %v1156, 5
      %v1159 = vsel %vm953, %v1154, %v1158
      %v1160 = vshrl.u32 %v928, 16
      %v1162 = vrot.slane %v1160, 4
      %v1163 = vor.u32 %v1162, %v1158
      %v1164 = vrot.slane %v1163, 4
      %v1166 = vshll.u32 %v929, 16
      %v1168 = vrot.slane %v1166, 5
      %v1169 = vsel %vm953, %v1164, %v1168
      %v1171 = vshrl.u32 %v930, 16
      %v1173 = vrot.slane %v1171, 4
      %v1174 = vshll.u32 %v930, 16
      %v1176 = vrot.slane %v1174, 5
      %v1177 = vor.u32 %v1173, %v1176
      %v1178 = vrot.slane %v1177, 4
      %v1180 = vshll.u32 %v931, 16
      %v1182 = vrot.slane %v1180, 5
      %v1183 = vsel %vm953, %v1178, %v1182
      %v1184 = vshrl.u32 %v931, 16
      %v1186 = vrot.slane %v1184, 4
      %v1187 = vor.u32 %v1186, %v1182
      %v1188 = vrot.slane %v1187, 4
      %v1190 = vshll.u32 %v932, 16
      %v1192 = vrot.slane %v1190, 5
      %v1193 = vsel %vm953, %v1188, %v1192
      %v1195 = vshrl.u32 %v933, 16
      %v1197 = vrot.slane %v1195, 4
      %v1198 = vshll.u32 %v933, 16
      %v1200 = vrot.slane %v1198, 5
      %v1201 = vor.u32 %v1197, %v1200
      %v1202 = vrot.slane %v1201, 4
      %v1204 = vshll.u32 %v934, 16
      %v1206 = vrot.slane %v1204, 5
      %v1207 = vsel %vm953, %v1202, %v1206
      %v1208 = vshrl.u32 %v934, 16
      %v1210 = vrot.slane %v1208, 4
      %v1211 = vor.u32 %v1210, %v1206
      %v1212 = vrot.slane %v1211, 4
      %v1214 = vshll.u32 %v935, 16
      %v1216 = vrot.slane %v1214, 5
      %v1217 = vsel %vm953, %v1212, %v1216
      %v1219 = vshrl.u32 %v936, 16
      %v1221 = vrot.slane %v1219, 4
      %v1222 = vshll.u32 %v936, 16
      %v1224 = vrot.slane %v1222, 5
      %v1225 = vor.u32 %v1221, %v1224
      %v1226 = vrot.slane %v1225, 4
      %v1228 = vshll.u32 %v937, 16
      %v1230 = vrot.slane %v1228, 5
      %v1231 = vsel %vm953, %v1226, %v1230
      %v1232 = vshrl.u32 %v937, 16
      %v1234 = vrot.slane %v1232, 4
      %v1235 = vor.u32 %v1234, %v1230
      %v1236 = vrot.slane %v1235, 4
      %v1238 = vshll.u32 %v938, 16
      %v1240 = vrot.slane %v1238, 5
      %v1241 = vsel %vm953, %v1236, %v1240
      %v1243 = vshrl.u32 %v939, 16
      %v1245 = vrot.slane %v1243, 4
      %v1246 = vshll.u32 %v939, 16
      %v1248 = vrot.slane %v1246, 5
      %v1249 = vor.u32 %v1245, %v1248
      %v1250 = vrot.slane %v1249, 4
      %v1252 = vshll.u32 %v940, 16
      %v1254 = vrot.slane %v1252, 5
      %v1255 = vsel %vm953, %v1250, %v1254
      %v1256 = vshrl.u32 %v940, 16
      %v1258 = vrot.slane %v1256, 4
      %v1259 = vor.u32 %v1258, %v1254
      %v1260 = vrot.slane %v1259, 4
      %v1262 = vshll.u32 %v941, 16
      %v1264 = vrot.slane %v1262, 5
      %v1265 = vsel %vm953, %v1260, %v1264
      %v1267 = vshrl.u32 %v942, 16
      %v1269 = vrot.slane %v1267, 4
      %v1270 = vshll.u32 %v942, 16
      %v1272 = vrot.slane %v1270, 5
      %v1273 = vor.u32 %v1269, %v1272
      %v1274 = vrot.slane %v1273, 4
      %v1276 = vshll.u32 %v943, 16
      %v1278 = vrot.slane %v1276, 5
      %v1279 = vsel %vm953, %v1274, %v1278
      %v1280 = vshrl.u32 %v943, 16
      %v1282 = vrot.slane %v1280, 4
      %v1283 = vor.u32 %v1282, %v1278
      %v1284 = vrot.slane %v1283, 4
      %v1286 = vshll.u32 %v944, 16
      %v1288 = vrot.slane %v1286, 5
      %v1289 = vsel %vm953, %v1284, %v1288
      %v1291 = vshrl.u32 %v945, 16
      %v1293 = vrot.slane %v1291, 4
      %v1294 = vshll.u32 %v945, 16
      %v1296 = vrot.slane %v1294, 5
      %v1297 = vor.u32 %v1293, %v1296
      %v1298 = vrot.slane %v1297, 4
      %v1300 = vshll.u32 %v946, 16
      %v1302 = vrot.slane %v1300, 5
      %v1303 = vsel %vm953, %v1298, %v1302
      %v1304 = vshrl.u32 %v946, 16
      %v1306 = vrot.slane %v1304, 4
      %v1307 = vor.u32 %v1306, %v1302
      %v1308 = vrot.slane %v1307, 4
      %v1310 = vshll.u32 %v947, 16
      %v1312 = vrot.slane %v1310, 5
      %v1313 = vsel %vm953, %v1308, %v1312
      %v1315 = vshrl.u32 %v948, 16
      %v1317 = vrot.slane %v1315, 4
      %v1318 = vshll.u32 %v948, 16
      %v1320 = vrot.slane %v1318, 5
      %v1321 = vor.u32 %v1317, %v1320
      %v1322 = vrot.slane %v1321, 4
      %v1324 = vshll.u32 %v949, 16
      %v1326 = vrot.slane %v1324, 5
      %v1327 = vsel %vm953, %v1322, %v1326
      %v1328 = vshrl.u32 %v949, 16
      %v1330 = vrot.slane %v1328, 4
      %v1331 = vor.u32 %v1330, %v1326
      %v1332 = vrot.slane %v1331, 4
      %v1334 = vshll.u32 %v950, 16
      %v1336 = vrot.slane %v1334, 5
      %v1337 = vsel %vm953, %v1332, %v1336
      %v1338 = vunpack.c.l.b16 %v967
      %v1339 = vunpack.c.l.b16 %v977
      %v1340 = vunpack.c.l.b16 %v991
      %v1341 = vunpack.c.l.b16 %v1001
      %v1342 = vunpack.c.l.b16 %v1015
      %v1343 = vunpack.c.l.b16 %v1025
      %v1344 = vunpack.c.l.b16 %v1039
      %v1345 = vunpack.c.l.b16 %v1049
      %v1346 = vunpack.c.l.b16 %v1063
      %v1347 = vunpack.c.l.b16 %v1073
      %v1348 = vunpack.c.l.b16 %v1087
      %v1349 = vunpack.c.l.b16 %v1097
      %v1350 = vunpack.c.l.b16 %v1111
      %v1351 = vunpack.c.l.b16 %v1121
      %v1352 = vunpack.c.l.b16 %v1135
      %v1353 = vunpack.c.l.b16 %v1145
      %v1354 = vunpack.c.l.b16 %v1159
      %v1355 = vunpack.c.l.b16 %v1169
      %v1356 = vunpack.c.l.b16 %v1183
      %v1357 = vunpack.c.l.b16 %v1193
      %v1358 = vunpack.c.l.b16 %v1207
      %v1359 = vunpack.c.l.b16 %v1217
      %v1360 = vunpack.c.l.b16 %v1231
      %v1361 = vunpack.c.l.b16 %v1241
      %v1362 = vunpack.c.l.b16 %v1255
      %v1363 = vunpack.c.l.b16 %v1265
      %v1364 = vunpack.c.l.b16 %v1279
      %v1365 = vunpack.c.l.b16 %v1289
      %v1366 = vunpack.c.l.b16 %v1303
      %v1367 = vunpack.c.l.b16 %v1313
      %v1368 = vunpack.c.l.b16 %v1327
      %v1369 = vunpack.c.l.b16 %v1337
      %v1370 = vpack.c.b16 %v1339, %v1338
      %v1371 = vpack.c.b16 %v1341, %v1340
      %v1372 = vpack.c.b16 %v1343, %v1342
      %v1373 = vpack.c.b16 %v1345, %v1344
      %v1374 = vpack.c.b16 %v1347, %v1346
      %v1375 = vpack.c.b16 %v1349, %v1348
      %v1376 = vpack.c.b16 %v1351, %v1350
      %v1377 = vpack.c.b16 %v1353, %v1352
      %v1378 = vpack.c.b16 %v1355, %v1354
      %v1379 = vpack.c.b16 %v1357, %v1356
      %v1380 = vpack.c.b16 %v1359, %v1358
      %v1381 = vpack.c.b16 %v1361, %v1360
      %v1382 = vpack.c.b16 %v1363, %v1362
      %v1383 = vpack.c.b16 %v1365, %v1364
      %v1384 = vpack.c.b16 %v1367, %v1366
      %v1385 = vpack.c.b16 %v1369, %v1368
      %1402 = vst [vmem:[#allocation3 + $0x8] sm:$0xff] %v1370
      %1403 = vst [vmem:[#allocation3 + $0x50] sm:$0xff] %v1371
      %1404 = vst [vmem:[#allocation3 + $0x98] sm:$0xff] %v1372
      %1405 = vst [vmem:[#allocation3 + $0xe0] sm:$0xff] %v1373
      %1406 = vst [vmem:[#allocation3 + $0x128] sm:$0xff] %v1374
      %1407 = vst [vmem:[#allocation3 + $0x170] sm:$0xff] %v1375
      %1408 = vst [vmem:[#allocation3 + $0x1b8] sm:$0xff] %v1376
      %1409 = vst [vmem:[#allocation3 + $0x200] sm:$0xff] %v1377
      %1410 = vst [vmem:[#allocation3 + $0x248] sm:$0xff] %v1378
      %1411 = vst [vmem:[#allocation3 + $0x290] sm:$0xff] %v1379
      %1412 = vst [vmem:[#allocation3 + $0x2d8] sm:$0xff] %v1380
      %1413 = vst [vmem:[#allocation3 + $0x320] sm:$0xff] %v1381
      %1414 = vst [vmem:[#allocation3 + $0x368] sm:$0xff] %v1382
      %1415 = vst [vmem:[#allocation3 + $0x3b0] sm:$0xff] %v1383
      %1416 = vst [vmem:[#allocation3 + $0x3f8] sm:$0xff] %v1384
      %1417 = vst [vmem:[#allocation3 + $0x440] sm:$0xff] %v1385
      %v1418 = vld [vmem:[#allocation2] sm:$0xe]
      %v1419 = vld [vmem:[#allocation2 + $0x4] sm:$0xf]
      %v1420 = vld [vmem:[#allocation2 + $0x8] sm:$0x1]
      %v1421 = vld [vmem:[#allocation2 + $0xc] sm:$0xe]
      %v1422 = vld [vmem:[#allocation2 + $0x10] sm:$0xf]
      %v1423 = vld [vmem:[#allocation2 + $0x14] sm:$0x1]
      %v1424 = vld [vmem:[#allocation2 + $0x18] sm:$0xe]
      %v1425 = vld [vmem:[#allocation2 + $0x1c] sm:$0xf]
      %v1426 = vld [vmem:[#allocation2 + $0x20] sm:$0x1]
      %v1427 = vld [vmem:[#allocation2 + $0x24] sm:$0xe]
      %v1428 = vld [vmem:[#allocation2 + $0x28] sm:$0xf]
      %v1429 = vld [vmem:[#allocation2 + $0x2c] sm:$0x1]
      %v1430 = vld [vmem:[#allocation2 + $0x30] sm:$0xe]
      %v1431 = vld [vmem:[#allocation2 + $0x34] sm:$0xf]
      %v1432 = vld [vmem:[#allocation2 + $0x38] sm:$0x1]
      %v1433 = vld [vmem:[#allocation2 + $0x3c] sm:$0xe]
      %v1434 = vld [vmem:[#allocation2 + $0x40] sm:$0xf]
      %v1435 = vld [vmem:[#allocation2 + $0x44] sm:$0x1]
      %v1436 = vld [vmem:[#allocation2 + $0x48] sm:$0xe]
      %v1437 = vld [vmem:[#allocation2 + $0x4c] sm:$0xf]
      %v1438 = vld [vmem:[#allocation2 + $0x50] sm:$0x1]
      %v1439 = vld [vmem:[#allocation2 + $0x54] sm:$0xe]
      %v1440 = vld [vmem:[#allocation2 + $0x58] sm:$0xf]
      %v1441 = vld [vmem:[#allocation2 + $0x5c] sm:$0x1]
      %v1442 = vld [vmem:[#allocation2 + $0x60] sm:$0xe]
      %v1443 = vld [vmem:[#allocation2 + $0x64] sm:$0xf]
      %v1444 = vld [vmem:[#allocation2 + $0x68] sm:$0x1]
      %v1445 = vld [vmem:[#allocation2 + $0x6c] sm:$0xe]
      %v1446 = vld [vmem:[#allocation2 + $0x70] sm:$0xf]
      %v1447 = vld [vmem:[#allocation2 + $0x74] sm:$0x1]
      %v1448 = vld [vmem:[#allocation2 + $0x78] sm:$0xe]
      %v1449 = vld [vmem:[#allocation2 + $0x7c] sm:$0xf]
      %v1450 = vld [vmem:[#allocation2 + $0x80] sm:$0x1]
      %v1451 = vld [vmem:[#allocation2 + $0x84] sm:$0xe]
      %v1452 = vld [vmem:[#allocation2 + $0x88] sm:$0xf]
      %v1453 = vld [vmem:[#allocation2 + $0x8c] sm:$0x1]
      %v1454 = vld [vmem:[#allocation2 + $0x90] sm:$0xe]
      %v1455 = vld [vmem:[#allocation2 + $0x94] sm:$0xf]
      %v1456 = vld [vmem:[#allocation2 + $0x98] sm:$0x1]
      %v1457 = vld [vmem:[#allocation2 + $0x9c] sm:$0xe]
      %v1458 = vld [vmem:[#allocation2 + $0xa0] sm:$0xf]
      %v1459 = vld [vmem:[#allocation2 + $0xa4] sm:$0x1]
      %v1460 = vld [vmem:[#allocation2 + $0xa8] sm:$0xe]
      %v1461 = vld [vmem:[#allocation2 + $0xac] sm:$0xf]
      %v1462 = vld [vmem:[#allocation2 + $0xb0] sm:$0x1]
      %v1463 = vld [vmem:[#allocation2 + $0xb4] sm:$0xe]
      %v1464 = vld [vmem:[#allocation2 + $0xb8] sm:$0xf]
      %v1465 = vld [vmem:[#allocation2 + $0xbc] sm:$0x1]
      %vm1514 = vcmask 1042432
      %vm1515 = vcmask 1046532
      %vm1516 = vmor %vm1514, %vm1515
      %v1517 = vrot.slane %v1418, 5
      %v1518 = vrot.slane %v1517, 4
      %v1519 = vrot.slane %v1419, 5
      %v1520 = vsel %vm1516, %v1518, %v1519
      %v1521 = vrot.slane %v1519, 4
      %v1522 = vrot.slane %v1420, 5
      %v1523 = vsel %vm1516, %v1521, %v1522
      %v1524 = vrot.slane %v1421, 5
      %v1525 = vrot.slane %v1524, 4
      %v1526 = vrot.slane %v1422, 5
      %v1527 = vsel %vm1516, %v1525, %v1526
      %v1528 = vrot.slane %v1526, 4
      %v1529 = vrot.slane %v1423, 5
      %v1530 = vsel %vm1516, %v1528, %v1529
      %v1531 = vrot.slane %v1424, 5
      %v1532 = vrot.slane %v1531, 4
      %v1533 = vrot.slane %v1425, 5
      %v1534 = vsel %vm1516, %v1532, %v1533
      %v1535 = vrot.slane %v1533, 4
      %v1536 = vrot.slane %v1426, 5
      %v1537 = vsel %vm1516, %v1535, %v1536
      %v1538 = vrot.slane %v1427, 5
      %v1539 = vrot.slane %v1538, 4
      %v1540 = vrot.slane %v1428, 5
      %v1541 = vsel %vm1516, %v1539, %v1540
      %v1542 = vrot.slane %v1540, 4
      %v1543 = vrot.slane %v1429, 5
      %v1544 = vsel %vm1516, %v1542, %v1543
      %v1545 = vrot.slane %v1430, 5
      %v1546 = vrot.slane %v1545, 4
      %v1547 = vrot.slane %v1431, 5
      %v1548 = vsel %vm1516, %v1546, %v1547
      %v1549 = vrot.slane %v1547, 4
      %v1550 = vrot.slane %v1432, 5
      %v1551 = vsel %vm1516, %v1549, %v1550
      %v1552 = vrot.slane %v1433, 5
      %v1553 = vrot.slane %v1552, 4
      %v1554 = vrot.slane %v1434, 5
      %v1555 = vsel %vm1516, %v1553, %v1554
      %v1556 = vrot.slane %v1554, 4
      %v1557 = vrot.slane %v1435, 5
      %v1558 = vsel %vm1516, %v1556, %v1557
      %v1559 = vrot.slane %v1436, 5
      %v1560 = vrot.slane %v1559, 4
      %v1561 = vrot.slane %v1437, 5
      %v1562 = vsel %vm1516, %v1560, %v1561
      %v1563 = vrot.slane %v1561, 4
      %v1564 = vrot.slane %v1438, 5
      %v1565 = vsel %vm1516, %v1563, %v1564
      %v1566 = vrot.slane %v1439, 5
      %v1567 = vrot.slane %v1566, 4
      %v1568 = vrot.slane %v1440, 5
      %v1569 = vsel %vm1516, %v1567, %v1568
      %v1570 = vrot.slane %v1568, 4
      %v1571 = vrot.slane %v1441, 5
      %v1572 = vsel %vm1516, %v1570, %v1571
      %v1573 = vrot.slane %v1442, 5
      %v1574 = vrot.slane %v1573, 4
      %v1575 = vrot.slane %v1443, 5
      %v1576 = vsel %vm1516, %v1574, %v1575
      %v1577 = vrot.slane %v1575, 4
      %v1578 = vrot.slane %v1444, 5
      %v1579 = vsel %vm1516, %v1577, %v1578
      %v1580 = vrot.slane %v1445, 5
      %v1581 = vrot.slane %v1580, 4
      %v1582 = vrot.slane %v1446, 5
      %v1583 = vsel %vm1516, %v1581, %v1582
      %v1584 = vrot.slane %v1582, 4
      %v1585 = vrot.slane %v1447, 5
      %v1586 = vsel %vm1516, %v1584, %v1585
      %v1587 = vrot.slane %v1448, 5
      %v1588 = vrot.slane %v1587, 4
      %v1589 = vrot.slane %v1449, 5
      %v1590 = vsel %vm1516, %v1588, %v1589
      %v1591 = vrot.slane %v1589, 4
      %v1592 = vrot.slane %v1450, 5
      %v1593 = vsel %vm1516, %v1591, %v1592
      %v1594 = vrot.slane %v1451, 5
      %v1595 = vrot.slane %v1594, 4
      %v1596 = vrot.slane %v1452, 5
      %v1597 = vsel %vm1516, %v1595, %v1596
      %v1598 = vrot.slane %v1596, 4
      %v1599 = vrot.slane %v1453, 5
      %v1600 = vsel %vm1516, %v1598, %v1599
      %v1601 = vrot.slane %v1454, 5
      %v1602 = vrot.slane %v1601, 4
      %v1603 = vrot.slane %v1455, 5
      %v1604 = vsel %vm1516, %v1602, %v1603
      %v1605 = vrot.slane %v1603, 4
      %v1606 = vrot.slane %v1456, 5
      %v1607 = vsel %vm1516, %v1605, %v1606
      %v1608 = vrot.slane %v1457, 5
      %v1609 = vrot.slane %v1608, 4
      %v1610 = vrot.slane %v1458, 5
      %v1611 = vsel %vm1516, %v1609, %v1610
      %v1612 = vrot.slane %v1610, 4
      %v1613 = vrot.slane %v1459, 5
      %v1614 = vsel %vm1516, %v1612, %v1613
      %v1615 = vrot.slane %v1460, 5
      %v1616 = vrot.slane %v1615, 4
      %v1617 = vrot.slane %v1461, 5
      %v1618 = vsel %vm1516, %v1616, %v1617
      %v1619 = vrot.slane %v1617, 4
      %v1620 = vrot.slane %v1462, 5
      %v1621 = vsel %vm1516, %v1619, %v1620
      %v1622 = vrot.slane %v1463, 5
      %v1623 = vrot.slane %v1622, 4
      %v1624 = vrot.slane %v1464, 5
      %v1625 = vsel %vm1516, %v1623, %v1624
      %v1626 = vrot.slane %v1624, 4
      %v1627 = vrot.slane %v1465, 5
      %v1628 = vsel %vm1516, %v1626, %v1627
      %v1629 = vunpack.c.l.b16 %v1520
      %v1630 = vunpack.c.l.b16 %v1523
      %v1631 = vunpack.c.l.b16 %v1527
      %v1632 = vunpack.c.l.b16 %v1530
      %v1633 = vunpack.c.l.b16 %v1534
      %v1634 = vunpack.c.l.b16 %v1537
      %v1635 = vunpack.c.l.b16 %v1541
      %v1636 = vunpack.c.l.b16 %v1544
      %v1637 = vunpack.c.l.b16 %v1548
      %v1638 = vunpack.c.l.b16 %v1551
      %v1639 = vunpack.c.l.b16 %v1555
      %v1640 = vunpack.c.l.b16 %v1558
      %v1641 = vunpack.c.l.b16 %v1562
      %v1642 = vunpack.c.l.b16 %v1565
      %v1643 = vunpack.c.l.b16 %v1569
      %v1644 = vunpack.c.l.b16 %v1572
      %v1645 = vunpack.c.l.b16 %v1576
      %v1646 = vunpack.c.l.b16 %v1579
      %v1647 = vunpack.c.l.b16 %v1583
      %v1648 = vunpack.c.l.b16 %v1586
      %v1649 = vunpack.c.l.b16 %v1590
      %v1650 = vunpack.c.l.b16 %v1593
      %v1651 = vunpack.c.l.b16 %v1597
      %v1652 = vunpack.c.l.b16 %v1600
      %v1653 = vunpack.c.l.b16 %v1604
      %v1654 = vunpack.c.l.b16 %v1607
      %v1655 = vunpack.c.l.b16 %v1611
      %v1656 = vunpack.c.l.b16 %v1614
      %v1657 = vunpack.c.l.b16 %v1618
      %v1658 = vunpack.c.l.b16 %v1621
      %v1659 = vunpack.c.l.b16 %v1625
      %v1660 = vunpack.c.l.b16 %v1628
      %v1661 = vpack.c.b16 %v1630, %v1629
      %v1662 = vpack.c.b16 %v1632, %v1631
      %v1663 = vpack.c.b16 %v1634, %v1633
      %v1664 = vpack.c.b16 %v1636, %v1635
      %v1665 = vpack.c.b16 %v1638, %v1637
      %v1666 = vpack.c.b16 %v1640, %v1639
      %v1667 = vpack.c.b16 %v1642, %v1641
      %v1668 = vpack.c.b16 %v1644, %v1643
      %v1669 = vpack.c.b16 %v1646, %v1645
      %v1670 = vpack.c.b16 %v1648, %v1647
      %v1671 = vpack.c.b16 %v1650, %v1649
      %v1672 = vpack.c.b16 %v1652, %v1651
      %v1673 = vpack.c.b16 %v1654, %v1653
      %v1674 = vpack.c.b16 %v1656, %v1655
      %v1675 = vpack.c.b16 %v1658, %v1657
      %v1676 = vpack.c.b16 %v1660, %v1659
      %1693 = vst [vmem:[#allocation3 + $0x10] sm:$0xff] %v1661
      %1694 = vst [vmem:[#allocation3 + $0x58] sm:$0xff] %v1662
      %1695 = vst [vmem:[#allocation3 + $0xa0] sm:$0xff] %v1663
      %1696 = vst [vmem:[#allocation3 + $0xe8] sm:$0xff] %v1664
      %1697 = vst [vmem:[#allocation3 + $0x130] sm:$0xff] %v1665
      %1698 = vst [vmem:[#allocation3 + $0x178] sm:$0xff] %v1666
      %1699 = vst [vmem:[#allocation3 + $0x1c0] sm:$0xff] %v1667
      %1700 = vst [vmem:[#allocation3 + $0x208] sm:$0xff] %v1668
      %1701 = vst [vmem:[#allocation3 + $0x250] sm:$0xff] %v1669
      %1702 = vst [vmem:[#allocation3 + $0x298] sm:$0xff] %v1670
      %1703 = vst [vmem:[#allocation3 + $0x2e0] sm:$0xff] %v1671
      %1704 = vst [vmem:[#allocation3 + $0x328] sm:$0xff] %v1672
      %1705 = vst [vmem:[#allocation3 + $0x370] sm:$0xff] %v1673
      %1706 = vst [vmem:[#allocation3 + $0x3b8] sm:$0xff] %v1674
      %1707 = vst [vmem:[#allocation3 + $0x400] sm:$0xff] %v1675
      %1708 = vst [vmem:[#allocation3 + $0x448] sm:$0xff] %v1676
      %v1709 = vld [vmem:[%s222] sm:$0xf]
      %v1710 = vld [vmem:[%s222 + $0x4] sm:$0xf]
      %v1711 = vld [vmem:[%s222 + $0xc] sm:$0xf]
      %v1712 = vld [vmem:[%s222 + $0x10] sm:$0xf]
      %v1713 = vld [vmem:[%s222 + $0x18] sm:$0xf]
      %v1714 = vld [vmem:[%s222 + $0x1c] sm:$0xf]
      %v1715 = vld [vmem:[%s222 + $0x24] sm:$0xf]
      %v1716 = vld [vmem:[%s222 + $0x28] sm:$0xf]
      %v1717 = vld [vmem:[%s222 + $0x30] sm:$0xf]
      %v1718 = vld [vmem:[%s222 + $0x34] sm:$0xf]
      %v1719 = vld [vmem:[%s222 + $0x3c] sm:$0xf]
      %v1720 = vld [vmem:[%s222 + $0x40] sm:$0xf]
      %v1721 = vld [vmem:[%s222 + $0x48] sm:$0xf]
      %v1722 = vld [vmem:[%s222 + $0x4c] sm:$0xf]
      %v1723 = vld [vmem:[%s222 + $0x54] sm:$0xf]
      %v1724 = vld [vmem:[%s222 + $0x58] sm:$0xf]
      %v1725 = vld [vmem:[%s222 + $0x60] sm:$0xf]
      %v1726 = vld [vmem:[%s222 + $0x64] sm:$0xf]
      %v1727 = vld [vmem:[%s222 + $0x6c] sm:$0xf]
      %v1728 = vld [vmem:[%s222 + $0x70] sm:$0xf]
      %v1729 = vld [vmem:[%s222 + $0x78] sm:$0xf]
      %v1730 = vld [vmem:[%s222 + $0x7c] sm:$0xf]
      %v1731 = vld [vmem:[%s222 + $0x84] sm:$0xf]
      %v1732 = vld [vmem:[%s222 + $0x88] sm:$0xf]
      %v1733 = vld [vmem:[%s222 + $0x90] sm:$0xf]
      %v1734 = vld [vmem:[%s222 + $0x94] sm:$0xf]
      %v1735 = vld [vmem:[%s222 + $0x9c] sm:$0xf]
      %v1736 = vld [vmem:[%s222 + $0xa0] sm:$0xf]
      %v1737 = vld [vmem:[%s222 + $0xa8] sm:$0xf]
      %v1738 = vld [vmem:[%s222 + $0xac] sm:$0xf]
      %v1739 = vld [vmem:[%s222 + $0xb4] sm:$0xf]
      %v1740 = vld [vmem:[%s222 + $0xb8] sm:$0xf]
      %v1773 = vunpack.c.l.b16 %v1709
      %v1774 = vunpack.c.l.b16 %v1710
      %v1775 = vunpack.c.l.b16 %v1711
      %v1776 = vunpack.c.l.b16 %v1712
      %v1777 = vunpack.c.l.b16 %v1713
      %v1778 = vunpack.c.l.b16 %v1714
      %v1779 = vunpack.c.l.b16 %v1715
      %v1780 = vunpack.c.l.b16 %v1716
      %v1781 = vunpack.c.l.b16 %v1717
      %v1782 = vunpack.c.l.b16 %v1718
      %v1783 = vunpack.c.l.b16 %v1719
      %v1784 = vunpack.c.l.b16 %v1720
      %v1785 = vunpack.c.l.b16 %v1721
      %v1786 = vunpack.c.l.b16 %v1722
      %v1787 = vunpack.c.l.b16 %v1723
      %v1788 = vunpack.c.l.b16 %v1724
      %v1789 = vunpack.c.l.b16 %v1725
      %v1790 = vunpack.c.l.b16 %v1726
      %v1791 = vunpack.c.l.b16 %v1727
      %v1792 = vunpack.c.l.b16 %v1728
      %v1793 = vunpack.c.l.b16 %v1729
      %v1794 = vunpack.c.l.b16 %v1730
      %v1795 = vunpack.c.l.b16 %v1731
      %v1796 = vunpack.c.l.b16 %v1732
      %v1797 = vunpack.c.l.b16 %v1733
      %v1798 = vunpack.c.l.b16 %v1734
      %v1799 = vunpack.c.l.b16 %v1735
      %v1800 = vunpack.c.l.b16 %v1736
      %v1801 = vunpack.c.l.b16 %v1737
      %v1802 = vunpack.c.l.b16 %v1738
      %v1803 = vunpack.c.l.b16 %v1739
      %v1804 = vunpack.c.l.b16 %v1740
      %v1805 = vpack.c.b16 %v1774, %v1773
      %v1806 = vpack.c.b16 %v1776, %v1775
      %v1807 = vpack.c.b16 %v1778, %v1777
      %v1808 = vpack.c.b16 %v1780, %v1779
      %v1809 = vpack.c.b16 %v1782, %v1781
      %v1810 = vpack.c.b16 %v1784, %v1783
      %v1811 = vpack.c.b16 %v1786, %v1785
      %v1812 = vpack.c.b16 %v1788, %v1787
      %v1813 = vpack.c.b16 %v1790, %v1789
      %v1814 = vpack.c.b16 %v1792, %v1791
      %v1815 = vpack.c.b16 %v1794, %v1793
      %v1816 = vpack.c.b16 %v1796, %v1795
      %v1817 = vpack.c.b16 %v1798, %v1797
      %v1818 = vpack.c.b16 %v1800, %v1799
      %v1819 = vpack.c.b16 %v1802, %v1801
      %v1820 = vpack.c.b16 %v1804, %v1803
      %1837 = vst [vmem:[#allocation3 + $0x18] sm:$0xff] %v1805
      %1838 = vst [vmem:[#allocation3 + $0x60] sm:$0xff] %v1806
      %1839 = vst [vmem:[#allocation3 + $0xa8] sm:$0xff] %v1807
      %1840 = vst [vmem:[#allocation3 + $0xf0] sm:$0xff] %v1808
      %1841 = vst [vmem:[#allocation3 + $0x138] sm:$0xff] %v1809
      %1842 = vst [vmem:[#allocation3 + $0x180] sm:$0xff] %v1810
      %1843 = vst [vmem:[#allocation3 + $0x1c8] sm:$0xff] %v1811
      %1844 = vst [vmem:[#allocation3 + $0x210] sm:$0xff] %v1812
      %1845 = vst [vmem:[#allocation3 + $0x258] sm:$0xff] %v1813
      %1846 = vst [vmem:[#allocation3 + $0x2a0] sm:$0xff] %v1814
      %1847 = vst [vmem:[#allocation3 + $0x2e8] sm:$0xff] %v1815
      %1848 = vst [vmem:[#allocation3 + $0x330] sm:$0xff] %v1816
      %1849 = vst [vmem:[#allocation3 + $0x378] sm:$0xff] %v1817
      %1850 = vst [vmem:[#allocation3 + $0x3c0] sm:$0xff] %v1818
      %1851 = vst [vmem:[#allocation3 + $0x408] sm:$0xff] %v1819
      %1852 = vst [vmem:[#allocation3 + $0x450] sm:$0xff] %v1820
      %v1853 = vld [vmem:[%s222] sm:$0xf]
      %v1854 = vld [vmem:[%s222 + $0x4] sm:$0xf]
      %v1855 = vld [vmem:[%s222 + $0x8] sm:$0x1]
      %v1856 = vld [vmem:[%s222 + $0xc] sm:$0xf]
      %v1857 = vld [vmem:[%s222 + $0x10] sm:$0xf]
      %v1858 = vld [vmem:[%s222 + $0x14] sm:$0x1]
      %v1859 = vld [vmem:[%s222 + $0x18] sm:$0xf]
      %v1860 = vld [vmem:[%s222 + $0x1c] sm:$0xf]
      %v1861 = vld [vmem:[%s222 + $0x20] sm:$0x1]
      %v1862 = vld [vmem:[%s222 + $0x24] sm:$0xf]
      %v1863 = vld [vmem:[%s222 + $0x28] sm:$0xf]
      %v1864 = vld [vmem:[%s222 + $0x2c] sm:$0x1]
      %v1865 = vld [vmem:[%s222 + $0x30] sm:$0xf]
      %v1866 = vld [vmem:[%s222 + $0x34] sm:$0xf]
      %v1867 = vld [vmem:[%s222 + $0x38] sm:$0x1]
      %v1868 = vld [vmem:[%s222 + $0x3c] sm:$0xf]
      %v1869 = vld [vmem:[%s222 + $0x40] sm:$0xf]
      %v1870 = vld [vmem:[%s222 + $0x44] sm:$0x1]
      %v1871 = vld [vmem:[%s222 + $0x48] sm:$0xf]
      %v1872 = vld [vmem:[%s222 + $0x4c] sm:$0xf]
      %v1873 = vld [vmem:[%s222 + $0x50] sm:$0x1]
      %v1874 = vld [vmem:[%s222 + $0x54] sm:$0xf]
      %v1875 = vld [vmem:[%s222 + $0x58] sm:$0xf]
      %v1876 = vld [vmem:[%s222 + $0x5c] sm:$0x1]
      %v1877 = vld [vmem:[%s222 + $0x60] sm:$0xf]
      %v1878 = vld [vmem:[%s222 + $0x64] sm:$0xf]
      %v1879 = vld [vmem:[%s222 + $0x68] sm:$0x1]
      %v1880 = vld [vmem:[%s222 + $0x6c] sm:$0xf]
      %v1881 = vld [vmem:[%s222 + $0x70] sm:$0xf]
      %v1882 = vld [vmem:[%s222 + $0x74] sm:$0x1]
      %v1883 = vld [vmem:[%s222 + $0x78] sm:$0xf]
      %v1884 = vld [vmem:[%s222 + $0x7c] sm:$0xf]
      %v1885 = vld [vmem:[%s222 + $0x80] sm:$0x1]
      %v1886 = vld [vmem:[%s222 + $0x84] sm:$0xf]
      %v1887 = vld [vmem:[%s222 + $0x88] sm:$0xf]
      %v1888 = vld [vmem:[%s222 + $0x8c] sm:$0x1]
      %v1889 = vld [vmem:[%s222 + $0x90] sm:$0xf]
      %v1890 = vld [vmem:[%s222 + $0x94] sm:$0xf]
      %v1891 = vld [vmem:[%s222 + $0x98] sm:$0x1]
      %v1892 = vld [vmem:[%s222 + $0x9c] sm:$0xf]
      %v1893 = vld [vmem:[%s222 + $0xa0] sm:$0xf]
      %v1894 = vld [vmem:[%s222 + $0xa4] sm:$0x1]
      %v1895 = vld [vmem:[%s222 + $0xa8] sm:$0xf]
      %v1896 = vld [vmem:[%s222 + $0xac] sm:$0xf]
      %v1897 = vld [vmem:[%s222 + $0xb0] sm:$0x1]
      %v1898 = vld [vmem:[%s222 + $0xb4] sm:$0xf]
      %v1899 = vld [vmem:[%s222 + $0xb8] sm:$0xf]
      %v1900 = vld [vmem:[%s222 + $0xbc] sm:$0x1]
      %v1902 = vshrl.u32 %v1853, 16
      %v1904 = vrot.slane %v1902, 4
      %v1905 = vshll.u32 %v1853, 16
      %v1907 = vrot.slane %v1905, 5
      %v1908 = vor.u32 %v1904, %v1907
      %v1909 = vrot.slane %v1908, 4
      %v1911 = vshll.u32 %v1854, 16
      %v1913 = vrot.slane %v1911, 5
      %v1914 = vsel %vm953, %v1909, %v1913
      %v1915 = vshrl.u32 %v1854, 16
      %v1917 = vrot.slane %v1915, 4
      %v1918 = vor.u32 %v1917, %v1913
      %v1919 = vrot.slane %v1918, 4
      %v1921 = vshll.u32 %v1855, 16
      %v1923 = vrot.slane %v1921, 5
      %v1924 = vsel %vm953, %v1919, %v1923
      %v1926 = vshrl.u32 %v1856, 16
      %v1928 = vrot.slane %v1926, 4
      %v1929 = vshll.u32 %v1856, 16
      %v1931 = vrot.slane %v1929, 5
      %v1932 = vor.u32 %v1928, %v1931
      %v1933 = vrot.slane %v1932, 4
      %v1935 = vshll.u32 %v1857, 16
      %v1937 = vrot.slane %v1935, 5
      %v1938 = vsel %vm953, %v1933, %v1937
      %v1939 = vshrl.u32 %v1857, 16
      %v1941 = vrot.slane %v1939, 4
      %v1942 = vor.u32 %v1941, %v1937
      %v1943 = vrot.slane %v1942, 4
      %v1945 = vshll.u32 %v1858, 16
      %v1947 = vrot.slane %v1945, 5
      %v1948 = vsel %vm953, %v1943, %v1947
      %v1950 = vshrl.u32 %v1859, 16
      %v1952 = vrot.slane %v1950, 4
      %v1953 = vshll.u32 %v1859, 16
      %v1955 = vrot.slane %v1953, 5
      %v1956 = vor.u32 %v1952, %v1955
      %v1957 = vrot.slane %v1956, 4
      %v1959 = vshll.u32 %v1860, 16
      %v1961 = vrot.slane %v1959, 5
      %v1962 = vsel %vm953, %v1957, %v1961
      %v1963 = vshrl.u32 %v1860, 16
      %v1965 = vrot.slane %v1963, 4
      %v1966 = vor.u32 %v1965, %v1961
      %v1967 = vrot.slane %v1966, 4
      %v1969 = vshll.u32 %v1861, 16
      %v1971 = vrot.slane %v1969, 5
      %v1972 = vsel %vm953, %v1967, %v1971
      %v1974 = vshrl.u32 %v1862, 16
      %v1976 = vrot.slane %v1974, 4
      %v1977 = vshll.u32 %v1862, 16
      %v1979 = vrot.slane %v1977, 5
      %v1980 = vor.u32 %v1976, %v1979
      %v1981 = vrot.slane %v1980, 4
      %v1983 = vshll.u32 %v1863, 16
      %v1985 = vrot.slane %v1983, 5
      %v1986 = vsel %vm953, %v1981, %v1985
      %v1987 = vshrl.u32 %v1863, 16
      %v1989 = vrot.slane %v1987, 4
      %v1990 = vor.u32 %v1989, %v1985
      %v1991 = vrot.slane %v1990, 4
      %v1993 = vshll.u32 %v1864, 16
      %v1995 = vrot.slane %v1993, 5
      %v1996 = vsel %vm953, %v1991, %v1995
      %v1998 = vshrl.u32 %v1865, 16
      %v2000 = vrot.slane %v1998, 4
      %v2001 = vshll.u32 %v1865, 16
      %v2003 = vrot.slane %v2001, 5
      %v2004 = vor.u32 %v2000, %v2003
      %v2005 = vrot.slane %v2004, 4
      %v2007 = vshll.u32 %v1866, 16
      %v2009 = vrot.slane %v2007, 5
      %v2010 = vsel %vm953, %v2005, %v2009
      %v2011 = vshrl.u32 %v1866, 16
      %v2013 = vrot.slane %v2011, 4
      %v2014 = vor.u32 %v2013, %v2009
      %v2015 = vrot.slane %v2014, 4
      %v2017 = vshll.u32 %v1867, 16
      %v2019 = vrot.slane %v2017, 5
      %v2020 = vsel %vm953, %v2015, %v2019
      %v2022 = vshrl.u32 %v1868, 16
      %v2024 = vrot.slane %v2022, 4
      %v2025 = vshll.u32 %v1868, 16
      %v2027 = vrot.slane %v2025, 5
      %v2028 = vor.u32 %v2024, %v2027
      %v2029 = vrot.slane %v2028, 4
      %v2031 = vshll.u32 %v1869, 16
      %v2033 = vrot.slane %v2031, 5
      %v2034 = vsel %vm953, %v2029, %v2033
      %v2035 = vshrl.u32 %v1869, 16
      %v2037 = vrot.slane %v2035, 4
      %v2038 = vor.u32 %v2037, %v2033
      %v2039 = vrot.slane %v2038, 4
      %v2041 = vshll.u32 %v1870, 16
      %v2043 = vrot.slane %v2041, 5
      %v2044 = vsel %vm953, %v2039, %v2043
      %v2046 = vshrl.u32 %v1871, 16
      %v2048 = vrot.slane %v2046, 4
      %v2049 = vshll.u32 %v1871, 16
      %v2051 = vrot.slane %v2049, 5
      %v2052 = vor.u32 %v2048, %v2051
      %v2053 = vrot.slane %v2052, 4
      %v2055 = vshll.u32 %v1872, 16
      %v2057 = vrot.slane %v2055, 5
      %v2058 = vsel %vm953, %v2053, %v2057
      %v2059 = vshrl.u32 %v1872, 16
      %v2061 = vrot.slane %v2059, 4
      %v2062 = vor.u32 %v2061, %v2057
      %v2063 = vrot.slane %v2062, 4
      %v2065 = vshll.u32 %v1873, 16
      %v2067 = vrot.slane %v2065, 5
      %v2068 = vsel %vm953, %v2063, %v2067
      %v2070 = vshrl.u32 %v1874, 16
      %v2072 = vrot.slane %v2070, 4
      %v2073 = vshll.u32 %v1874, 16
      %v2075 = vrot.slane %v2073, 5
      %v2076 = vor.u32 %v2072, %v2075
      %v2077 = vrot.slane %v2076, 4
      %v2079 = vshll.u32 %v1875, 16
      %v2081 = vrot.slane %v2079, 5
      %v2082 = vsel %vm953, %v2077, %v2081
      %v2083 = vshrl.u32 %v1875, 16
      %v2085 = vrot.slane %v2083, 4
      %v2086 = vor.u32 %v2085, %v2081
      %v2087 = vrot.slane %v2086, 4
      %v2089 = vshll.u32 %v1876, 16
      %v2091 = vrot.slane %v2089, 5
      %v2092 = vsel %vm953, %v2087, %v2091
      %v2094 = vshrl.u32 %v1877, 16
      %v2096 = vrot.slane %v2094, 4
      %v2097 = vshll.u32 %v1877, 16
      %v2099 = vrot.slane %v2097, 5
      %v2100 = vor.u32 %v2096, %v2099
      %v2101 = vrot.slane %v2100, 4
      %v2103 = vshll.u32 %v1878, 16
      %v2105 = vrot.slane %v2103, 5
      %v2106 = vsel %vm953, %v2101, %v2105
      %v2107 = vshrl.u32 %v1878, 16
      %v2109 = vrot.slane %v2107, 4
      %v2110 = vor.u32 %v2109, %v2105
      %v2111 = vrot.slane %v2110, 4
      %v2113 = vshll.u32 %v1879, 16
      %v2115 = vrot.slane %v2113, 5
      %v2116 = vsel %vm953, %v2111, %v2115
      %v2118 = vshrl.u32 %v1880, 16
      %v2120 = vrot.slane %v2118, 4
      %v2121 = vshll.u32 %v1880, 16
      %v2123 = vrot.slane %v2121, 5
      %v2124 = vor.u32 %v2120, %v2123
      %v2125 = vrot.slane %v2124, 4
      %v2127 = vshll.u32 %v1881, 16
      %v2129 = vrot.slane %v2127, 5
      %v2130 = vsel %vm953, %v2125, %v2129
      %v2131 = vshrl.u32 %v1881, 16
      %v2133 = vrot.slane %v2131, 4
      %v2134 = vor.u32 %v2133, %v2129
      %v2135 = vrot.slane %v2134, 4
      %v2137 = vshll.u32 %v1882, 16
      %v2139 = vrot.slane %v2137, 5
      %v2140 = vsel %vm953, %v2135, %v2139
      %v2142 = vshrl.u32 %v1883, 16
      %v2144 = vrot.slane %v2142, 4
      %v2145 = vshll.u32 %v1883, 16
      %v2147 = vrot.slane %v2145, 5
      %v2148 = vor.u32 %v2144, %v2147
      %v2149 = vrot.slane %v2148, 4
      %v2151 = vshll.u32 %v1884, 16
      %v2153 = vrot.slane %v2151, 5
      %v2154 = vsel %vm953, %v2149, %v2153
      %v2155 = vshrl.u32 %v1884, 16
      %v2157 = vrot.slane %v2155, 4
      %v2158 = vor.u32 %v2157, %v2153
      %v2159 = vrot.slane %v2158, 4
      %v2161 = vshll.u32 %v1885, 16
      %v2163 = vrot.slane %v2161, 5
      %v2164 = vsel %vm953, %v2159, %v2163
      %v2166 = vshrl.u32 %v1886, 16
      %v2168 = vrot.slane %v2166, 4
      %v2169 = vshll.u32 %v1886, 16
      %v2171 = vrot.slane %v2169, 5
      %v2172 = vor.u32 %v2168, %v2171
      %v2173 = vrot.slane %v2172, 4
      %v2175 = vshll.u32 %v1887, 16
      %v2177 = vrot.slane %v2175, 5
      %v2178 = vsel %vm953, %v2173, %v2177
      %v2179 = vshrl.u32 %v1887, 16
      %v2181 = vrot.slane %v2179, 4
      %v2182 = vor.u32 %v2181, %v2177
      %v2183 = vrot.slane %v2182, 4
      %v2185 = vshll.u32 %v1888, 16
      %v2187 = vrot.slane %v2185, 5
      %v2188 = vsel %vm953, %v2183, %v2187
      %v2190 = vshrl.u32 %v1889, 16
      %v2192 = vrot.slane %v2190, 4
      %v2193 = vshll.u32 %v1889, 16
      %v2195 = vrot.slane %v2193, 5
      %v2196 = vor.u32 %v2192, %v2195
      %v2197 = vrot.slane %v2196, 4
      %v2199 = vshll.u32 %v1890, 16
      %v2201 = vrot.slane %v2199, 5
      %v2202 = vsel %vm953, %v2197, %v2201
      %v2203 = vshrl.u32 %v1890, 16
      %v2205 = vrot.slane %v2203, 4
      %v2206 = vor.u32 %v2205, %v2201
      %v2207 = vrot.slane %v2206, 4
      %v2209 = vshll.u32 %v1891, 16
      %v2211 = vrot.slane %v2209, 5
      %v2212 = vsel %vm953, %v2207, %v2211
      %v2214 = vshrl.u32 %v1892, 16
      %v2216 = vrot.slane %v2214, 4
      %v2217 = vshll.u32 %v1892, 16
      %v2219 = vrot.slane %v2217, 5
      %v2220 = vor.u32 %v2216, %v2219
      %v2221 = vrot.slane %v2220, 4
      %v2223 = vshll.u32 %v1893, 16
      %v2225 = vrot.slane %v2223, 5
      %v2226 = vsel %vm953, %v2221, %v2225
      %v2227 = vshrl.u32 %v1893, 16
      %v2229 = vrot.slane %v2227, 4
      %v2230 = vor.u32 %v2229, %v2225
      %v2231 = vrot.slane %v2230, 4
      %v2233 = vshll.u32 %v1894, 16
      %v2235 = vrot.slane %v2233, 5
      %v2236 = vsel %vm953, %v2231, %v2235
      %v2238 = vshrl.u32 %v1895, 16
      %v2240 = vrot.slane %v2238, 4
      %v2241 = vshll.u32 %v1895, 16
      %v2243 = vrot.slane %v2241, 5
      %v2244 = vor.u32 %v2240, %v2243
      %v2245 = vrot.slane %v2244, 4
      %v2247 = vshll.u32 %v1896, 16
      %v2249 = vrot.slane %v2247, 5
      %v2250 = vsel %vm953, %v2245, %v2249
      %v2251 = vshrl.u32 %v1896, 16
      %v2253 = vrot.slane %v2251, 4
      %v2254 = vor.u32 %v2253, %v2249
      %v2255 = vrot.slane %v2254, 4
      %v2257 = vshll.u32 %v1897, 16
      %v2259 = vrot.slane %v2257, 5
      %v2260 = vsel %vm953, %v2255, %v2259
      %v2262 = vshrl.u32 %v1898, 16
      %v2264 = vrot.slane %v2262, 4
      %v2265 = vshll.u32 %v1898, 16
      %v2267 = vrot.slane %v2265, 5
      %v2268 = vor.u32 %v2264, %v2267
      %v2269 = vrot.slane %v2268, 4
      %v2271 = vshll.u32 %v1899, 16
      %v2273 = vrot.slane %v2271, 5
      %v2274 = vsel %vm953, %v2269, %v2273
      %v2275 = vshrl.u32 %v1899, 16
      %v2277 = vrot.slane %v2275, 4
      %v2278 = vor.u32 %v2277, %v2273
      %v2279 = vrot.slane %v2278, 4
      %v2281 = vshll.u32 %v1900, 16
      %v2283 = vrot.slane %v2281, 5
      %v2284 = vsel %vm953, %v2279, %v2283
      %v2285 = vunpack.c.l.b16 %v1914
      %v2286 = vunpack.c.l.b16 %v1924
      %v2287 = vunpack.c.l.b16 %v1938
      %v2288 = vunpack.c.l.b16 %v1948
      %v2289 = vunpack.c.l.b16 %v1962
      %v2290 = vunpack.c.l.b16 %v1972
      %v2291 = vunpack.c.l.b16 %v1986
      %v2292 = vunpack.c.l.b16 %v1996
      %v2293 = vunpack.c.l.b16 %v2010
      %v2294 = vunpack.c.l.b16 %v2020
      %v2295 = vunpack.c.l.b16 %v2034
      %v2296 = vunpack.c.l.b16 %v2044
      %v2297 = vunpack.c.l.b16 %v2058
      %v2298 = vunpack.c.l.b16 %v2068
      %v2299 = vunpack.c.l.b16 %v2082
      %v2300 = vunpack.c.l.b16 %v2092
      %v2301 = vunpack.c.l.b16 %v2106
      %v2302 = vunpack.c.l.b16 %v2116
      %v2303 = vunpack.c.l.b16 %v2130
      %v2304 = vunpack.c.l.b16 %v2140
      %v2305 = vunpack.c.l.b16 %v2154
      %v2306 = vunpack.c.l.b16 %v2164
      %v2307 = vunpack.c.l.b16 %v2178
      %v2308 = vunpack.c.l.b16 %v2188
      %v2309 = vunpack.c.l.b16 %v2202
      %v2310 = vunpack.c.l.b16 %v2212
      %v2311 = vunpack.c.l.b16 %v2226
      %v2312 = vunpack.c.l.b16 %v2236
      %v2313 = vunpack.c.l.b16 %v2250
      %v2314 = vunpack.c.l.b16 %v2260
      %v2315 = vunpack.c.l.b16 %v2274
      %v2316 = vunpack.c.l.b16 %v2284
      %v2317 = vpack.c.b16 %v2286, %v2285
      %v2318 = vpack.c.b16 %v2288, %v2287
      %v2319 = vpack.c.b16 %v2290, %v2289
      %v2320 = vpack.c.b16 %v2292, %v2291
      %v2321 = vpack.c.b16 %v2294, %v2293
      %v2322 = vpack.c.b16 %v2296, %v2295
      %v2323 = vpack.c.b16 %v2298, %v2297
      %v2324 = vpack.c.b16 %v2300, %v2299
      %v2325 = vpack.c.b16 %v2302, %v2301
      %v2326 = vpack.c.b16 %v2304, %v2303
      %v2327 = vpack.c.b16 %v2306, %v2305
      %v2328 = vpack.c.b16 %v2308, %v2307
      %v2329 = vpack.c.b16 %v2310, %v2309
      %v2330 = vpack.c.b16 %v2312, %v2311
      %v2331 = vpack.c.b16 %v2314, %v2313
      %v2332 = vpack.c.b16 %v2316, %v2315
      %2349 = vst [vmem:[#allocation3 + $0x20] sm:$0xff] %v2317
      %2350 = vst [vmem:[#allocation3 + $0x68] sm:$0xff] %v2318
      %2351 = vst [vmem:[#allocation3 + $0xb0] sm:$0xff] %v2319
      %2352 = vst [vmem:[#allocation3 + $0xf8] sm:$0xff] %v2320
      %2353 = vst [vmem:[#allocation3 + $0x140] sm:$0xff] %v2321
      %2354 = vst [vmem:[#allocation3 + $0x188] sm:$0xff] %v2322
      %2355 = vst [vmem:[#allocation3 + $0x1d0] sm:$0xff] %v2323
      %2356 = vst [vmem:[#allocation3 + $0x218] sm:$0xff] %v2324
      %2357 = vst [vmem:[#allocation3 + $0x260] sm:$0xff] %v2325
      %2358 = vst [vmem:[#allocation3 + $0x2a8] sm:$0xff] %v2326
      %2359 = vst [vmem:[#allocation3 + $0x2f0] sm:$0xff] %v2327
      %2360 = vst [vmem:[#allocation3 + $0x338] sm:$0xff] %v2328
      %2361 = vst [vmem:[#allocation3 + $0x380] sm:$0xff] %v2329
      %2362 = vst [vmem:[#allocation3 + $0x3c8] sm:$0xff] %v2330
      %2363 = vst [vmem:[#allocation3 + $0x410] sm:$0xff] %v2331
      %2364 = vst [vmem:[#allocation3 + $0x458] sm:$0xff] %v2332
      %v2365 = vld [vmem:[%s222] sm:$0xe]
      %v2366 = vld [vmem:[%s222 + $0x4] sm:$0xf]
      %v2367 = vld [vmem:[%s222 + $0x8] sm:$0x1]
      %v2368 = vld [vmem:[%s222 + $0xc] sm:$0xe]
      %v2369 = vld [vmem:[%s222 + $0x10] sm:$0xf]
      %v2370 = vld [vmem:[%s222 + $0x14] sm:$0x1]
      %v2371 = vld [vmem:[%s222 + $0x18] sm:$0xe]
      %v2372 = vld [vmem:[%s222 + $0x1c] sm:$0xf]
      %v2373 = vld [vmem:[%s222 + $0x20] sm:$0x1]
      %v2374 = vld [vmem:[%s222 + $0x24] sm:$0xe]
      %v2375 = vld [vmem:[%s222 + $0x28] sm:$0xf]
      %v2376 = vld [vmem:[%s222 + $0x2c] sm:$0x1]
      %v2377 = vld [vmem:[%s222 + $0x30] sm:$0xe]
      %v2378 = vld [vmem:[%s222 + $0x34] sm:$0xf]
      %v2379 = vld [vmem:[%s222 + $0x38] sm:$0x1]
      %v2380 = vld [vmem:[%s222 + $0x3c] sm:$0xe]
      %v2381 = vld [vmem:[%s222 + $0x40] sm:$0xf]
      %v2382 = vld [vmem:[%s222 + $0x44] sm:$0x1]
      %v2383 = vld [vmem:[%s222 + $0x48] sm:$0xe]
      %v2384 = vld [vmem:[%s222 + $0x4c] sm:$0xf]
      %v2385 = vld [vmem:[%s222 + $0x50] sm:$0x1]
      %v2386 = vld [vmem:[%s222 + $0x54] sm:$0xe]
      %v2387 = vld [vmem:[%s222 + $0x58] sm:$0xf]
      %v2388 = vld [vmem:[%s222 + $0x5c] sm:$0x1]
      %v2389 = vld [vmem:[%s222 + $0x60] sm:$0xe]
      %v2390 = vld [vmem:[%s222 + $0x64] sm:$0xf]
      %v2391 = vld [vmem:[%s222 + $0x68] sm:$0x1]
      %v2392 = vld [vmem:[%s222 + $0x6c] sm:$0xe]
      %v2393 = vld [vmem:[%s222 + $0x70] sm:$0xf]
      %v2394 = vld [vmem:[%s222 + $0x74] sm:$0x1]
      %v2395 = vld [vmem:[%s222 + $0x78] sm:$0xe]
      %v2396 = vld [vmem:[%s222 + $0x7c] sm:$0xf]
      %v2397 = vld [vmem:[%s222 + $0x80] sm:$0x1]
      %v2398 = vld [vmem:[%s222 + $0x84] sm:$0xe]
      %v2399 = vld [vmem:[%s222 + $0x88] sm:$0xf]
      %v2400 = vld [vmem:[%s222 + $0x8c] sm:$0x1]
      %v2401 = vld [vmem:[%s222 + $0x90] sm:$0xe]
      %v2402 = vld [vmem:[%s222 + $0x94] sm:$0xf]
      %v2403 = vld [vmem:[%s222 + $0x98] sm:$0x1]
      %v2404 = vld [vmem:[%s222 + $0x9c] sm:$0xe]
      %v2405 = vld [vmem:[%s222 + $0xa0] sm:$0xf]
      %v2406 = vld [vmem:[%s222 + $0xa4] sm:$0x1]
      %v2407 = vld [vmem:[%s222 + $0xa8] sm:$0xe]
      %v2408 = vld [vmem:[%s222 + $0xac] sm:$0xf]
      %v2409 = vld [vmem:[%s222 + $0xb0] sm:$0x1]
      %v2410 = vld [vmem:[%s222 + $0xb4] sm:$0xe]
      %v2411 = vld [vmem:[%s222 + $0xb8] sm:$0xf]
      %v2412 = vld [vmem:[%s222 + $0xbc] sm:$0x1]
      %v2461 = vrot.slane %v2365, 5
      %v2462 = vrot.slane %v2461, 4
      %v2463 = vrot.slane %v2366, 5
      %v2464 = vsel %vm1516, %v2462, %v2463
      %v2465 = vrot.slane %v2463, 4
      %v2466 = vrot.slane %v2367, 5
      %v2467 = vsel %vm1516, %v2465, %v2466
      %v2468 = vrot.slane %v2368, 5
      %v2469 = vrot.slane %v2468, 4
      %v2470 = vrot.slane %v2369, 5
      %v2471 = vsel %vm1516, %v2469, %v2470
      %v2472 = vrot.slane %v2470, 4
      %v2473 = vrot.slane %v2370, 5
      %v2474 = vsel %vm1516, %v2472, %v2473
      %v2475 = vrot.slane %v2371, 5
      %v2476 = vrot.slane %v2475, 4
      %v2477 = vrot.slane %v2372, 5
      %v2478 = vsel %vm1516, %v2476, %v2477
      %v2479 = vrot.slane %v2477, 4
      %v2480 = vrot.slane %v2373, 5
      %v2481 = vsel %vm1516, %v2479, %v2480
      %v2482 = vrot.slane %v2374, 5
      %v2483 = vrot.slane %v2482, 4
      %v2484 = vrot.slane %v2375, 5
      %v2485 = vsel %vm1516, %v2483, %v2484
      %v2486 = vrot.slane %v2484, 4
      %v2487 = vrot.slane %v2376, 5
      %v2488 = vsel %vm1516, %v2486, %v2487
      %v2489 = vrot.slane %v2377, 5
      %v2490 = vrot.slane %v2489, 4
      %v2491 = vrot.slane %v2378, 5
      %v2492 = vsel %vm1516, %v2490, %v2491
      %v2493 = vrot.slane %v2491, 4
      %v2494 = vrot.slane %v2379, 5
      %v2495 = vsel %vm1516, %v2493, %v2494
      %v2496 = vrot.slane %v2380, 5
      %v2497 = vrot.slane %v2496, 4
      %v2498 = vrot.slane %v2381, 5
      %v2499 = vsel %vm1516, %v2497, %v2498
      %v2500 = vrot.slane %v2498, 4
      %v2501 = vrot.slane %v2382, 5
      %v2502 = vsel %vm1516, %v2500, %v2501
      %v2503 = vrot.slane %v2383, 5
      %v2504 = vrot.slane %v2503, 4
      %v2505 = vrot.slane %v2384, 5
      %v2506 = vsel %vm1516, %v2504, %v2505
      %v2507 = vrot.slane %v2505, 4
      %v2508 = vrot.slane %v2385, 5
      %v2509 = vsel %vm1516, %v2507, %v2508
      %v2510 = vrot.slane %v2386, 5
      %v2511 = vrot.slane %v2510, 4
      %v2512 = vrot.slane %v2387, 5
      %v2513 = vsel %vm1516, %v2511, %v2512
      %v2514 = vrot.slane %v2512, 4
      %v2515 = vrot.slane %v2388, 5
      %v2516 = vsel %vm1516, %v2514, %v2515
      %v2517 = vrot.slane %v2389, 5
      %v2518 = vrot.slane %v2517, 4
      %v2519 = vrot.slane %v2390, 5
      %v2520 = vsel %vm1516, %v2518, %v2519
      %v2521 = vrot.slane %v2519, 4
      %v2522 = vrot.slane %v2391, 5
      %v2523 = vsel %vm1516, %v2521, %v2522
      %v2524 = vrot.slane %v2392, 5
      %v2525 = vrot.slane %v2524, 4
      %v2526 = vrot.slane %v2393, 5
      %v2527 = vsel %vm1516, %v2525, %v2526
      %v2528 = vrot.slane %v2526, 4
      %v2529 = vrot.slane %v2394, 5
      %v2530 = vsel %vm1516, %v2528, %v2529
      %v2531 = vrot.slane %v2395, 5
      %v2532 = vrot.slane %v2531, 4
      %v2533 = vrot.slane %v2396, 5
      %v2534 = vsel %vm1516, %v2532, %v2533
      %v2535 = vrot.slane %v2533, 4
      %v2536 = vrot.slane %v2397, 5
      %v2537 = vsel %vm1516, %v2535, %v2536
      %v2538 = vrot.slane %v2398, 5
      %v2539 = vrot.slane %v2538, 4
      %v2540 = vrot.slane %v2399, 5
      %v2541 = vsel %vm1516, %v2539, %v2540
      %v2542 = vrot.slane %v2540, 4
      %v2543 = vrot.slane %v2400, 5
      %v2544 = vsel %vm1516, %v2542, %v2543
      %v2545 = vrot.slane %v2401, 5
      %v2546 = vrot.slane %v2545, 4
      %v2547 = vrot.slane %v2402, 5
      %v2548 = vsel %vm1516, %v2546, %v2547
      %v2549 = vrot.slane %v2547, 4
      %v2550 = vrot.slane %v2403, 5
      %v2551 = vsel %vm1516, %v2549, %v2550
      %v2552 = vrot.slane %v2404, 5
      %v2553 = vrot.slane %v2552, 4
      %v2554 = vrot.slane %v2405, 5
      %v2555 = vsel %vm1516, %v2553, %v2554
      %v2556 = vrot.slane %v2554, 4
      %v2557 = vrot.slane %v2406, 5
      %v2558 = vsel %vm1516, %v2556, %v2557
      %v2559 = vrot.slane %v2407, 5
      %v2560 = vrot.slane %v2559, 4
      %v2561 = vrot.slane %v2408, 5
      %v2562 = vsel %vm1516, %v2560, %v2561
      %v2563 = vrot.slane %v2561, 4
      %v2564 = vrot.slane %v2409, 5
      %v2565 = vsel %vm1516, %v2563, %v2564
      %v2566 = vrot.slane %v2410, 5
      %v2567 = vrot.slane %v2566, 4
      %v2568 = vrot.slane %v2411, 5
      %v2569 = vsel %vm1516, %v2567, %v2568
      %v2570 = vrot.slane %v2568, 4
      %v2571 = vrot.slane %v2412, 5
      %v2572 = vsel %vm1516, %v2570, %v2571
      %v2573 = vunpack.c.l.b16 %v2464
      %v2574 = vunpack.c.l.b16 %v2467
      %v2575 = vunpack.c.l.b16 %v2471
      %v2576 = vunpack.c.l.b16 %v2474
      %v2577 = vunpack.c.l.b16 %v2478
      %v2578 = vunpack.c.l.b16 %v2481
      %v2579 = vunpack.c.l.b16 %v2485
      %v2580 = vunpack.c.l.b16 %v2488
      %v2581 = vunpack.c.l.b16 %v2492
      %v2582 = vunpack.c.l.b16 %v2495
      %v2583 = vunpack.c.l.b16 %v2499
      %v2584 = vunpack.c.l.b16 %v2502
      %v2585 = vunpack.c.l.b16 %v2506
      %v2586 = vunpack.c.l.b16 %v2509
      %v2587 = vunpack.c.l.b16 %v2513
      %v2588 = vunpack.c.l.b16 %v2516
      %v2589 = vunpack.c.l.b16 %v2520
      %v2590 = vunpack.c.l.b16 %v2523
      %v2591 = vunpack.c.l.b16 %v2527
      %v2592 = vunpack.c.l.b16 %v2530
      %v2593 = vunpack.c.l.b16 %v2534
      %v2594 = vunpack.c.l.b16 %v2537
      %v2595 = vunpack.c.l.b16 %v2541
      %v2596 = vunpack.c.l.b16 %v2544
      %v2597 = vunpack.c.l.b16 %v2548
      %v2598 = vunpack.c.l.b16 %v2551
      %v2599 = vunpack.c.l.b16 %v2555
      %v2600 = vunpack.c.l.b16 %v2558
      %v2601 = vunpack.c.l.b16 %v2562
      %v2602 = vunpack.c.l.b16 %v2565
      %v2603 = vunpack.c.l.b16 %v2569
      %v2604 = vunpack.c.l.b16 %v2572
      %v2605 = vpack.c.b16 %v2574, %v2573
      %v2606 = vpack.c.b16 %v2576, %v2575
      %v2607 = vpack.c.b16 %v2578, %v2577
      %v2608 = vpack.c.b16 %v2580, %v2579
      %v2609 = vpack.c.b16 %v2582, %v2581
      %v2610 = vpack.c.b16 %v2584, %v2583
      %v2611 = vpack.c.b16 %v2586, %v2585
      %v2612 = vpack.c.b16 %v2588, %v2587
      %v2613 = vpack.c.b16 %v2590, %v2589
      %v2614 = vpack.c.b16 %v2592, %v2591
      %v2615 = vpack.c.b16 %v2594, %v2593
      %v2616 = vpack.c.b16 %v2596, %v2595
      %v2617 = vpack.c.b16 %v2598, %v2597
      %v2618 = vpack.c.b16 %v2600, %v2599
      %v2619 = vpack.c.b16 %v2602, %v2601
      %v2620 = vpack.c.b16 %v2604, %v2603
      %2637 = vst [vmem:[#allocation3 + $0x28] sm:$0xff] %v2605
      %2638 = vst [vmem:[#allocation3 + $0x70] sm:$0xff] %v2606
      %2639 = vst [vmem:[#allocation3 + $0xb8] sm:$0xff] %v2607
      %2640 = vst [vmem:[#allocation3 + $0x100] sm:$0xff] %v2608
      %2641 = vst [vmem:[#allocation3 + $0x148] sm:$0xff] %v2609
      %2642 = vst [vmem:[#allocation3 + $0x190] sm:$0xff] %v2610
      %2643 = vst [vmem:[#allocation3 + $0x1d8] sm:$0xff] %v2611
      %2644 = vst [vmem:[#allocation3 + $0x220] sm:$0xff] %v2612
      %2645 = vst [vmem:[#allocation3 + $0x268] sm:$0xff] %v2613
      %2646 = vst [vmem:[#allocation3 + $0x2b0] sm:$0xff] %v2614
      %2647 = vst [vmem:[#allocation3 + $0x2f8] sm:$0xff] %v2615
      %2648 = vst [vmem:[#allocation3 + $0x340] sm:$0xff] %v2616
      %2649 = vst [vmem:[#allocation3 + $0x388] sm:$0xff] %v2617
      %2650 = vst [vmem:[#allocation3 + $0x3d0] sm:$0xff] %v2618
      %2651 = vst [vmem:[#allocation3 + $0x418] sm:$0xff] %v2619
      %2652 = vst [vmem:[#allocation3 + $0x460] sm:$0xff] %v2620
      %s2653 = scalar_lea.vmem [#allocation2], 24
      %v2654 = vld [vmem:[%s2653] sm:$0xf]
      %v2655 = vld [vmem:[%s2653 + $0x4] sm:$0xf]
      %v2656 = vld [vmem:[%s2653 + $0xc] sm:$0xf]
      %v2657 = vld [vmem:[%s2653 + $0x10] sm:$0xf]
      %v2658 = vld [vmem:[%s2653 + $0x18] sm:$0xf]
      %v2659 = vld [vmem:[%s2653 + $0x1c] sm:$0xf]
      %v2660 = vld [vmem:[%s2653 + $0x24] sm:$0xf]
      %v2661 = vld [vmem:[%s2653 + $0x28] sm:$0xf]
      %v2662 = vld [vmem:[%s2653 + $0x30] sm:$0xf]
      %v2663 = vld [vmem:[%s2653 + $0x34] sm:$0xf]
      %v2664 = vld [vmem:[%s2653 + $0x3c] sm:$0xf]
      %v2665 = vld [vmem:[%s2653 + $0x40] sm:$0xf]
      %v2666 = vld [vmem:[%s2653 + $0x48] sm:$0xf]
      %v2667 = vld [vmem:[%s2653 + $0x4c] sm:$0xf]
      %v2668 = vld [vmem:[%s2653 + $0x54] sm:$0xf]
      %v2669 = vld [vmem:[%s2653 + $0x58] sm:$0xf]
      %v2670 = vld [vmem:[%s2653 + $0x60] sm:$0xf]
      %v2671 = vld [vmem:[%s2653 + $0x64] sm:$0xf]
      %v2672 = vld [vmem:[%s2653 + $0x6c] sm:$0xf]
      %v2673 = vld [vmem:[%s2653 + $0x70] sm:$0xf]
      %v2674 = vld [vmem:[%s2653 + $0x78] sm:$0xf]
      %v2675 = vld [vmem:[%s2653 + $0x7c] sm:$0xf]
      %v2676 = vld [vmem:[%s2653 + $0x84] sm:$0xf]
      %v2677 = vld [vmem:[%s2653 + $0x88] sm:$0xf]
      %v2678 = vld [vmem:[%s2653 + $0x90] sm:$0xf]
      %v2679 = vld [vmem:[%s2653 + $0x94] sm:$0xf]
      %v2680 = vld [vmem:[%s2653 + $0x9c] sm:$0xf]
      %v2681 = vld [vmem:[%s2653 + $0xa0] sm:$0xf]
      %v2682 = vld [vmem:[%s2653 + $0xa8] sm:$0xf]
      %v2683 = vld [vmem:[%s2653 + $0xac] sm:$0xf]
      %v2684 = vld [vmem:[%s2653 + $0xb4] sm:$0xf]
      %v2685 = vld [vmem:[%s2653 + $0xb8] sm:$0xf]
      %v2718 = vunpack.c.l.b16 %v2654
      %v2719 = vunpack.c.l.b16 %v2655
      %v2720 = vunpack.c.l.b16 %v2656
      %v2721 = vunpack.c.l.b16 %v2657
      %v2722 = vunpack.c.l.b16 %v2658
      %v2723 = vunpack.c.l.b16 %v2659
      %v2724 = vunpack.c.l.b16 %v2660
      %v2725 = vunpack.c.l.b16 %v2661
      %v2726 = vunpack.c.l.b16 %v2662
      %v2727 = vunpack.c.l.b16 %v2663
      %v2728 = vunpack.c.l.b16 %v2664
      %v2729 = vunpack.c.l.b16 %v2665
      %v2730 = vunpack.c.l.b16 %v2666
      %v2731 = vunpack.c.l.b16 %v2667
      %v2732 = vunpack.c.l.b16 %v2668
      %v2733 = vunpack.c.l.b16 %v2669
      %v2734 = vunpack.c.l.b16 %v2670
      %v2735 = vunpack.c.l.b16 %v2671
      %v2736 = vunpack.c.l.b16 %v2672
      %v2737 = vunpack.c.l.b16 %v2673
      %v2738 = vunpack.c.l.b16 %v2674
      %v2739 = vunpack.c.l.b16 %v2675
      %v2740 = vunpack.c.l.b16 %v2676
      %v2741 = vunpack.c.l.b16 %v2677
      %v2742 = vunpack.c.l.b16 %v2678
      %v2743 = vunpack.c.l.b16 %v2679
      %v2744 = vunpack.c.l.b16 %v2680
      %v2745 = vunpack.c.l.b16 %v2681
      %v2746 = vunpack.c.l.b16 %v2682
      %v2747 = vunpack.c.l.b16 %v2683
      %v2748 = vunpack.c.l.b16 %v2684
      %v2749 = vunpack.c.l.b16 %v2685
      %v2750 = vpack.c.b16 %v2719, %v2718
      %v2751 = vpack.c.b16 %v2721, %v2720
      %v2752 = vpack.c.b16 %v2723, %v2722
      %v2753 = vpack.c.b16 %v2725, %v2724
      %v2754 = vpack.c.b16 %v2727, %v2726
      %v2755 = vpack.c.b16 %v2729, %v2728
      %v2756 = vpack.c.b16 %v2731, %v2730
      %v2757 = vpack.c.b16 %v2733, %v2732
      %v2758 = vpack.c.b16 %v2735, %v2734
      %v2759 = vpack.c.b16 %v2737, %v2736
      %v2760 = vpack.c.b16 %v2739, %v2738
      %v2761 = vpack.c.b16 %v2741, %v2740
      %v2762 = vpack.c.b16 %v2743, %v2742
      %v2763 = vpack.c.b16 %v2745, %v2744
      %v2764 = vpack.c.b16 %v2747, %v2746
      %v2765 = vpack.c.b16 %v2749, %v2748
      %2782 = vst [vmem:[#allocation3 + $0x30] sm:$0xff] %v2750
      %2783 = vst [vmem:[#allocation3 + $0x78] sm:$0xff] %v2751
      %2784 = vst [vmem:[#allocation3 + $0xc0] sm:$0xff] %v2752
      %2785 = vst [vmem:[#allocation3 + $0x108] sm:$0xff] %v2753
      %2786 = vst [vmem:[#allocation3 + $0x150] sm:$0xff] %v2754
      %2787 = vst [vmem:[#allocation3 + $0x198] sm:$0xff] %v2755
      %2788 = vst [vmem:[#allocation3 + $0x1e0] sm:$0xff] %v2756
      %2789 = vst [vmem:[#allocation3 + $0x228] sm:$0xff] %v2757
      %2790 = vst [vmem:[#allocation3 + $0x270] sm:$0xff] %v2758
      %2791 = vst [vmem:[#allocation3 + $0x2b8] sm:$0xff] %v2759
      %2792 = vst [vmem:[#allocation3 + $0x300] sm:$0xff] %v2760
      %2793 = vst [vmem:[#allocation3 + $0x348] sm:$0xff] %v2761
      %2794 = vst [vmem:[#allocation3 + $0x390] sm:$0xff] %v2762
      %2795 = vst [vmem:[#allocation3 + $0x3d8] sm:$0xff] %v2763
      %2796 = vst [vmem:[#allocation3 + $0x420] sm:$0xff] %v2764
      %2797 = vst [vmem:[#allocation3 + $0x468] sm:$0xff] %v2765
      %v2798 = vld [vmem:[%s2653] sm:$0xf]
      %v2799 = vld [vmem:[%s2653 + $0x4] sm:$0xf]
      %v2800 = vld [vmem:[%s2653 + $0x8] sm:$0x1]
      %v2801 = vld [vmem:[%s2653 + $0xc] sm:$0xf]
      %v2802 = vld [vmem:[%s2653 + $0x10] sm:$0xf]
      %v2803 = vld [vmem:[%s2653 + $0x14] sm:$0x1]
      %v2804 = vld [vmem:[%s2653 + $0x18] sm:$0xf]
      %v2805 = vld [vmem:[%s2653 + $0x1c] sm:$0xf]
      %v2806 = vld [vmem:[%s2653 + $0x20] sm:$0x1]
      %v2807 = vld [vmem:[%s2653 + $0x24] sm:$0xf]
      %v2808 = vld [vmem:[%s2653 + $0x28] sm:$0xf]
      %v2809 = vld [vmem:[%s2653 + $0x2c] sm:$0x1]
      %v2810 = vld [vmem:[%s2653 + $0x30] sm:$0xf]
      %v2811 = vld [vmem:[%s2653 + $0x34] sm:$0xf]
      %v2812 = vld [vmem:[%s2653 + $0x38] sm:$0x1]
      %v2813 = vld [vmem:[%s2653 + $0x3c] sm:$0xf]
      %v2814 = vld [vmem:[%s2653 + $0x40] sm:$0xf]
      %v2815 = vld [vmem:[%s2653 + $0x44] sm:$0x1]
      %v2816 = vld [vmem:[%s2653 + $0x48] sm:$0xf]
      %v2817 = vld [vmem:[%s2653 + $0x4c] sm:$0xf]
      %v2818 = vld [vmem:[%s2653 + $0x50] sm:$0x1]
      %v2819 = vld [vmem:[%s2653 + $0x54] sm:$0xf]
      %v2820 = vld [vmem:[%s2653 + $0x58] sm:$0xf]
      %v2821 = vld [vmem:[%s2653 + $0x5c] sm:$0x1]
      %v2822 = vld [vmem:[%s2653 + $0x60] sm:$0xf]
      %v2823 = vld [vmem:[%s2653 + $0x64] sm:$0xf]
      %v2824 = vld [vmem:[%s2653 + $0x68] sm:$0x1]
      %v2825 = vld [vmem:[%s2653 + $0x6c] sm:$0xf]
      %v2826 = vld [vmem:[%s2653 + $0x70] sm:$0xf]
      %v2827 = vld [vmem:[%s2653 + $0x74] sm:$0x1]
      %v2828 = vld [vmem:[%s2653 + $0x78] sm:$0xf]
      %v2829 = vld [vmem:[%s2653 + $0x7c] sm:$0xf]
      %v2830 = vld [vmem:[%s2653 + $0x80] sm:$0x1]
      %v2831 = vld [vmem:[%s2653 + $0x84] sm:$0xf]
      %v2832 = vld [vmem:[%s2653 + $0x88] sm:$0xf]
      %v2833 = vld [vmem:[%s2653 + $0x8c] sm:$0x1]
      %v2834 = vld [vmem:[%s2653 + $0x90] sm:$0xf]
      %v2835 = vld [vmem:[%s2653 + $0x94] sm:$0xf]
      %v2836 = vld [vmem:[%s2653 + $0x98] sm:$0x1]
      %v2837 = vld [vmem:[%s2653 + $0x9c] sm:$0xf]
      %v2838 = vld [vmem:[%s2653 + $0xa0] sm:$0xf]
      %v2839 = vld [vmem:[%s2653 + $0xa4] sm:$0x1]
      %v2840 = vld [vmem:[%s2653 + $0xa8] sm:$0xf]
      %v2841 = vld [vmem:[%s2653 + $0xac] sm:$0xf]
      %v2842 = vld [vmem:[%s2653 + $0xb0] sm:$0x1]
      %v2843 = vld [vmem:[%s2653 + $0xb4] sm:$0xf]
      %v2844 = vld [vmem:[%s2653 + $0xb8] sm:$0xf]
      %v2845 = vld [vmem:[%s2653 + $0xbc] sm:$0x1]
      %v2847 = vshrl.u32 %v2798, 16
      %v2849 = vrot.slane %v2847, 4
      %v2850 = vshll.u32 %v2798, 16
      %v2852 = vrot.slane %v2850, 5
      %v2853 = vor.u32 %v2849, %v2852
      %v2854 = vrot.slane %v2853, 4
      %v2856 = vshll.u32 %v2799, 16
      %v2858 = vrot.slane %v2856, 5
      %v2859 = vsel %vm953, %v2854, %v2858
      %v2860 = vshrl.u32 %v2799, 16
      %v2862 = vrot.slane %v2860, 4
      %v2863 = vor.u32 %v2862, %v2858
      %v2864 = vrot.slane %v2863, 4
      %v2866 = vshll.u32 %v2800, 16
      %v2868 = vrot.slane %v2866, 5
      %v2869 = vsel %vm953, %v2864, %v2868
      %v2871 = vshrl.u32 %v2801, 16
      %v2873 = vrot.slane %v2871, 4
      %v2874 = vshll.u32 %v2801, 16
      %v2876 = vrot.slane %v2874, 5
      %v2877 = vor.u32 %v2873, %v2876
      %v2878 = vrot.slane %v2877, 4
      %v2880 = vshll.u32 %v2802, 16
      %v2882 = vrot.slane %v2880, 5
      %v2883 = vsel %vm953, %v2878, %v2882
      %v2884 = vshrl.u32 %v2802, 16
      %v2886 = vrot.slane %v2884, 4
      %v2887 = vor.u32 %v2886, %v2882
      %v2888 = vrot.slane %v2887, 4
      %v2890 = vshll.u32 %v2803, 16
      %v2892 = vrot.slane %v2890, 5
      %v2893 = vsel %vm953, %v2888, %v2892
      %v2895 = vshrl.u32 %v2804, 16
      %v2897 = vrot.slane %v2895, 4
      %v2898 = vshll.u32 %v2804, 16
      %v2900 = vrot.slane %v2898, 5
      %v2901 = vor.u32 %v2897, %v2900
      %v2902 = vrot.slane %v2901, 4
      %v2904 = vshll.u32 %v2805, 16
      %v2906 = vrot.slane %v2904, 5
      %v2907 = vsel %vm953, %v2902, %v2906
      %v2908 = vshrl.u32 %v2805, 16
      %v2910 = vrot.slane %v2908, 4
      %v2911 = vor.u32 %v2910, %v2906
      %v2912 = vrot.slane %v2911, 4
      %v2914 = vshll.u32 %v2806, 16
      %v2916 = vrot.slane %v2914, 5
      %v2917 = vsel %vm953, %v2912, %v2916
      %v2919 = vshrl.u32 %v2807, 16
      %v2921 = vrot.slane %v2919, 4
      %v2922 = vshll.u32 %v2807, 16
      %v2924 = vrot.slane %v2922, 5
      %v2925 = vor.u32 %v2921, %v2924
      %v2926 = vrot.slane %v2925, 4
      %v2928 = vshll.u32 %v2808, 16
      %v2930 = vrot.slane %v2928, 5
      %v2931 = vsel %vm953, %v2926, %v2930
      %v2932 = vshrl.u32 %v2808, 16
      %v2934 = vrot.slane %v2932, 4
      %v2935 = vor.u32 %v2934, %v2930
      %v2936 = vrot.slane %v2935, 4
      %v2938 = vshll.u32 %v2809, 16
      %v2940 = vrot.slane %v2938, 5
      %v2941 = vsel %vm953, %v2936, %v2940
      %v2943 = vshrl.u32 %v2810, 16
      %v2945 = vrot.slane %v2943, 4
      %v2946 = vshll.u32 %v2810, 16
      %v2948 = vrot.slane %v2946, 5
      %v2949 = vor.u32 %v2945, %v2948
      %v2950 = vrot.slane %v2949, 4
      %v2952 = vshll.u32 %v2811, 16
      %v2954 = vrot.slane %v2952, 5
      %v2955 = vsel %vm953, %v2950, %v2954
      %v2956 = vshrl.u32 %v2811, 16
      %v2958 = vrot.slane %v2956, 4
      %v2959 = vor.u32 %v2958, %v2954
      %v2960 = vrot.slane %v2959, 4
      %v2962 = vshll.u32 %v2812, 16
      %v2964 = vrot.slane %v2962, 5
      %v2965 = vsel %vm953, %v2960, %v2964
      %v2967 = vshrl.u32 %v2813, 16
      %v2969 = vrot.slane %v2967, 4
      %v2970 = vshll.u32 %v2813, 16
      %v2972 = vrot.slane %v2970, 5
      %v2973 = vor.u32 %v2969, %v2972
      %v2974 = vrot.slane %v2973, 4
      %v2976 = vshll.u32 %v2814, 16
      %v2978 = vrot.slane %v2976, 5
      %v2979 = vsel %vm953, %v2974, %v2978
      %v2980 = vshrl.u32 %v2814, 16
      %v2982 = vrot.slane %v2980, 4
      %v2983 = vor.u32 %v2982, %v2978
      %v2984 = vrot.slane %v2983, 4
      %v2986 = vshll.u32 %v2815, 16
      %v2988 = vrot.slane %v2986, 5
      %v2989 = vsel %vm953, %v2984, %v2988
      %v2991 = vshrl.u32 %v2816, 16
      %v2993 = vrot.slane %v2991, 4
      %v2994 = vshll.u32 %v2816, 16
      %v2996 = vrot.slane %v2994, 5
      %v2997 = vor.u32 %v2993, %v2996
      %v2998 = vrot.slane %v2997, 4
      %v3000 = vshll.u32 %v2817, 16
      %v3002 = vrot.slane %v3000, 5
      %v3003 = vsel %vm953, %v2998, %v3002
      %v3004 = vshrl.u32 %v2817, 16
      %v3006 = vrot.slane %v3004, 4
      %v3007 = vor.u32 %v3006, %v3002
      %v3008 = vrot.slane %v3007, 4
      %v3010 = vshll.u32 %v2818, 16
      %v3012 = vrot.slane %v3010, 5
      %v3013 = vsel %vm953, %v3008, %v3012
      %v3015 = vshrl.u32 %v2819, 16
      %v3017 = vrot.slane %v3015, 4
      %v3018 = vshll.u32 %v2819, 16
      %v3020 = vrot.slane %v3018, 5
      %v3021 = vor.u32 %v3017, %v3020
      %v3022 = vrot.slane %v3021, 4
      %v3024 = vshll.u32 %v2820, 16
      %v3026 = vrot.slane %v3024, 5
      %v3027 = vsel %vm953, %v3022, %v3026
      %v3028 = vshrl.u32 %v2820, 16
      %v3030 = vrot.slane %v3028, 4
      %v3031 = vor.u32 %v3030, %v3026
      %v3032 = vrot.slane %v3031, 4
      %v3034 = vshll.u32 %v2821, 16
      %v3036 = vrot.slane %v3034, 5
      %v3037 = vsel %vm953, %v3032, %v3036
      %v3039 = vshrl.u32 %v2822, 16
      %v3041 = vrot.slane %v3039, 4
      %v3042 = vshll.u32 %v2822, 16
      %v3044 = vrot.slane %v3042, 5
      %v3045 = vor.u32 %v3041, %v3044
      %v3046 = vrot.slane %v3045, 4
      %v3048 = vshll.u32 %v2823, 16
      %v3050 = vrot.slane %v3048, 5
      %v3051 = vsel %vm953, %v3046, %v3050
      %v3052 = vshrl.u32 %v2823, 16
      %v3054 = vrot.slane %v3052, 4
      %v3055 = vor.u32 %v3054, %v3050
      %v3056 = vrot.slane %v3055, 4
      %v3058 = vshll.u32 %v2824, 16
      %v3060 = vrot.slane %v3058, 5
      %v3061 = vsel %vm953, %v3056, %v3060
      %v3063 = vshrl.u32 %v2825, 16
      %v3065 = vrot.slane %v3063, 4
      %v3066 = vshll.u32 %v2825, 16
      %v3068 = vrot.slane %v3066, 5
      %v3069 = vor.u32 %v3065, %v3068
      %v3070 = vrot.slane %v3069, 4
      %v3072 = vshll.u32 %v2826, 16
      %v3074 = vrot.slane %v3072, 5
      %v3075 = vsel %vm953, %v3070, %v3074
      %v3076 = vshrl.u32 %v2826, 16
      %v3078 = vrot.slane %v3076, 4
      %v3079 = vor.u32 %v3078, %v3074
      %v3080 = vrot.slane %v3079, 4
      %v3082 = vshll.u32 %v2827, 16
      %v3084 = vrot.slane %v3082, 5
      %v3085 = vsel %vm953, %v3080, %v3084
      %v3087 = vshrl.u32 %v2828, 16
      %v3089 = vrot.slane %v3087, 4
      %v3090 = vshll.u32 %v2828, 16
      %v3092 = vrot.slane %v3090, 5
      %v3093 = vor.u32 %v3089, %v3092
      %v3094 = vrot.slane %v3093, 4
      %v3096 = vshll.u32 %v2829, 16
      %v3098 = vrot.slane %v3096, 5
      %v3099 = vsel %vm953, %v3094, %v3098
      %v3100 = vshrl.u32 %v2829, 16
      %v3102 = vrot.slane %v3100, 4
      %v3103 = vor.u32 %v3102, %v3098
      %v3104 = vrot.slane %v3103, 4
      %v3106 = vshll.u32 %v2830, 16
      %v3108 = vrot.slane %v3106, 5
      %v3109 = vsel %vm953, %v3104, %v3108
      %v3111 = vshrl.u32 %v2831, 16
      %v3113 = vrot.slane %v3111, 4
      %v3114 = vshll.u32 %v2831, 16
      %v3116 = vrot.slane %v3114, 5
      %v3117 = vor.u32 %v3113, %v3116
      %v3118 = vrot.slane %v3117, 4
      %v3120 = vshll.u32 %v2832, 16
      %v3122 = vrot.slane %v3120, 5
      %v3123 = vsel %vm953, %v3118, %v3122
      %v3124 = vshrl.u32 %v2832, 16
      %v3126 = vrot.slane %v3124, 4
      %v3127 = vor.u32 %v3126, %v3122
      %v3128 = vrot.slane %v3127, 4
      %v3130 = vshll.u32 %v2833, 16
      %v3132 = vrot.slane %v3130, 5
      %v3133 = vsel %vm953, %v3128, %v3132
      %v3135 = vshrl.u32 %v2834, 16
      %v3137 = vrot.slane %v3135, 4
      %v3138 = vshll.u32 %v2834, 16
      %v3140 = vrot.slane %v3138, 5
      %v3141 = vor.u32 %v3137, %v3140
      %v3142 = vrot.slane %v3141, 4
      %v3144 = vshll.u32 %v2835, 16
      %v3146 = vrot.slane %v3144, 5
      %v3147 = vsel %vm953, %v3142, %v3146
      %v3148 = vshrl.u32 %v2835, 16
      %v3150 = vrot.slane %v3148, 4
      %v3151 = vor.u32 %v3150, %v3146
      %v3152 = vrot.slane %v3151, 4
      %v3154 = vshll.u32 %v2836, 16
      %v3156 = vrot.slane %v3154, 5
      %v3157 = vsel %vm953, %v3152, %v3156
      %v3159 = vshrl.u32 %v2837, 16
      %v3161 = vrot.slane %v3159, 4
      %v3162 = vshll.u32 %v2837, 16
      %v3164 = vrot.slane %v3162, 5
      %v3165 = vor.u32 %v3161, %v3164
      %v3166 = vrot.slane %v3165, 4
      %v3168 = vshll.u32 %v2838, 16
      %v3170 = vrot.slane %v3168, 5
      %v3171 = vsel %vm953, %v3166, %v3170
      %v3172 = vshrl.u32 %v2838, 16
      %v3174 = vrot.slane %v3172, 4
      %v3175 = vor.u32 %v3174, %v3170
      %v3176 = vrot.slane %v3175, 4
      %v3178 = vshll.u32 %v2839, 16
      %v3180 = vrot.slane %v3178, 5
      %v3181 = vsel %vm953, %v3176, %v3180
      %v3183 = vshrl.u32 %v2840, 16
      %v3185 = vrot.slane %v3183, 4
      %v3186 = vshll.u32 %v2840, 16
      %v3188 = vrot.slane %v3186, 5
      %v3189 = vor.u32 %v3185, %v3188
      %v3190 = vrot.slane %v3189, 4
      %v3192 = vshll.u32 %v2841, 16
      %v3194 = vrot.slane %v3192, 5
      %v3195 = vsel %vm953, %v3190, %v3194
      %v3196 = vshrl.u32 %v2841, 16
      %v3198 = vrot.slane %v3196, 4
      %v3199 = vor.u32 %v3198, %v3194
      %v3200 = vrot.slane %v3199, 4
      %v3202 = vshll.u32 %v2842, 16
      %v3204 = vrot.slane %v3202, 5
      %v3205 = vsel %vm953, %v3200, %v3204
      %v3207 = vshrl.u32 %v2843, 16
      %v3209 = vrot.slane %v3207, 4
      %v3210 = vshll.u32 %v2843, 16
      %v3212 = vrot.slane %v3210, 5
      %v3213 = vor.u32 %v3209, %v3212
      %v3214 = vrot.slane %v3213, 4
      %v3216 = vshll.u32 %v2844, 16
      %v3218 = vrot.slane %v3216, 5
      %v3219 = vsel %vm953, %v3214, %v3218
      %v3220 = vshrl.u32 %v2844, 16
      %v3222 = vrot.slane %v3220, 4
      %v3223 = vor.u32 %v3222, %v3218
      %v3224 = vrot.slane %v3223, 4
      %v3226 = vshll.u32 %v2845, 16
      %v3228 = vrot.slane %v3226, 5
      %v3229 = vsel %vm953, %v3224, %v3228
      %v3230 = vunpack.c.l.b16 %v2859
      %v3231 = vunpack.c.l.b16 %v2869
      %v3232 = vunpack.c.l.b16 %v2883
      %v3233 = vunpack.c.l.b16 %v2893
      %v3234 = vunpack.c.l.b16 %v2907
      %v3235 = vunpack.c.l.b16 %v2917
      %v3236 = vunpack.c.l.b16 %v2931
      %v3237 = vunpack.c.l.b16 %v2941
      %v3238 = vunpack.c.l.b16 %v2955
      %v3239 = vunpack.c.l.b16 %v2965
      %v3240 = vunpack.c.l.b16 %v2979
      %v3241 = vunpack.c.l.b16 %v2989
      %v3242 = vunpack.c.l.b16 %v3003
      %v3243 = vunpack.c.l.b16 %v3013
      %v3244 = vunpack.c.l.b16 %v3027
      %v3245 = vunpack.c.l.b16 %v3037
      %v3246 = vunpack.c.l.b16 %v3051
      %v3247 = vunpack.c.l.b16 %v3061
      %v3248 = vunpack.c.l.b16 %v3075
      %v3249 = vunpack.c.l.b16 %v3085
      %v3250 = vunpack.c.l.b16 %v3099
      %v3251 = vunpack.c.l.b16 %v3109
      %v3252 = vunpack.c.l.b16 %v3123
      %v3253 = vunpack.c.l.b16 %v3133
      %v3254 = vunpack.c.l.b16 %v3147
      %v3255 = vunpack.c.l.b16 %v3157
      %v3256 = vunpack.c.l.b16 %v3171
      %v3257 = vunpack.c.l.b16 %v3181
      %v3258 = vunpack.c.l.b16 %v3195
      %v3259 = vunpack.c.l.b16 %v3205
      %v3260 = vunpack.c.l.b16 %v3219
      %v3261 = vunpack.c.l.b16 %v3229
      %v3262 = vpack.c.b16 %v3231, %v3230
      %v3263 = vpack.c.b16 %v3233, %v3232
      %v3264 = vpack.c.b16 %v3235, %v3234
      %v3265 = vpack.c.b16 %v3237, %v3236
      %v3266 = vpack.c.b16 %v3239, %v3238
      %v3267 = vpack.c.b16 %v3241, %v3240
      %v3268 = vpack.c.b16 %v3243, %v3242
      %v3269 = vpack.c.b16 %v3245, %v3244
      %v3270 = vpack.c.b16 %v3247, %v3246
      %v3271 = vpack.c.b16 %v3249, %v3248
      %v3272 = vpack.c.b16 %v3251, %v3250
      %v3273 = vpack.c.b16 %v3253, %v3252
      %v3274 = vpack.c.b16 %v3255, %v3254
      %v3275 = vpack.c.b16 %v3257, %v3256
      %v3276 = vpack.c.b16 %v3259, %v3258
      %v3277 = vpack.c.b16 %v3261, %v3260
      %3294 = vst [vmem:[#allocation3 + $0x38] sm:$0xff] %v3262
      %3295 = vst [vmem:[#allocation3 + $0x80] sm:$0xff] %v3263
      %3296 = vst [vmem:[#allocation3 + $0xc8] sm:$0xff] %v3264
      %3297 = vst [vmem:[#allocation3 + $0x110] sm:$0xff] %v3265
      %3298 = vst [vmem:[#allocation3 + $0x158] sm:$0xff] %v3266
      %3299 = vst [vmem:[#allocation3 + $0x1a0] sm:$0xff] %v3267
      %3300 = vst [vmem:[#allocation3 + $0x1e8] sm:$0xff] %v3268
      %3301 = vst [vmem:[#allocation3 + $0x230] sm:$0xff] %v3269
      %3302 = vst [vmem:[#allocation3 + $0x278] sm:$0xff] %v3270
      %3303 = vst [vmem:[#allocation3 + $0x2c0] sm:$0xff] %v3271
      %3304 = vst [vmem:[#allocation3 + $0x308] sm:$0xff] %v3272
      %3305 = vst [vmem:[#allocation3 + $0x350] sm:$0xff] %v3273
      %3306 = vst [vmem:[#allocation3 + $0x398] sm:$0xff] %v3274
      %3307 = vst [vmem:[#allocation3 + $0x3e0] sm:$0xff] %v3275
      %3308 = vst [vmem:[#allocation3 + $0x428] sm:$0xff] %v3276
      %3309 = vst [vmem:[#allocation3 + $0x470] sm:$0xff] %v3277
      %v3310 = vld [vmem:[%s2653] sm:$0xe]
      %v3311 = vld [vmem:[%s2653 + $0x4] sm:$0xf]
      %v3312 = vld [vmem:[%s2653 + $0x8] sm:$0x1]
      %v3313 = vld [vmem:[%s2653 + $0xc] sm:$0xe]
      %v3314 = vld [vmem:[%s2653 + $0x10] sm:$0xf]
      %v3315 = vld [vmem:[%s2653 + $0x14] sm:$0x1]
      %v3316 = vld [vmem:[%s2653 + $0x18] sm:$0xe]
      %v3317 = vld [vmem:[%s2653 + $0x1c] sm:$0xf]
      %v3318 = vld [vmem:[%s2653 + $0x20] sm:$0x1]
      %v3319 = vld [vmem:[%s2653 + $0x24] sm:$0xe]
      %v3320 = vld [vmem:[%s2653 + $0x28] sm:$0xf]
      %v3321 = vld [vmem:[%s2653 + $0x2c] sm:$0x1]
      %v3322 = vld [vmem:[%s2653 + $0x30] sm:$0xe]
      %v3323 = vld [vmem:[%s2653 + $0x34] sm:$0xf]
      %v3324 = vld [vmem:[%s2653 + $0x38] sm:$0x1]
      %v3325 = vld [vmem:[%s2653 + $0x3c] sm:$0xe]
      %v3326 = vld [vmem:[%s2653 + $0x40] sm:$0xf]
      %v3327 = vld [vmem:[%s2653 + $0x44] sm:$0x1]
      %v3328 = vld [vmem:[%s2653 + $0x48] sm:$0xe]
      %v3329 = vld [vmem:[%s2653 + $0x4c] sm:$0xf]
      %v3330 = vld [vmem:[%s2653 + $0x50] sm:$0x1]
      %v3331 = vld [vmem:[%s2653 + $0x54] sm:$0xe]
      %v3332 = vld [vmem:[%s2653 + $0x58] sm:$0xf]
      %v3333 = vld [vmem:[%s2653 + $0x5c] sm:$0x1]
      %v3334 = vld [vmem:[%s2653 + $0x60] sm:$0xe]
      %v3335 = vld [vmem:[%s2653 + $0x64] sm:$0xf]
      %v3336 = vld [vmem:[%s2653 + $0x68] sm:$0x1]
      %v3337 = vld [vmem:[%s2653 + $0x6c] sm:$0xe]
      %v3338 = vld [vmem:[%s2653 + $0x70] sm:$0xf]
      %v3339 = vld [vmem:[%s2653 + $0x74] sm:$0x1]
      %v3340 = vld [vmem:[%s2653 + $0x78] sm:$0xe]
      %v3341 = vld [vmem:[%s2653 + $0x7c] sm:$0xf]
      %v3342 = vld [vmem:[%s2653 + $0x80] sm:$0x1]
      %v3343 = vld [vmem:[%s2653 + $0x84] sm:$0xe]
      %v3344 = vld [vmem:[%s2653 + $0x88] sm:$0xf]
      %v3345 = vld [vmem:[%s2653 + $0x8c] sm:$0x1]
      %v3346 = vld [vmem:[%s2653 + $0x90] sm:$0xe]
      %v3347 = vld [vmem:[%s2653 + $0x94] sm:$0xf]
      %v3348 = vld [vmem:[%s2653 + $0x98] sm:$0x1]
      %v3349 = vld [vmem:[%s2653 + $0x9c] sm:$0xe]
      %v3350 = vld [vmem:[%s2653 + $0xa0] sm:$0xf]
      %v3351 = vld [vmem:[%s2653 + $0xa4] sm:$0x1]
      %v3352 = vld [vmem:[%s2653 + $0xa8] sm:$0xe]
      %v3353 = vld [vmem:[%s2653 + $0xac] sm:$0xf]
      %v3354 = vld [vmem:[%s2653 + $0xb0] sm:$0x1]
      %v3355 = vld [vmem:[%s2653 + $0xb4] sm:$0xe]
      %v3356 = vld [vmem:[%s2653 + $0xb8] sm:$0xf]
      %v3357 = vld [vmem:[%s2653 + $0xbc] sm:$0x1]
      %v3406 = vrot.slane %v3310, 5
      %v3407 = vrot.slane %v3406, 4
      %v3408 = vrot.slane %v3311, 5
      %v3409 = vsel %vm1516, %v3407, %v3408
      %v3410 = vrot.slane %v3408, 4
      %v3411 = vrot.slane %v3312, 5
      %v3412 = vsel %vm1516, %v3410, %v3411
      %v3413 = vrot.slane %v3313, 5
      %v3414 = vrot.slane %v3413, 4
      %v3415 = vrot.slane %v3314, 5
      %v3416 = vsel %vm1516, %v3414, %v3415
      %v3417 = vrot.slane %v3415, 4
      %v3418 = vrot.slane %v3315, 5
      %v3419 = vsel %vm1516, %v3417, %v3418
      %v3420 = vrot.slane %v3316, 5
      %v3421 = vrot.slane %v3420, 4
      %v3422 = vrot.slane %v3317, 5
      %v3423 = vsel %vm1516, %v3421, %v3422
      %v3424 = vrot.slane %v3422, 4
      %v3425 = vrot.slane %v3318, 5
      %v3426 = vsel %vm1516, %v3424, %v3425
      %v3427 = vrot.slane %v3319, 5
      %v3428 = vrot.slane %v3427, 4
      %v3429 = vrot.slane %v3320, 5
      %v3430 = vsel %vm1516, %v3428, %v3429
      %v3431 = vrot.slane %v3429, 4
      %v3432 = vrot.slane %v3321, 5
      %v3433 = vsel %vm1516, %v3431, %v3432
      %v3434 = vrot.slane %v3322, 5
      %v3435 = vrot.slane %v3434, 4
      %v3436 = vrot.slane %v3323, 5
      %v3437 = vsel %vm1516, %v3435, %v3436
      %v3438 = vrot.slane %v3436, 4
      %v3439 = vrot.slane %v3324, 5
      %v3440 = vsel %vm1516, %v3438, %v3439
      %v3441 = vrot.slane %v3325, 5
      %v3442 = vrot.slane %v3441, 4
      %v3443 = vrot.slane %v3326, 5
      %v3444 = vsel %vm1516, %v3442, %v3443
      %v3445 = vrot.slane %v3443, 4
      %v3446 = vrot.slane %v3327, 5
      %v3447 = vsel %vm1516, %v3445, %v3446
      %v3448 = vrot.slane %v3328, 5
      %v3449 = vrot.slane %v3448, 4
      %v3450 = vrot.slane %v3329, 5
      %v3451 = vsel %vm1516, %v3449, %v3450
      %v3452 = vrot.slane %v3450, 4
      %v3453 = vrot.slane %v3330, 5
      %v3454 = vsel %vm1516, %v3452, %v3453
      %v3455 = vrot.slane %v3331, 5
      %v3456 = vrot.slane %v3455, 4
      %v3457 = vrot.slane %v3332, 5
      %v3458 = vsel %vm1516, %v3456, %v3457
      %v3459 = vrot.slane %v3457, 4
      %v3460 = vrot.slane %v3333, 5
      %v3461 = vsel %vm1516, %v3459, %v3460
      %v3462 = vrot.slane %v3334, 5
      %v3463 = vrot.slane %v3462, 4
      %v3464 = vrot.slane %v3335, 5
      %v3465 = vsel %vm1516, %v3463, %v3464
      %v3466 = vrot.slane %v3464, 4
      %v3467 = vrot.slane %v3336, 5
      %v3468 = vsel %vm1516, %v3466, %v3467
      %v3469 = vrot.slane %v3337, 5
      %v3470 = vrot.slane %v3469, 4
      %v3471 = vrot.slane %v3338, 5
      %v3472 = vsel %vm1516, %v3470, %v3471
      %v3473 = vrot.slane %v3471, 4
      %v3474 = vrot.slane %v3339, 5
      %v3475 = vsel %vm1516, %v3473, %v3474
      %v3476 = vrot.slane %v3340, 5
      %v3477 = vrot.slane %v3476, 4
      %v3478 = vrot.slane %v3341, 5
      %v3479 = vsel %vm1516, %v3477, %v3478
      %v3480 = vrot.slane %v3478, 4
      %v3481 = vrot.slane %v3342, 5
      %v3482 = vsel %vm1516, %v3480, %v3481
      %v3483 = vrot.slane %v3343, 5
      %v3484 = vrot.slane %v3483, 4
      %v3485 = vrot.slane %v3344, 5
      %v3486 = vsel %vm1516, %v3484, %v3485
      %v3487 = vrot.slane %v3485, 4
      %v3488 = vrot.slane %v3345, 5
      %v3489 = vsel %vm1516, %v3487, %v3488
      %v3490 = vrot.slane %v3346, 5
      %v3491 = vrot.slane %v3490, 4
      %v3492 = vrot.slane %v3347, 5
      %v3493 = vsel %vm1516, %v3491, %v3492
      %v3494 = vrot.slane %v3492, 4
      %v3495 = vrot.slane %v3348, 5
      %v3496 = vsel %vm1516, %v3494, %v3495
      %v3497 = vrot.slane %v3349, 5
      %v3498 = vrot.slane %v3497, 4
      %v3499 = vrot.slane %v3350, 5
      %v3500 = vsel %vm1516, %v3498, %v3499
      %v3501 = vrot.slane %v3499, 4
      %v3502 = vrot.slane %v3351, 5
      %v3503 = vsel %vm1516, %v3501, %v3502
      %v3504 = vrot.slane %v3352, 5
      %v3505 = vrot.slane %v3504, 4
      %v3506 = vrot.slane %v3353, 5
      %v3507 = vsel %vm1516, %v3505, %v3506
      %v3508 = vrot.slane %v3506, 4
      %v3509 = vrot.slane %v3354, 5
      %v3510 = vsel %vm1516, %v3508, %v3509
      %v3511 = vrot.slane %v3355, 5
      %v3512 = vrot.slane %v3511, 4
      %v3513 = vrot.slane %v3356, 5
      %v3514 = vsel %vm1516, %v3512, %v3513
      %v3515 = vrot.slane %v3513, 4
      %v3516 = vrot.slane %v3357, 5
      %v3517 = vsel %vm1516, %v3515, %v3516
      %v3518 = vunpack.c.l.b16 %v3409
      %v3519 = vunpack.c.l.b16 %v3412
      %v3520 = vunpack.c.l.b16 %v3416
      %v3521 = vunpack.c.l.b16 %v3419
      %v3522 = vunpack.c.l.b16 %v3423
      %v3523 = vunpack.c.l.b16 %v3426
      %v3524 = vunpack.c.l.b16 %v3430
      %v3525 = vunpack.c.l.b16 %v3433
      %v3526 = vunpack.c.l.b16 %v3437
      %v3527 = vunpack.c.l.b16 %v3440
      %v3528 = vunpack.c.l.b16 %v3444
      %v3529 = vunpack.c.l.b16 %v3447
      %v3530 = vunpack.c.l.b16 %v3451
      %v3531 = vunpack.c.l.b16 %v3454
      %v3532 = vunpack.c.l.b16 %v3458
      %v3533 = vunpack.c.l.b16 %v3461
      %v3534 = vunpack.c.l.b16 %v3465
      %v3535 = vunpack.c.l.b16 %v3468
      %v3536 = vunpack.c.l.b16 %v3472
      %v3537 = vunpack.c.l.b16 %v3475
      %v3538 = vunpack.c.l.b16 %v3479
      %v3539 = vunpack.c.l.b16 %v3482
      %v3540 = vunpack.c.l.b16 %v3486
      %v3541 = vunpack.c.l.b16 %v3489
      %v3542 = vunpack.c.l.b16 %v3493
      %v3543 = vunpack.c.l.b16 %v3496
      %v3544 = vunpack.c.l.b16 %v3500
      %v3545 = vunpack.c.l.b16 %v3503
      %v3546 = vunpack.c.l.b16 %v3507
      %v3547 = vunpack.c.l.b16 %v3510
      %v3548 = vunpack.c.l.b16 %v3514
      %v3549 = vunpack.c.l.b16 %v3517
      %v3550 = vpack.c.b16 %v3519, %v3518
      %v3551 = vpack.c.b16 %v3521, %v3520
      %v3552 = vpack.c.b16 %v3523, %v3522
      %v3553 = vpack.c.b16 %v3525, %v3524
      %v3554 = vpack.c.b16 %v3527, %v3526
      %v3555 = vpack.c.b16 %v3529, %v3528
      %v3556 = vpack.c.b16 %v3531, %v3530
      %v3557 = vpack.c.b16 %v3533, %v3532
      %v3558 = vpack.c.b16 %v3535, %v3534
      %v3559 = vpack.c.b16 %v3537, %v3536
      %v3560 = vpack.c.b16 %v3539, %v3538
      %v3561 = vpack.c.b16 %v3541, %v3540
      %v3562 = vpack.c.b16 %v3543, %v3542
      %v3563 = vpack.c.b16 %v3545, %v3544
      %v3564 = vpack.c.b16 %v3547, %v3546
      %v3565 = vpack.c.b16 %v3549, %v3548
      %3582 = vst [vmem:[#allocation3 + $0x40] sm:$0xff] %v3550
      %3583 = vst [vmem:[#allocation3 + $0x88] sm:$0xff] %v3551
      %3584 = vst [vmem:[#allocation3 + $0xd0] sm:$0xff] %v3552
      %3585 = vst [vmem:[#allocation3 + $0x118] sm:$0xff] %v3553
      %3586 = vst [vmem:[#allocation3 + $0x160] sm:$0xff] %v3554
      %3587 = vst [vmem:[#allocation3 + $0x1a8] sm:$0xff] %v3555
      %3588 = vst [vmem:[#allocation3 + $0x1f0] sm:$0xff] %v3556
      %3589 = vst [vmem:[#allocation3 + $0x238] sm:$0xff] %v3557
      %3590 = vst [vmem:[#allocation3 + $0x280] sm:$0xff] %v3558
      %3591 = vst [vmem:[#allocation3 + $0x2c8] sm:$0xff] %v3559
      %3592 = vst [vmem:[#allocation3 + $0x310] sm:$0xff] %v3560
      %3593 = vst [vmem:[#allocation3 + $0x358] sm:$0xff] %v3561
      %3594 = vst [vmem:[#allocation3 + $0x3a0] sm:$0xff] %v3562
      %3595 = vst [vmem:[#allocation3 + $0x3e8] sm:$0xff] %v3563
      %3596 = vst [vmem:[#allocation3 + $0x430] sm:$0xff] %v3564
      %3597 = vst [vmem:[#allocation3 + $0x478] sm:$0xff] %v3565
      %v3598 = vld [vmem:[#allocation3] sm:$0xff]
      %v3599 = vld [vmem:[#allocation3 + $0x8] sm:$0xff]
      %v3600 = vld [vmem:[#allocation3 + $0x10] sm:$0xff]
      %v3601 = vld [vmem:[#allocation3 + $0x18] sm:$0xff]
      %v3602 = vld [vmem:[#allocation3 + $0x20] sm:$0xff]
      %v3603 = vld [vmem:[#allocation3 + $0x28] sm:$0xff]
      %v3604 = vld [vmem:[#allocation3 + $0x30] sm:$0xff]
      %v3605 = vld [vmem:[#allocation3 + $0x38] sm:$0xff]
      %v3606 = vld [vmem:[#allocation3 + $0x40] sm:$0xff]
      %v3607 = vld [vmem:[#allocation3 + $0x48] sm:$0xff]
      %v3608 = vld [vmem:[#allocation3 + $0x50] sm:$0xff]
      %v3609 = vld [vmem:[#allocation3 + $0x58] sm:$0xff]
      %v3610 = vld [vmem:[#allocation3 + $0x60] sm:$0xff]
      %v3611 = vld [vmem:[#allocation3 + $0x68] sm:$0xff]
      %v3612 = vld [vmem:[#allocation3 + $0x70] sm:$0xff]
      %v3613 = vld [vmem:[#allocation3 + $0x78] sm:$0xff]
      %v3614 = vld [vmem:[#allocation3 + $0x80] sm:$0xff]
      %v3615 = vld [vmem:[#allocation3 + $0x88] sm:$0xff]
      %v3616 = vld [vmem:[#allocation3 + $0x90] sm:$0xff]
      %v3617 = vld [vmem:[#allocation3 + $0x98] sm:$0xff]
      %v3618 = vld [vmem:[#allocation3 + $0xa0] sm:$0xff]
      %v3619 = vld [vmem:[#allocation3 + $0xa8] sm:$0xff]
      %v3620 = vld [vmem:[#allocation3 + $0xb0] sm:$0xff]
      %v3621 = vld [vmem:[#allocation3 + $0xb8] sm:$0xff]
      %v3622 = vld [vmem:[#allocation3 + $0xc0] sm:$0xff]
      %v3623 = vld [vmem:[#allocation3 + $0xc8] sm:$0xff]
      %v3624 = vld [vmem:[#allocation3 + $0xd0] sm:$0xff]
      %v3625 = vld [vmem:[#allocation3 + $0xd8] sm:$0xff]
      %v3626 = vld [vmem:[#allocation3 + $0xe0] sm:$0xff]
      %v3627 = vld [vmem:[#allocation3 + $0xe8] sm:$0xff]
      %v3628 = vld [vmem:[#allocation3 + $0xf0] sm:$0xff]
      %v3629 = vld [vmem:[#allocation3 + $0xf8] sm:$0xff]
      %v3630 = vld [vmem:[#allocation3 + $0x100] sm:$0xff]
      %v3631 = vld [vmem:[#allocation3 + $0x108] sm:$0xff]
      %v3632 = vld [vmem:[#allocation3 + $0x110] sm:$0xff]
      %v3633 = vld [vmem:[#allocation3 + $0x118] sm:$0xff]
      %v3634 = vld [vmem:[#allocation3 + $0x120] sm:$0xff]
      %v3635 = vld [vmem:[#allocation3 + $0x128] sm:$0xff]
      %v3636 = vld [vmem:[#allocation3 + $0x130] sm:$0xff]
      %v3637 = vld [vmem:[#allocation3 + $0x138] sm:$0xff]
      %v3638 = vld [vmem:[#allocation3 + $0x140] sm:$0xff]
      %v3639 = vld [vmem:[#allocation3 + $0x148] sm:$0xff]
      %v3640 = vld [vmem:[#allocation3 + $0x150] sm:$0xff]
      %v3641 = vld [vmem:[#allocation3 + $0x158] sm:$0xff]
      %v3642 = vld [vmem:[#allocation3 + $0x160] sm:$0xff]
      %v3643 = vld [vmem:[#allocation3 + $0x168] sm:$0xff]
      %v3644 = vld [vmem:[#allocation3 + $0x170] sm:$0xff]
      %v3645 = vld [vmem:[#allocation3 + $0x178] sm:$0xff]
      %v3646 = vld [vmem:[#allocation3 + $0x180] sm:$0xff]
      %v3647 = vld [vmem:[#allocation3 + $0x188] sm:$0xff]
      %v3648 = vld [vmem:[#allocation3 + $0x190] sm:$0xff]
      %v3649 = vld [vmem:[#allocation3 + $0x198] sm:$0xff]
      %v3650 = vld [vmem:[#allocation3 + $0x1a0] sm:$0xff]
      %v3651 = vld [vmem:[#allocation3 + $0x1a8] sm:$0xff]
      %v3652 = vld [vmem:[#allocation3 + $0x1b0] sm:$0xff]
      %v3653 = vld [vmem:[#allocation3 + $0x1b8] sm:$0xff]
      %v3654 = vld [vmem:[#allocation3 + $0x1c0] sm:$0xff]
      %v3655 = vld [vmem:[#allocation3 + $0x1c8] sm:$0xff]
      %v3656 = vld [vmem:[#allocation3 + $0x1d0] sm:$0xff]
      %v3657 = vld [vmem:[#allocation3 + $0x1d8] sm:$0xff]
      %v3658 = vld [vmem:[#allocation3 + $0x1e0] sm:$0xff]
      %v3659 = vld [vmem:[#allocation3 + $0x1e8] sm:$0xff]
      %v3660 = vld [vmem:[#allocation3 + $0x1f0] sm:$0xff]
      %v3661 = vld [vmem:[#allocation3 + $0x1f8] sm:$0xff]
      %v3662 = vld [vmem:[#allocation3 + $0x200] sm:$0xff]
      %v3663 = vld [vmem:[#allocation3 + $0x208] sm:$0xff]
      %v3664 = vld [vmem:[#allocation3 + $0x210] sm:$0xff]
      %v3665 = vld [vmem:[#allocation3 + $0x218] sm:$0xff]
      %v3666 = vld [vmem:[#allocation3 + $0x220] sm:$0xff]
      %v3667 = vld [vmem:[#allocation3 + $0x228] sm:$0xff]
      %v3668 = vld [vmem:[#allocation3 + $0x230] sm:$0xff]
      %v3669 = vld [vmem:[#allocation3 + $0x238] sm:$0xff]
      %v3670 = vld [vmem:[#allocation3 + $0x240] sm:$0xff]
      %v3671 = vld [vmem:[#allocation3 + $0x248] sm:$0xff]
      %v3672 = vld [vmem:[#allocation3 + $0x250] sm:$0xff]
      %v3673 = vld [vmem:[#allocation3 + $0x258] sm:$0xff]
      %v3674 = vld [vmem:[#allocation3 + $0x260] sm:$0xff]
      %v3675 = vld [vmem:[#allocation3 + $0x268] sm:$0xff]
      %v3676 = vld [vmem:[#allocation3 + $0x270] sm:$0xff]
      %v3677 = vld [vmem:[#allocation3 + $0x278] sm:$0xff]
      %v3678 = vld [vmem:[#allocation3 + $0x280] sm:$0xff]
      %v3679 = vld [vmem:[#allocation3 + $0x288] sm:$0xff]
      %v3680 = vld [vmem:[#allocation3 + $0x290] sm:$0xff]
      %v3681 = vld [vmem:[#allocation3 + $0x298] sm:$0xff]
      %v3682 = vld [vmem:[#allocation3 + $0x2a0] sm:$0xff]
      %v3683 = vld [vmem:[#allocation3 + $0x2a8] sm:$0xff]
      %v3684 = vld [vmem:[#allocation3 + $0x2b0] sm:$0xff]
      %v3685 = vld [vmem:[#allocation3 + $0x2b8] sm:$0xff]
      %v3686 = vld [vmem:[#allocation3 + $0x2c0] sm:$0xff]
      %v3687 = vld [vmem:[#allocation3 + $0x2c8] sm:$0xff]
      %v3688 = vld [vmem:[#allocation3 + $0x2d0] sm:$0xff]
      %v3689 = vld [vmem:[#allocation3 + $0x2d8] sm:$0xff]
      %v3690 = vld [vmem:[#allocation3 + $0x2e0] sm:$0xff]
      %v3691 = vld [vmem:[#allocation3 + $0x2e8] sm:$0xff]
      %v3692 = vld [vmem:[#allocation3 + $0x2f0] sm:$0xff]
      %v3693 = vld [vmem:[#allocation3 + $0x2f8] sm:$0xff]
      %v3694 = vld [vmem:[#allocation3 + $0x300] sm:$0xff]
      %v3695 = vld [vmem:[#allocation3 + $0x308] sm:$0xff]
      %v3696 = vld [vmem:[#allocation3 + $0x310] sm:$0xff]
      %v3697 = vld [vmem:[#allocation3 + $0x318] sm:$0xff]
      %v3698 = vld [vmem:[#allocation3 + $0x320] sm:$0xff]
      %v3699 = vld [vmem:[#allocation3 + $0x328] sm:$0xff]
      %v3700 = vld [vmem:[#allocation3 + $0x330] sm:$0xff]
      %v3701 = vld [vmem:[#allocation3 + $0x338] sm:$0xff]
      %v3702 = vld [vmem:[#allocation3 + $0x340] sm:$0xff]
      %v3703 = vld [vmem:[#allocation3 + $0x348] sm:$0xff]
      %v3704 = vld [vmem:[#allocation3 + $0x350] sm:$0xff]
      %v3705 = vld [vmem:[#allocation3 + $0x358] sm:$0xff]
      %v3706 = vld [vmem:[#allocation3 + $0x360] sm:$0xff]
      %v3707 = vld [vmem:[#allocation3 + $0x368] sm:$0xff]
      %v3708 = vld [vmem:[#allocation3 + $0x370] sm:$0xff]
      %v3709 = vld [vmem:[#allocation3 + $0x378] sm:$0xff]
      %v3710 = vld [vmem:[#allocation3 + $0x380] sm:$0xff]
      %v3711 = vld [vmem:[#allocation3 + $0x388] sm:$0xff]
      %v3712 = vld [vmem:[#allocation3 + $0x390] sm:$0xff]
      %v3713 = vld [vmem:[#allocation3 + $0x398] sm:$0xff]
      %v3714 = vld [vmem:[#allocation3 + $0x3a0] sm:$0xff]
      %v3715 = vld [vmem:[#allocation3 + $0x3a8] sm:$0xff]
      %v3716 = vld [vmem:[#allocation3 + $0x3b0] sm:$0xff]
      %v3717 = vld [vmem:[#allocation3 + $0x3b8] sm:$0xff]
      %v3718 = vld [vmem:[#allocation3 + $0x3c0] sm:$0xff]
      %v3719 = vld [vmem:[#allocation3 + $0x3c8] sm:$0xff]
      %v3720 = vld [vmem:[#allocation3 + $0x3d0] sm:$0xff]
      %v3721 = vld [vmem:[#allocation3 + $0x3d8] sm:$0xff]
      %v3722 = vld [vmem:[#allocation3 + $0x3e0] sm:$0xff]
      %v3723 = vld [vmem:[#allocation3 + $0x3e8] sm:$0xff]
      %v3724 = vld [vmem:[#allocation3 + $0x3f0] sm:$0xff]
      %v3725 = vld [vmem:[#allocation3 + $0x3f8] sm:$0xff]
      %v3726 = vld [vmem:[#allocation3 + $0x400] sm:$0xff]
      %v3727 = vld [vmem:[#allocation3 + $0x408] sm:$0xff]
      %v3728 = vld [vmem:[#allocation3 + $0x410] sm:$0xff]
      %v3729 = vld [vmem:[#allocation3 + $0x418] sm:$0xff]
      %v3730 = vld [vmem:[#allocation3 + $0x420] sm:$0xff]
      %v3731 = vld [vmem:[#allocation3 + $0x428] sm:$0xff]
      %v3732 = vld [vmem:[#allocation3 + $0x430] sm:$0xff]
      %v3733 = vld [vmem:[#allocation3 + $0x438] sm:$0xff]
      %v3734 = vld [vmem:[#allocation3 + $0x440] sm:$0xff]
      %v3735 = vld [vmem:[#allocation3 + $0x448] sm:$0xff]
      %v3736 = vld [vmem:[#allocation3 + $0x450] sm:$0xff]
      %v3737 = vld [vmem:[#allocation3 + $0x458] sm:$0xff]
      %v3738 = vld [vmem:[#allocation3 + $0x460] sm:$0xff]
      %v3739 = vld [vmem:[#allocation3 + $0x468] sm:$0xff]
      %v3740 = vld [vmem:[#allocation3 + $0x470] sm:$0xff]
      %v3741 = vld [vmem:[#allocation3 + $0x478] sm:$0xff]
      %v3742 = vld [vmem:[%s1] sm:$0xf]
      %v3743 = vld [vmem:[%s1 + $0x4] sm:$0xf]
      %v3744 = vld [vmem:[%s1 + $0x8] sm:$0xf]
      %v3745 = vld [vmem:[%s1 + $0xc] sm:$0xf]
      %v3746 = vld [vmem:[%s1 + $0x10] sm:$0xf]
      %v3747 = vld [vmem:[%s1 + $0x14] sm:$0xf]
      %v3748 = vld [vmem:[%s1 + $0x18] sm:$0xf]
      %v3749 = vld [vmem:[%s1 + $0x1c] sm:$0xf]
      %v3750 = vld [vmem:[%s1 + $0x20] sm:$0xf]
      %v3751 = vld [vmem:[%s1 + $0x24] sm:$0xf]
      %v3752 = vld [vmem:[%s1 + $0x28] sm:$0xf]
      %v3753 = vld [vmem:[%s1 + $0x2c] sm:$0xf]
      %v3754 = vld [vmem:[%s1 + $0x30] sm:$0xf]
      %v3755 = vld [vmem:[%s1 + $0x34] sm:$0xf]
      %v3756 = vld [vmem:[%s1 + $0x38] sm:$0xf]
      %v3757 = vld [vmem:[%s1 + $0x3c] sm:$0xf]
      %v3758 = vld [vmem:[%s1 + $0x40] sm:$0xf]
      %v3759 = vld [vmem:[%s1 + $0x44] sm:$0xf]
      %v3760 = vld [vmem:[%s1 + $0x48] sm:$0xf]
      %v3761 = vld [vmem:[%s1 + $0x4c] sm:$0xf]
      %v3762 = vld [vmem:[%s1 + $0x50] sm:$0xf]
      %v3763 = vld [vmem:[%s1 + $0x54] sm:$0xf]
      %v3764 = vld [vmem:[%s1 + $0x58] sm:$0xf]
      %v3765 = vld [vmem:[%s1 + $0x5c] sm:$0xf]
      %v3766 = vld [vmem:[%s1 + $0x60] sm:$0xf]
      %v3767 = vld [vmem:[%s1 + $0x64] sm:$0xf]
      %v3768 = vld [vmem:[%s1 + $0x68] sm:$0xf]
      %v3769 = vld [vmem:[%s1 + $0x6c] sm:$0xf]
      %v3770 = vld [vmem:[%s1 + $0x70] sm:$0xf]
      %v3771 = vld [vmem:[%s1 + $0x74] sm:$0xf]
      %v3772 = vld [vmem:[%s1 + $0x78] sm:$0xf]
      %v3773 = vld [vmem:[%s1 + $0x7c] sm:$0xf]
      %v3774 = vld [vmem:[%s1 + $0x80] sm:$0xf]
      %v3775 = vld [vmem:[%s1 + $0x84] sm:$0xf]
      %v3776 = vld [vmem:[%s1 + $0x88] sm:$0xf]
      %v3777 = vld [vmem:[%s1 + $0x8c] sm:$0xf]
      %v3778 = vld [vmem:[%s1 + $0x90] sm:$0xf]
      %v3779 = vld [vmem:[%s1 + $0x94] sm:$0xf]
      %v3780 = vld [vmem:[%s1 + $0x98] sm:$0xf]
      %v3781 = vld [vmem:[%s1 + $0x9c] sm:$0xf]
      %v3782 = vld [vmem:[%s1 + $0xa0] sm:$0xf]
      %v3783 = vld [vmem:[%s1 + $0xa4] sm:$0xf]
      %v3784 = vld [vmem:[%s1 + $0xa8] sm:$0xf]
      %v3785 = vld [vmem:[%s1 + $0xac] sm:$0xf]
      %v3786 = vld [vmem:[%s1 + $0xb0] sm:$0xf]
      %v3787 = vld [vmem:[%s1 + $0xb4] sm:$0xf]
      %v3788 = vld [vmem:[%s1 + $0xb8] sm:$0xf]
      %v3789 = vld [vmem:[%s1 + $0xbc] sm:$0xf]
      %v3790 = vld [vmem:[%s1 + $0xc0] sm:$0xf]
      %v3791 = vld [vmem:[%s1 + $0xc4] sm:$0xf]
      %v3792 = vld [vmem:[%s1 + $0xc8] sm:$0xf]
      %v3793 = vld [vmem:[%s1 + $0xcc] sm:$0xf]
      %v3794 = vld [vmem:[%s1 + $0xd0] sm:$0xf]
      %v3795 = vld [vmem:[%s1 + $0xd4] sm:$0xf]
      %v3796 = vld [vmem:[%s1 + $0xd8] sm:$0xf]
      %v3797 = vld [vmem:[%s1 + $0xdc] sm:$0xf]
      %v3798 = vld [vmem:[%s1 + $0xe0] sm:$0xf]
      %v3799 = vld [vmem:[%s1 + $0xe4] sm:$0xf]
      %v3800 = vld [vmem:[%s1 + $0xe8] sm:$0xf]
      %v3801 = vld [vmem:[%s1 + $0xec] sm:$0xf]
      %v3802 = vld [vmem:[%s1 + $0xf0] sm:$0xf]
      %v3803 = vld [vmem:[%s1 + $0xf4] sm:$0xf]
      %v3804 = vld [vmem:[%s1 + $0xf8] sm:$0xf]
      %v3805 = vld [vmem:[%s1 + $0xfc] sm:$0xf]
      %v3806 = vld [vmem:[%s1 + $0x100] sm:$0xf]
      %v3807 = vld [vmem:[%s1 + $0x104] sm:$0xf]
      %v3808 = vld [vmem:[%s1 + $0x108] sm:$0xf]
      %v3809 = vld [vmem:[%s1 + $0x10c] sm:$0xf]
      %v3810 = vld [vmem:[%s1 + $0x110] sm:$0xf]
      %v3811 = vld [vmem:[%s1 + $0x114] sm:$0xf]
      %v3812 = vld [vmem:[%s1 + $0x118] sm:$0xf]
      %v3813 = vld [vmem:[%s1 + $0x11c] sm:$0xf]
      %v3814 = vld [vmem:[%s1 + $0x120] sm:$0xf]
      %v3815 = vld [vmem:[%s1 + $0x124] sm:$0xf]
      %v3816 = vld [vmem:[%s1 + $0x128] sm:$0xf]
      %v3817 = vld [vmem:[%s1 + $0x12c] sm:$0xf]
      %v3818 = vld [vmem:[%s1 + $0x130] sm:$0xf]
      %v3819 = vld [vmem:[%s1 + $0x134] sm:$0xf]
      %v3820 = vld [vmem:[%s1 + $0x138] sm:$0xf]
      %v3821 = vld [vmem:[%s1 + $0x13c] sm:$0xf]
      %v3822 = vld [vmem:[%s1 + $0x140] sm:$0xf]
      %v3823 = vld [vmem:[%s1 + $0x144] sm:$0xf]
      %v3824 = vld [vmem:[%s1 + $0x148] sm:$0xf]
      %v3825 = vld [vmem:[%s1 + $0x14c] sm:$0xf]
      %v3826 = vld [vmem:[%s1 + $0x150] sm:$0xf]
      %v3827 = vld [vmem:[%s1 + $0x154] sm:$0xf]
      %v3828 = vld [vmem:[%s1 + $0x158] sm:$0xf]
      %v3829 = vld [vmem:[%s1 + $0x15c] sm:$0xf]
      %v3830 = vld [vmem:[%s1 + $0x160] sm:$0xf]
      %v3831 = vld [vmem:[%s1 + $0x164] sm:$0xf]
      %v3832 = vld [vmem:[%s1 + $0x168] sm:$0xf]
      %v3833 = vld [vmem:[%s1 + $0x16c] sm:$0xf]
      %v3834 = vld [vmem:[%s1 + $0x170] sm:$0xf]
      %v3835 = vld [vmem:[%s1 + $0x174] sm:$0xf]
      %v3836 = vld [vmem:[%s1 + $0x178] sm:$0xf]
      %v3837 = vld [vmem:[%s1 + $0x17c] sm:$0xf]
      %v3838 = vld [vmem:[%s1 + $0x180] sm:$0xf]
      %v3839 = vld [vmem:[%s1 + $0x184] sm:$0xf]
      %v3840 = vld [vmem:[%s1 + $0x188] sm:$0xf]
      %v3841 = vld [vmem:[%s1 + $0x18c] sm:$0xf]
      %v3842 = vld [vmem:[%s1 + $0x190] sm:$0xf]
      %v3843 = vld [vmem:[%s1 + $0x194] sm:$0xf]
      %v3844 = vld [vmem:[%s1 + $0x198] sm:$0xf]
      %v3845 = vld [vmem:[%s1 + $0x19c] sm:$0xf]
      %v3846 = vld [vmem:[%s1 + $0x1a0] sm:$0xf]
      %v3847 = vld [vmem:[%s1 + $0x1a4] sm:$0xf]
      %v3848 = vld [vmem:[%s1 + $0x1a8] sm:$0xf]
      %v3849 = vld [vmem:[%s1 + $0x1ac] sm:$0xf]
      %v3850 = vld [vmem:[%s1 + $0x1b0] sm:$0xf]
      %v3851 = vld [vmem:[%s1 + $0x1b4] sm:$0xf]
      %v3852 = vld [vmem:[%s1 + $0x1b8] sm:$0xf]
      %v3853 = vld [vmem:[%s1 + $0x1bc] sm:$0xf]
      %v3854 = vld [vmem:[%s1 + $0x1c0] sm:$0xf]
      %v3855 = vld [vmem:[%s1 + $0x1c4] sm:$0xf]
      %v3856 = vld [vmem:[%s1 + $0x1c8] sm:$0xf]
      %v3857 = vld [vmem:[%s1 + $0x1cc] sm:$0xf]
      %v3858 = vld [vmem:[%s1 + $0x1d0] sm:$0xf]
      %v3859 = vld [vmem:[%s1 + $0x1d4] sm:$0xf]
      %v3860 = vld [vmem:[%s1 + $0x1d8] sm:$0xf]
      %v3861 = vld [vmem:[%s1 + $0x1dc] sm:$0xf]
      %v3862 = vld [vmem:[%s1 + $0x1e0] sm:$0xf]
      %v3863 = vld [vmem:[%s1 + $0x1e4] sm:$0xf]
      %v3864 = vld [vmem:[%s1 + $0x1e8] sm:$0xf]
      %v3865 = vld [vmem:[%s1 + $0x1ec] sm:$0xf]
      %v3866 = vld [vmem:[%s1 + $0x1f0] sm:$0xf]
      %v3867 = vld [vmem:[%s1 + $0x1f4] sm:$0xf]
      %v3868 = vld [vmem:[%s1 + $0x1f8] sm:$0xf]
      %v3869 = vld [vmem:[%s1 + $0x1fc] sm:$0xf]
      %v3870 = vld [vmem:[%s1 + $0x200] sm:$0xf]
      %v3871 = vld [vmem:[%s1 + $0x204] sm:$0xf]
      %v3872 = vld [vmem:[%s1 + $0x208] sm:$0xf]
      %v3873 = vld [vmem:[%s1 + $0x20c] sm:$0xf]
      %v3874 = vld [vmem:[%s1 + $0x210] sm:$0xf]
      %v3875 = vld [vmem:[%s1 + $0x214] sm:$0xf]
      %v3876 = vld [vmem:[%s1 + $0x218] sm:$0xf]
      %v3877 = vld [vmem:[%s1 + $0x21c] sm:$0xf]
      %v3878 = vld [vmem:[%s1 + $0x220] sm:$0xf]
      %v3879 = vld [vmem:[%s1 + $0x224] sm:$0xf]
      %v3880 = vld [vmem:[%s1 + $0x228] sm:$0xf]
      %v3881 = vld [vmem:[%s1 + $0x22c] sm:$0xf]
      %v3882 = vld [vmem:[%s1 + $0x230] sm:$0xf]
      %v3883 = vld [vmem:[%s1 + $0x234] sm:$0xf]
      %v3884 = vld [vmem:[%s1 + $0x238] sm:$0xf]
      %v3885 = vld [vmem:[%s1 + $0x23c] sm:$0xf]
      %v4030 = vunpack.c.l.b16 %v3742
      %v4031 = vunpack.c.l.b16 %v3743
      %v4032 = vunpack.c.l.b16 %v3744
      %v4033 = vunpack.c.l.b16 %v3745
      %v4034 = vunpack.c.l.b16 %v3746
      %v4035 = vunpack.c.l.b16 %v3747
      %v4036 = vunpack.c.l.b16 %v3748
      %v4037 = vunpack.c.l.b16 %v3749
      %v4038 = vunpack.c.l.b16 %v3750
      %v4039 = vunpack.c.l.b16 %v3751
      %v4040 = vunpack.c.l.b16 %v3752
      %v4041 = vunpack.c.l.b16 %v3753
      %v4042 = vunpack.c.l.b16 %v3754
      %v4043 = vunpack.c.l.b16 %v3755
      %v4044 = vunpack.c.l.b16 %v3756
      %v4045 = vunpack.c.l.b16 %v3757
      %v4046 = vunpack.c.l.b16 %v3758
      %v4047 = vunpack.c.l.b16 %v3759
      %v4048 = vunpack.c.l.b16 %v3760
      %v4049 = vunpack.c.l.b16 %v3761
      %v4050 = vunpack.c.l.b16 %v3762
      %v4051 = vunpack.c.l.b16 %v3763
      %v4052 = vunpack.c.l.b16 %v3764
      %v4053 = vunpack.c.l.b16 %v3765
      %v4054 = vunpack.c.l.b16 %v3766
      %v4055 = vunpack.c.l.b16 %v3767
      %v4056 = vunpack.c.l.b16 %v3768
      %v4057 = vunpack.c.l.b16 %v3769
      %v4058 = vunpack.c.l.b16 %v3770
      %v4059 = vunpack.c.l.b16 %v3771
      %v4060 = vunpack.c.l.b16 %v3772
      %v4061 = vunpack.c.l.b16 %v3773
      %v4062 = vunpack.c.l.b16 %v3774
      %v4063 = vunpack.c.l.b16 %v3775
      %v4064 = vunpack.c.l.b16 %v3776
      %v4065 = vunpack.c.l.b16 %v3777
      %v4066 = vunpack.c.l.b16 %v3778
      %v4067 = vunpack.c.l.b16 %v3779
      %v4068 = vunpack.c.l.b16 %v3780
      %v4069 = vunpack.c.l.b16 %v3781
      %v4070 = vunpack.c.l.b16 %v3782
      %v4071 = vunpack.c.l.b16 %v3783
      %v4072 = vunpack.c.l.b16 %v3784
      %v4073 = vunpack.c.l.b16 %v3785
      %v4074 = vunpack.c.l.b16 %v3786
      %v4075 = vunpack.c.l.b16 %v3787
      %v4076 = vunpack.c.l.b16 %v3788
      %v4077 = vunpack.c.l.b16 %v3789
      %v4078 = vunpack.c.l.b16 %v3790
      %v4079 = vunpack.c.l.b16 %v3791
      %v4080 = vunpack.c.l.b16 %v3792
      %v4081 = vunpack.c.l.b16 %v3793
      %v4082 = vunpack.c.l.b16 %v3794
      %v4083 = vunpack.c.l.b16 %v3795
      %v4084 = vunpack.c.l.b16 %v3796
      %v4085 = vunpack.c.l.b16 %v3797
      %v4086 = vunpack.c.l.b16 %v3798
      %v4087 = vunpack.c.l.b16 %v3799
      %v4088 = vunpack.c.l.b16 %v3800
      %v4089 = vunpack.c.l.b16 %v3801
      %v4090 = vunpack.c.l.b16 %v3802
      %v4091 = vunpack.c.l.b16 %v3803
      %v4092 = vunpack.c.l.b16 %v3804
      %v4093 = vunpack.c.l.b16 %v3805
      %v4094 = vunpack.c.l.b16 %v3806
      %v4095 = vunpack.c.l.b16 %v3807
      %v4096 = vunpack.c.l.b16 %v3808
      %v4097 = vunpack.c.l.b16 %v3809
      %v4098 = vunpack.c.l.b16 %v3810
      %v4099 = vunpack.c.l.b16 %v3811
      %v4100 = vunpack.c.l.b16 %v3812
      %v4101 = vunpack.c.l.b16 %v3813
      %v4102 = vunpack.c.l.b16 %v3814
      %v4103 = vunpack.c.l.b16 %v3815
      %v4104 = vunpack.c.l.b16 %v3816
      %v4105 = vunpack.c.l.b16 %v3817
      %v4106 = vunpack.c.l.b16 %v3818
      %v4107 = vunpack.c.l.b16 %v3819
      %v4108 = vunpack.c.l.b16 %v3820
      %v4109 = vunpack.c.l.b16 %v3821
      %v4110 = vunpack.c.l.b16 %v3822
      %v4111 = vunpack.c.l.b16 %v3823
      %v4112 = vunpack.c.l.b16 %v3824
      %v4113 = vunpack.c.l.b16 %v3825
      %v4114 = vunpack.c.l.b16 %v3826
      %v4115 = vunpack.c.l.b16 %v3827
      %v4116 = vunpack.c.l.b16 %v3828
      %v4117 = vunpack.c.l.b16 %v3829
      %v4118 = vunpack.c.l.b16 %v3830
      %v4119 = vunpack.c.l.b16 %v3831
      %v4120 = vunpack.c.l.b16 %v3832
      %v4121 = vunpack.c.l.b16 %v3833
      %v4122 = vunpack.c.l.b16 %v3834
      %v4123 = vunpack.c.l.b16 %v3835
      %v4124 = vunpack.c.l.b16 %v3836
      %v4125 = vunpack.c.l.b16 %v3837
      %v4126 = vunpack.c.l.b16 %v3838
      %v4127 = vunpack.c.l.b16 %v3839
      %v4128 = vunpack.c.l.b16 %v3840
      %v4129 = vunpack.c.l.b16 %v3841
      %v4130 = vunpack.c.l.b16 %v3842
      %v4131 = vunpack.c.l.b16 %v3843
      %v4132 = vunpack.c.l.b16 %v3844
      %v4133 = vunpack.c.l.b16 %v3845
      %v4134 = vunpack.c.l.b16 %v3846
      %v4135 = vunpack.c.l.b16 %v3847
      %v4136 = vunpack.c.l.b16 %v3848
      %v4137 = vunpack.c.l.b16 %v3849
      %v4138 = vunpack.c.l.b16 %v3850
      %v4139 = vunpack.c.l.b16 %v3851
      %v4140 = vunpack.c.l.b16 %v3852
      %v4141 = vunpack.c.l.b16 %v3853
      %v4142 = vunpack.c.l.b16 %v3854
      %v4143 = vunpack.c.l.b16 %v3855
      %v4144 = vunpack.c.l.b16 %v3856
      %v4145 = vunpack.c.l.b16 %v3857
      %v4146 = vunpack.c.l.b16 %v3858
      %v4147 = vunpack.c.l.b16 %v3859
      %v4148 = vunpack.c.l.b16 %v3860
      %v4149 = vunpack.c.l.b16 %v3861
      %v4150 = vunpack.c.l.b16 %v3862
      %v4151 = vunpack.c.l.b16 %v3863
      %v4152 = vunpack.c.l.b16 %v3864
      %v4153 = vunpack.c.l.b16 %v3865
      %v4154 = vunpack.c.l.b16 %v3866
      %v4155 = vunpack.c.l.b16 %v3867
      %v4156 = vunpack.c.l.b16 %v3868
      %v4157 = vunpack.c.l.b16 %v3869
      %v4158 = vunpack.c.l.b16 %v3870
      %v4159 = vunpack.c.l.b16 %v3871
      %v4160 = vunpack.c.l.b16 %v3872
      %v4161 = vunpack.c.l.b16 %v3873
      %v4162 = vunpack.c.l.b16 %v3874
      %v4163 = vunpack.c.l.b16 %v3875
      %v4164 = vunpack.c.l.b16 %v3876
      %v4165 = vunpack.c.l.b16 %v3877
      %v4166 = vunpack.c.l.b16 %v3878
      %v4167 = vunpack.c.l.b16 %v3879
      %v4168 = vunpack.c.l.b16 %v3880
      %v4169 = vunpack.c.l.b16 %v3881
      %v4170 = vunpack.c.l.b16 %v3882
      %v4171 = vunpack.c.l.b16 %v3883
      %v4172 = vunpack.c.l.b16 %v3884
      %v4173 = vunpack.c.l.b16 %v3885
      %v4174 = vpack.c.b16 %v4031, %v4030
      %v4175 = vpack.c.b16 %v4033, %v4032
      %v4176 = vpack.c.b16 %v4035, %v4034
      %v4177 = vpack.c.b16 %v4037, %v4036
      %v4178 = vpack.c.b16 %v4039, %v4038
      %v4179 = vpack.c.b16 %v4041, %v4040
      %v4180 = vpack.c.b16 %v4043, %v4042
      %v4181 = vpack.c.b16 %v4045, %v4044
      %v4182 = vpack.c.b16 %v4047, %v4046
      %v4183 = vpack.c.b16 %v4049, %v4048
      %v4184 = vpack.c.b16 %v4051, %v4050
      %v4185 = vpack.c.b16 %v4053, %v4052
      %v4186 = vpack.c.b16 %v4055, %v4054
      %v4187 = vpack.c.b16 %v4057, %v4056
      %v4188 = vpack.c.b16 %v4059, %v4058
      %v4189 = vpack.c.b16 %v4061, %v4060
      %v4190 = vpack.c.b16 %v4063, %v4062
      %v4191 = vpack.c.b16 %v4065, %v4064
      %v4192 = vpack.c.b16 %v4067, %v4066
      %v4193 = vpack.c.b16 %v4069, %v4068
      %v4194 = vpack.c.b16 %v4071, %v4070
      %v4195 = vpack.c.b16 %v4073, %v4072
      %v4196 = vpack.c.b16 %v4075, %v4074
      %v4197 = vpack.c.b16 %v4077, %v4076
      %v4198 = vpack.c.b16 %v4079, %v4078
      %v4199 = vpack.c.b16 %v4081, %v4080
      %v4200 = vpack.c.b16 %v4083, %v4082
      %v4201 = vpack.c.b16 %v4085, %v4084
      %v4202 = vpack.c.b16 %v4087, %v4086
      %v4203 = vpack.c.b16 %v4089, %v4088
      %v4204 = vpack.c.b16 %v4091, %v4090
      %v4205 = vpack.c.b16 %v4093, %v4092
      %v4206 = vpack.c.b16 %v4095, %v4094
      %v4207 = vpack.c.b16 %v4097, %v4096
      %v4208 = vpack.c.b16 %v4099, %v4098
      %v4209 = vpack.c.b16 %v4101, %v4100
      %v4210 = vpack.c.b16 %v4103, %v4102
      %v4211 = vpack.c.b16 %v4105, %v4104
      %v4212 = vpack.c.b16 %v4107, %v4106
      %v4213 = vpack.c.b16 %v4109, %v4108
      %v4214 = vpack.c.b16 %v4111, %v4110
      %v4215 = vpack.c.b16 %v4113, %v4112
      %v4216 = vpack.c.b16 %v4115, %v4114
      %v4217 = vpack.c.b16 %v4117, %v4116
      %v4218 = vpack.c.b16 %v4119, %v4118
      %v4219 = vpack.c.b16 %v4121, %v4120
      %v4220 = vpack.c.b16 %v4123, %v4122
      %v4221 = vpack.c.b16 %v4125, %v4124
      %v4222 = vpack.c.b16 %v4127, %v4126
      %v4223 = vpack.c.b16 %v4129, %v4128
      %v4224 = vpack.c.b16 %v4131, %v4130
      %v4225 = vpack.c.b16 %v4133, %v4132
      %v4226 = vpack.c.b16 %v4135, %v4134
      %v4227 = vpack.c.b16 %v4137, %v4136
      %v4228 = vpack.c.b16 %v4139, %v4138
      %v4229 = vpack.c.b16 %v4141, %v4140
      %v4230 = vpack.c.b16 %v4143, %v4142
      %v4231 = vpack.c.b16 %v4145, %v4144
      %v4232 = vpack.c.b16 %v4147, %v4146
      %v4233 = vpack.c.b16 %v4149, %v4148
      %v4234 = vpack.c.b16 %v4151, %v4150
      %v4235 = vpack.c.b16 %v4153, %v4152
      %v4236 = vpack.c.b16 %v4155, %v4154
      %v4237 = vpack.c.b16 %v4157, %v4156
      %v4238 = vpack.c.b16 %v4159, %v4158
      %v4239 = vpack.c.b16 %v4161, %v4160
      %v4240 = vpack.c.b16 %v4163, %v4162
      %v4241 = vpack.c.b16 %v4165, %v4164
      %v4242 = vpack.c.b16 %v4167, %v4166
      %v4243 = vpack.c.b16 %v4169, %v4168
      %v4244 = vpack.c.b16 %v4171, %v4170
      %v4245 = vpack.c.b16 %v4173, %v4172
      %4318 = vmatprep.subr.bf16.mxu0 0
      %4319 = vmatpush1.bf16.msra.mxu0 %v4174
      %4320 = vmatprep.subr.bf16.mxu0 0
      %4321 = vmatpush1.bf16.msra.mxu0 %v4175
      %4322 = vmatprep.subr.bf16.mxu0 0
      %4323 = vmatpush1.bf16.msra.mxu0 %v4176
      %4324 = vmatprep.subr.bf16.mxu0 0
      %4325 = vmatpush1.bf16.msra.mxu0 %v4177
      %4326 = vmatprep.subr.bf16.mxu0 0
      %4327 = vmatpush1.bf16.msra.mxu0 %v4178
      %4328 = vmatprep.subr.bf16.mxu0 0
      %4329 = vmatpush1.bf16.msra.mxu0 %v4179
      %4330 = vmatprep.subr.bf16.mxu0 0
      %4331 = vmatpush1.bf16.msra.mxu0 %v4180
      %4332 = vmatprep.subr.bf16.mxu0 0
      %4333 = vmatpush1.bf16.msra.mxu0 %v4181
      %4334 = vmatprep.subr.bf16.mxu0 0
      %4335 = vmatpush1.bf16.msra.mxu0 %v4182
      %4336 = vmatprep.subr.bf16.mxu0 0
      %4337 = vmatpush1.bf16.msra.mxu0 %v4183
      %4338 = vmatprep.subr.bf16.mxu0 0
      %4339 = vmatpush1.bf16.msra.mxu0 %v4184
      %4340 = vmatprep.subr.bf16.mxu0 0
      %4341 = vmatpush1.bf16.msra.mxu0 %v4185
      %4342 = vmatprep.subr.bf16.mxu0 0
      %4343 = vmatpush1.bf16.msra.mxu0 %v4186
      %4344 = vmatprep.subr.bf16.mxu0 0
      %4345 = vmatpush1.bf16.msra.mxu0 %v4187
      %4346 = vmatprep.subr.bf16.mxu0 0
      %4347 = vmatpush1.bf16.msra.mxu0 %v4188
      %4348 = vmatprep.subr.bf16.mxu0 0
      %4349 = vmatpush1.bf16.msra.mxu0 %v4189
      %4350 = vmatprep.mubr.bf16.mxu0 %v3599
      %4351 = vmatmul.mubr.bf16.gmra.mrb[0].mxu0 %v3598
      %v4352 = vpop.f32.mrb[0].mxu0
      %v4353 = vadd.f32 0.0, %v4352
      %v4354 = vpop.f32.mrb[0].mxu0
      %v4355 = vpop.f32.mrb[0].mxu0
      %v4356 = vadd.f32 0.0, %v4355
      %v4357 = vpop.f32.mrb[0].mxu0
      %4358 = vmatprep.mubr.bf16.mxu0 %v3608
      %4359 = vmatmul.mubr.bf16.gmra.mrb[0].mxu0 %v3607
      %v4360 = vpop.f32.mrb[0].mxu0
      %v4361 = vadd.f32 0.0, %v4360
      %v4362 = vpop.f32.mrb[0].mxu0
      %v4363 = vpop.f32.mrb[0].mxu0
      %v4364 = vadd.f32 0.0, %v4363
      %v4365 = vpop.f32.mrb[0].mxu0
      %4366 = vmatprep.mubr.bf16.mxu0 %v3617
      %4367 = vmatmul.mubr.bf16.gmra.mrb[0].mxu0 %v3616
      %v4368 = vpop.f32.mrb[0].mxu0
      %v4369 = vadd.f32 0.0, %v4368
      %v4370 = vpop.f32.mrb[0].mxu0
      %v4371 = vpop.f32.mrb[0].mxu0
      %v4372 = vadd.f32 0.0, %v4371
      %v4373 = vpop.f32.mrb[0].mxu0
      %4374 = vmatprep.mubr.bf16.mxu0 %v3626
      %4375 = vmatmul.mubr.bf16.gmra.mrb[0].mxu0 %v3625
      %v4376 = vpop.f32.mrb[0].mxu0
      %v4377 = vadd.f32 0.0, %v4376
      %v4378 = vpop.f32.mrb[0].mxu0
      %v4379 = vpop.f32.mrb[0].mxu0
      %v4380 = vadd.f32 0.0, %v4379
      %v4381 = vpop.f32.mrb[0].mxu0
      %4382 = vmatprep.mubr.bf16.mxu0 %v3635
      %4383 = vmatmul.mubr.bf16.gmra.mrb[0].mxu0 %v3634
      %v4384 = vpop.f32.mrb[0].mxu0
      %v4385 = vadd.f32 0.0, %v4384
      %v4386 = vpop.f32.mrb[0].mxu0
      %v4387 = vpop.f32.mrb[0].mxu0
      %v4388 = vadd.f32 0.0, %v4387
      %v4389 = vpop.f32.mrb[0].mxu0
      %4390 = vmatprep.mubr.bf16.mxu0 %v3644
      %4391 = vmatmul.mubr.bf16.gmra.mrb[0].mxu0 %v3643
      %v4392 = vpop.f32.mrb[0].mxu0
      %v4393 = vadd.f32 0.0, %v4392
      %v4394 = vpop.f32.mrb[0].mxu0
      %v4395 = vpop.f32.mrb[0].mxu0
      %v4396 = vadd.f32 0.0, %v4395
      %v4397 = vpop.f32.mrb[0].mxu0
      %4398 = vmatprep.mubr.bf16.mxu0 %v3653
      %4399 = vmatmul.mubr.bf16.gmra.mrb[0].mxu0 %v3652
      %v4400 = vpop.f32.mrb[0].mxu0
      %v4401 = vadd.f32 0.0, %v4400
      %v4402 = vpop.f32.mrb[0].mxu0
      %v4403 = vpop.f32.mrb[0].mxu0
      %v4404 = vadd.f32 0.0, %v4403
      %v4405 = vpop.f32.mrb[0].mxu0
      %4406 = vmatprep.mubr.bf16.mxu0 %v3662
      %4407 = vmatmul.mubr.bf16.gmra.mrb[0].mxu0 %v3661
      %v4408 = vpop.f32.mrb[0].mxu0
      %v4409 = vadd.f32 0.0, %v4408
      %v4410 = vpop.f32.mrb[0].mxu0
      %v4411 = vpop.f32.mrb[0].mxu0
      %v4412 = vadd.f32 0.0, %v4411
      %v4413 = vpop.f32.mrb[0].mxu0
      %4414 = vmatprep.mubr.bf16.mxu0 %v3671
      %4415 = vmatmul.mubr.bf16.gmra.mrb[0].mxu0 %v3670
      %v4416 = vpop.f32.mrb[0].mxu0
      %v4417 = vadd.f32 0.0, %v4416
      %v4418 = vpop.f32.mrb[0].mxu0
      %v4419 = vpop.f32.mrb[0].mxu0
      %v4420 = vadd.f32 0.0, %v4419
      %v4421 = vpop.f32.mrb[0].mxu0
      %4422 = vmatprep.mubr.bf16.mxu0 %v3680
      %4423 = vmatmul.mubr.bf16.gmra.mrb[0].mxu0 %v3679
      %v4424 = vpop.f32.mrb[0].mxu0
      %v4425 = vadd.f32 0.0, %v4424
      %v4426 = vpop.f32.mrb[0].mxu0
      %v4427 = vpop.f32.mrb[0].mxu0
      %v4428 = vadd.f32 0.0, %v4427
      %v4429 = vpop.f32.mrb[0].mxu0
      %4430 = vmatprep.mubr.bf16.mxu0 %v3689
      %4431 = vmatmul.mubr.bf16.gmra.mrb[0].mxu0 %v3688
      %v4432 = vpop.f32.mrb[0].mxu0
      %v4433 = vadd.f32 0.0, %v4432
      %v4434 = vpop.f32.mrb[0].mxu0
      %v4435 = vpop.f32.mrb[0].mxu0
      %v4436 = vadd.f32 0.0, %v4435
      %v4437 = vpop.f32.mrb[0].mxu0
      %4438 = vmatprep.mubr.bf16.mxu0 %v3698
      %4439 = vmatmul.mubr.bf16.gmra.mrb[0].mxu0 %v3697
      %v4440 = vpop.f32.mrb[0].mxu0
      %v4441 = vadd.f32 0.0, %v4440
      %v4442 = vpop.f32.mrb[0].mxu0
      %v4443 = vpop.f32.mrb[0].mxu0
      %v4444 = vadd.f32 0.0, %v4443
      %v4445 = vpop.f32.mrb[0].mxu0
      %4446 = vmatprep.mubr.bf16.mxu0 %v3707
      %4447 = vmatmul.mubr.bf16.gmra.mrb[0].mxu0 %v3706
      %v4448 = vpop.f32.mrb[0].mxu0
      %v4449 = vadd.f32 0.0, %v4448
      %v4450 = vpop.f32.mrb[0].mxu0
      %v4451 = vpop.f32.mrb[0].mxu0
      %v4452 = vadd.f32 0.0, %v4451
      %v4453 = vpop.f32.mrb[0].mxu0
      %4454 = vmatprep.mubr.bf16.mxu0 %v3716
      %4455 = vmatmul.mubr.bf16.gmra.mrb[0].mxu0 %v3715
      %v4456 = vpop.f32.mrb[0].mxu0
      %v4457 = vadd.f32 0.0, %v4456
      %v4458 = vpop.f32.mrb[0].mxu0
      %v4459 = vpop.f32.mrb[0].mxu0
      %v4460 = vadd.f32 0.0, %v4459
      %v4461 = vpop.f32.mrb[0].mxu0
      %4462 = vmatprep.mubr.bf16.mxu0 %v3725
      %4463 = vmatmul.mubr.bf16.gmra.mrb[0].mxu0 %v3724
      %v4464 = vpop.f32.mrb[0].mxu0
      %v4465 = vadd.f32 0.0, %v4464
      %v4466 = vpop.f32.mrb[0].mxu0
      %v4467 = vpop.f32.mrb[0].mxu0
      %v4468 = vadd.f32 0.0, %v4467
      %v4469 = vpop.f32.mrb[0].mxu0
      %4470 = vmatprep.mubr.bf16.mxu0 %v3734
      %4471 = vmatmul.mubr.bf16.gmra.mrb[0].mxu0 %v3733
      %v4472 = vpop.f32.mrb[0].mxu0
      %v4473 = vadd.f32 0.0, %v4472
      %v4474 = vpop.f32.mrb[0].mxu0
      %v4475 = vpop.f32.mrb[0].mxu0
      %v4476 = vadd.f32 0.0, %v4475
      %v4477 = vpop.f32.mrb[0].mxu0
      %4478 = vdwg.mxu0
      %4479 = vmatprep.subr.bf16.mxu0 0
      %4480 = vmatpush1.bf16.msra.mxu0 %v4190
      %4481 = vmatprep.subr.bf16.mxu0 0
      %4482 = vmatpush1.bf16.msra.mxu0 %v4191
      %4483 = vmatprep.subr.bf16.mxu0 0
      %4484 = vmatpush1.bf16.msra.mxu0 %v4192
      %4485 = vmatprep.subr.bf16.mxu0 0
      %4486 = vmatpush1.bf16.msra.mxu0 %v4193
      %4487 = vmatprep.subr.bf16.mxu0 0
      %4488 = vmatpush1.bf16.msra.mxu0 %v4194
      %4489 = vmatprep.subr.bf16.mxu0 0
      %4490 = vmatpush1.bf16.msra.mxu0 %v4195
      %4491 = vmatprep.subr.bf16.mxu0 0
      %4492 = vmatpush1.bf16.msra.mxu0 %v4196
      %4493 = vmatprep.subr.bf16.mxu0 0
      %4494 = vmatpush1.bf16.msra.mxu0 %v4197
      %4495 = vmatprep.subr.bf16.mxu0 0
      %4496 = vmatpush1.bf16.msra.mxu0 %v4198
      %4497 = vmatprep.subr.bf16.mxu0 0
      %4498 = vmatpush1.bf16.msra.mxu0 %v4199
      %4499 = vmatprep.subr.bf16.mxu0 0
      %4500 = vmatpush1.bf16.msra.mxu0 %v4200
      %4501 = vmatprep.subr.bf16.mxu0 0
      %4502 = vmatpush1.bf16.msra.mxu0 %v4201
      %4503 = vmatprep.subr.bf16.mxu0 0
      %4504 = vmatpush1.bf16.msra.mxu0 %v4202
      %4505 = vmatprep.subr.bf16.mxu0 0
      %4506 = vmatpush1.bf16.msra.mxu0 %v4203
      %4507 = vmatprep.subr.bf16.mxu0 0
      %4508 = vmatpush1.bf16.msra.mxu0 %v4204
      %4509 = vmatprep.subr.bf16.mxu0 0
      %4510 = vmatpush1.bf16.msra.mxu0 %v4205
      %4511 = vmatprep.mubr.bf16.mxu0 %v3601
      %4512 = vmatmul.mubr.bf16.gmra.mrb[0].mxu0 %v3600
      %v4513 = vpop.f32.mrb[0].mxu0
      %v4514 = vadd.f32 %v4353, %v4513
      %v4515 = vpop.f32.mrb[0].mxu0
      %v4516 = vpop.f32.mrb[0].mxu0
      %v4517 = vadd.f32 %v4356, %v4516
      %v4518 = vpop.f32.mrb[0].mxu0
      %4519 = vmatprep.mubr.bf16.mxu0 %v3610
      %4520 = vmatmul.mubr.bf16.gmra.mrb[0].mxu0 %v3609
      %v4521 = vpop.f32.mrb[0].mxu0
      %v4522 = vadd.f32 %v4361, %v4521
      %v4523 = vpop.f32.mrb[0].mxu0
      %v4524 = vpop.f32.mrb[0].mxu0
      %v4525 = vadd.f32 %v4364, %v4524
      %v4526 = vpop.f32.mrb[0].mxu0
      %4527 = vmatprep.mubr.bf16.mxu0 %v3619
      %4528 = vmatmul.mubr.bf16.gmra.mrb[0].mxu0 %v3618
      %v4529 = vpop.f32.mrb[0].mxu0
      %v4530 = vadd.f32 %v4369, %v4529
      %v4531 = vpop.f32.mrb[0].mxu0
      %v4532 = vpop.f32.mrb[0].mxu0
      %v4533 = vadd.f32 %v4372, %v4532
      %v4534 = vpop.f32.mrb[0].mxu0
      %4535 = vmatprep.mubr.bf16.mxu0 %v3628
      %4536 = vmatmul.mubr.bf16.gmra.mrb[0].mxu0 %v3627
      %v4537 = vpop.f32.mrb[0].mxu0
      %v4538 = vadd.f32 %v4377, %v4537
      %v4539 = vpop.f32.mrb[0].mxu0
      %v4540 = vpop.f32.mrb[0].mxu0
      %v4541 = vadd.f32 %v4380, %v4540
      %v4542 = vpop.f32.mrb[0].mxu0
      %4543 = vmatprep.mubr.bf16.mxu0 %v3637
      %4544 = vmatmul.mubr.bf16.gmra.mrb[0].mxu0 %v3636
      %v4545 = vpop.f32.mrb[0].mxu0
      %v4546 = vadd.f32 %v4385, %v4545
      %v4547 = vpop.f32.mrb[0].mxu0
      %v4548 = vpop.f32.mrb[0].mxu0
      %v4549 = vadd.f32 %v4388, %v4548
      %v4550 = vpop.f32.mrb[0].mxu0
      %4551 = vmatprep.mubr.bf16.mxu0 %v3646
      %4552 = vmatmul.mubr.bf16.gmra.mrb[0].mxu0 %v3645
      %v4553 = vpop.f32.mrb[0].mxu0
      %v4554 = vadd.f32 %v4393, %v4553
      %v4555 = vpop.f32.mrb[0].mxu0
      %v4556 = vpop.f32.mrb[0].mxu0
      %v4557 = vadd.f32 %v4396, %v4556
      %v4558 = vpop.f32.mrb[0].mxu0
      %4559 = vmatprep.mubr.bf16.mxu0 %v3655
      %4560 = vmatmul.mubr.bf16.gmra.mrb[0].mxu0 %v3654
      %v4561 = vpop.f32.mrb[0].mxu0
      %v4562 = vadd.f32 %v4401, %v4561
      %v4563 = vpop.f32.mrb[0].mxu0
      %v4564 = vpop.f32.mrb[0].mxu0
      %v4565 = vadd.f32 %v4404, %v4564
      %v4566 = vpop.f32.mrb[0].mxu0
      %4567 = vmatprep.mubr.bf16.mxu0 %v3664
      %4568 = vmatmul.mubr.bf16.gmra.mrb[0].mxu0 %v3663
      %v4569 = vpop.f32.mrb[0].mxu0
      %v4570 = vadd.f32 %v4409, %v4569
      %v4571 = vpop.f32.mrb[0].mxu0
      %v4572 = vpop.f32.mrb[0].mxu0
      %v4573 = vadd.f32 %v4412, %v4572
      %v4574 = vpop.f32.mrb[0].mxu0
      %4575 = vmatprep.mubr.bf16.mxu0 %v3673
      %4576 = vmatmul.mubr.bf16.gmra.mrb[0].mxu0 %v3672
      %v4577 = vpop.f32.mrb[0].mxu0
      %v4578 = vadd.f32 %v4417, %v4577
      %v4579 = vpop.f32.mrb[0].mxu0
      %v4580 = vpop.f32.mrb[0].mxu0
      %v4581 = vadd.f32 %v4420, %v4580
      %v4582 = vpop.f32.mrb[0].mxu0
      %4583 = vmatprep.mubr.bf16.mxu0 %v3682
      %4584 = vmatmul.mubr.bf16.gmra.mrb[0].mxu0 %v3681
      %v4585 = vpop.f32.mrb[0].mxu0
      %v4586 = vadd.f32 %v4425, %v4585
      %v4587 = vpop.f32.mrb[0].mxu0
      %v4588 = vpop.f32.mrb[0].mxu0
      %v4589 = vadd.f32 %v4428, %v4588
      %v4590 = vpop.f32.mrb[0].mxu0
      %4591 = vmatprep.mubr.bf16.mxu0 %v3691
      %4592 = vmatmul.mubr.bf16.gmra.mrb[0].mxu0 %v3690
      %v4593 = vpop.f32.mrb[0].mxu0
      %v4594 = vadd.f32 %v4433, %v4593
      %v4595 = vpop.f32.mrb[0].mxu0
      %v4596 = vpop.f32.mrb[0].mxu0
      %v4597 = vadd.f32 %v4436, %v4596
      %v4598 = vpop.f32.mrb[0].mxu0
      %4599 = vmatprep.mubr.bf16.mxu0 %v3700
      %4600 = vmatmul.mubr.bf16.gmra.mrb[0].mxu0 %v3699
      %v4601 = vpop.f32.mrb[0].mxu0
      %v4602 = vadd.f32 %v4441, %v4601
      %v4603 = vpop.f32.mrb[0].mxu0
      %v4604 = vpop.f32.mrb[0].mxu0
      %v4605 = vadd.f32 %v4444, %v4604
      %v4606 = vpop.f32.mrb[0].mxu0
      %4607 = vmatprep.mubr.bf16.mxu0 %v3709
      %4608 = vmatmul.mubr.bf16.gmra.mrb[0].mxu0 %v3708
      %v4609 = vpop.f32.mrb[0].mxu0
      %v4610 = vadd.f32 %v4449, %v4609
      %v4611 = vpop.f32.mrb[0].mxu0
      %v4612 = vpop.f32.mrb[0].mxu0
      %v4613 = vadd.f32 %v4452, %v4612
      %v4614 = vpop.f32.mrb[0].mxu0
      %4615 = vmatprep.mubr.bf16.mxu0 %v3718
      %4616 = vmatmul.mubr.bf16.gmra.mrb[0].mxu0 %v3717
      %v4617 = vpop.f32.mrb[0].mxu0
      %v4618 = vadd.f32 %v4457, %v4617
      %v4619 = vpop.f32.mrb[0].mxu0
      %v4620 = vpop.f32.mrb[0].mxu0
      %v4621 = vadd.f32 %v4460, %v4620
      %v4622 = vpop.f32.mrb[0].mxu0
      %4623 = vmatprep.mubr.bf16.mxu0 %v3727
      %4624 = vmatmul.mubr.bf16.gmra.mrb[0].mxu0 %v3726
      %v4625 = vpop.f32.mrb[0].mxu0
      %v4626 = vadd.f32 %v4465, %v4625
      %v4627 = vpop.f32.mrb[0].mxu0
      %v4628 = vpop.f32.mrb[0].mxu0
      %v4629 = vadd.f32 %v4468, %v4628
      %v4630 = vpop.f32.mrb[0].mxu0
      %4631 = vmatprep.mubr.bf16.mxu0 %v3736
      %4632 = vmatmul.mubr.bf16.gmra.mrb[0].mxu0 %v3735
      %v4633 = vpop.f32.mrb[0].mxu0
      %v4634 = vadd.f32 %v4473, %v4633
      %v4635 = vpop.f32.mrb[0].mxu0
      %v4636 = vpop.f32.mrb[0].mxu0
      %v4637 = vadd.f32 %v4476, %v4636
      %v4638 = vpop.f32.mrb[0].mxu0
      %4639 = vdwg.mxu0
      %4640 = vmatprep.subr.bf16.mxu0 0
      %4641 = vmatpush1.bf16.msra.mxu0 %v4206
      %4642 = vmatprep.subr.bf16.mxu0 0
      %4643 = vmatpush1.bf16.msra.mxu0 %v4207
      %4644 = vmatprep.subr.bf16.mxu0 0
      %4645 = vmatpush1.bf16.msra.mxu0 %v4208
      %4646 = vmatprep.subr.bf16.mxu0 0
      %4647 = vmatpush1.bf16.msra.mxu0 %v4209
      %4648 = vmatprep.subr.bf16.mxu0 0
      %4649 = vmatpush1.bf16.msra.mxu0 %v4210
      %4650 = vmatprep.subr.bf16.mxu0 0
      %4651 = vmatpush1.bf16.msra.mxu0 %v4211
      %4652 = vmatprep.subr.bf16.mxu0 0
      %4653 = vmatpush1.bf16.msra.mxu0 %v4212
      %4654 = vmatprep.subr.bf16.mxu0 0
      %4655 = vmatpush1.bf16.msra.mxu0 %v4213
      %4656 = vmatprep.subr.bf16.mxu0 0
      %4657 = vmatpush1.bf16.msra.mxu0 %v4214
      %4658 = vmatprep.subr.bf16.mxu0 0
      %4659 = vmatpush1.bf16.msra.mxu0 %v4215
      %4660 = vmatprep.subr.bf16.mxu0 0
      %4661 = vmatpush1.bf16.msra.mxu0 %v4216
      %4662 = vmatprep.subr.bf16.mxu0 0
      %4663 = vmatpush1.bf16.msra.mxu0 %v4217
      %4664 = vmatprep.subr.bf16.mxu0 0
      %4665 = vmatpush1.bf16.msra.mxu0 %v4218
      %4666 = vmatprep.subr.bf16.mxu0 0
      %4667 = vmatpush1.bf16.msra.mxu0 %v4219
      %4668 = vmatprep.subr.bf16.mxu0 0
      %4669 = vmatpush1.bf16.msra.mxu0 %v4220
      %4670 = vmatprep.subr.bf16.mxu0 0
      %4671 = vmatpush1.bf16.msra.mxu0 %v4221
      %4672 = vmatprep.mubr.bf16.mxu0 %v3603
      %4673 = vmatmul.mubr.bf16.gmra.mrb[0].mxu0 %v3602
      %v4674 = vpop.f32.mrb[0].mxu0
      %v4675 = vadd.f32 %v4514, %v4674
      %v4676 = vpop.f32.mrb[0].mxu0
      %v4677 = vpop.f32.mrb[0].mxu0
      %v4678 = vadd.f32 %v4517, %v4677
      %v4679 = vpop.f32.mrb[0].mxu0
      %4680 = vmatprep.mubr.bf16.mxu0 %v3612
      %4681 = vmatmul.mubr.bf16.gmra.mrb[0].mxu0 %v3611
      %v4682 = vpop.f32.mrb[0].mxu0
      %v4683 = vadd.f32 %v4522, %v4682
      %v4684 = vpop.f32.mrb[0].mxu0
      %v4685 = vpop.f32.mrb[0].mxu0
      %v4686 = vadd.f32 %v4525, %v4685
      %v4687 = vpop.f32.mrb[0].mxu0
      %4688 = vmatprep.mubr.bf16.mxu0 %v3621
      %4689 = vmatmul.mubr.bf16.gmra.mrb[0].mxu0 %v3620
      %v4690 = vpop.f32.mrb[0].mxu0
      %v4691 = vadd.f32 %v4530, %v4690
      %v4692 = vpop.f32.mrb[0].mxu0
      %v4693 = vpop.f32.mrb[0].mxu0
      %v4694 = vadd.f32 %v4533, %v4693
      %v4695 = vpop.f32.mrb[0].mxu0
      %4696 = vmatprep.mubr.bf16.mxu0 %v3630
      %4697 = vmatmul.mubr.bf16.gmra.mrb[0].mxu0 %v3629
      %v4698 = vpop.f32.mrb[0].mxu0
      %v4699 = vadd.f32 %v4538, %v4698
      %v4700 = vpop.f32.mrb[0].mxu0
      %v4701 = vpop.f32.mrb[0].mxu0
      %v4702 = vadd.f32 %v4541, %v4701
      %v4703 = vpop.f32.mrb[0].mxu0
      %4704 = vmatprep.mubr.bf16.mxu0 %v3639
      %4705 = vmatmul.mubr.bf16.gmra.mrb[0].mxu0 %v3638
      %v4706 = vpop.f32.mrb[0].mxu0
      %v4707 = vadd.f32 %v4546, %v4706
      %v4708 = vpop.f32.mrb[0].mxu0
      %v4709 = vpop.f32.mrb[0].mxu0
      %v4710 = vadd.f32 %v4549, %v4709
      %v4711 = vpop.f32.mrb[0].mxu0
      %4712 = vmatprep.mubr.bf16.mxu0 %v3648
      %4713 = vmatmul.mubr.bf16.gmra.mrb[0].mxu0 %v3647
      %v4714 = vpop.f32.mrb[0].mxu0
      %v4715 = vadd.f32 %v4554, %v4714
      %v4716 = vpop.f32.mrb[0].mxu0
      %v4717 = vpop.f32.mrb[0].mxu0
      %v4718 = vadd.f32 %v4557, %v4717
      %v4719 = vpop.f32.mrb[0].mxu0
      %4720 = vmatprep.mubr.bf16.mxu0 %v3657
      %4721 = vmatmul.mubr.bf16.gmra.mrb[0].mxu0 %v3656
      %v4722 = vpop.f32.mrb[0].mxu0
      %v4723 = vadd.f32 %v4562, %v4722
      %v4724 = vpop.f32.mrb[0].mxu0
      %v4725 = vpop.f32.mrb[0].mxu0
      %v4726 = vadd.f32 %v4565, %v4725
      %v4727 = vpop.f32.mrb[0].mxu0
      %4728 = vmatprep.mubr.bf16.mxu0 %v3666
      %4729 = vmatmul.mubr.bf16.gmra.mrb[0].mxu0 %v3665
      %v4730 = vpop.f32.mrb[0].mxu0
      %v4731 = vadd.f32 %v4570, %v4730
      %v4732 = vpop.f32.mrb[0].mxu0
      %v4733 = vpop.f32.mrb[0].mxu0
      %v4734 = vadd.f32 %v4573, %v4733
      %v4735 = vpop.f32.mrb[0].mxu0
      %4736 = vmatprep.mubr.bf16.mxu0 %v3675
      %4737 = vmatmul.mubr.bf16.gmra.mrb[0].mxu0 %v3674
      %v4738 = vpop.f32.mrb[0].mxu0
      %v4739 = vadd.f32 %v4578, %v4738
      %v4740 = vpop.f32.mrb[0].mxu0
      %v4741 = vpop.f32.mrb[0].mxu0
      %v4742 = vadd.f32 %v4581, %v4741
      %v4743 = vpop.f32.mrb[0].mxu0
      %4744 = vmatprep.mubr.bf16.mxu0 %v3684
      %4745 = vmatmul.mubr.bf16.gmra.mrb[0].mxu0 %v3683
      %v4746 = vpop.f32.mrb[0].mxu0
      %v4747 = vadd.f32 %v4586, %v4746
      %v4748 = vpop.f32.mrb[0].mxu0
      %v4749 = vpop.f32.mrb[0].mxu0
      %v4750 = vadd.f32 %v4589, %v4749
      %v4751 = vpop.f32.mrb[0].mxu0
      %4752 = vmatprep.mubr.bf16.mxu0 %v3693
      %4753 = vmatmul.mubr.bf16.gmra.mrb[0].mxu0 %v3692
      %v4754 = vpop.f32.mrb[0].mxu0
      %v4755 = vadd.f32 %v4594, %v4754
      %v4756 = vpop.f32.mrb[0].mxu0
      %v4757 = vpop.f32.mrb[0].mxu0
      %v4758 = vadd.f32 %v4597, %v4757
      %v4759 = vpop.f32.mrb[0].mxu0
      %4760 = vmatprep.mubr.bf16.mxu0 %v3702
      %4761 = vmatmul.mubr.bf16.gmra.mrb[0].mxu0 %v3701
      %v4762 = vpop.f32.mrb[0].mxu0
      %v4763 = vadd.f32 %v4602, %v4762
      %v4764 = vpop.f32.mrb[0].mxu0
      %v4765 = vpop.f32.mrb[0].mxu0
      %v4766 = vadd.f32 %v4605, %v4765
      %v4767 = vpop.f32.mrb[0].mxu0
      %4768 = vmatprep.mubr.bf16.mxu0 %v3711
      %4769 = vmatmul.mubr.bf16.gmra.mrb[0].mxu0 %v3710
      %v4770 = vpop.f32.mrb[0].mxu0
      %v4771 = vadd.f32 %v4610, %v4770
      %v4772 = vpop.f32.mrb[0].mxu0
      %v4773 = vpop.f32.mrb[0].mxu0
      %v4774 = vadd.f32 %v4613, %v4773
      %v4775 = vpop.f32.mrb[0].mxu0
      %4776 = vmatprep.mubr.bf16.mxu0 %v3720
      %4777 = vmatmul.mubr.bf16.gmra.mrb[0].mxu0 %v3719
      %v4778 = vpop.f32.mrb[0].mxu0
      %v4779 = vadd.f32 %v4618, %v4778
      %v4780 = vpop.f32.mrb[0].mxu0
      %v4781 = vpop.f32.mrb[0].mxu0
      %v4782 = vadd.f32 %v4621, %v4781
      %v4783 = vpop.f32.mrb[0].mxu0
      %4784 = vmatprep.mubr.bf16.mxu0 %v3729
      %4785 = vmatmul.mubr.bf16.gmra.mrb[0].mxu0 %v3728
      %v4786 = vpop.f32.mrb[0].mxu0
      %v4787 = vadd.f32 %v4626, %v4786
      %v4788 = vpop.f32.mrb[0].mxu0
      %v4789 = vpop.f32.mrb[0].mxu0
      %v4790 = vadd.f32 %v4629, %v4789
      %v4791 = vpop.f32.mrb[0].mxu0
      %4792 = vmatprep.mubr.bf16.mxu0 %v3738
      %4793 = vmatmul.mubr.bf16.gmra.mrb[0].mxu0 %v3737
      %v4794 = vpop.f32.mrb[0].mxu0
      %v4795 = vadd.f32 %v4634, %v4794
      %v4796 = vpop.f32.mrb[0].mxu0
      %v4797 = vpop.f32.mrb[0].mxu0
      %v4798 = vadd.f32 %v4637, %v4797
      %v4799 = vpop.f32.mrb[0].mxu0
      %4800 = vdwg.mxu0
      %4801 = vmatprep.subr.bf16.mxu0 0
      %4802 = vmatpush1.bf16.msra.mxu0 %v4222
      %4803 = vmatprep.subr.bf16.mxu0 0
      %4804 = vmatpush1.bf16.msra.mxu0 %v4223
      %4805 = vmatprep.subr.bf16.mxu0 0
      %4806 = vmatpush1.bf16.msra.mxu0 %v4224
      %4807 = vmatprep.subr.bf16.mxu0 0
      %4808 = vmatpush1.bf16.msra.mxu0 %v4225
      %4809 = vmatprep.subr.bf16.mxu0 0
      %4810 = vmatpush1.bf16.msra.mxu0 %v4226
      %4811 = vmatprep.subr.bf16.mxu0 0
      %4812 = vmatpush1.bf16.msra.mxu0 %v4227
      %4813 = vmatprep.subr.bf16.mxu0 0
      %4814 = vmatpush1.bf16.msra.mxu0 %v4228
      %4815 = vmatprep.subr.bf16.mxu0 0
      %4816 = vmatpush1.bf16.msra.mxu0 %v4229
      %4817 = vmatprep.subr.bf16.mxu0 0
      %4818 = vmatpush1.bf16.msra.mxu0 %v4230
      %4819 = vmatprep.subr.bf16.mxu0 0
      %4820 = vmatpush1.bf16.msra.mxu0 %v4231
      %4821 = vmatprep.subr.bf16.mxu0 0
      %4822 = vmatpush1.bf16.msra.mxu0 %v4232
      %4823 = vmatprep.subr.bf16.mxu0 0
      %4824 = vmatpush1.bf16.msra.mxu0 %v4233
      %4825 = vmatprep.subr.bf16.mxu0 0
      %4826 = vmatpush1.bf16.msra.mxu0 %v4234
      %4827 = vmatprep.subr.bf16.mxu0 0
      %4828 = vmatpush1.bf16.msra.mxu0 %v4235
      %4829 = vmatprep.subr.bf16.mxu0 0
      %4830 = vmatpush1.bf16.msra.mxu0 %v4236
      %4831 = vmatprep.subr.bf16.mxu0 0
      %4832 = vmatpush1.bf16.msra.mxu0 %v4237
      %4833 = vmatprep.mubr.bf16.mxu0 %v3605
      %4834 = vmatmul.mubr.bf16.gmra.mrb[0].mxu0 %v3604
      %v4835 = vpop.f32.mrb[0].mxu0
      %v4836 = vadd.f32 %v4675, %v4835
      %v4837 = vpop.f32.mrb[0].mxu0
      %v4838 = vpop.f32.mrb[0].mxu0
      %v4839 = vadd.f32 %v4678, %v4838
      %v4840 = vpop.f32.mrb[0].mxu0
      %4841 = vmatprep.mubr.bf16.mxu0 %v3614
      %4842 = vmatmul.mubr.bf16.gmra.mrb[0].mxu0 %v3613
      %v4843 = vpop.f32.mrb[0].mxu0
      %v4844 = vadd.f32 %v4683, %v4843
      %v4845 = vpop.f32.mrb[0].mxu0
      %v4846 = vpop.f32.mrb[0].mxu0
      %v4847 = vadd.f32 %v4686, %v4846
      %v4848 = vpop.f32.mrb[0].mxu0
      %4849 = vmatprep.mubr.bf16.mxu0 %v3623
      %4850 = vmatmul.mubr.bf16.gmra.mrb[0].mxu0 %v3622
      %v4851 = vpop.f32.mrb[0].mxu0
      %v4852 = vadd.f32 %v4691, %v4851
      %v4853 = vpop.f32.mrb[0].mxu0
      %v4854 = vpop.f32.mrb[0].mxu0
      %v4855 = vadd.f32 %v4694, %v4854
      %v4856 = vpop.f32.mrb[0].mxu0
      %4857 = vmatprep.mubr.bf16.mxu0 %v3632
      %4858 = vmatmul.mubr.bf16.gmra.mrb[0].mxu0 %v3631
      %v4859 = vpop.f32.mrb[0].mxu0
      %v4860 = vadd.f32 %v4699, %v4859
      %v4861 = vpop.f32.mrb[0].mxu0
      %v4862 = vpop.f32.mrb[0].mxu0
      %v4863 = vadd.f32 %v4702, %v4862
      %v4864 = vpop.f32.mrb[0].mxu0
      %4865 = vmatprep.mubr.bf16.mxu0 %v3641
      %4866 = vmatmul.mubr.bf16.gmra.mrb[0].mxu0 %v3640
      %v4867 = vpop.f32.mrb[0].mxu0
      %v4868 = vadd.f32 %v4707, %v4867
      %v4869 = vpop.f32.mrb[0].mxu0
      %v4870 = vpop.f32.mrb[0].mxu0
      %v4871 = vadd.f32 %v4710, %v4870
      %v4872 = vpop.f32.mrb[0].mxu0
      %4873 = vmatprep.mubr.bf16.mxu0 %v3650
      %4874 = vmatmul.mubr.bf16.gmra.mrb[0].mxu0 %v3649
      %v4875 = vpop.f32.mrb[0].mxu0
      %v4876 = vadd.f32 %v4715, %v4875
      %v4877 = vpop.f32.mrb[0].mxu0
      %v4878 = vpop.f32.mrb[0].mxu0
      %v4879 = vadd.f32 %v4718, %v4878
      %v4880 = vpop.f32.mrb[0].mxu0
      %4881 = vmatprep.mubr.bf16.mxu0 %v3659
      %4882 = vmatmul.mubr.bf16.gmra.mrb[0].mxu0 %v3658
      %v4883 = vpop.f32.mrb[0].mxu0
      %v4884 = vadd.f32 %v4723, %v4883
      %v4885 = vpop.f32.mrb[0].mxu0
      %v4886 = vpop.f32.mrb[0].mxu0
      %v4887 = vadd.f32 %v4726, %v4886
      %v4888 = vpop.f32.mrb[0].mxu0
      %4889 = vmatprep.mubr.bf16.mxu0 %v3668
      %4890 = vmatmul.mubr.bf16.gmra.mrb[0].mxu0 %v3667
      %v4891 = vpop.f32.mrb[0].mxu0
      %v4892 = vadd.f32 %v4731, %v4891
      %v4893 = vpop.f32.mrb[0].mxu0
      %v4894 = vpop.f32.mrb[0].mxu0
      %v4895 = vadd.f32 %v4734, %v4894
      %v4896 = vpop.f32.mrb[0].mxu0
      %4897 = vmatprep.mubr.bf16.mxu0 %v3677
      %4898 = vmatmul.mubr.bf16.gmra.mrb[0].mxu0 %v3676
      %v4899 = vpop.f32.mrb[0].mxu0
      %v4900 = vadd.f32 %v4739, %v4899
      %v4901 = vpop.f32.mrb[0].mxu0
      %v4902 = vpop.f32.mrb[0].mxu0
      %v4903 = vadd.f32 %v4742, %v4902
      %v4904 = vpop.f32.mrb[0].mxu0
      %4905 = vmatprep.mubr.bf16.mxu0 %v3686
      %4906 = vmatmul.mubr.bf16.gmra.mrb[0].mxu0 %v3685
      %v4907 = vpop.f32.mrb[0].mxu0
      %v4908 = vadd.f32 %v4747, %v4907
      %v4909 = vpop.f32.mrb[0].mxu0
      %v4910 = vpop.f32.mrb[0].mxu0
      %v4911 = vadd.f32 %v4750, %v4910
      %v4912 = vpop.f32.mrb[0].mxu0
      %4913 = vmatprep.mubr.bf16.mxu0 %v3695
      %4914 = vmatmul.mubr.bf16.gmra.mrb[0].mxu0 %v3694
      %v4915 = vpop.f32.mrb[0].mxu0
      %v4916 = vadd.f32 %v4755, %v4915
      %v4917 = vpop.f32.mrb[0].mxu0
      %v4918 = vpop.f32.mrb[0].mxu0
      %v4919 = vadd.f32 %v4758, %v4918
      %v4920 = vpop.f32.mrb[0].mxu0
      %4921 = vmatprep.mubr.bf16.mxu0 %v3704
      %4922 = vmatmul.mubr.bf16.gmra.mrb[0].mxu0 %v3703
      %v4923 = vpop.f32.mrb[0].mxu0
      %v4924 = vadd.f32 %v4763, %v4923
      %v4925 = vpop.f32.mrb[0].mxu0
      %v4926 = vpop.f32.mrb[0].mxu0
      %v4927 = vadd.f32 %v4766, %v4926
      %v4928 = vpop.f32.mrb[0].mxu0
      %4929 = vmatprep.mubr.bf16.mxu0 %v3713
      %4930 = vmatmul.mubr.bf16.gmra.mrb[0].mxu0 %v3712
      %v4931 = vpop.f32.mrb[0].mxu0
      %v4932 = vadd.f32 %v4771, %v4931
      %v4933 = vpop.f32.mrb[0].mxu0
      %v4934 = vpop.f32.mrb[0].mxu0
      %v4935 = vadd.f32 %v4774, %v4934
      %v4936 = vpop.f32.mrb[0].mxu0
      %4937 = vmatprep.mubr.bf16.mxu0 %v3722
      %4938 = vmatmul.mubr.bf16.gmra.mrb[0].mxu0 %v3721
      %v4939 = vpop.f32.mrb[0].mxu0
      %v4940 = vadd.f32 %v4779, %v4939
      %v4941 = vpop.f32.mrb[0].mxu0
      %v4942 = vpop.f32.mrb[0].mxu0
      %v4943 = vadd.f32 %v4782, %v4942
      %v4944 = vpop.f32.mrb[0].mxu0
      %4945 = vmatprep.mubr.bf16.mxu0 %v3731
      %4946 = vmatmul.mubr.bf16.gmra.mrb[0].mxu0 %v3730
      %v4947 = vpop.f32.mrb[0].mxu0
      %v4948 = vadd.f32 %v4787, %v4947
      %v4949 = vpop.f32.mrb[0].mxu0
      %v4950 = vpop.f32.mrb[0].mxu0
      %v4951 = vadd.f32 %v4790, %v4950
      %v4952 = vpop.f32.mrb[0].mxu0
      %4953 = vmatprep.mubr.bf16.mxu0 %v3740
      %4954 = vmatmul.mubr.bf16.gmra.mrb[0].mxu0 %v3739
      %v4955 = vpop.f32.mrb[0].mxu0
      %v4956 = vadd.f32 %v4795, %v4955
      %v4957 = vpop.f32.mrb[0].mxu0
      %v4958 = vpop.f32.mrb[0].mxu0
      %v4959 = vadd.f32 %v4798, %v4958
      %v4960 = vpop.f32.mrb[0].mxu0
      %4961 = vdwg.mxu0
      %4962 = vmatprep.subr.bf16.mxu0 0
      %4963 = vmatpush1.bf16.msra.mxu0 %v4238
      %4964 = vmatprep.subr.bf16.mxu0 0
      %4965 = vmatpush1.bf16.msra.mxu0 %v4239
      %4966 = vmatprep.subr.bf16.mxu0 0
      %4967 = vmatpush1.bf16.msra.mxu0 %v4240
      %4968 = vmatprep.subr.bf16.mxu0 0
      %4969 = vmatpush1.bf16.msra.mxu0 %v4241
      %4970 = vmatprep.subr.bf16.mxu0 0
      %4971 = vmatpush1.bf16.msra.mxu0 %v4242
      %4972 = vmatprep.subr.bf16.mxu0 0
      %4973 = vmatpush1.bf16.msra.mxu0 %v4243
      %4974 = vmatprep.subr.bf16.mxu0 0
      %4975 = vmatpush1.bf16.msra.mxu0 %v4244
      %4976 = vmatprep.subr.bf16.mxu0 0
      %4977 = vmatpush1.bf16.msra.mxu0 %v4245
      %4978 = vmatprep.subr.bf16.mxu0 0
      %4979 = vmatpush1.bf16.msra.mxu0 0
      %4980 = vmatprep.subr.bf16.mxu0 0
      %4981 = vmatpush1.bf16.msra.mxu0 0
      %4982 = vmatprep.subr.bf16.mxu0 0
      %4983 = vmatpush1.bf16.msra.mxu0 0
      %4984 = vmatprep.subr.bf16.mxu0 0
      %4985 = vmatpush1.bf16.msra.mxu0 0
      %4986 = vmatprep.subr.bf16.mxu0 0
      %4987 = vmatpush1.bf16.msra.mxu0 0
      %4988 = vmatprep.subr.bf16.mxu0 0
      %4989 = vmatpush1.bf16.msra.mxu0 0
      %4990 = vmatprep.subr.bf16.mxu0 0
      %4991 = vmatpush1.bf16.msra.mxu0 0
      %4992 = vmatprep.subr.bf16.mxu0 0
      %4993 = vmatpush1.bf16.msra.mxu0 0
      %4994 = vmatprep.mubr.bf16.mxu0 0
      %4995 = vmatmul.mubr.bf16.gmra.mrb[0].mxu0 %v3606
      %v4996 = vpop.f32.mrb[0].mxu0
      %v4997 = vadd.f32 %v4836, %v4996
      %v4998 = vpop.f32.mrb[0].mxu0
      %v4999 = vpop.f32.mrb[0].mxu0
      %v5000 = vadd.f32 %v4839, %v4999
      %v5001 = vpop.f32.mrb[0].mxu0
      %5002 = vmatprep.mubr.bf16.mxu0 0
      %5003 = vmatmul.mubr.bf16.gmra.mrb[0].mxu0 %v3615
      %v5004 = vpop.f32.mrb[0].mxu0
      %v5005 = vadd.f32 %v4844, %v5004
      %v5006 = vpop.f32.mrb[0].mxu0
      %v5007 = vpop.f32.mrb[0].mxu0
      %v5008 = vadd.f32 %v4847, %v5007
      %v5009 = vpop.f32.mrb[0].mxu0
      %5010 = vmatprep.mubr.bf16.mxu0 0
      %5011 = vmatmul.mubr.bf16.gmra.mrb[0].mxu0 %v3624
      %v5012 = vpop.f32.mrb[0].mxu0
      %v5013 = vadd.f32 %v4852, %v5012
      %v5014 = vpop.f32.mrb[0].mxu0
      %v5015 = vpop.f32.mrb[0].mxu0
      %v5016 = vadd.f32 %v4855, %v5015
      %v5017 = vpop.f32.mrb[0].mxu0
      %5018 = vmatprep.mubr.bf16.mxu0 0
      %5019 = vmatmul.mubr.bf16.gmra.mrb[0].mxu0 %v3633
      %v5020 = vpop.f32.mrb[0].mxu0
      %v5021 = vadd.f32 %v4860, %v5020
      %v5022 = vpop.f32.mrb[0].mxu0
      %v5023 = vpop.f32.mrb[0].mxu0
      %v5024 = vadd.f32 %v4863, %v5023
      %v5025 = vpop.f32.mrb[0].mxu0
      %5026 = vmatprep.mubr.bf16.mxu0 0
      %5027 = vmatmul.mubr.bf16.gmra.mrb[0].mxu0 %v3642
      %v5028 = vpop.f32.mrb[0].mxu0
      %v5029 = vadd.f32 %v4868, %v5028
      %v5030 = vpop.f32.mrb[0].mxu0
      %v5031 = vpop.f32.mrb[0].mxu0
      %v5032 = vadd.f32 %v4871, %v5031
      %v5033 = vpop.f32.mrb[0].mxu0
      %5034 = vmatprep.mubr.bf16.mxu0 0
      %5035 = vmatmul.mubr.bf16.gmra.mrb[0].mxu0 %v3651
      %v5036 = vpop.f32.mrb[0].mxu0
      %v5037 = vadd.f32 %v4876, %v5036
      %v5038 = vpop.f32.mrb[0].mxu0
      %v5039 = vpop.f32.mrb[0].mxu0
      %v5040 = vadd.f32 %v4879, %v5039
      %v5041 = vpop.f32.mrb[0].mxu0
      %5042 = vmatprep.mubr.bf16.mxu0 0
      %5043 = vmatmul.mubr.bf16.gmra.mrb[0].mxu0 %v3660
      %v5044 = vpop.f32.mrb[0].mxu0
      %v5045 = vadd.f32 %v4884, %v5044
      %v5046 = vpop.f32.mrb[0].mxu0
      %v5047 = vpop.f32.mrb[0].mxu0
      %v5048 = vadd.f32 %v4887, %v5047
      %v5049 = vpop.f32.mrb[0].mxu0
      %5050 = vmatprep.mubr.bf16.mxu0 0
      %5051 = vmatmul.mubr.bf16.gmra.mrb[0].mxu0 %v3669
      %v5052 = vpop.f32.mrb[0].mxu0
      %v5053 = vadd.f32 %v4892, %v5052
      %v5054 = vpop.f32.mrb[0].mxu0
      %v5055 = vpop.f32.mrb[0].mxu0
      %v5056 = vadd.f32 %v4895, %v5055
      %v5057 = vpop.f32.mrb[0].mxu0
      %5058 = vmatprep.mubr.bf16.mxu0 0
      %5059 = vmatmul.mubr.bf16.gmra.mrb[0].mxu0 %v3678
      %v5060 = vpop.f32.mrb[0].mxu0
      %v5061 = vadd.f32 %v4900, %v5060
      %v5062 = vpop.f32.mrb[0].mxu0
      %v5063 = vpop.f32.mrb[0].mxu0
      %v5064 = vadd.f32 %v4903, %v5063
      %v5065 = vpop.f32.mrb[0].mxu0
      %5066 = vmatprep.mubr.bf16.mxu0 0
      %5067 = vmatmul.mubr.bf16.gmra.mrb[0].mxu0 %v3687
      %v5068 = vpop.f32.mrb[0].mxu0
      %v5069 = vadd.f32 %v4908, %v5068
      %v5070 = vpop.f32.mrb[0].mxu0
      %v5071 = vpop.f32.mrb[0].mxu0
      %v5072 = vadd.f32 %v4911, %v5071
      %v5073 = vpop.f32.mrb[0].mxu0
      %5074 = vmatprep.mubr.bf16.mxu0 0
      %5075 = vmatmul.mubr.bf16.gmra.mrb[0].mxu0 %v3696
      %v5076 = vpop.f32.mrb[0].mxu0
      %v5077 = vadd.f32 %v4916, %v5076
      %v5078 = vpop.f32.mrb[0].mxu0
      %v5079 = vpop.f32.mrb[0].mxu0
      %v5080 = vadd.f32 %v4919, %v5079
      %v5081 = vpop.f32.mrb[0].mxu0
      %5082 = vmatprep.mubr.bf16.mxu0 0
      %5083 = vmatmul.mubr.bf16.gmra.mrb[0].mxu0 %v3705
      %v5084 = vpop.f32.mrb[0].mxu0
      %v5085 = vadd.f32 %v4924, %v5084
      %v5086 = vpop.f32.mrb[0].mxu0
      %v5087 = vpop.f32.mrb[0].mxu0
      %v5088 = vadd.f32 %v4927, %v5087
      %v5089 = vpop.f32.mrb[0].mxu0
      %5090 = vmatprep.mubr.bf16.mxu0 0
      %5091 = vmatmul.mubr.bf16.gmra.mrb[0].mxu0 %v3714
      %v5092 = vpop.f32.mrb[0].mxu0
      %v5093 = vadd.f32 %v4932, %v5092
      %v5094 = vpop.f32.mrb[0].mxu0
      %v5095 = vpop.f32.mrb[0].mxu0
      %v5096 = vadd.f32 %v4935, %v5095
      %v5097 = vpop.f32.mrb[0].mxu0
      %5098 = vmatprep.mubr.bf16.mxu0 0
      %5099 = vmatmul.mubr.bf16.gmra.mrb[0].mxu0 %v3723
      %v5100 = vpop.f32.mrb[0].mxu0
      %v5101 = vadd.f32 %v4940, %v5100
      %v5102 = vpop.f32.mrb[0].mxu0
      %v5103 = vpop.f32.mrb[0].mxu0
      %v5104 = vadd.f32 %v4943, %v5103
      %v5105 = vpop.f32.mrb[0].mxu0
      %5106 = vmatprep.mubr.bf16.mxu0 0
      %5107 = vmatmul.mubr.bf16.gmra.mrb[0].mxu0 %v3732
      %v5108 = vpop.f32.mrb[0].mxu0
      %v5109 = vadd.f32 %v4948, %v5108
      %v5110 = vpop.f32.mrb[0].mxu0
      %v5111 = vpop.f32.mrb[0].mxu0
      %v5112 = vadd.f32 %v4951, %v5111
      %v5113 = vpop.f32.mrb[0].mxu0
      %5114 = vmatprep.mubr.bf16.mxu0 0
      %5115 = vmatmul.mubr.bf16.gmra.mrb[0].mxu0 %v3741
      %v5116 = vpop.f32.mrb[0].mxu0
      %v5117 = vadd.f32 %v4956, %v5116
      %v5118 = vpop.f32.mrb[0].mxu0
      %v5119 = vpop.f32.mrb[0].mxu0
      %v5120 = vadd.f32 %v4959, %v5119
      %v5121 = vpop.f32.mrb[0].mxu0
      %5122 = vdwg.mxu0
      %v5123 = vadd.f32 %v4997, %v5000
      %v5124 = vadd.f32 %v5123, %v5005
      %v5125 = vadd.f32 %v5124, %v5008
      %v5126 = vadd.f32 %v5125, %v5013
      %v5127 = vadd.f32 %v5126, %v5016
      %v5128 = vadd.f32 %v5127, %v5021
      %v5129 = vadd.f32 %v5128, %v5024
      %v5130 = vadd.f32 %v5129, %v5029
      %v5131 = vadd.f32 %v5130, %v5032
      %v5132 = vadd.f32 %v5131, %v5037
      %v5133 = vadd.f32 %v5132, %v5040
      %v5134 = vadd.f32 %v5133, %v5045
      %v5135 = vadd.f32 %v5134, %v5048
      %v5136 = vadd.f32 %v5135, %v5053
      %v5137 = vadd.f32 %v5136, %v5056
      %v5138 = vadd.f32 %v5137, %v5061
      %v5139 = vadd.f32 %v5138, %v5064
      %v5140 = vadd.f32 %v5139, %v5069
      %v5141 = vadd.f32 %v5140, %v5072
      %v5142 = vadd.f32 %v5141, %v5077
      %v5143 = vadd.f32 %v5142, %v5080
      %v5144 = vadd.f32 %v5143, %v5085
      %v5145 = vadd.f32 %v5144, %v5088
      %v5146 = vadd.f32 %v5145, %v5093
      %v5147 = vadd.f32 %v5146, %v5096
      %v5148 = vadd.f32 %v5147, %v5101
      %v5149 = vadd.f32 %v5148, %v5104
      %v5150 = vadd.f32 %v5149, %v5109
      %v5151 = vadd.f32 %v5150, %v5112
      %v5152 = vadd.f32 %v5151, %v5117
      %v5153 = vadd.f32 %v5152, %v5120
      %v5154 = vrot.slane %v5153, 4
      %v5155 = vadd.f32 %v5153, %v5154
      %v5156 = vrot.slane %v5155, 2
      %v5157 = vadd.f32 %v5155, %v5156
      %v5158 = vrot.slane %v5157, 1
      %v5159 = vadd.f32 %v5157, %v5158
      %5160 = vst [vmem:[%s181] sm:$0x1] %v5159
      %v5161 = vmul.f32 %v4997, %v4997
      %v5162 = vmul.f32 %v5000, %v5000
      %v5163 = vmul.f32 %v5005, %v5005
      %v5164 = vmul.f32 %v5008, %v5008
      %v5165 = vmul.f32 %v5013, %v5013
      %v5166 = vmul.f32 %v5016, %v5016
      %v5167 = vmul.f32 %v5021, %v5021
      %v5168 = vmul.f32 %v5024, %v5024
      %v5169 = vmul.f32 %v5029, %v5029
      %v5170 = vmul.f32 %v5032, %v5032
      %v5171 = vmul.f32 %v5037, %v5037
      %v5172 = vmul.f32 %v5040, %v5040
      %v5173 = vmul.f32 %v5045, %v5045
      %v5174 = vmul.f32 %v5048, %v5048
      %v5175 = vmul.f32 %v5053, %v5053
      %v5176 = vmul.f32 %v5056, %v5056
      %v5177 = vmul.f32 %v5061, %v5061
      %v5178 = vmul.f32 %v5064, %v5064
      %v5179 = vmul.f32 %v5069, %v5069
      %v5180 = vmul.f32 %v5072, %v5072
      %v5181 = vmul.f32 %v5077, %v5077
      %v5182 = vmul.f32 %v5080, %v5080
      %v5183 = vmul.f32 %v5085, %v5085
      %v5184 = vmul.f32 %v5088, %v5088
      %v5185 = vmul.f32 %v5093, %v5093
      %v5186 = vmul.f32 %v5096, %v5096
      %v5187 = vmul.f32 %v5101, %v5101
      %v5188 = vmul.f32 %v5104, %v5104
      %v5189 = vmul.f32 %v5109, %v5109
      %v5190 = vmul.f32 %v5112, %v5112
      %v5191 = vmul.f32 %v5117, %v5117
      %v5192 = vmul.f32 %v5120, %v5120
      %v5193 = vadd.f32 %v5161, %v5162
      %v5194 = vadd.f32 %v5193, %v5163
      %v5195 = vadd.f32 %v5194, %v5164
      %v5196 = vadd.f32 %v5195, %v5165
      %v5197 = vadd.f32 %v5196, %v5166
      %v5198 = vadd.f32 %v5197, %v5167
      %v5199 = vadd.f32 %v5198, %v5168
      %v5200 = vadd.f32 %v5199, %v5169
      %v5201 = vadd.f32 %v5200, %v5170
      %v5202 = vadd.f32 %v5201, %v5171
      %v5203 = vadd.f32 %v5202, %v5172
      %v5204 = vadd.f32 %v5203, %v5173
      %v5205 = vadd.f32 %v5204, %v5174
      %v5206 = vadd.f32 %v5205, %v5175
      %v5207 = vadd.f32 %v5206, %v5176
      %v5208 = vadd.f32 %v5207, %v5177
      %v5209 = vadd.f32 %v5208, %v5178
      %v5210 = vadd.f32 %v5209, %v5179
      %v5211 = vadd.f32 %v5210, %v5180
      %v5212 = vadd.f32 %v5211, %v5181
      %v5213 = vadd.f32 %v5212, %v5182
      %v5214 = vadd.f32 %v5213, %v5183
      %v5215 = vadd.f32 %v5214, %v5184
      %v5216 = vadd.f32 %v5215, %v5185
      %v5217 = vadd.f32 %v5216, %v5186
      %v5218 = vadd.f32 %v5217, %v5187
      %v5219 = vadd.f32 %v5218, %v5188
      %v5220 = vadd.f32 %v5219, %v5189
      %v5221 = vadd.f32 %v5220, %v5190
      %v5222 = vadd.f32 %v5221, %v5191
      %v5223 = vadd.f32 %v5222, %v5192
      %v5224 = vrot.slane %v5223, 4
      %v5225 = vadd.f32 %v5223, %v5224
      %v5226 = vrot.slane %v5225, 2
      %v5227 = vadd.f32 %v5225, %v5226
      %v5228 = vrot.slane %v5227, 1
      %v5229 = vadd.f32 %v5227, %v5228
      %5230 = vst [vmem:[%s181 + $0x1] sm:$0x1] %v5229
      %v5231 = vpack.c.bf16 %v5000, %v4997
      %v5232 = vpack.c.bf16 %v5008, %v5005
      %v5233 = vpack.c.bf16 %v5016, %v5013
      %v5234 = vpack.c.bf16 %v5024, %v5021
      %v5235 = vpack.c.bf16 %v5032, %v5029
      %v5236 = vpack.c.bf16 %v5040, %v5037
      %v5237 = vpack.c.bf16 %v5048, %v5045
      %v5238 = vpack.c.bf16 %v5056, %v5053
      %v5239 = vpack.c.bf16 %v5064, %v5061
      %v5240 = vpack.c.bf16 %v5072, %v5069
      %v5241 = vpack.c.bf16 %v5080, %v5077
      %v5242 = vpack.c.bf16 %v5088, %v5085
      %v5243 = vpack.c.bf16 %v5096, %v5093
      %v5244 = vpack.c.bf16 %v5104, %v5101
      %v5245 = vpack.c.bf16 %v5112, %v5109
      %v5246 = vpack.c.bf16 %v5120, %v5117
      %v5263 = vunpack.c.l.b16 %v5231
      %v5264 = vunpack.c.h.b16 %v5231
      %v5265 = vunpack.c.l.b16 %v5232
      %v5266 = vunpack.c.h.b16 %v5232
      %v5267 = vunpack.c.l.b16 %v5233
      %v5268 = vunpack.c.h.b16 %v5233
      %v5269 = vunpack.c.l.b16 %v5234
      %v5270 = vunpack.c.h.b16 %v5234
      %v5271 = vunpack.c.l.b16 %v5235
      %v5272 = vunpack.c.h.b16 %v5235
      %v5273 = vunpack.c.l.b16 %v5236
      %v5274 = vunpack.c.h.b16 %v5236
      %v5275 = vunpack.c.l.b16 %v5237
      %v5276 = vunpack.c.h.b16 %v5237
      %v5277 = vunpack.c.l.b16 %v5238
      %v5278 = vunpack.c.h.b16 %v5238
      %v5279 = vunpack.c.l.b16 %v5239
      %v5280 = vunpack.c.h.b16 %v5239
      %v5281 = vunpack.c.l.b16 %v5240
      %v5282 = vunpack.c.h.b16 %v5240
      %v5283 = vunpack.c.l.b16 %v5241
      %v5284 = vunpack.c.h.b16 %v5241
      %v5285 = vunpack.c.l.b16 %v5242
      %v5286 = vunpack.c.h.b16 %v5242
      %v5287 = vunpack.c.l.b16 %v5243
      %v5288 = vunpack.c.h.b16 %v5243
      %v5289 = vunpack.c.l.b16 %v5244
      %v5290 = vunpack.c.h.b16 %v5244
      %v5291 = vunpack.c.l.b16 %v5245
      %v5292 = vunpack.c.h.b16 %v5245
      %v5293 = vunpack.c.l.b16 %v5246
      %v5294 = vunpack.c.h.b16 %v5246
      %v5295 = vpack.c.b16 %v5263, %v5263
      %v5296 = vpack.c.b16 %v5264, %v5264
      %v5297 = vpack.c.b16 %v5265, %v5265
      %v5298 = vpack.c.b16 %v5266, %v5266
      %v5299 = vpack.c.b16 %v5267, %v5267
      %v5300 = vpack.c.b16 %v5268, %v5268
      %v5301 = vpack.c.b16 %v5269, %v5269
      %v5302 = vpack.c.b16 %v5270, %v5270
      %v5303 = vpack.c.b16 %v5271, %v5271
      %v5304 = vpack.c.b16 %v5272, %v5272
      %v5305 = vpack.c.b16 %v5273, %v5273
      %v5306 = vpack.c.b16 %v5274, %v5274
      %v5307 = vpack.c.b16 %v5275, %v5275
      %v5308 = vpack.c.b16 %v5276, %v5276
      %v5309 = vpack.c.b16 %v5277, %v5277
      %v5310 = vpack.c.b16 %v5278, %v5278
      %v5311 = vpack.c.b16 %v5279, %v5279
      %v5312 = vpack.c.b16 %v5280, %v5280
      %v5313 = vpack.c.b16 %v5281, %v5281
      %v5314 = vpack.c.b16 %v5282, %v5282
      %v5315 = vpack.c.b16 %v5283, %v5283
      %v5316 = vpack.c.b16 %v5284, %v5284
      %v5317 = vpack.c.b16 %v5285, %v5285
      %v5318 = vpack.c.b16 %v5286, %v5286
      %v5319 = vpack.c.b16 %v5287, %v5287
      %v5320 = vpack.c.b16 %v5288, %v5288
      %v5321 = vpack.c.b16 %v5289, %v5289
      %v5322 = vpack.c.b16 %v5290, %v5290
      %v5323 = vpack.c.b16 %v5291, %v5291
      %v5324 = vpack.c.b16 %v5292, %v5292
      %v5325 = vpack.c.b16 %v5293, %v5293
      %v5326 = vpack.c.b16 %v5294, %v5294
      %5359 = vst [vmem:[%s177] sm:$0xf] %v5295
      %5360 = vst [vmem:[%s177 + $0x4] sm:$0xf] %v5296
      %5361 = vst [vmem:[%s177 + $0x8] sm:$0xf] %v5297
      %5362 = vst [vmem:[%s177 + $0xc] sm:$0xf] %v5298
      %5363 = vst [vmem:[%s177 + $0x10] sm:$0xf] %v5299
      %5364 = vst [vmem:[%s177 + $0x14] sm:$0xf] %v5300
      %5365 = vst [vmem:[%s177 + $0x18] sm:$0xf] %v5301
      %5366 = vst [vmem:[%s177 + $0x1c] sm:$0xf] %v5302
      %5367 = vst [vmem:[%s177 + $0x20] sm:$0xf] %v5303
      %5368 = vst [vmem:[%s177 + $0x24] sm:$0xf] %v5304
      %5369 = vst [vmem:[%s177 + $0x28] sm:$0xf] %v5305
      %5370 = vst [vmem:[%s177 + $0x2c] sm:$0xf] %v5306
      %5371 = vst [vmem:[%s177 + $0x30] sm:$0xf] %v5307
      %5372 = vst [vmem:[%s177 + $0x34] sm:$0xf] %v5308
      %5373 = vst [vmem:[%s177 + $0x38] sm:$0xf] %v5309
      %5374 = vst [vmem:[%s177 + $0x3c] sm:$0xf] %v5310
      %5375 = vst [vmem:[%s177 + $0x40] sm:$0xf] %v5311
      %5376 = vst [vmem:[%s177 + $0x44] sm:$0xf] %v5312
      %5377 = vst [vmem:[%s177 + $0x48] sm:$0xf] %v5313
      %5378 = vst [vmem:[%s177 + $0x4c] sm:$0xf] %v5314
      %5379 = vst [vmem:[%s177 + $0x50] sm:$0xf] %v5315
      %5380 = vst [vmem:[%s177 + $0x54] sm:$0xf] %v5316
      %5381 = vst [vmem:[%s177 + $0x58] sm:$0xf] %v5317
      %5382 = vst [vmem:[%s177 + $0x5c] sm:$0xf] %v5318
      %5383 = vst [vmem:[%s177 + $0x60] sm:$0xf] %v5319
      %5384 = vst [vmem:[%s177 + $0x64] sm:$0xf] %v5320
      %5385 = vst [vmem:[%s177 + $0x68] sm:$0xf] %v5321
      %5386 = vst [vmem:[%s177 + $0x6c] sm:$0xf] %v5322
      %5387 = vst [vmem:[%s177 + $0x70] sm:$0xf] %v5323
      %5388 = vst [vmem:[%s177 + $0x74] sm:$0xf] %v5324
      %5389 = vst [vmem:[%s177 + $0x78] sm:$0xf] %v5325
      %5390 = vst [vmem:[%s177 + $0x7c] sm:$0xf] %v5326
      %p5391 = scmp.lt.s32.totalorder %s15, 1
      %s5392 = scalar_select %p5391, %s15, 1
      %s5393 = smul.addr %s5392, 32
      %s5394 = smul.addr %s5393, 4
      %s5395 = scalar_lea.vmem %s2, %s5394
      %p5396 = scmp.lt.s32.totalorder %s15, 1
      %s5397 = scalar_select %p5396, %s15, 1
      %s5398 = smul.addr %s5397, 2
      %s5399 = scalar_lea.vmem %s3, %s5398
      // Predicated region
      $region29: #{tresblock_forward.3} parent=27 // pred_check
        %p5400 = pneg %p80
      $region30: #{tresblock_forward.3} parent=27 // pred_check_branch
        %5402 = sbr.rel (%p5400) target = $region32
      $region31: #{tresblock_forward.3} parent=27 // pred_region
        _
      $region32: #{tresblock_forward.3} parent=27 // pred_fallthru
        _
      // Predicated region
      $region33: #{tresblock_forward.3} parent=27 // pred_check
        %p5403 = pneg %p106
      $region34: #{tresblock_forward.3} parent=27 // pred_check_branch
        %5405 = sbr.rel (%p5403) target = $region36
      $region35: #{tresblock_forward.3} parent=27 // pred_region
        _
      $region36: #{tresblock_forward.3} parent=27 // pred_fallthru
        _
    $region28: #{tresblock_forward.3} parent=5 // pred_fallthru
      _
    %p5406 = scmp.le.s32.totalorder 2, %s10
    // Predicated region
    $region37: #{tresblock_forward.3} parent=5 // pred_check
      %p5407 = pneg %p5406
    $region38: #{tresblock_forward.3} parent=5 // pred_check_branch
      %5409 = sbr.rel (%p5407) target = $region40
    $region39: #{tresblock_forward.3} parent=5 // pred_region
      %s5410 = ssub.s32 %s10, 2
      // Predicated region
      $region41: #{tresblock_forward.3} parent=39 // pred_check
        %p5411 = pneg %p86
      $region42: #{tresblock_forward.3} parent=39 // pred_check_branch
        %5413 = sbr.rel (%p5411) target = $region44
      $region43: #{tresblock_forward.3} parent=39 // pred_region
        %p5414 = scmp.lt.s32.totalorder %s16, 1
        %s5415 = scalar_select %p5414, %s16, 1
        %s5416 = smul.addr %s5415, 32
        %s5417 = smul.addr %s5416, 4
        %s5418 = scalar_lea.vmem %s2, %s5417
      $region44: #{tresblock_forward.3} parent=39 // pred_fallthru
        _
      // Predicated region
      $region45: #{tresblock_forward.3} parent=39 // pred_check
        %p5419 = pneg %p112
      $region46: #{tresblock_forward.3} parent=39 // pred_check_branch
        %5421 = sbr.rel (%p5419) target = $region48
      $region47: #{tresblock_forward.3} parent=39 // pred_region
        %p5422 = scmp.lt.s32.totalorder %s16, 1
        %s5423 = scalar_select %p5422, %s16, 1
        %s5424 = smul.addr %s5423, 2
        %s5425 = scalar_lea.vmem %s3, %s5424
      $region48: #{tresblock_forward.3} parent=39 // pred_fallthru
        _
    $region40: #{tresblock_forward.3} parent=5 // pred_fallthru
      _
  $region6: #{tresblock_forward.3} parent=0 // loop_footer
    %s14 = sadd.s32 1, %s10
  $region7: #{tresblock_forward.3} parent=0 // loop_footer_branch
    %9 = sbr.rel target = $region3
  $region8: #{tresblock_forward.3} parent=0 // loop_exit
    _

// kernel: tresblock_forward.4
$region0: #{tresblock_forward.4}
  #allocation0 [shape = 'u32[]', space=smem, size = 0x4, offset = 0x4, fixed_abs, tag = 'smem constant byte address 0x4 - core index']
  #allocation1 [shape = 'u32[144,128]{1,0:T(1,128)}', space=vmem, size = 0x12000, scoped, tag = 'internal scratch']
  #allocation2 [shape = 'bf16[18,24,128]{2,1,0:T(8,128)(2,1)}', space=vmem, size = 0x1b000, scoped, tag = 'scratch operand']
  #allocation3 [shape = 'bf16[256,1152]{1,0:T(16,128)(2,1)}', space=vmem, size = 0x90000, scoped, tag = 'scratch operand']
  %s0 = inlined_call_operand.vmem [shape: bf16[2,16,16,128], index: 0, kind: input, shape index: {}]
  %s1 = inlined_call_operand.vmem [shape: f32[1,128], index: 1, kind: input, shape index: {}]
  %s2 = inlined_call_operand.vmem [shape: f32[1,128], index: 2, kind: input, shape index: {}]
  %s3 = inlined_call_operand.vmem [shape: bf16[1152,128], index: 3, kind: input, shape index: {}]
  %s4 = inlined_call_operand.vmem [shape: bf16[2,256,128], index: 4, kind: output, shape index: {0}]
  %s5 = inlined_call_operand.vmem [shape: f32[2,2,128], index: 5, kind: output, shape index: {1}]
  %6 = xla_tuple %s4, %s5
  %s7 = sld [smem:[#allocation0]]
  $region57: #{tresblock_forward.4} parent=0
    _
  %s9 = ssub.s32 1, %s7
  %s10 = scalar_select 0, %s9, %s7
  loop: start=0, step=1, limit=4
  $region2: #{tresblock_forward.4} parent=0 // loop_pre_header
    _
  $region3: #{tresblock_forward.4} parent=0 // loop_header
    %s12 = sphi 0, %s16
    %p13 = scmp.ge.s32.totalorder %s12, 4
    %s22 = sphi 0, %s24
    %s25 = sphi 0, %s22
    %s26 = sphi 0, %s25
    %s42 = sphi 0, %s26
    %s46 = sphi 0, %s46
    %s48 = sphi 0, %s46
    %s49 = sphi 0, %s48
    %s63 = sphi 0, %s49
    %s67 = sphi 0, %s67
    %s69 = sphi 0, %s67
    %s70 = sphi 0, %s69
    %s84 = sphi 0, %s70
    %s88 = sphi 0, %s88
    %s90 = sphi 0, %s88
    %s91 = sphi 0, %s90
    %s105 = sphi 0, %s91
    %s111 = sphi 0, %s113
    %s114 = sphi 0, %s111
    %s115 = sphi 0, %s114
    %s131 = sphi 0, %s115
    %s137 = sphi 0, %s139
    %s140 = sphi 0, %s137
    %s141 = sphi 0, %s140
    %s157 = sphi 0, %s141
  $region4: #{tresblock_forward.4} parent=0 // loop_header_branch
    %15 = sbr.rel (%p13) target = $region8
  $region5: #{tresblock_forward.4} parent=0 // loop_body
    %s17 = ssub.s32 %s12, 1
    %s18 = ssub.s32 %s12, 2
    %s19 = sadd.s32 %s12, 1
    %s20 = ssub.s32 %s12, %s19
    %p21 = scmp.eq.s32.totalorder %s20, 0
    %s23 = sadd.s32 %s22, 1
    %s24 = scalar_select %p21, %s22, %s23
    %p27 = pneg %p21
    %p28 = scmp.eq.s32.totalorder %s12, 1
    %p29 = por %p27, %p28
    %p30 = scmp.ne.s32.totalorder %s22, %s25
    %p31 = scmp.eq.s32.totalorder %s12, 0
    %p32 = por %p30, %p31
    %p33 = scmp.ne.s32.totalorder %s22, %s25
    %p34 = scmp.eq.s32.totalorder %s17, 1
    %p35 = por %p33, %p34
    %p36 = scmp.ne.s32.totalorder %s25, %s26
    %p37 = scmp.eq.s32.totalorder %s17, 0
    %p38 = por %p36, %p37
    %p39 = scmp.ne.s32.totalorder %s25, %s26
    %p40 = scmp.eq.s32.totalorder %s18, 1
    %p41 = por %p39, %p40
    %p43 = scmp.ne.s32.totalorder %s26, %s42
    %p44 = scmp.eq.s32.totalorder %s18, 0
    %p45 = por %p43, %p44
    %s47 = sadd.s32 %s46, 1
    %p50 = scmp.eq.s32.totalorder %s12, 1
    %p51 = scmp.ne.s32.totalorder %s46, %s48
    %p52 = scmp.eq.s32.totalorder %s12, 0
    %p53 = por %p51, %p52
    %p54 = scmp.ne.s32.totalorder %s46, %s48
    %p55 = scmp.eq.s32.totalorder %s17, 1
    %p56 = por %p54, %p55
    %p57 = scmp.ne.s32.totalorder %s48, %s49
    %p58 = scmp.eq.s32.totalorder %s17, 0
    %p59 = por %p57, %p58
    %p60 = scmp.ne.s32.totalorder %s48, %s49
    %p61 = scmp.eq.s32.totalorder %s18, 1
    %p62 = por %p60, %p61
    %p64 = scmp.ne.s32.totalorder %s49, %s63
    %p65 = scmp.eq.s32.totalorder %s18, 0
    %p66 = por %p64, %p65
    %s68 = sadd.s32 %s67, 1
    %p71 = scmp.eq.s32.totalorder %s12, 1
    %p72 = scmp.ne.s32.totalorder %s67, %s69
    %p73 = scmp.eq.s32.totalorder %s12, 0
    %p74 = por %p72, %p73
    %p75 = scmp.ne.s32.totalorder %s67, %s69
    %p76 = scmp.eq.s32.totalorder %s17, 1
    %p77 = por %p75, %p76
    %p78 = scmp.ne.s32.totalorder %s69, %s70
    %p79 = scmp.eq.s32.totalorder %s17, 0
    %p80 = por %p78, %p79
    %p81 = scmp.ne.s32.totalorder %s69, %s70
    %p82 = scmp.eq.s32.totalorder %s18, 1
    %p83 = por %p81, %p82
    %p85 = scmp.ne.s32.totalorder %s70, %s84
    %p86 = scmp.eq.s32.totalorder %s18, 0
    %p87 = por %p85, %p86
    %s89 = sadd.s32 %s88, 1
    %p92 = scmp.eq.s32.totalorder %s12, 1
    %p93 = scmp.ne.s32.totalorder %s88, %s90
    %p94 = scmp.eq.s32.totalorder %s12, 0
    %p95 = por %p93, %p94
    %p96 = scmp.ne.s32.totalorder %s88, %s90
    %p97 = scmp.eq.s32.totalorder %s17, 1
    %p98 = por %p96, %p97
    %p99 = scmp.ne.s32.totalorder %s90, %s91
    %p100 = scmp.eq.s32.totalorder %s17, 0
    %p101 = por %p99, %p100
    %p102 = scmp.ne.s32.totalorder %s90, %s91
    %p103 = scmp.eq.s32.totalorder %s18, 1
    %p104 = por %p102, %p103
    %p106 = scmp.ne.s32.totalorder %s91, %s105
    %p107 = scmp.eq.s32.totalorder %s18, 0
    %p108 = por %p106, %p107
    %s109 = ssub.s32 %s12, %s19
    %p110 = scmp.eq.s32.totalorder %s109, 0
    %s112 = sadd.s32 %s111, 1
    %s113 = scalar_select %p110, %s111, %s112
    %p116 = pneg %p110
    %p117 = scmp.eq.s32.totalorder %s12, 1
    %p118 = por %p116, %p117
    %p119 = scmp.ne.s32.totalorder %s111, %s114
    %p120 = scmp.eq.s32.totalorder %s12, 0
    %p121 = por %p119, %p120
    %p122 = scmp.ne.s32.totalorder %s111, %s114
    %p123 = scmp.eq.s32.totalorder %s17, 1
    %p124 = por %p122, %p123
    %p125 = scmp.ne.s32.totalorder %s114, %s115
    %p126 = scmp.eq.s32.totalorder %s17, 0
    %p127 = por %p125, %p126
    %p128 = scmp.ne.s32.totalorder %s114, %s115
    %p129 = scmp.eq.s32.totalorder %s18, 1
    %p130 = por %p128, %p129
    %p132 = scmp.ne.s32.totalorder %s115, %s131
    %p133 = scmp.eq.s32.totalorder %s18, 0
    %p134 = por %p132, %p133
    %s135 = ssub.s32 %s12, %s19
    %p136 = scmp.eq.s32.totalorder %s135, 0
    %s138 = sadd.s32 %s137, 1
    %s139 = scalar_select %p136, %s137, %s138
    %p142 = pneg %p136
    %p143 = scmp.eq.s32.totalorder %s12, 1
    %p144 = por %p142, %p143
    %p145 = scmp.ne.s32.totalorder %s137, %s140
    %p146 = scmp.eq.s32.totalorder %s12, 0
    %p147 = por %p145, %p146
    %p148 = scmp.ne.s32.totalorder %s137, %s140
    %p149 = scmp.eq.s32.totalorder %s17, 1
    %p150 = por %p148, %p149
    %p151 = scmp.ne.s32.totalorder %s140, %s141
    %p152 = scmp.eq.s32.totalorder %s17, 0
    %p153 = por %p151, %p152
    %p154 = scmp.ne.s32.totalorder %s140, %s141
    %p155 = scmp.eq.s32.totalorder %s18, 1
    %p156 = por %p154, %p155
    %p158 = scmp.ne.s32.totalorder %s141, %s157
    %p159 = scmp.eq.s32.totalorder %s18, 0
    %p160 = por %p158, %p159
    %p161 = scmp.le.s32.totalorder 1, %s12
    %p162 = scmp.lt.s32.totalorder %s12, 3
    %p163 = pnand %p161, %p162
    %p164 = pneg %p163
    // Predicated region
    $region9: #{tresblock_forward.4} parent=5 // pred_check
      _
    $region10: #{tresblock_forward.4} parent=5 // pred_check_branch
      %166 = sbr.rel (%p163) target = $region12
    $region11: #{tresblock_forward.4} parent=5 // pred_region
      %s167 = ssub.s32 %s12, 1
      // Predicated region
      $region13: #{tresblock_forward.4} parent=11 // pred_check
        %p168 = pneg %p59
      $region14: #{tresblock_forward.4} parent=11 // pred_check_branch
        %170 = sbr.rel (%p168) target = $region16
      $region15: #{tresblock_forward.4} parent=11 // pred_region
        _
      $region16: #{tresblock_forward.4} parent=11 // pred_fallthru
        _
      // Predicated region
      $region17: #{tresblock_forward.4} parent=11 // pred_check
        %p171 = pneg %p80
      $region18: #{tresblock_forward.4} parent=11 // pred_check_branch
        %173 = sbr.rel (%p171) target = $region20
      $region19: #{tresblock_forward.4} parent=11 // pred_region
        _
      $region20: #{tresblock_forward.4} parent=11 // pred_fallthru
        _
      // Predicated region
      $region21: #{tresblock_forward.4} parent=11 // pred_check
        %p174 = pneg %p101
      $region22: #{tresblock_forward.4} parent=11 // pred_check_branch
        %176 = sbr.rel (%p174) target = $region24
      $region23: #{tresblock_forward.4} parent=11 // pred_region
        _
      $region24: #{tresblock_forward.4} parent=11 // pred_fallthru
        _
    $region12: #{tresblock_forward.4} parent=5 // pred_fallthru
      _
    %p177 = scmp.lt.s32.totalorder %s12, 2
    // Predicated region
    $region25: #{tresblock_forward.4} parent=5 // pred_check
      %p178 = pneg %p177
    $region26: #{tresblock_forward.4} parent=5 // pred_check_branch
      %180 = sbr.rel (%p178) target = $region28
    $region27: #{tresblock_forward.4} parent=5 // pred_region
      // Predicated region
      $region29: #{tresblock_forward.4} parent=27 // pred_check
        %p181 = pneg %p32
      $region30: #{tresblock_forward.4} parent=27 // pred_check_branch
        %183 = sbr.rel (%p181) target = $region32
      $region31: #{tresblock_forward.4} parent=27 // pred_region
        %p184 = scmp.lt.s32.totalorder %s12, 1
        %s185 = scalar_select %p184, %s12, 1
        %s186 = smul.addr %s185, 32
        %s187 = smul.addr %s186, 4
        %s188 = scalar_lea.vmem %s0, %s187
      $region32: #{tresblock_forward.4} parent=27 // pred_fallthru
        _
    $region28: #{tresblock_forward.4} parent=5 // pred_fallthru
      _
    %p189 = scmp.le.s32.totalorder 1, %s12
    %p190 = scmp.lt.s32.totalorder %s12, 3
    %p191 = pnand %p189, %p190
    %p192 = pneg %p191
    // Predicated region
    $region33: #{tresblock_forward.4} parent=5 // pred_check
      _
    $region34: #{tresblock_forward.4} parent=5 // pred_check_branch
      %194 = sbr.rel (%p191) target = $region36
    $region35: #{tresblock_forward.4} parent=5 // pred_region
      %s195 = ssub.s32 %s12, 1
      %p196 = scmp.lt.s32.totalorder %s17, 1
      %s197 = scalar_select %p196, %s17, 1
      %s198 = smul.addr %s197, 32
      %s199 = smul.addr %s198, 4
      %s200 = scalar_lea.vmem %s0, %s199
      %p201 = pneg %p38
      %p202 = pneg %p35
      %p203 = pneg %p59
      %p204 = pneg %p56
      %p205 = pneg %p80
      %p206 = pneg %p77
      %p207 = pneg %p101
      %p208 = pneg %p98
      %p209 = pneg %p127
      %p210 = pneg %p124
      %p211 = scmp.lt.s32.totalorder %s17, 1
      %s212 = scalar_select %p211, %s17, 1
      %s213 = smul.addr %s212, 32
      %s214 = smul.addr %s213, 4
      %s215 = scalar_lea.vmem %s4, %s214
      %p216 = pneg %p153
      %p217 = pneg %p150
      %p218 = scmp.lt.s32.totalorder %s17, 1
      %s219 = scalar_select %p218, %s17, 1
      %s220 = smul.addr %s219, 2
      %s221 = scalar_lea.vmem %s5, %s220
      %p222 = scmp.lt.s32.totalorder %s17, 1
      %s223 = scalar_select %p222, %s17, 1
      %s224 = smul.addr %s223, 32
      %s225 = smul.addr %s224, 4
      %s226 = scalar_lea.vmem %s0, %s225
      %p227 = scmp.lt.s32.totalorder %s17, 1
      %s228 = scalar_select %p227, %s17, 1
      %s229 = smul.addr %s228, 32
      %s230 = smul.addr %s229, 4
      %s231 = scalar_lea.vmem %s4, %s230
      %p232 = scmp.lt.s32.totalorder %s17, 1
      %s233 = scalar_select %p232, %s17, 1
      %s234 = smul.addr %s233, 2
      %s235 = scalar_lea.vmem %s5, %s234
      %v237 = vld [vmem:[%s226] sm:$0xf]
      %v238 = vld [vmem:[%s226 + $0x4] sm:$0xf]
      %v239 = vld [vmem:[%s226 + $0x8] sm:$0xf]
      %v240 = vld [vmem:[%s226 + $0xc] sm:$0xf]
      %v241 = vld [vmem:[%s226 + $0x10] sm:$0xf]
      %v242 = vld [vmem:[%s226 + $0x14] sm:$0xf]
      %v243 = vld [vmem:[%s226 + $0x18] sm:$0xf]
      %v244 = vld [vmem:[%s226 + $0x1c] sm:$0xf]
      %v245 = vld [vmem:[%s226 + $0x20] sm:$0xf]
      %v246 = vld [vmem:[%s226 + $0x24] sm:$0xf]
      %v247 = vld [vmem:[%s226 + $0x28] sm:$0xf]
      %v248 = vld [vmem:[%s226 + $0x2c] sm:$0xf]
      %v249 = vld [vmem:[%s226 + $0x30] sm:$0xf]
      %v250 = vld [vmem:[%s226 + $0x34] sm:$0xf]
      %v251 = vld [vmem:[%s226 + $0x38] sm:$0xf]
      %v252 = vld [vmem:[%s226 + $0x3c] sm:$0xf]
      %v253 = vld [vmem:[%s226 + $0x40] sm:$0xf]
      %v254 = vld [vmem:[%s226 + $0x44] sm:$0xf]
      %v255 = vld [vmem:[%s226 + $0x48] sm:$0xf]
      %v256 = vld [vmem:[%s226 + $0x4c] sm:$0xf]
      %v257 = vld [vmem:[%s226 + $0x50] sm:$0xf]
      %v258 = vld [vmem:[%s226 + $0x54] sm:$0xf]
      %v259 = vld [vmem:[%s226 + $0x58] sm:$0xf]
      %v260 = vld [vmem:[%s226 + $0x5c] sm:$0xf]
      %v261 = vld [vmem:[%s226 + $0x60] sm:$0xf]
      %v262 = vld [vmem:[%s226 + $0x64] sm:$0xf]
      %v263 = vld [vmem:[%s226 + $0x68] sm:$0xf]
      %v264 = vld [vmem:[%s226 + $0x6c] sm:$0xf]
      %v265 = vld [vmem:[%s226 + $0x70] sm:$0xf]
      %v266 = vld [vmem:[%s226 + $0x74] sm:$0xf]
      %v267 = vld [vmem:[%s226 + $0x78] sm:$0xf]
      %v268 = vld [vmem:[%s226 + $0x7c] sm:$0xf]
      %v269 = vunpack.c.l.bf16 %v237
      %v270 = vunpack.c.l.bf16 %v238
      %v271 = vunpack.c.l.bf16 %v239
      %v272 = vunpack.c.l.bf16 %v240
      %v273 = vunpack.c.l.bf16 %v241
      %v274 = vunpack.c.l.bf16 %v242
      %v275 = vunpack.c.l.bf16 %v243
      %v276 = vunpack.c.l.bf16 %v244
      %v277 = vunpack.c.l.bf16 %v245
      %v278 = vunpack.c.l.bf16 %v246
      %v279 = vunpack.c.l.bf16 %v247
      %v280 = vunpack.c.l.bf16 %v248
      %v281 = vunpack.c.l.bf16 %v249
      %v282 = vunpack.c.l.bf16 %v250
      %v283 = vunpack.c.l.bf16 %v251
      %v284 = vunpack.c.l.bf16 %v252
      %v285 = vunpack.c.l.bf16 %v253
      %v286 = vunpack.c.l.bf16 %v254
      %v287 = vunpack.c.l.bf16 %v255
      %v288 = vunpack.c.l.bf16 %v256
      %v289 = vunpack.c.l.bf16 %v257
      %v290 = vunpack.c.l.bf16 %v258
      %v291 = vunpack.c.l.bf16 %v259
      %v292 = vunpack.c.l.bf16 %v260
      %v293 = vunpack.c.l.bf16 %v261
      %v294 = vunpack.c.l.bf16 %v262
      %v295 = vunpack.c.l.bf16 %v263
      %v296 = vunpack.c.l.bf16 %v264
      %v297 = vunpack.c.l.bf16 %v265
      %v298 = vunpack.c.l.bf16 %v266
      %v299 = vunpack.c.l.bf16 %v267
      %v300 = vunpack.c.l.bf16 %v268
      %v301 = vld [vmem:[%s1] sm:$0x1]
      %v303 = vlaneseq
      %v304 = vshrl.u32 %v303, 7
      %v305 = vsub.s32 0, %v304
      %v306 = vrot.slane %v301, %v305
      %v308 = vmul.f32 %v269, %v306
      %v309 = vmul.f32 %v270, %v306
      %v310 = vmul.f32 %v271, %v306
      %v311 = vmul.f32 %v272, %v306
      %v312 = vmul.f32 %v273, %v306
      %v313 = vmul.f32 %v274, %v306
      %v314 = vmul.f32 %v275, %v306
      %v315 = vmul.f32 %v276, %v306
      %v316 = vmul.f32 %v277, %v306
      %v317 = vmul.f32 %v278, %v306
      %v318 = vmul.f32 %v279, %v306
      %v319 = vmul.f32 %v280, %v306
      %v320 = vmul.f32 %v281, %v306
      %v321 = vmul.f32 %v282, %v306
      %v322 = vmul.f32 %v283, %v306
      %v323 = vmul.f32 %v284, %v306
      %v324 = vmul.f32 %v285, %v306
      %v325 = vmul.f32 %v286, %v306
      %v326 = vmul.f32 %v287, %v306
      %v327 = vmul.f32 %v288, %v306
      %v328 = vmul.f32 %v289, %v306
      %v329 = vmul.f32 %v290, %v306
      %v330 = vmul.f32 %v291, %v306
      %v331 = vmul.f32 %v292, %v306
      %v332 = vmul.f32 %v293, %v306
      %v333 = vmul.f32 %v294, %v306
      %v334 = vmul.f32 %v295, %v306
      %v335 = vmul.f32 %v296, %v306
      %v336 = vmul.f32 %v297, %v306
      %v337 = vmul.f32 %v298, %v306
      %v338 = vmul.f32 %v299, %v306
      %v339 = vmul.f32 %v300, %v306
      %v340 = vld [vmem:[%s2] sm:$0x1]
      %v342 = vlaneseq
      %v343 = vshrl.u32 %v342, 7
      %v344 = vsub.s32 0, %v343
      %v345 = vrot.slane %v340, %v344
      %v347 = vadd.f32 %v308, %v345
      %v348 = vadd.f32 %v309, %v345
      %v349 = vadd.f32 %v310, %v345
      %v350 = vadd.f32 %v311, %v345
      %v351 = vadd.f32 %v312, %v345
      %v352 = vadd.f32 %v313, %v345
      %v353 = vadd.f32 %v314, %v345
      %v354 = vadd.f32 %v315, %v345
      %v355 = vadd.f32 %v316, %v345
      %v356 = vadd.f32 %v317, %v345
      %v357 = vadd.f32 %v318, %v345
      %v358 = vadd.f32 %v319, %v345
      %v359 = vadd.f32 %v320, %v345
      %v360 = vadd.f32 %v321, %v345
      %v361 = vadd.f32 %v322, %v345
      %v362 = vadd.f32 %v323, %v345
      %v363 = vadd.f32 %v324, %v345
      %v364 = vadd.f32 %v325, %v345
      %v365 = vadd.f32 %v326, %v345
      %v366 = vadd.f32 %v327, %v345
      %v367 = vadd.f32 %v328, %v345
      %v368 = vadd.f32 %v329, %v345
      %v369 = vadd.f32 %v330, %v345
      %v370 = vadd.f32 %v331, %v345
      %v371 = vadd.f32 %v332, %v345
      %v372 = vadd.f32 %v333, %v345
      %v373 = vadd.f32 %v334, %v345
      %v374 = vadd.f32 %v335, %v345
      %v375 = vadd.f32 %v336, %v345
      %v376 = vadd.f32 %v337, %v345
      %v377 = vadd.f32 %v338, %v345
      %v378 = vadd.f32 %v339, %v345
      %v379 = vmax.f32 %v347, 0.0
      %v380 = vmax.f32 %v348, 0.0
      %v381 = vmax.f32 %v349, 0.0
      %v382 = vmax.f32 %v350, 0.0
      %v383 = vmax.f32 %v351, 0.0
      %v384 = vmax.f32 %v352, 0.0
      %v385 = vmax.f32 %v353, 0.0
      %v386 = vmax.f32 %v354, 0.0
      %v387 = vmax.f32 %v355, 0.0
      %v388 = vmax.f32 %v356, 0.0
      %v389 = vmax.f32 %v357, 0.0
      %v390 = vmax.f32 %v358, 0.0
      %v391 = vmax.f32 %v359, 0.0
      %v392 = vmax.f32 %v360, 0.0
      %v393 = vmax.f32 %v361, 0.0
      %v394 = vmax.f32 %v362, 0.0
      %v395 = vmax.f32 %v363, 0.0
      %v396 = vmax.f32 %v364, 0.0
      %v397 = vmax.f32 %v365, 0.0
      %v398 = vmax.f32 %v366, 0.0
      %v399 = vmax.f32 %v367, 0.0
      %v400 = vmax.f32 %v368, 0.0
      %v401 = vmax.f32 %v369, 0.0
      %v402 = vmax.f32 %v370, 0.0
      %v403 = vmax.f32 %v371, 0.0
      %v404 = vmax.f32 %v372, 0.0
      %v405 = vmax.f32 %v373, 0.0
      %v406 = vmax.f32 %v374, 0.0
      %v407 = vmax.f32 %v375, 0.0
      %v408 = vmax.f32 %v376, 0.0
      %v409 = vmax.f32 %v377, 0.0
      %v410 = vmax.f32 %v378, 0.0
      %v411 = vpack.c.bf16 %v380, %v379
      %v412 = vpack.c.bf16 %v382, %v381
      %v413 = vpack.c.bf16 %v384, %v383
      %v414 = vpack.c.bf16 %v386, %v385
      %v415 = vpack.c.bf16 %v388, %v387
      %v416 = vpack.c.bf16 %v390, %v389
      %v417 = vpack.c.bf16 %v392, %v391
      %v418 = vpack.c.bf16 %v394, %v393
      %v419 = vpack.c.bf16 %v396, %v395
      %v420 = vpack.c.bf16 %v398, %v397
      %v421 = vpack.c.bf16 %v400, %v399
      %v422 = vpack.c.bf16 %v402, %v401
      %v423 = vpack.c.bf16 %v404, %v403
      %v424 = vpack.c.bf16 %v406, %v405
      %v425 = vpack.c.bf16 %v408, %v407
      %v426 = vpack.c.bf16 %v410, %v409
      %427 = vst [vmem:[#allocation2] sm:$0xf] 0
      %428 = vst [vmem:[#allocation2 + $0x4] sm:$0xf] 0
      %429 = vst [vmem:[#allocation2 + $0x8] sm:$0xf] 0
      %s430 = scalar_lea.vmem [#allocation2], 204
      %431 = vst [vmem:[%s430] sm:$0xf] 0
      %432 = vst [vmem:[%s430 + $0x4] sm:$0xf] 0
      %433 = vst [vmem:[%s430 + $0x8] sm:$0xf] 0
      %s434 = scalar_lea.vmem [#allocation2], 12
      %vm435 = vcmask 1040384
      %vm436 = vsmask.f32 256
      %vm437 = vmand %vm435, %vm436
      %v438 = vld [vmem:[%s434] sm:$0x1]
      %v439 = vsel %vm437, 0, %v438
      %440 = vst [vmem:[%s434] sm:$0x1] %v439
      %v441 = vld [vmem:[%s434 + $0xc] sm:$0x1]
      %v442 = vsel %vm437, 0, %v441
      %443 = vst [vmem:[%s434 + $0xc] sm:$0x1] %v442
      %v444 = vld [vmem:[%s434 + $0x18] sm:$0x1]
      %v445 = vsel %vm437, 0, %v444
      %446 = vst [vmem:[%s434 + $0x18] sm:$0x1] %v445
      %v447 = vld [vmem:[%s434 + $0x24] sm:$0x1]
      %v448 = vsel %vm437, 0, %v447
      %449 = vst [vmem:[%s434 + $0x24] sm:$0x1] %v448
      %v450 = vld [vmem:[%s434 + $0x30] sm:$0x1]
      %v451 = vsel %vm437, 0, %v450
      %452 = vst [vmem:[%s434 + $0x30] sm:$0x1] %v451
      %v453 = vld [vmem:[%s434 + $0x3c] sm:$0x1]
      %v454 = vsel %vm437, 0, %v453
      %455 = vst [vmem:[%s434 + $0x3c] sm:$0x1] %v454
      %v456 = vld [vmem:[%s434 + $0x48] sm:$0x1]
      %v457 = vsel %vm437, 0, %v456
      %458 = vst [vmem:[%s434 + $0x48] sm:$0x1] %v457
      %v459 = vld [vmem:[%s434 + $0x54] sm:$0x1]
      %v460 = vsel %vm437, 0, %v459
      %461 = vst [vmem:[%s434 + $0x54] sm:$0x1] %v460
      %v462 = vld [vmem:[%s434 + $0x60] sm:$0x1]
      %v463 = vsel %vm437, 0, %v462
      %464 = vst [vmem:[%s434 + $0x60] sm:$0x1] %v463
      %v465 = vld [vmem:[%s434 + $0x6c] sm:$0x1]
      %v466 = vsel %vm437, 0, %v465
      %467 = vst [vmem:[%s434 + $0x6c] sm:$0x1] %v466
      %v468 = vld [vmem:[%s434 + $0x78] sm:$0x1]
      %v469 = vsel %vm437, 0, %v468
      %470 = vst [vmem:[%s434 + $0x78] sm:$0x1] %v469
      %v471 = vld [vmem:[%s434 + $0x84] sm:$0x1]
      %v472 = vsel %vm437, 0, %v471
      %473 = vst [vmem:[%s434 + $0x84] sm:$0x1] %v472
      %v474 = vld [vmem:[%s434 + $0x90] sm:$0x1]
      %v475 = vsel %vm437, 0, %v474
      %476 = vst [vmem:[%s434 + $0x90] sm:$0x1] %v475
      %v477 = vld [vmem:[%s434 + $0x9c] sm:$0x1]
      %v478 = vsel %vm437, 0, %v477
      %479 = vst [vmem:[%s434 + $0x9c] sm:$0x1] %v478
      %v480 = vld [vmem:[%s434 + $0xa8] sm:$0x1]
      %v481 = vsel %vm437, 0, %v480
      %482 = vst [vmem:[%s434 + $0xa8] sm:$0x1] %v481
      %v483 = vld [vmem:[%s434 + $0xb4] sm:$0x1]
      %v484 = vsel %vm437, 0, %v483
      %485 = vst [vmem:[%s434 + $0xb4] sm:$0x1] %v484
      %vm486 = vcmask 1043456
      %vm487 = vsmask.f32 7938
      %vm488 = vmand %vm486, %vm487
      %v489 = vld [vmem:[%s434 + $0x8] sm:$0xf]
      %v490 = vsel %vm488, 0, %v489
      %491 = vst [vmem:[%s434 + $0x8] sm:$0xf] %v490
      %v492 = vld [vmem:[%s434 + $0x14] sm:$0xf]
      %v493 = vsel %vm488, 0, %v492
      %494 = vst [vmem:[%s434 + $0x14] sm:$0xf] %v493
      %v495 = vld [vmem:[%s434 + $0x20] sm:$0xf]
      %v496 = vsel %vm488, 0, %v495
      %497 = vst [vmem:[%s434 + $0x20] sm:$0xf] %v496
      %v498 = vld [vmem:[%s434 + $0x2c] sm:$0xf]
      %v499 = vsel %vm488, 0, %v498
      %500 = vst [vmem:[%s434 + $0x2c] sm:$0xf] %v499
      %v501 = vld [vmem:[%s434 + $0x38] sm:$0xf]
      %v502 = vsel %vm488, 0, %v501
      %503 = vst [vmem:[%s434 + $0x38] sm:$0xf] %v502
      %v504 = vld [vmem:[%s434 + $0x44] sm:$0xf]
      %v505 = vsel %vm488, 0, %v504
      %506 = vst [vmem:[%s434 + $0x44] sm:$0xf] %v505
      %v507 = vld [vmem:[%s434 + $0x50] sm:$0xf]
      %v508 = vsel %vm488, 0, %v507
      %509 = vst [vmem:[%s434 + $0x50] sm:$0xf] %v508
      %v510 = vld [vmem:[%s434 + $0x5c] sm:$0xf]
      %v511 = vsel %vm488, 0, %v510
      %512 = vst [vmem:[%s434 + $0x5c] sm:$0xf] %v511
      %v513 = vld [vmem:[%s434 + $0x68] sm:$0xf]
      %v514 = vsel %vm488, 0, %v513
      %515 = vst [vmem:[%s434 + $0x68] sm:$0xf] %v514
      %v516 = vld [vmem:[%s434 + $0x74] sm:$0xf]
      %v517 = vsel %vm488, 0, %v516
      %518 = vst [vmem:[%s434 + $0x74] sm:$0xf] %v517
      %v519 = vld [vmem:[%s434 + $0x80] sm:$0xf]
      %v520 = vsel %vm488, 0, %v519
      %521 = vst [vmem:[%s434 + $0x80] sm:$0xf] %v520
      %v522 = vld [vmem:[%s434 + $0x8c] sm:$0xf]
      %v523 = vsel %vm488, 0, %v522
      %524 = vst [vmem:[%s434 + $0x8c] sm:$0xf] %v523
      %v525 = vld [vmem:[%s434 + $0x98] sm:$0xf]
      %v526 = vsel %vm488, 0, %v525
      %527 = vst [vmem:[%s434 + $0x98] sm:$0xf] %v526
      %v528 = vld [vmem:[%s434 + $0xa4] sm:$0xf]
      %v529 = vsel %vm488, 0, %v528
      %530 = vst [vmem:[%s434 + $0xa4] sm:$0xf] %v529
      %v531 = vld [vmem:[%s434 + $0xb0] sm:$0xf]
      %v532 = vsel %vm488, 0, %v531
      %533 = vst [vmem:[%s434 + $0xb0] sm:$0xf] %v532
      %v534 = vld [vmem:[%s434 + $0xbc] sm:$0xf]
      %v535 = vsel %vm488, 0, %v534
      %536 = vst [vmem:[%s434 + $0xbc] sm:$0xf] %v535
      %v553 = vunpack.c.l.b16 %v411
      %v554 = vunpack.c.h.b16 %v411
      %v555 = vunpack.c.l.b16 %v412
      %v556 = vunpack.c.h.b16 %v412
      %v557 = vunpack.c.l.b16 %v413
      %v558 = vunpack.c.h.b16 %v413
      %v559 = vunpack.c.l.b16 %v414
      %v560 = vunpack.c.h.b16 %v414
      %v561 = vunpack.c.l.b16 %v415
      %v562 = vunpack.c.h.b16 %v415
      %v563 = vunpack.c.l.b16 %v416
      %v564 = vunpack.c.h.b16 %v416
      %v565 = vunpack.c.l.b16 %v417
      %v566 = vunpack.c.h.b16 %v417
      %v567 = vunpack.c.l.b16 %v418
      %v568 = vunpack.c.h.b16 %v418
      %v569 = vunpack.c.l.b16 %v419
      %v570 = vunpack.c.h.b16 %v419
      %v571 = vunpack.c.l.b16 %v420
      %v572 = vunpack.c.h.b16 %v420
      %v573 = vunpack.c.l.b16 %v421
      %v574 = vunpack.c.h.b16 %v421
      %v575 = vunpack.c.l.b16 %v422
      %v576 = vunpack.c.h.b16 %v422
      %v577 = vunpack.c.l.b16 %v423
      %v578 = vunpack.c.h.b16 %v423
      %v579 = vunpack.c.l.b16 %v424
      %v580 = vunpack.c.h.b16 %v424
      %v581 = vunpack.c.l.b16 %v425
      %v582 = vunpack.c.h.b16 %v425
      %v583 = vunpack.c.l.b16 %v426
      %v584 = vunpack.c.h.b16 %v426
      %v585 = vpack.c.b16 %v553, %v553
      %v586 = vpack.c.b16 %v554, %v554
      %v587 = vpack.c.b16 %v555, %v555
      %v588 = vpack.c.b16 %v556, %v556
      %v589 = vpack.c.b16 %v557, %v557
      %v590 = vpack.c.b16 %v558, %v558
      %v591 = vpack.c.b16 %v559, %v559
      %v592 = vpack.c.b16 %v560, %v560
      %v593 = vpack.c.b16 %v561, %v561
      %v594 = vpack.c.b16 %v562, %v562
      %v595 = vpack.c.b16 %v563, %v563
      %v596 = vpack.c.b16 %v564, %v564
      %v597 = vpack.c.b16 %v565, %v565
      %v598 = vpack.c.b16 %v566, %v566
      %v599 = vpack.c.b16 %v567, %v567
      %v600 = vpack.c.b16 %v568, %v568
      %v601 = vpack.c.b16 %v569, %v569
      %v602 = vpack.c.b16 %v570, %v570
      %v603 = vpack.c.b16 %v571, %v571
      %v604 = vpack.c.b16 %v572, %v572
      %v605 = vpack.c.b16 %v573, %v573
      %v606 = vpack.c.b16 %v574, %v574
      %v607 = vpack.c.b16 %v575, %v575
      %v608 = vpack.c.b16 %v576, %v576
      %v609 = vpack.c.b16 %v577, %v577
      %v610 = vpack.c.b16 %v578, %v578
      %v611 = vpack.c.b16 %v579, %v579
      %v612 = vpack.c.b16 %v580, %v580
      %v613 = vpack.c.b16 %v581, %v581
      %v614 = vpack.c.b16 %v582, %v582
      %v615 = vpack.c.b16 %v583, %v583
      %v616 = vpack.c.b16 %v584, %v584
      %vm617 = vsmask.f32 4368
      %vm618 = vmor %vm436, %vm617
      %v620 = vshrl.u32 %v585, 16
      %v622 = vrot.slane %v620, 7
      %v623 = vshll.u32 %v585, 16
      %v625 = vor.u32 %v622, %v623
      %v626 = vrot.slane %v622, 4
      %v628 = vshrl.u32 %v586, 16
      %v630 = vrot.slane %v628, 7
      %v631 = vshll.u32 %v586, 16
      %v633 = vor.u32 %v630, %v631
      %v634 = vsel %vm618, %v626, %v633
      %v635 = vrot.slane %v630, 4
      %v637 = vshrl.u32 %v587, 16
      %v639 = vrot.slane %v637, 7
      %v640 = vshll.u32 %v587, 16
      %v642 = vor.u32 %v639, %v640
      %v643 = vrot.slane %v639, 4
      %v645 = vshrl.u32 %v588, 16
      %v647 = vrot.slane %v645, 7
      %v648 = vshll.u32 %v588, 16
      %v650 = vor.u32 %v647, %v648
      %v651 = vsel %vm618, %v643, %v650
      %v652 = vrot.slane %v647, 4
      %v654 = vshrl.u32 %v589, 16
      %v656 = vrot.slane %v654, 7
      %v657 = vshll.u32 %v589, 16
      %v659 = vor.u32 %v656, %v657
      %v660 = vrot.slane %v656, 4
      %v662 = vshrl.u32 %v590, 16
      %v664 = vrot.slane %v662, 7
      %v665 = vshll.u32 %v590, 16
      %v667 = vor.u32 %v664, %v665
      %v668 = vsel %vm618, %v660, %v667
      %v669 = vrot.slane %v664, 4
      %v671 = vshrl.u32 %v591, 16
      %v673 = vrot.slane %v671, 7
      %v674 = vshll.u32 %v591, 16
      %v676 = vor.u32 %v673, %v674
      %v677 = vrot.slane %v673, 4
      %v679 = vshrl.u32 %v592, 16
      %v681 = vrot.slane %v679, 7
      %v682 = vshll.u32 %v592, 16
      %v684 = vor.u32 %v681, %v682
      %v685 = vsel %vm618, %v677, %v684
      %v686 = vrot.slane %v681, 4
      %v688 = vshrl.u32 %v593, 16
      %v690 = vrot.slane %v688, 7
      %v691 = vshll.u32 %v593, 16
      %v693 = vor.u32 %v690, %v691
      %v694 = vrot.slane %v690, 4
      %v696 = vshrl.u32 %v594, 16
      %v698 = vrot.slane %v696, 7
      %v699 = vshll.u32 %v594, 16
      %v701 = vor.u32 %v698, %v699
      %v702 = vsel %vm618, %v694, %v701
      %v703 = vrot.slane %v698, 4
      %v705 = vshrl.u32 %v595, 16
      %v707 = vrot.slane %v705, 7
      %v708 = vshll.u32 %v595, 16
      %v710 = vor.u32 %v707, %v708
      %v711 = vrot.slane %v707, 4
      %v713 = vshrl.u32 %v596, 16
      %v715 = vrot.slane %v713, 7
      %v716 = vshll.u32 %v596, 16
      %v718 = vor.u32 %v715, %v716
      %v719 = vsel %vm618, %v711, %v718
      %v720 = vrot.slane %v715, 4
      %v722 = vshrl.u32 %v597, 16
      %v724 = vrot.slane %v722, 7
      %v725 = vshll.u32 %v597, 16
      %v727 = vor.u32 %v724, %v725
      %v728 = vrot.slane %v724, 4
      %v730 = vshrl.u32 %v598, 16
      %v732 = vrot.slane %v730, 7
      %v733 = vshll.u32 %v598, 16
      %v735 = vor.u32 %v732, %v733
      %v736 = vsel %vm618, %v728, %v735
      %v737 = vrot.slane %v732, 4
      %v739 = vshrl.u32 %v599, 16
      %v741 = vrot.slane %v739, 7
      %v742 = vshll.u32 %v599, 16
      %v744 = vor.u32 %v741, %v742
      %v745 = vrot.slane %v741, 4
      %v747 = vshrl.u32 %v600, 16
      %v749 = vrot.slane %v747, 7
      %v750 = vshll.u32 %v600, 16
      %v752 = vor.u32 %v749, %v750
      %v753 = vsel %vm618, %v745, %v752
      %v754 = vrot.slane %v749, 4
      %v756 = vshrl.u32 %v601, 16
      %v758 = vrot.slane %v756, 7
      %v759 = vshll.u32 %v601, 16
      %v761 = vor.u32 %v758, %v759
      %v762 = vrot.slane %v758, 4
      %v764 = vshrl.u32 %v602, 16
      %v766 = vrot.slane %v764, 7
      %v767 = vshll.u32 %v602, 16
      %v769 = vor.u32 %v766, %v767
      %v770 = vsel %vm618, %v762, %v769
      %v771 = vrot.slane %v766, 4
      %v773 = vshrl.u32 %v603, 16
      %v775 = vrot.slane %v773, 7
      %v776 = vshll.u32 %v603, 16
      %v778 = vor.u32 %v775, %v776
      %v779 = vrot.slane %v775, 4
      %v781 = vshrl.u32 %v604, 16
      %v783 = vrot.slane %v781, 7
      %v784 = vshll.u32 %v604, 16
      %v786 = vor.u32 %v783, %v784
      %v787 = vsel %vm618, %v779, %v786
      %v788 = vrot.slane %v783, 4
      %v790 = vshrl.u32 %v605, 16
      %v792 = vrot.slane %v790, 7
      %v793 = vshll.u32 %v605, 16
      %v795 = vor.u32 %v792, %v793
      %v796 = vrot.slane %v792, 4
      %v798 = vshrl.u32 %v606, 16
      %v800 = vrot.slane %v798, 7
      %v801 = vshll.u32 %v606, 16
      %v803 = vor.u32 %v800, %v801
      %v804 = vsel %vm618, %v796, %v803
      %v805 = vrot.slane %v800, 4
      %v807 = vshrl.u32 %v607, 16
      %v809 = vrot.slane %v807, 7
      %v810 = vshll.u32 %v607, 16
      %v812 = vor.u32 %v809, %v810
      %v813 = vrot.slane %v809, 4
      %v815 = vshrl.u32 %v608, 16
      %v817 = vrot.slane %v815, 7
      %v818 = vshll.u32 %v608, 16
      %v820 = vor.u32 %v817, %v818
      %v821 = vsel %vm618, %v813, %v820
      %v822 = vrot.slane %v817, 4
      %v824 = vshrl.u32 %v609, 16
      %v826 = vrot.slane %v824, 7
      %v827 = vshll.u32 %v609, 16
      %v829 = vor.u32 %v826, %v827
      %v830 = vrot.slane %v826, 4
      %v832 = vshrl.u32 %v610, 16
      %v834 = vrot.slane %v832, 7
      %v835 = vshll.u32 %v610, 16
      %v837 = vor.u32 %v834, %v835
      %v838 = vsel %vm618, %v830, %v837
      %v839 = vrot.slane %v834, 4
      %v841 = vshrl.u32 %v611, 16
      %v843 = vrot.slane %v841, 7
      %v844 = vshll.u32 %v611, 16
      %v846 = vor.u32 %v843, %v844
      %v847 = vrot.slane %v843, 4
      %v849 = vshrl.u32 %v612, 16
      %v851 = vrot.slane %v849, 7
      %v852 = vshll.u32 %v612, 16
      %v854 = vor.u32 %v851, %v852
      %v855 = vsel %vm618, %v847, %v854
      %v856 = vrot.slane %v851, 4
      %v858 = vshrl.u32 %v613, 16
      %v860 = vrot.slane %v858, 7
      %v861 = vshll.u32 %v613, 16
      %v863 = vor.u32 %v860, %v861
      %v864 = vrot.slane %v860, 4
      %v866 = vshrl.u32 %v614, 16
      %v868 = vrot.slane %v866, 7
      %v869 = vshll.u32 %v614, 16
      %v871 = vor.u32 %v868, %v869
      %v872 = vsel %vm618, %v864, %v871
      %v873 = vrot.slane %v868, 4
      %v875 = vshrl.u32 %v615, 16
      %v877 = vrot.slane %v875, 7
      %v878 = vshll.u32 %v615, 16
      %v880 = vor.u32 %v877, %v878
      %v881 = vrot.slane %v877, 4
      %v883 = vshrl.u32 %v616, 16
      %v885 = vrot.slane %v883, 7
      %v886 = vshll.u32 %v616, 16
      %v888 = vor.u32 %v885, %v886
      %v889 = vsel %vm618, %v881, %v888
      %v890 = vrot.slane %v885, 4
      %v939 = vld [vmem:[%s434] sm:$0xf]
      %v940 = vsel %vm488, %v625, %v939
      %941 = vst [vmem:[%s434] sm:$0xf] %v940
      %942 = vst [vmem:[%s434 + $0x4] sm:$0xf] %v634
      %v943 = vld [vmem:[%s434 + $0x8] sm:$0x1]
      %v944 = vsel %vm437, %v635, %v943
      %945 = vst [vmem:[%s434 + $0x8] sm:$0x1] %v944
      %v946 = vld [vmem:[%s434 + $0xc] sm:$0xf]
      %v947 = vsel %vm488, %v642, %v946
      %948 = vst [vmem:[%s434 + $0xc] sm:$0xf] %v947
      %949 = vst [vmem:[%s434 + $0x10] sm:$0xf] %v651
      %v950 = vld [vmem:[%s434 + $0x14] sm:$0x1]
      %v951 = vsel %vm437, %v652, %v950
      %952 = vst [vmem:[%s434 + $0x14] sm:$0x1] %v951
      %v953 = vld [vmem:[%s434 + $0x18] sm:$0xf]
      %v954 = vsel %vm488, %v659, %v953
      %955 = vst [vmem:[%s434 + $0x18] sm:$0xf] %v954
      %956 = vst [vmem:[%s434 + $0x1c] sm:$0xf] %v668
      %v957 = vld [vmem:[%s434 + $0x20] sm:$0x1]
      %v958 = vsel %vm437, %v669, %v957
      %959 = vst [vmem:[%s434 + $0x20] sm:$0x1] %v958
      %v960 = vld [vmem:[%s434 + $0x24] sm:$0xf]
      %v961 = vsel %vm488, %v676, %v960
      %962 = vst [vmem:[%s434 + $0x24] sm:$0xf] %v961
      %963 = vst [vmem:[%s434 + $0x28] sm:$0xf] %v685
      %v964 = vld [vmem:[%s434 + $0x2c] sm:$0x1]
      %v965 = vsel %vm437, %v686, %v964
      %966 = vst [vmem:[%s434 + $0x2c] sm:$0x1] %v965
      %v967 = vld [vmem:[%s434 + $0x30] sm:$0xf]
      %v968 = vsel %vm488, %v693, %v967
      %969 = vst [vmem:[%s434 + $0x30] sm:$0xf] %v968
      %970 = vst [vmem:[%s434 + $0x34] sm:$0xf] %v702
      %v971 = vld [vmem:[%s434 + $0x38] sm:$0x1]
      %v972 = vsel %vm437, %v703, %v971
      %973 = vst [vmem:[%s434 + $0x38] sm:$0x1] %v972
      %v974 = vld [vmem:[%s434 + $0x3c] sm:$0xf]
      %v975 = vsel %vm488, %v710, %v974
      %976 = vst [vmem:[%s434 + $0x3c] sm:$0xf] %v975
      %977 = vst [vmem:[%s434 + $0x40] sm:$0xf] %v719
      %v978 = vld [vmem:[%s434 + $0x44] sm:$0x1]
      %v979 = vsel %vm437, %v720, %v978
      %980 = vst [vmem:[%s434 + $0x44] sm:$0x1] %v979
      %v981 = vld [vmem:[%s434 + $0x48] sm:$0xf]
      %v982 = vsel %vm488, %v727, %v981
      %983 = vst [vmem:[%s434 + $0x48] sm:$0xf] %v982
      %984 = vst [vmem:[%s434 + $0x4c] sm:$0xf] %v736
      %v985 = vld [vmem:[%s434 + $0x50] sm:$0x1]
      %v986 = vsel %vm437, %v737, %v985
      %987 = vst [vmem:[%s434 + $0x50] sm:$0x1] %v986
      %v988 = vld [vmem:[%s434 + $0x54] sm:$0xf]
      %v989 = vsel %vm488, %v744, %v988
      %990 = vst [vmem:[%s434 + $0x54] sm:$0xf] %v989
      %991 = vst [vmem:[%s434 + $0x58] sm:$0xf] %v753
      %v992 = vld [vmem:[%s434 + $0x5c] sm:$0x1]
      %v993 = vsel %vm437, %v754, %v992
      %994 = vst [vmem:[%s434 + $0x5c] sm:$0x1] %v993
      %v995 = vld [vmem:[%s434 + $0x60] sm:$0xf]
      %v996 = vsel %vm488, %v761, %v995
      %997 = vst [vmem:[%s434 + $0x60] sm:$0xf] %v996
      %998 = vst [vmem:[%s434 + $0x64] sm:$0xf] %v770
      %v999 = vld [vmem:[%s434 + $0x68] sm:$0x1]
      %v1000 = vsel %vm437, %v771, %v999
      %1001 = vst [vmem:[%s434 + $0x68] sm:$0x1] %v1000
      %v1002 = vld [vmem:[%s434 + $0x6c] sm:$0xf]
      %v1003 = vsel %vm488, %v778, %v1002
      %1004 = vst [vmem:[%s434 + $0x6c] sm:$0xf] %v1003
      %1005 = vst [vmem:[%s434 + $0x70] sm:$0xf] %v787
      %v1006 = vld [vmem:[%s434 + $0x74] sm:$0x1]
      %v1007 = vsel %vm437, %v788, %v1006
      %1008 = vst [vmem:[%s434 + $0x74] sm:$0x1] %v1007
      %v1009 = vld [vmem:[%s434 + $0x78] sm:$0xf]
      %v1010 = vsel %vm488, %v795, %v1009
      %1011 = vst [vmem:[%s434 + $0x78] sm:$0xf] %v1010
      %1012 = vst [vmem:[%s434 + $0x7c] sm:$0xf] %v804
      %v1013 = vld [vmem:[%s434 + $0x80] sm:$0x1]
      %v1014 = vsel %vm437, %v805, %v1013
      %1015 = vst [vmem:[%s434 + $0x80] sm:$0x1] %v1014
      %v1016 = vld [vmem:[%s434 + $0x84] sm:$0xf]
      %v1017 = vsel %vm488, %v812, %v1016
      %1018 = vst [vmem:[%s434 + $0x84] sm:$0xf] %v1017
      %1019 = vst [vmem:[%s434 + $0x88] sm:$0xf] %v821
      %v1020 = vld [vmem:[%s434 + $0x8c] sm:$0x1]
      %v1021 = vsel %vm437, %v822, %v1020
      %1022 = vst [vmem:[%s434 + $0x8c] sm:$0x1] %v1021
      %v1023 = vld [vmem:[%s434 + $0x90] sm:$0xf]
      %v1024 = vsel %vm488, %v829, %v1023
      %1025 = vst [vmem:[%s434 + $0x90] sm:$0xf] %v1024
      %1026 = vst [vmem:[%s434 + $0x94] sm:$0xf] %v838
      %v1027 = vld [vmem:[%s434 + $0x98] sm:$0x1]
      %v1028 = vsel %vm437, %v839, %v1027
      %1029 = vst [vmem:[%s434 + $0x98] sm:$0x1] %v1028
      %v1030 = vld [vmem:[%s434 + $0x9c] sm:$0xf]
      %v1031 = vsel %vm488, %v846, %v1030
      %1032 = vst [vmem:[%s434 + $0x9c] sm:$0xf] %v1031
      %1033 = vst [vmem:[%s434 + $0xa0] sm:$0xf] %v855
      %v1034 = vld [vmem:[%s434 + $0xa4] sm:$0x1]
      %v1035 = vsel %vm437, %v856, %v1034
      %1036 = vst [vmem:[%s434 + $0xa4] sm:$0x1] %v1035
      %v1037 = vld [vmem:[%s434 + $0xa8] sm:$0xf]
      %v1038 = vsel %vm488, %v863, %v1037
      %1039 = vst [vmem:[%s434 + $0xa8] sm:$0xf] %v1038
      %1040 = vst [vmem:[%s434 + $0xac] sm:$0xf] %v872
      %v1041 = vld [vmem:[%s434 + $0xb0] sm:$0x1]
      %v1042 = vsel %vm437, %v873, %v1041
      %1043 = vst [vmem:[%s434 + $0xb0] sm:$0x1] %v1042
      %v1044 = vld [vmem:[%s434 + $0xb4] sm:$0xf]
      %v1045 = vsel %vm488, %v880, %v1044
      %1046 = vst [vmem:[%s434 + $0xb4] sm:$0xf] %v1045
      %1047 = vst [vmem:[%s434 + $0xb8] sm:$0xf] %v889
      %v1048 = vld [vmem:[%s434 + $0xbc] sm:$0x1]
      %v1049 = vsel %vm437, %v890, %v1048
      %1050 = vst [vmem:[%s434 + $0xbc] sm:$0x1] %v1049
      %v1051 = vld [vmem:[#allocation2] sm:$0xf]
      %v1052 = vld [vmem:[#allocation2 + $0x4] sm:$0xf]
      %v1053 = vld [vmem:[#allocation2 + $0xc] sm:$0xf]
      %v1054 = vld [vmem:[#allocation2 + $0x10] sm:$0xf]
      %v1055 = vld [vmem:[#allocation2 + $0x18] sm:$0xf]
      %v1056 = vld [vmem:[#allocation2 + $0x1c] sm:$0xf]
      %v1057 = vld [vmem:[#allocation2 + $0x24] sm:$0xf]
      %v1058 = vld [vmem:[#allocation2 + $0x28] sm:$0xf]
      %v1059 = vld [vmem:[#allocation2 + $0x30] sm:$0xf]
      %v1060 = vld [vmem:[#allocation2 + $0x34] sm:$0xf]
      %v1061 = vld [vmem:[#allocation2 + $0x3c] sm:$0xf]
      %v1062 = vld [vmem:[#allocation2 + $0x40] sm:$0xf]
      %v1063 = vld [vmem:[#allocation2 + $0x48] sm:$0xf]
      %v1064 = vld [vmem:[#allocation2 + $0x4c] sm:$0xf]
      %v1065 = vld [vmem:[#allocation2 + $0x54] sm:$0xf]
      %v1066 = vld [vmem:[#allocation2 + $0x58] sm:$0xf]
      %v1067 = vld [vmem:[#allocation2 + $0x60] sm:$0xf]
      %v1068 = vld [vmem:[#allocation2 + $0x64] sm:$0xf]
      %v1069 = vld [vmem:[#allocation2 + $0x6c] sm:$0xf]
      %v1070 = vld [vmem:[#allocation2 + $0x70] sm:$0xf]
      %v1071 = vld [vmem:[#allocation2 + $0x78] sm:$0xf]
      %v1072 = vld [vmem:[#allocation2 + $0x7c] sm:$0xf]
      %v1073 = vld [vmem:[#allocation2 + $0x84] sm:$0xf]
      %v1074 = vld [vmem:[#allocation2 + $0x88] sm:$0xf]
      %v1075 = vld [vmem:[#allocation2 + $0x90] sm:$0xf]
      %v1076 = vld [vmem:[#allocation2 + $0x94] sm:$0xf]
      %v1077 = vld [vmem:[#allocation2 + $0x9c] sm:$0xf]
      %v1078 = vld [vmem:[#allocation2 + $0xa0] sm:$0xf]
      %v1079 = vld [vmem:[#allocation2 + $0xa8] sm:$0xf]
      %v1080 = vld [vmem:[#allocation2 + $0xac] sm:$0xf]
      %v1081 = vld [vmem:[#allocation2 + $0xb4] sm:$0xf]
      %v1082 = vld [vmem:[#allocation2 + $0xb8] sm:$0xf]
      %v1115 = vunpack.c.l.b16 %v1051
      %v1116 = vunpack.c.l.b16 %v1052
      %v1117 = vunpack.c.l.b16 %v1053
      %v1118 = vunpack.c.l.b16 %v1054
      %v1119 = vunpack.c.l.b16 %v1055
      %v1120 = vunpack.c.l.b16 %v1056
      %v1121 = vunpack.c.l.b16 %v1057
      %v1122 = vunpack.c.l.b16 %v1058
      %v1123 = vunpack.c.l.b16 %v1059
      %v1124 = vunpack.c.l.b16 %v1060
      %v1125 = vunpack.c.l.b16 %v1061
      %v1126 = vunpack.c.l.b16 %v1062
      %v1127 = vunpack.c.l.b16 %v1063
      %v1128 = vunpack.c.l.b16 %v1064
      %v1129 = vunpack.c.l.b16 %v1065
      %v1130 = vunpack.c.l.b16 %v1066
      %v1131 = vunpack.c.l.b16 %v1067
      %v1132 = vunpack.c.l.b16 %v1068
      %v1133 = vunpack.c.l.b16 %v1069
      %v1134 = vunpack.c.l.b16 %v1070
      %v1135 = vunpack.c.l.b16 %v1071
      %v1136 = vunpack.c.l.b16 %v1072
      %v1137 = vunpack.c.l.b16 %v1073
      %v1138 = vunpack.c.l.b16 %v1074
      %v1139 = vunpack.c.l.b16 %v1075
      %v1140 = vunpack.c.l.b16 %v1076
      %v1141 = vunpack.c.l.b16 %v1077
      %v1142 = vunpack.c.l.b16 %v1078
      %v1143 = vunpack.c.l.b16 %v1079
      %v1144 = vunpack.c.l.b16 %v1080
      %v1145 = vunpack.c.l.b16 %v1081
      %v1146 = vunpack.c.l.b16 %v1082
      %v1147 = vpack.c.b16 %v1116, %v1115
      %v1148 = vpack.c.b16 %v1118, %v1117
      %v1149 = vpack.c.b16 %v1120, %v1119
      %v1150 = vpack.c.b16 %v1122, %v1121
      %v1151 = vpack.c.b16 %v1124, %v1123
      %v1152 = vpack.c.b16 %v1126, %v1125
      %v1153 = vpack.c.b16 %v1128, %v1127
      %v1154 = vpack.c.b16 %v1130, %v1129
      %v1155 = vpack.c.b16 %v1132, %v1131
      %v1156 = vpack.c.b16 %v1134, %v1133
      %v1157 = vpack.c.b16 %v1136, %v1135
      %v1158 = vpack.c.b16 %v1138, %v1137
      %v1159 = vpack.c.b16 %v1140, %v1139
      %v1160 = vpack.c.b16 %v1142, %v1141
      %v1161 = vpack.c.b16 %v1144, %v1143
      %v1162 = vpack.c.b16 %v1146, %v1145
      %1179 = vst [vmem:[#allocation3] sm:$0xff] %v1147
      %1180 = vst [vmem:[#allocation3 + $0x48] sm:$0xff] %v1148
      %1181 = vst [vmem:[#allocation3 + $0x90] sm:$0xff] %v1149
      %1182 = vst [vmem:[#allocation3 + $0xd8] sm:$0xff] %v1150
      %1183 = vst [vmem:[#allocation3 + $0x120] sm:$0xff] %v1151
      %1184 = vst [vmem:[#allocation3 + $0x168] sm:$0xff] %v1152
      %1185 = vst [vmem:[#allocation3 + $0x1b0] sm:$0xff] %v1153
      %1186 = vst [vmem:[#allocation3 + $0x1f8] sm:$0xff] %v1154
      %1187 = vst [vmem:[#allocation3 + $0x240] sm:$0xff] %v1155
      %1188 = vst [vmem:[#allocation3 + $0x288] sm:$0xff] %v1156
      %1189 = vst [vmem:[#allocation3 + $0x2d0] sm:$0xff] %v1157
      %1190 = vst [vmem:[#allocation3 + $0x318] sm:$0xff] %v1158
      %1191 = vst [vmem:[#allocation3 + $0x360] sm:$0xff] %v1159
      %1192 = vst [vmem:[#allocation3 + $0x3a8] sm:$0xff] %v1160
      %1193 = vst [vmem:[#allocation3 + $0x3f0] sm:$0xff] %v1161
      %1194 = vst [vmem:[#allocation3 + $0x438] sm:$0xff] %v1162
      %v1195 = vld [vmem:[#allocation2] sm:$0xf]
      %v1196 = vld [vmem:[#allocation2 + $0x4] sm:$0xf]
      %v1197 = vld [vmem:[#allocation2 + $0x8] sm:$0x1]
      %v1198 = vld [vmem:[#allocation2 + $0xc] sm:$0xf]
      %v1199 = vld [vmem:[#allocation2 + $0x10] sm:$0xf]
      %v1200 = vld [vmem:[#allocation2 + $0x14] sm:$0x1]
      %v1201 = vld [vmem:[#allocation2 + $0x18] sm:$0xf]
      %v1202 = vld [vmem:[#allocation2 + $0x1c] sm:$0xf]
      %v1203 = vld [vmem:[#allocation2 + $0x20] sm:$0x1]
      %v1204 = vld [vmem:[#allocation2 + $0x24] sm:$0xf]
      %v1205 = vld [vmem:[#allocation2 + $0x28] sm:$0xf]
      %v1206 = vld [vmem:[#allocation2 + $0x2c] sm:$0x1]
      %v1207 = vld [vmem:[#allocation2 + $0x30] sm:$0xf]
      %v1208 = vld [vmem:[#allocation2 + $0x34] sm:$0xf]
      %v1209 = vld [vmem:[#allocation2 + $0x38] sm:$0x1]
      %v1210 = vld [vmem:[#allocation2 + $0x3c] sm:$0xf]
      %v1211 = vld [vmem:[#allocation2 + $0x40] sm:$0xf]
      %v1212 = vld [vmem:[#allocation2 + $0x44] sm:$0x1]
      %v1213 = vld [vmem:[#allocation2 + $0x48] sm:$0xf]
      %v1214 = vld [vmem:[#allocation2 + $0x4c] sm:$0xf]
      %v1215 = vld [vmem:[#allocation2 + $0x50] sm:$0x1]
      %v1216 = vld [vmem:[#allocation2 + $0x54] sm:$0xf]
      %v1217 = vld [vmem:[#allocation2 + $0x58] sm:$0xf]
      %v1218 = vld [vmem:[#allocation2 + $0x5c] sm:$0x1]
      %v1219 = vld [vmem:[#allocation2 + $0x60] sm:$0xf]
      %v1220 = vld [vmem:[#allocation2 + $0x64] sm:$0xf]
      %v1221 = vld [vmem:[#allocation2 + $0x68] sm:$0x1]
      %v1222 = vld [vmem:[#allocation2 + $0x6c] sm:$0xf]
      %v1223 = vld [vmem:[#allocation2 + $0x70] sm:$0xf]
      %v1224 = vld [vmem:[#allocation2 + $0x74] sm:$0x1]
      %v1225 = vld [vmem:[#allocation2 + $0x78] sm:$0xf]
      %v1226 = vld [vmem:[#allocation2 + $0x7c] sm:$0xf]
      %v1227 = vld [vmem:[#allocation2 + $0x80] sm:$0x1]
      %v1228 = vld [vmem:[#allocation2 + $0x84] sm:$0xf]
      %v1229 = vld [vmem:[#allocation2 + $0x88] sm:$0xf]
      %v1230 = vld [vmem:[#allocation2 + $0x8c] sm:$0x1]
      %v1231 = vld [vmem:[#allocation2 + $0x90] sm:$0xf]
      %v1232 = vld [vmem:[#allocation2 + $0x94] sm:$0xf]
      %v1233 = vld [vmem:[#allocation2 + $0x98] sm:$0x1]
      %v1234 = vld [vmem:[#allocation2 + $0x9c] sm:$0xf]
      %v1235 = vld [vmem:[#allocation2 + $0xa0] sm:$0xf]
      %v1236 = vld [vmem:[#allocation2 + $0xa4] sm:$0x1]
      %v1237 = vld [vmem:[#allocation2 + $0xa8] sm:$0xf]
      %v1238 = vld [vmem:[#allocation2 + $0xac] sm:$0xf]
      %v1239 = vld [vmem:[#allocation2 + $0xb0] sm:$0x1]
      %v1240 = vld [vmem:[#allocation2 + $0xb4] sm:$0xf]
      %v1241 = vld [vmem:[#allocation2 + $0xb8] sm:$0xf]
      %v1242 = vld [vmem:[#allocation2 + $0xbc] sm:$0x1]
      %vm1243 = vsmask.f32 3328
      %vm1244 = vsmask.f32 7440
      %vm1245 = vmor %vm1243, %vm1244
      %v1247 = vshrl.u32 %v1195, 16
      %v1249 = vrot.slane %v1247, 4
      %v1250 = vshll.u32 %v1195, 16
      %v1252 = vrot.slane %v1250, 5
      %v1253 = vor.u32 %v1249, %v1252
      %v1254 = vrot.slane %v1253, 4
      %v1256 = vshll.u32 %v1196, 16
      %v1258 = vrot.slane %v1256, 5
      %v1259 = vsel %vm1245, %v1254, %v1258
      %v1260 = vshrl.u32 %v1196, 16
      %v1262 = vrot.slane %v1260, 4
      %v1263 = vor.u32 %v1262, %v1258
      %v1264 = vrot.slane %v1263, 4
      %v1266 = vshll.u32 %v1197, 16
      %v1268 = vrot.slane %v1266, 5
      %v1269 = vsel %vm1245, %v1264, %v1268
      %v1271 = vshrl.u32 %v1198, 16
      %v1273 = vrot.slane %v1271, 4
      %v1274 = vshll.u32 %v1198, 16
      %v1276 = vrot.slane %v1274, 5
      %v1277 = vor.u32 %v1273, %v1276
      %v1278 = vrot.slane %v1277, 4
      %v1280 = vshll.u32 %v1199, 16
      %v1282 = vrot.slane %v1280, 5
      %v1283 = vsel %vm1245, %v1278, %v1282
      %v1284 = vshrl.u32 %v1199, 16
      %v1286 = vrot.slane %v1284, 4
      %v1287 = vor.u32 %v1286, %v1282
      %v1288 = vrot.slane %v1287, 4
      %v1290 = vshll.u32 %v1200, 16
      %v1292 = vrot.slane %v1290, 5
      %v1293 = vsel %vm1245, %v1288, %v1292
      %v1295 = vshrl.u32 %v1201, 16
      %v1297 = vrot.slane %v1295, 4
      %v1298 = vshll.u32 %v1201, 16
      %v1300 = vrot.slane %v1298, 5
      %v1301 = vor.u32 %v1297, %v1300
      %v1302 = vrot.slane %v1301, 4
      %v1304 = vshll.u32 %v1202, 16
      %v1306 = vrot.slane %v1304, 5
      %v1307 = vsel %vm1245, %v1302, %v1306
      %v1308 = vshrl.u32 %v1202, 16
      %v1310 = vrot.slane %v1308, 4
      %v1311 = vor.u32 %v1310, %v1306
      %v1312 = vrot.slane %v1311, 4
      %v1314 = vshll.u32 %v1203, 16
      %v1316 = vrot.slane %v1314, 5
      %v1317 = vsel %vm1245, %v1312, %v1316
      %v1319 = vshrl.u32 %v1204, 16
      %v1321 = vrot.slane %v1319, 4
      %v1322 = vshll.u32 %v1204, 16
      %v1324 = vrot.slane %v1322, 5
      %v1325 = vor.u32 %v1321, %v1324
      %v1326 = vrot.slane %v1325, 4
      %v1328 = vshll.u32 %v1205, 16
      %v1330 = vrot.slane %v1328, 5
      %v1331 = vsel %vm1245, %v1326, %v1330
      %v1332 = vshrl.u32 %v1205, 16
      %v1334 = vrot.slane %v1332, 4
      %v1335 = vor.u32 %v1334, %v1330
      %v1336 = vrot.slane %v1335, 4
      %v1338 = vshll.u32 %v1206, 16
      %v1340 = vrot.slane %v1338, 5
      %v1341 = vsel %vm1245, %v1336, %v1340
      %v1343 = vshrl.u32 %v1207, 16
      %v1345 = vrot.slane %v1343, 4
      %v1346 = vshll.u32 %v1207, 16
      %v1348 = vrot.slane %v1346, 5
      %v1349 = vor.u32 %v1345, %v1348
      %v1350 = vrot.slane %v1349, 4
      %v1352 = vshll.u32 %v1208, 16
      %v1354 = vrot.slane %v1352, 5
      %v1355 = vsel %vm1245, %v1350, %v1354
      %v1356 = vshrl.u32 %v1208, 16
      %v1358 = vrot.slane %v1356, 4
      %v1359 = vor.u32 %v1358, %v1354
      %v1360 = vrot.slane %v1359, 4
      %v1362 = vshll.u32 %v1209, 16
      %v1364 = vrot.slane %v1362, 5
      %v1365 = vsel %vm1245, %v1360, %v1364
      %v1367 = vshrl.u32 %v1210, 16
      %v1369 = vrot.slane %v1367, 4
      %v1370 = vshll.u32 %v1210, 16
      %v1372 = vrot.slane %v1370, 5
      %v1373 = vor.u32 %v1369, %v1372
      %v1374 = vrot.slane %v1373, 4
      %v1376 = vshll.u32 %v1211, 16
      %v1378 = vrot.slane %v1376, 5
      %v1379 = vsel %vm1245, %v1374, %v1378
      %v1380 = vshrl.u32 %v1211, 16
      %v1382 = vrot.slane %v1380, 4
      %v1383 = vor.u32 %v1382, %v1378
      %v1384 = vrot.slane %v1383, 4
      %v1386 = vshll.u32 %v1212, 16
      %v1388 = vrot.slane %v1386, 5
      %v1389 = vsel %vm1245, %v1384, %v1388
      %v1391 = vshrl.u32 %v1213, 16
      %v1393 = vrot.slane %v1391, 4
      %v1394 = vshll.u32 %v1213, 16
      %v1396 = vrot.slane %v1394, 5
      %v1397 = vor.u32 %v1393, %v1396
      %v1398 = vrot.slane %v1397, 4
      %v1400 = vshll.u32 %v1214, 16
      %v1402 = vrot.slane %v1400, 5
      %v1403 = vsel %vm1245, %v1398, %v1402
      %v1404 = vshrl.u32 %v1214, 16
      %v1406 = vrot.slane %v1404, 4
      %v1407 = vor.u32 %v1406, %v1402
      %v1408 = vrot.slane %v1407, 4
      %v1410 = vshll.u32 %v1215, 16
      %v1412 = vrot.slane %v1410, 5
      %v1413 = vsel %vm1245, %v1408, %v1412
      %v1415 = vshrl.u32 %v1216, 16
      %v1417 = vrot.slane %v1415, 4
      %v1418 = vshll.u32 %v1216, 16
      %v1420 = vrot.slane %v1418, 5
      %v1421 = vor.u32 %v1417, %v1420
      %v1422 = vrot.slane %v1421, 4
      %v1424 = vshll.u32 %v1217, 16
      %v1426 = vrot.slane %v1424, 5
      %v1427 = vsel %vm1245, %v1422, %v1426
      %v1428 = vshrl.u32 %v1217, 16
      %v1430 = vrot.slane %v1428, 4
      %v1431 = vor.u32 %v1430, %v1426
      %v1432 = vrot.slane %v1431, 4
      %v1434 = vshll.u32 %v1218, 16
      %v1436 = vrot.slane %v1434, 5
      %v1437 = vsel %vm1245, %v1432, %v1436
      %v1439 = vshrl.u32 %v1219, 16
      %v1441 = vrot.slane %v1439, 4
      %v1442 = vshll.u32 %v1219, 16
      %v1444 = vrot.slane %v1442, 5
      %v1445 = vor.u32 %v1441, %v1444
      %v1446 = vrot.slane %v1445, 4
      %v1448 = vshll.u32 %v1220, 16
      %v1450 = vrot.slane %v1448, 5
      %v1451 = vsel %vm1245, %v1446, %v1450
      %v1452 = vshrl.u32 %v1220, 16
      %v1454 = vrot.slane %v1452, 4
      %v1455 = vor.u32 %v1454, %v1450
      %v1456 = vrot.slane %v1455, 4
      %v1458 = vshll.u32 %v1221, 16
      %v1460 = vrot.slane %v1458, 5
      %v1461 = vsel %vm1245, %v1456, %v1460
      %v1463 = vshrl.u32 %v1222, 16
      %v1465 = vrot.slane %v1463, 4
      %v1466 = vshll.u32 %v1222, 16
      %v1468 = vrot.slane %v1466, 5
      %v1469 = vor.u32 %v1465, %v1468
      %v1470 = vrot.slane %v1469, 4
      %v1472 = vshll.u32 %v1223, 16
      %v1474 = vrot.slane %v1472, 5
      %v1475 = vsel %vm1245, %v1470, %v1474
      %v1476 = vshrl.u32 %v1223, 16
      %v1478 = vrot.slane %v1476, 4
      %v1479 = vor.u32 %v1478, %v1474
      %v1480 = vrot.slane %v1479, 4
      %v1482 = vshll.u32 %v1224, 16
      %v1484 = vrot.slane %v1482, 5
      %v1485 = vsel %vm1245, %v1480, %v1484
      %v1487 = vshrl.u32 %v1225, 16
      %v1489 = vrot.slane %v1487, 4
      %v1490 = vshll.u32 %v1225, 16
      %v1492 = vrot.slane %v1490, 5
      %v1493 = vor.u32 %v1489, %v1492
      %v1494 = vrot.slane %v1493, 4
      %v1496 = vshll.u32 %v1226, 16
      %v1498 = vrot.slane %v1496, 5
      %v1499 = vsel %vm1245, %v1494, %v1498
      %v1500 = vshrl.u32 %v1226, 16
      %v1502 = vrot.slane %v1500, 4
      %v1503 = vor.u32 %v1502, %v1498
      %v1504 = vrot.slane %v1503, 4
      %v1506 = vshll.u32 %v1227, 16
      %v1508 = vrot.slane %v1506, 5
      %v1509 = vsel %vm1245, %v1504, %v1508
      %v1511 = vshrl.u32 %v1228, 16
      %v1513 = vrot.slane %v1511, 4
      %v1514 = vshll.u32 %v1228, 16
      %v1516 = vrot.slane %v1514, 5
      %v1517 = vor.u32 %v1513, %v1516
      %v1518 = vrot.slane %v1517, 4
      %v1520 = vshll.u32 %v1229, 16
      %v1522 = vrot.slane %v1520, 5
      %v1523 = vsel %vm1245, %v1518, %v1522
      %v1524 = vshrl.u32 %v1229, 16
      %v1526 = vrot.slane %v1524, 4
      %v1527 = vor.u32 %v1526, %v1522
      %v1528 = vrot.slane %v1527, 4
      %v1530 = vshll.u32 %v1230, 16
      %v1532 = vrot.slane %v1530, 5
      %v1533 = vsel %vm1245, %v1528, %v1532
      %v1535 = vshrl.u32 %v1231, 16
      %v1537 = vrot.slane %v1535, 4
      %v1538 = vshll.u32 %v1231, 16
      %v1540 = vrot.slane %v1538, 5
      %v1541 = vor.u32 %v1537, %v1540
      %v1542 = vrot.slane %v1541, 4
      %v1544 = vshll.u32 %v1232, 16
      %v1546 = vrot.slane %v1544, 5
      %v1547 = vsel %vm1245, %v1542, %v1546
      %v1548 = vshrl.u32 %v1232, 16
      %v1550 = vrot.slane %v1548, 4
      %v1551 = vor.u32 %v1550, %v1546
      %v1552 = vrot.slane %v1551, 4
      %v1554 = vshll.u32 %v1233, 16
      %v1556 = vrot.slane %v1554, 5
      %v1557 = vsel %vm1245, %v1552, %v1556
      %v1559 = vshrl.u32 %v1234, 16
      %v1561 = vrot.slane %v1559, 4
      %v1562 = vshll.u32 %v1234, 16
      %v1564 = vrot.slane %v1562, 5
      %v1565 = vor.u32 %v1561, %v1564
      %v1566 = vrot.slane %v1565, 4
      %v1568 = vshll.u32 %v1235, 16
      %v1570 = vrot.slane %v1568, 5
      %v1571 = vsel %vm1245, %v1566, %v1570
      %v1572 = vshrl.u32 %v1235, 16
      %v1574 = vrot.slane %v1572, 4
      %v1575 = vor.u32 %v1574, %v1570
      %v1576 = vrot.slane %v1575, 4
      %v1578 = vshll.u32 %v1236, 16
      %v1580 = vrot.slane %v1578, 5
      %v1581 = vsel %vm1245, %v1576, %v1580
      %v1583 = vshrl.u32 %v1237, 16
      %v1585 = vrot.slane %v1583, 4
      %v1586 = vshll.u32 %v1237, 16
      %v1588 = vrot.slane %v1586, 5
      %v1589 = vor.u32 %v1585, %v1588
      %v1590 = vrot.slane %v1589, 4
      %v1592 = vshll.u32 %v1238, 16
      %v1594 = vrot.slane %v1592, 5
      %v1595 = vsel %vm1245, %v1590, %v1594
      %v1596 = vshrl.u32 %v1238, 16
      %v1598 = vrot.slane %v1596, 4
      %v1599 = vor.u32 %v1598, %v1594
      %v1600 = vrot.slane %v1599, 4
      %v1602 = vshll.u32 %v1239, 16
      %v1604 = vrot.slane %v1602, 5
      %v1605 = vsel %vm1245, %v1600, %v1604
      %v1607 = vshrl.u32 %v1240, 16
      %v1609 = vrot.slane %v1607, 4
      %v1610 = vshll.u32 %v1240, 16
      %v1612 = vrot.slane %v1610, 5
      %v1613 = vor.u32 %v1609, %v1612
      %v1614 = vrot.slane %v1613, 4
      %v1616 = vshll.u32 %v1241, 16
      %v1618 = vrot.slane %v1616, 5
      %v1619 = vsel %vm1245, %v1614, %v1618
      %v1620 = vshrl.u32 %v1241, 16
      %v1622 = vrot.slane %v1620, 4
      %v1623 = vor.u32 %v1622, %v1618
      %v1624 = vrot.slane %v1623, 4
      %v1626 = vshll.u32 %v1242, 16
      %v1628 = vrot.slane %v1626, 5
      %v1629 = vsel %vm1245, %v1624, %v1628
      %v1630 = vunpack.c.l.b16 %v1259
      %v1631 = vunpack.c.l.b16 %v1269
      %v1632 = vunpack.c.l.b16 %v1283
      %v1633 = vunpack.c.l.b16 %v1293
      %v1634 = vunpack.c.l.b16 %v1307
      %v1635 = vunpack.c.l.b16 %v1317
      %v1636 = vunpack.c.l.b16 %v1331
      %v1637 = vunpack.c.l.b16 %v1341
      %v1638 = vunpack.c.l.b16 %v1355
      %v1639 = vunpack.c.l.b16 %v1365
      %v1640 = vunpack.c.l.b16 %v1379
      %v1641 = vunpack.c.l.b16 %v1389
      %v1642 = vunpack.c.l.b16 %v1403
      %v1643 = vunpack.c.l.b16 %v1413
      %v1644 = vunpack.c.l.b16 %v1427
      %v1645 = vunpack.c.l.b16 %v1437
      %v1646 = vunpack.c.l.b16 %v1451
      %v1647 = vunpack.c.l.b16 %v1461
      %v1648 = vunpack.c.l.b16 %v1475
      %v1649 = vunpack.c.l.b16 %v1485
      %v1650 = vunpack.c.l.b16 %v1499
      %v1651 = vunpack.c.l.b16 %v1509
      %v1652 = vunpack.c.l.b16 %v1523
      %v1653 = vunpack.c.l.b16 %v1533
      %v1654 = vunpack.c.l.b16 %v1547
      %v1655 = vunpack.c.l.b16 %v1557
      %v1656 = vunpack.c.l.b16 %v1571
      %v1657 = vunpack.c.l.b16 %v1581
      %v1658 = vunpack.c.l.b16 %v1595
      %v1659 = vunpack.c.l.b16 %v1605
      %v1660 = vunpack.c.l.b16 %v1619
      %v1661 = vunpack.c.l.b16 %v1629
      %v1662 = vpack.c.b16 %v1631, %v1630
      %v1663 = vpack.c.b16 %v1633, %v1632
      %v1664 = vpack.c.b16 %v1635, %v1634
      %v1665 = vpack.c.b16 %v1637, %v1636
      %v1666 = vpack.c.b16 %v1639, %v1638
      %v1667 = vpack.c.b16 %v1641, %v1640
      %v1668 = vpack.c.b16 %v1643, %v1642
      %v1669 = vpack.c.b16 %v1645, %v1644
      %v1670 = vpack.c.b16 %v1647, %v1646
      %v1671 = vpack.c.b16 %v1649, %v1648
      %v1672 = vpack.c.b16 %v1651, %v1650
      %v1673 = vpack.c.b16 %v1653, %v1652
      %v1674 = vpack.c.b16 %v1655, %v1654
      %v1675 = vpack.c.b16 %v1657, %v1656
      %v1676 = vpack.c.b16 %v1659, %v1658
      %v1677 = vpack.c.b16 %v1661, %v1660
      %1694 = vst [vmem:[#allocation3 + $0x8] sm:$0xff] %v1662
      %1695 = vst [vmem:[#allocation3 + $0x50] sm:$0xff] %v1663
      %1696 = vst [vmem:[#allocation3 + $0x98] sm:$0xff] %v1664
      %1697 = vst [vmem:[#allocation3 + $0xe0] sm:$0xff] %v1665
      %1698 = vst [vmem:[#allocation3 + $0x128] sm:$0xff] %v1666
      %1699 = vst [vmem:[#allocation3 + $0x170] sm:$0xff] %v1667
      %1700 = vst [vmem:[#allocation3 + $0x1b8] sm:$0xff] %v1668
      %1701 = vst [vmem:[#allocation3 + $0x200] sm:$0xff] %v1669
      %1702 = vst [vmem:[#allocation3 + $0x248] sm:$0xff] %v1670
      %1703 = vst [vmem:[#allocation3 + $0x290] sm:$0xff] %v1671
      %1704 = vst [vmem:[#allocation3 + $0x2d8] sm:$0xff] %v1672
      %1705 = vst [vmem:[#allocation3 + $0x320] sm:$0xff] %v1673
      %1706 = vst [vmem:[#allocation3 + $0x368] sm:$0xff] %v1674
      %1707 = vst [vmem:[#allocation3 + $0x3b0] sm:$0xff] %v1675
      %1708 = vst [vmem:[#allocation3 + $0x3f8] sm:$0xff] %v1676
      %1709 = vst [vmem:[#allocation3 + $0x440] sm:$0xff] %v1677
      %v1710 = vld [vmem:[#allocation2] sm:$0xe]
      %v1711 = vld [vmem:[#allocation2 + $0x4] sm:$0xf]
      %v1712 = vld [vmem:[#allocation2 + $0x8] sm:$0x1]
      %v1713 = vld [vmem:[#allocation2 + $0xc] sm:$0xe]
      %v1714 = vld [vmem:[#allocation2 + $0x10] sm:$0xf]
      %v1715 = vld [vmem:[#allocation2 + $0x14] sm:$0x1]
      %v1716 = vld [vmem:[#allocation2 + $0x18] sm:$0xe]
      %v1717 = vld [vmem:[#allocation2 + $0x1c] sm:$0xf]
      %v1718 = vld [vmem:[#allocation2 + $0x20] sm:$0x1]
      %v1719 = vld [vmem:[#allocation2 + $0x24] sm:$0xe]
      %v1720 = vld [vmem:[#allocation2 + $0x28] sm:$0xf]
      %v1721 = vld [vmem:[#allocation2 + $0x2c] sm:$0x1]
      %v1722 = vld [vmem:[#allocation2 + $0x30] sm:$0xe]
      %v1723 = vld [vmem:[#allocation2 + $0x34] sm:$0xf]
      %v1724 = vld [vmem:[#allocation2 + $0x38] sm:$0x1]
      %v1725 = vld [vmem:[#allocation2 + $0x3c] sm:$0xe]
      %v1726 = vld [vmem:[#allocation2 + $0x40] sm:$0xf]
      %v1727 = vld [vmem:[#allocation2 + $0x44] sm:$0x1]
      %v1728 = vld [vmem:[#allocation2 + $0x48] sm:$0xe]
      %v1729 = vld [vmem:[#allocation2 + $0x4c] sm:$0xf]
      %v1730 = vld [vmem:[#allocation2 + $0x50] sm:$0x1]
      %v1731 = vld [vmem:[#allocation2 + $0x54] sm:$0xe]
      %v1732 = vld [vmem:[#allocation2 + $0x58] sm:$0xf]
      %v1733 = vld [vmem:[#allocation2 + $0x5c] sm:$0x1]
      %v1734 = vld [vmem:[#allocation2 + $0x60] sm:$0xe]
      %v1735 = vld [vmem:[#allocation2 + $0x64] sm:$0xf]
      %v1736 = vld [vmem:[#allocation2 + $0x68] sm:$0x1]
      %v1737 = vld [vmem:[#allocation2 + $0x6c] sm:$0xe]
      %v1738 = vld [vmem:[#allocation2 + $0x70] sm:$0xf]
      %v1739 = vld [vmem:[#allocation2 + $0x74] sm:$0x1]
      %v1740 = vld [vmem:[#allocation2 + $0x78] sm:$0xe]
      %v1741 = vld [vmem:[#allocation2 + $0x7c] sm:$0xf]
      %v1742 = vld [vmem:[#allocation2 + $0x80] sm:$0x1]
      %v1743 = vld [vmem:[#allocation2 + $0x84] sm:$0xe]
      %v1744 = vld [vmem:[#allocation2 + $0x88] sm:$0xf]
      %v1745 = vld [vmem:[#allocation2 + $0x8c] sm:$0x1]
      %v1746 = vld [vmem:[#allocation2 + $0x90] sm:$0xe]
      %v1747 = vld [vmem:[#allocation2 + $0x94] sm:$0xf]
      %v1748 = vld [vmem:[#allocation2 + $0x98] sm:$0x1]
      %v1749 = vld [vmem:[#allocation2 + $0x9c] sm:$0xe]
      %v1750 = vld [vmem:[#allocation2 + $0xa0] sm:$0xf]
      %v1751 = vld [vmem:[#allocation2 + $0xa4] sm:$0x1]
      %v1752 = vld [vmem:[#allocation2 + $0xa8] sm:$0xe]
      %v1753 = vld [vmem:[#allocation2 + $0xac] sm:$0xf]
      %v1754 = vld [vmem:[#allocation2 + $0xb0] sm:$0x1]
      %v1755 = vld [vmem:[#allocation2 + $0xb4] sm:$0xe]
      %v1756 = vld [vmem:[#allocation2 + $0xb8] sm:$0xf]
      %v1757 = vld [vmem:[#allocation2 + $0xbc] sm:$0x1]
      %vm1806 = vcmask 1042432
      %vm1807 = vcmask 1046532
      %vm1808 = vmor %vm1806, %vm1807
      %v1809 = vrot.slane %v1710, 5
      %v1810 = vrot.slane %v1809, 4
      %v1811 = vrot.slane %v1711, 5
      %v1812 = vsel %vm1808, %v1810, %v1811
      %v1813 = vrot.slane %v1811, 4
      %v1814 = vrot.slane %v1712, 5
      %v1815 = vsel %vm1808, %v1813, %v1814
      %v1816 = vrot.slane %v1713, 5
      %v1817 = vrot.slane %v1816, 4
      %v1818 = vrot.slane %v1714, 5
      %v1819 = vsel %vm1808, %v1817, %v1818
      %v1820 = vrot.slane %v1818, 4
      %v1821 = vrot.slane %v1715, 5
      %v1822 = vsel %vm1808, %v1820, %v1821
      %v1823 = vrot.slane %v1716, 5
      %v1824 = vrot.slane %v1823, 4
      %v1825 = vrot.slane %v1717, 5
      %v1826 = vsel %vm1808, %v1824, %v1825
      %v1827 = vrot.slane %v1825, 4
      %v1828 = vrot.slane %v1718, 5
      %v1829 = vsel %vm1808, %v1827, %v1828
      %v1830 = vrot.slane %v1719, 5
      %v1831 = vrot.slane %v1830, 4
      %v1832 = vrot.slane %v1720, 5
      %v1833 = vsel %vm1808, %v1831, %v1832
      %v1834 = vrot.slane %v1832, 4
      %v1835 = vrot.slane %v1721, 5
      %v1836 = vsel %vm1808, %v1834, %v1835
      %v1837 = vrot.slane %v1722, 5
      %v1838 = vrot.slane %v1837, 4
      %v1839 = vrot.slane %v1723, 5
      %v1840 = vsel %vm1808, %v1838, %v1839
      %v1841 = vrot.slane %v1839, 4
      %v1842 = vrot.slane %v1724, 5
      %v1843 = vsel %vm1808, %v1841, %v1842
      %v1844 = vrot.slane %v1725, 5
      %v1845 = vrot.slane %v1844, 4
      %v1846 = vrot.slane %v1726, 5
      %v1847 = vsel %vm1808, %v1845, %v1846
      %v1848 = vrot.slane %v1846, 4
      %v1849 = vrot.slane %v1727, 5
      %v1850 = vsel %vm1808, %v1848, %v1849
      %v1851 = vrot.slane %v1728, 5
      %v1852 = vrot.slane %v1851, 4
      %v1853 = vrot.slane %v1729, 5
      %v1854 = vsel %vm1808, %v1852, %v1853
      %v1855 = vrot.slane %v1853, 4
      %v1856 = vrot.slane %v1730, 5
      %v1857 = vsel %vm1808, %v1855, %v1856
      %v1858 = vrot.slane %v1731, 5
      %v1859 = vrot.slane %v1858, 4
      %v1860 = vrot.slane %v1732, 5
      %v1861 = vsel %vm1808, %v1859, %v1860
      %v1862 = vrot.slane %v1860, 4
      %v1863 = vrot.slane %v1733, 5
      %v1864 = vsel %vm1808, %v1862, %v1863
      %v1865 = vrot.slane %v1734, 5
      %v1866 = vrot.slane %v1865, 4
      %v1867 = vrot.slane %v1735, 5
      %v1868 = vsel %vm1808, %v1866, %v1867
      %v1869 = vrot.slane %v1867, 4
      %v1870 = vrot.slane %v1736, 5
      %v1871 = vsel %vm1808, %v1869, %v1870
      %v1872 = vrot.slane %v1737, 5
      %v1873 = vrot.slane %v1872, 4
      %v1874 = vrot.slane %v1738, 5
      %v1875 = vsel %vm1808, %v1873, %v1874
      %v1876 = vrot.slane %v1874, 4
      %v1877 = vrot.slane %v1739, 5
      %v1878 = vsel %vm1808, %v1876, %v1877
      %v1879 = vrot.slane %v1740, 5
      %v1880 = vrot.slane %v1879, 4
      %v1881 = vrot.slane %v1741, 5
      %v1882 = vsel %vm1808, %v1880, %v1881
      %v1883 = vrot.slane %v1881, 4
      %v1884 = vrot.slane %v1742, 5
      %v1885 = vsel %vm1808, %v1883, %v1884
      %v1886 = vrot.slane %v1743, 5
      %v1887 = vrot.slane %v1886, 4
      %v1888 = vrot.slane %v1744, 5
      %v1889 = vsel %vm1808, %v1887, %v1888
      %v1890 = vrot.slane %v1888, 4
      %v1891 = vrot.slane %v1745, 5
      %v1892 = vsel %vm1808, %v1890, %v1891
      %v1893 = vrot.slane %v1746, 5
      %v1894 = vrot.slane %v1893, 4
      %v1895 = vrot.slane %v1747, 5
      %v1896 = vsel %vm1808, %v1894, %v1895
      %v1897 = vrot.slane %v1895, 4
      %v1898 = vrot.slane %v1748, 5
      %v1899 = vsel %vm1808, %v1897, %v1898
      %v1900 = vrot.slane %v1749, 5
      %v1901 = vrot.slane %v1900, 4
      %v1902 = vrot.slane %v1750, 5
      %v1903 = vsel %vm1808, %v1901, %v1902
      %v1904 = vrot.slane %v1902, 4
      %v1905 = vrot.slane %v1751, 5
      %v1906 = vsel %vm1808, %v1904, %v1905
      %v1907 = vrot.slane %v1752, 5
      %v1908 = vrot.slane %v1907, 4
      %v1909 = vrot.slane %v1753, 5
      %v1910 = vsel %vm1808, %v1908, %v1909
      %v1911 = vrot.slane %v1909, 4
      %v1912 = vrot.slane %v1754, 5
      %v1913 = vsel %vm1808, %v1911, %v1912
      %v1914 = vrot.slane %v1755, 5
      %v1915 = vrot.slane %v1914, 4
      %v1916 = vrot.slane %v1756, 5
      %v1917 = vsel %vm1808, %v1915, %v1916
      %v1918 = vrot.slane %v1916, 4
      %v1919 = vrot.slane %v1757, 5
      %v1920 = vsel %vm1808, %v1918, %v1919
      %v1921 = vunpack.c.l.b16 %v1812
      %v1922 = vunpack.c.l.b16 %v1815
      %v1923 = vunpack.c.l.b16 %v1819
      %v1924 = vunpack.c.l.b16 %v1822
      %v1925 = vunpack.c.l.b16 %v1826
      %v1926 = vunpack.c.l.b16 %v1829
      %v1927 = vunpack.c.l.b16 %v1833
      %v1928 = vunpack.c.l.b16 %v1836
      %v1929 = vunpack.c.l.b16 %v1840
      %v1930 = vunpack.c.l.b16 %v1843
      %v1931 = vunpack.c.l.b16 %v1847
      %v1932 = vunpack.c.l.b16 %v1850
      %v1933 = vunpack.c.l.b16 %v1854
      %v1934 = vunpack.c.l.b16 %v1857
      %v1935 = vunpack.c.l.b16 %v1861
      %v1936 = vunpack.c.l.b16 %v1864
      %v1937 = vunpack.c.l.b16 %v1868
      %v1938 = vunpack.c.l.b16 %v1871
      %v1939 = vunpack.c.l.b16 %v1875
      %v1940 = vunpack.c.l.b16 %v1878
      %v1941 = vunpack.c.l.b16 %v1882
      %v1942 = vunpack.c.l.b16 %v1885
      %v1943 = vunpack.c.l.b16 %v1889
      %v1944 = vunpack.c.l.b16 %v1892
      %v1945 = vunpack.c.l.b16 %v1896
      %v1946 = vunpack.c.l.b16 %v1899
      %v1947 = vunpack.c.l.b16 %v1903
      %v1948 = vunpack.c.l.b16 %v1906
      %v1949 = vunpack.c.l.b16 %v1910
      %v1950 = vunpack.c.l.b16 %v1913
      %v1951 = vunpack.c.l.b16 %v1917
      %v1952 = vunpack.c.l.b16 %v1920
      %v1953 = vpack.c.b16 %v1922, %v1921
      %v1954 = vpack.c.b16 %v1924, %v1923
      %v1955 = vpack.c.b16 %v1926, %v1925
      %v1956 = vpack.c.b16 %v1928, %v1927
      %v1957 = vpack.c.b16 %v1930, %v1929
      %v1958 = vpack.c.b16 %v1932, %v1931
      %v1959 = vpack.c.b16 %v1934, %v1933
      %v1960 = vpack.c.b16 %v1936, %v1935
      %v1961 = vpack.c.b16 %v1938, %v1937
      %v1962 = vpack.c.b16 %v1940, %v1939
      %v1963 = vpack.c.b16 %v1942, %v1941
      %v1964 = vpack.c.b16 %v1944, %v1943
      %v1965 = vpack.c.b16 %v1946, %v1945
      %v1966 = vpack.c.b16 %v1948, %v1947
      %v1967 = vpack.c.b16 %v1950, %v1949
      %v1968 = vpack.c.b16 %v1952, %v1951
      %1985 = vst [vmem:[#allocation3 + $0x10] sm:$0xff] %v1953
      %1986 = vst [vmem:[#allocation3 + $0x58] sm:$0xff] %v1954
      %1987 = vst [vmem:[#allocation3 + $0xa0] sm:$0xff] %v1955
      %1988 = vst [vmem:[#allocation3 + $0xe8] sm:$0xff] %v1956
      %1989 = vst [vmem:[#allocation3 + $0x130] sm:$0xff] %v1957
      %1990 = vst [vmem:[#allocation3 + $0x178] sm:$0xff] %v1958
      %1991 = vst [vmem:[#allocation3 + $0x1c0] sm:$0xff] %v1959
      %1992 = vst [vmem:[#allocation3 + $0x208] sm:$0xff] %v1960
      %1993 = vst [vmem:[#allocation3 + $0x250] sm:$0xff] %v1961
      %1994 = vst [vmem:[#allocation3 + $0x298] sm:$0xff] %v1962
      %1995 = vst [vmem:[#allocation3 + $0x2e0] sm:$0xff] %v1963
      %1996 = vst [vmem:[#allocation3 + $0x328] sm:$0xff] %v1964
      %1997 = vst [vmem:[#allocation3 + $0x370] sm:$0xff] %v1965
      %1998 = vst [vmem:[#allocation3 + $0x3b8] sm:$0xff] %v1966
      %1999 = vst [vmem:[#allocation3 + $0x400] sm:$0xff] %v1967
      %2000 = vst [vmem:[#allocation3 + $0x448] sm:$0xff] %v1968
      %v2001 = vld [vmem:[%s434] sm:$0xf]
      %v2002 = vld [vmem:[%s434 + $0x4] sm:$0xf]
      %v2003 = vld [vmem:[%s434 + $0xc] sm:$0xf]
      %v2004 = vld [vmem:[%s434 + $0x10] sm:$0xf]
      %v2005 = vld [vmem:[%s434 + $0x18] sm:$0xf]
      %v2006 = vld [vmem:[%s434 + $0x1c] sm:$0xf]
      %v2007 = vld [vmem:[%s434 + $0x24] sm:$0xf]
      %v2008 = vld [vmem:[%s434 + $0x28] sm:$0xf]
      %v2009 = vld [vmem:[%s434 + $0x30] sm:$0xf]
      %v2010 = vld [vmem:[%s434 + $0x34] sm:$0xf]
      %v2011 = vld [vmem:[%s434 + $0x3c] sm:$0xf]
      %v2012 = vld [vmem:[%s434 + $0x40] sm:$0xf]
      %v2013 = vld [vmem:[%s434 + $0x48] sm:$0xf]
      %v2014 = vld [vmem:[%s434 + $0x4c] sm:$0xf]
      %v2015 = vld [vmem:[%s434 + $0x54] sm:$0xf]
      %v2016 = vld [vmem:[%s434 + $0x58] sm:$0xf]
      %v2017 = vld [vmem:[%s434 + $0x60] sm:$0xf]
      %v2018 = vld [vmem:[%s434 + $0x64] sm:$0xf]
      %v2019 = vld [vmem:[%s434 + $0x6c] sm:$0xf]
      %v2020 = vld [vmem:[%s434 + $0x70] sm:$0xf]
      %v2021 = vld [vmem:[%s434 + $0x78] sm:$0xf]
      %v2022 = vld [vmem:[%s434 + $0x7c] sm:$0xf]
      %v2023 = vld [vmem:[%s434 + $0x84] sm:$0xf]
      %v2024 = vld [vmem:[%s434 + $0x88] sm:$0xf]
      %v2025 = vld [vmem:[%s434 + $0x90] sm:$0xf]
      %v2026 = vld [vmem:[%s434 + $0x94] sm:$0xf]
      %v2027 = vld [vmem:[%s434 + $0x9c] sm:$0xf]
      %v2028 = vld [vmem:[%s434 + $0xa0] sm:$0xf]
      %v2029 = vld [vmem:[%s434 + $0xa8] sm:$0xf]
      %v2030 = vld [vmem:[%s434 + $0xac] sm:$0xf]
      %v2031 = vld [vmem:[%s434 + $0xb4] sm:$0xf]
      %v2032 = vld [vmem:[%s434 + $0xb8] sm:$0xf]
      %v2065 = vunpack.c.l.b16 %v2001
      %v2066 = vunpack.c.l.b16 %v2002
      %v2067 = vunpack.c.l.b16 %v2003
      %v2068 = vunpack.c.l.b16 %v2004
      %v2069 = vunpack.c.l.b16 %v2005
      %v2070 = vunpack.c.l.b16 %v2006
      %v2071 = vunpack.c.l.b16 %v2007
      %v2072 = vunpack.c.l.b16 %v2008
      %v2073 = vunpack.c.l.b16 %v2009
      %v2074 = vunpack.c.l.b16 %v2010
      %v2075 = vunpack.c.l.b16 %v2011
      %v2076 = vunpack.c.l.b16 %v2012
      %v2077 = vunpack.c.l.b16 %v2013
      %v2078 = vunpack.c.l.b16 %v2014
      %v2079 = vunpack.c.l.b16 %v2015
      %v2080 = vunpack.c.l.b16 %v2016
      %v2081 = vunpack.c.l.b16 %v2017
      %v2082 = vunpack.c.l.b16 %v2018
      %v2083 = vunpack.c.l.b16 %v2019
      %v2084 = vunpack.c.l.b16 %v2020
      %v2085 = vunpack.c.l.b16 %v2021
      %v2086 = vunpack.c.l.b16 %v2022
      %v2087 = vunpack.c.l.b16 %v2023
      %v2088 = vunpack.c.l.b16 %v2024
      %v2089 = vunpack.c.l.b16 %v2025
      %v2090 = vunpack.c.l.b16 %v2026
      %v2091 = vunpack.c.l.b16 %v2027
      %v2092 = vunpack.c.l.b16 %v2028
      %v2093 = vunpack.c.l.b16 %v2029
      %v2094 = vunpack.c.l.b16 %v2030
      %v2095 = vunpack.c.l.b16 %v2031
      %v2096 = vunpack.c.l.b16 %v2032
      %v2097 = vpack.c.b16 %v2066, %v2065
      %v2098 = vpack.c.b16 %v2068, %v2067
      %v2099 = vpack.c.b16 %v2070, %v2069
      %v2100 = vpack.c.b16 %v2072, %v2071
      %v2101 = vpack.c.b16 %v2074, %v2073
      %v2102 = vpack.c.b16 %v2076, %v2075
      %v2103 = vpack.c.b16 %v2078, %v2077
      %v2104 = vpack.c.b16 %v2080, %v2079
      %v2105 = vpack.c.b16 %v2082, %v2081
      %v2106 = vpack.c.b16 %v2084, %v2083
      %v2107 = vpack.c.b16 %v2086, %v2085
      %v2108 = vpack.c.b16 %v2088, %v2087
      %v2109 = vpack.c.b16 %v2090, %v2089
      %v2110 = vpack.c.b16 %v2092, %v2091
      %v2111 = vpack.c.b16 %v2094, %v2093
      %v2112 = vpack.c.b16 %v2096, %v2095
      %2129 = vst [vmem:[#allocation3 + $0x18] sm:$0xff] %v2097
      %2130 = vst [vmem:[#allocation3 + $0x60] sm:$0xff] %v2098
      %2131 = vst [vmem:[#allocation3 + $0xa8] sm:$0xff] %v2099
      %2132 = vst [vmem:[#allocation3 + $0xf0] sm:$0xff] %v2100
      %2133 = vst [vmem:[#allocation3 + $0x138] sm:$0xff] %v2101
      %2134 = vst [vmem:[#allocation3 + $0x180] sm:$0xff] %v2102
      %2135 = vst [vmem:[#allocation3 + $0x1c8] sm:$0xff] %v2103
      %2136 = vst [vmem:[#allocation3 + $0x210] sm:$0xff] %v2104
      %2137 = vst [vmem:[#allocation3 + $0x258] sm:$0xff] %v2105
      %2138 = vst [vmem:[#allocation3 + $0x2a0] sm:$0xff] %v2106
      %2139 = vst [vmem:[#allocation3 + $0x2e8] sm:$0xff] %v2107
      %2140 = vst [vmem:[#allocation3 + $0x330] sm:$0xff] %v2108
      %2141 = vst [vmem:[#allocation3 + $0x378] sm:$0xff] %v2109
      %2142 = vst [vmem:[#allocation3 + $0x3c0] sm:$0xff] %v2110
      %2143 = vst [vmem:[#allocation3 + $0x408] sm:$0xff] %v2111
      %2144 = vst [vmem:[#allocation3 + $0x450] sm:$0xff] %v2112
      %v2145 = vld [vmem:[%s434] sm:$0xf]
      %v2146 = vld [vmem:[%s434 + $0x4] sm:$0xf]
      %v2147 = vld [vmem:[%s434 + $0x8] sm:$0x1]
      %v2148 = vld [vmem:[%s434 + $0xc] sm:$0xf]
      %v2149 = vld [vmem:[%s434 + $0x10] sm:$0xf]
      %v2150 = vld [vmem:[%s434 + $0x14] sm:$0x1]
      %v2151 = vld [vmem:[%s434 + $0x18] sm:$0xf]
      %v2152 = vld [vmem:[%s434 + $0x1c] sm:$0xf]
      %v2153 = vld [vmem:[%s434 + $0x20] sm:$0x1]
      %v2154 = vld [vmem:[%s434 + $0x24] sm:$0xf]
      %v2155 = vld [vmem:[%s434 + $0x28] sm:$0xf]
      %v2156 = vld [vmem:[%s434 + $0x2c] sm:$0x1]
      %v2157 = vld [vmem:[%s434 + $0x30] sm:$0xf]
      %v2158 = vld [vmem:[%s434 + $0x34] sm:$0xf]
      %v2159 = vld [vmem:[%s434 + $0x38] sm:$0x1]
      %v2160 = vld [vmem:[%s434 + $0x3c] sm:$0xf]
      %v2161 = vld [vmem:[%s434 + $0x40] sm:$0xf]
      %v2162 = vld [vmem:[%s434 + $0x44] sm:$0x1]
      %v2163 = vld [vmem:[%s434 + $0x48] sm:$0xf]
      %v2164 = vld [vmem:[%s434 + $0x4c] sm:$0xf]
      %v2165 = vld [vmem:[%s434 + $0x50] sm:$0x1]
      %v2166 = vld [vmem:[%s434 + $0x54] sm:$0xf]
      %v2167 = vld [vmem:[%s434 + $0x58] sm:$0xf]
      %v2168 = vld [vmem:[%s434 + $0x5c] sm:$0x1]
      %v2169 = vld [vmem:[%s434 + $0x60] sm:$0xf]
      %v2170 = vld [vmem:[%s434 + $0x64] sm:$0xf]
      %v2171 = vld [vmem:[%s434 + $0x68] sm:$0x1]
      %v2172 = vld [vmem:[%s434 + $0x6c] sm:$0xf]
      %v2173 = vld [vmem:[%s434 + $0x70] sm:$0xf]
      %v2174 = vld [vmem:[%s434 + $0x74] sm:$0x1]
      %v2175 = vld [vmem:[%s434 + $0x78] sm:$0xf]
      %v2176 = vld [vmem:[%s434 + $0x7c] sm:$0xf]
      %v2177 = vld [vmem:[%s434 + $0x80] sm:$0x1]
      %v2178 = vld [vmem:[%s434 + $0x84] sm:$0xf]
      %v2179 = vld [vmem:[%s434 + $0x88] sm:$0xf]
      %v2180 = vld [vmem:[%s434 + $0x8c] sm:$0x1]
      %v2181 = vld [vmem:[%s434 + $0x90] sm:$0xf]
      %v2182 = vld [vmem:[%s434 + $0x94] sm:$0xf]
      %v2183 = vld [vmem:[%s434 + $0x98] sm:$0x1]
      %v2184 = vld [vmem:[%s434 + $0x9c] sm:$0xf]
      %v2185 = vld [vmem:[%s434 + $0xa0] sm:$0xf]
      %v2186 = vld [vmem:[%s434 + $0xa4] sm:$0x1]
      %v2187 = vld [vmem:[%s434 + $0xa8] sm:$0xf]
      %v2188 = vld [vmem:[%s434 + $0xac] sm:$0xf]
      %v2189 = vld [vmem:[%s434 + $0xb0] sm:$0x1]
      %v2190 = vld [vmem:[%s434 + $0xb4] sm:$0xf]
      %v2191 = vld [vmem:[%s434 + $0xb8] sm:$0xf]
      %v2192 = vld [vmem:[%s434 + $0xbc] sm:$0x1]
      %v2194 = vshrl.u32 %v2145, 16
      %v2196 = vrot.slane %v2194, 4
      %v2197 = vshll.u32 %v2145, 16
      %v2199 = vrot.slane %v2197, 5
      %v2200 = vor.u32 %v2196, %v2199
      %v2201 = vrot.slane %v2200, 4
      %v2203 = vshll.u32 %v2146, 16
      %v2205 = vrot.slane %v2203, 5
      %v2206 = vsel %vm1245, %v2201, %v2205
      %v2207 = vshrl.u32 %v2146, 16
      %v2209 = vrot.slane %v2207, 4
      %v2210 = vor.u32 %v2209, %v2205
      %v2211 = vrot.slane %v2210, 4
      %v2213 = vshll.u32 %v2147, 16
      %v2215 = vrot.slane %v2213, 5
      %v2216 = vsel %vm1245, %v2211, %v2215
      %v2218 = vshrl.u32 %v2148, 16
      %v2220 = vrot.slane %v2218, 4
      %v2221 = vshll.u32 %v2148, 16
      %v2223 = vrot.slane %v2221, 5
      %v2224 = vor.u32 %v2220, %v2223
      %v2225 = vrot.slane %v2224, 4
      %v2227 = vshll.u32 %v2149, 16
      %v2229 = vrot.slane %v2227, 5
      %v2230 = vsel %vm1245, %v2225, %v2229
      %v2231 = vshrl.u32 %v2149, 16
      %v2233 = vrot.slane %v2231, 4
      %v2234 = vor.u32 %v2233, %v2229
      %v2235 = vrot.slane %v2234, 4
      %v2237 = vshll.u32 %v2150, 16
      %v2239 = vrot.slane %v2237, 5
      %v2240 = vsel %vm1245, %v2235, %v2239
      %v2242 = vshrl.u32 %v2151, 16
      %v2244 = vrot.slane %v2242, 4
      %v2245 = vshll.u32 %v2151, 16
      %v2247 = vrot.slane %v2245, 5
      %v2248 = vor.u32 %v2244, %v2247
      %v2249 = vrot.slane %v2248, 4
      %v2251 = vshll.u32 %v2152, 16
      %v2253 = vrot.slane %v2251, 5
      %v2254 = vsel %vm1245, %v2249, %v2253
      %v2255 = vshrl.u32 %v2152, 16
      %v2257 = vrot.slane %v2255, 4
      %v2258 = vor.u32 %v2257, %v2253
      %v2259 = vrot.slane %v2258, 4
      %v2261 = vshll.u32 %v2153, 16
      %v2263 = vrot.slane %v2261, 5
      %v2264 = vsel %vm1245, %v2259, %v2263
      %v2266 = vshrl.u32 %v2154, 16
      %v2268 = vrot.slane %v2266, 4
      %v2269 = vshll.u32 %v2154, 16
      %v2271 = vrot.slane %v2269, 5
      %v2272 = vor.u32 %v2268, %v2271
      %v2273 = vrot.slane %v2272, 4
      %v2275 = vshll.u32 %v2155, 16
      %v2277 = vrot.slane %v2275, 5
      %v2278 = vsel %vm1245, %v2273, %v2277
      %v2279 = vshrl.u32 %v2155, 16
      %v2281 = vrot.slane %v2279, 4
      %v2282 = vor.u32 %v2281, %v2277
      %v2283 = vrot.slane %v2282, 4
      %v2285 = vshll.u32 %v2156, 16
      %v2287 = vrot.slane %v2285, 5
      %v2288 = vsel %vm1245, %v2283, %v2287
      %v2290 = vshrl.u32 %v2157, 16
      %v2292 = vrot.slane %v2290, 4
      %v2293 = vshll.u32 %v2157, 16
      %v2295 = vrot.slane %v2293, 5
      %v2296 = vor.u32 %v2292, %v2295
      %v2297 = vrot.slane %v2296, 4
      %v2299 = vshll.u32 %v2158, 16
      %v2301 = vrot.slane %v2299, 5
      %v2302 = vsel %vm1245, %v2297, %v2301
      %v2303 = vshrl.u32 %v2158, 16
      %v2305 = vrot.slane %v2303, 4
      %v2306 = vor.u32 %v2305, %v2301
      %v2307 = vrot.slane %v2306, 4
      %v2309 = vshll.u32 %v2159, 16
      %v2311 = vrot.slane %v2309, 5
      %v2312 = vsel %vm1245, %v2307, %v2311
      %v2314 = vshrl.u32 %v2160, 16
      %v2316 = vrot.slane %v2314, 4
      %v2317 = vshll.u32 %v2160, 16
      %v2319 = vrot.slane %v2317, 5
      %v2320 = vor.u32 %v2316, %v2319
      %v2321 = vrot.slane %v2320, 4
      %v2323 = vshll.u32 %v2161, 16
      %v2325 = vrot.slane %v2323, 5
      %v2326 = vsel %vm1245, %v2321, %v2325
      %v2327 = vshrl.u32 %v2161, 16
      %v2329 = vrot.slane %v2327, 4
      %v2330 = vor.u32 %v2329, %v2325
      %v2331 = vrot.slane %v2330, 4
      %v2333 = vshll.u32 %v2162, 16
      %v2335 = vrot.slane %v2333, 5
      %v2336 = vsel %vm1245, %v2331, %v2335
      %v2338 = vshrl.u32 %v2163, 16
      %v2340 = vrot.slane %v2338, 4
      %v2341 = vshll.u32 %v2163, 16
      %v2343 = vrot.slane %v2341, 5
      %v2344 = vor.u32 %v2340, %v2343
      %v2345 = vrot.slane %v2344, 4
      %v2347 = vshll.u32 %v2164, 16
      %v2349 = vrot.slane %v2347, 5
      %v2350 = vsel %vm1245, %v2345, %v2349
      %v2351 = vshrl.u32 %v2164, 16
      %v2353 = vrot.slane %v2351, 4
      %v2354 = vor.u32 %v2353, %v2349
      %v2355 = vrot.slane %v2354, 4
      %v2357 = vshll.u32 %v2165, 16
      %v2359 = vrot.slane %v2357, 5
      %v2360 = vsel %vm1245, %v2355, %v2359
      %v2362 = vshrl.u32 %v2166, 16
      %v2364 = vrot.slane %v2362, 4
      %v2365 = vshll.u32 %v2166, 16
      %v2367 = vrot.slane %v2365, 5
      %v2368 = vor.u32 %v2364, %v2367
      %v2369 = vrot.slane %v2368, 4
      %v2371 = vshll.u32 %v2167, 16
      %v2373 = vrot.slane %v2371, 5
      %v2374 = vsel %vm1245, %v2369, %v2373
      %v2375 = vshrl.u32 %v2167, 16
      %v2377 = vrot.slane %v2375, 4
      %v2378 = vor.u32 %v2377, %v2373
      %v2379 = vrot.slane %v2378, 4
      %v2381 = vshll.u32 %v2168, 16
      %v2383 = vrot.slane %v2381, 5
      %v2384 = vsel %vm1245, %v2379, %v2383
      %v2386 = vshrl.u32 %v2169, 16
      %v2388 = vrot.slane %v2386, 4
      %v2389 = vshll.u32 %v2169, 16
      %v2391 = vrot.slane %v2389, 5
      %v2392 = vor.u32 %v2388, %v2391
      %v2393 = vrot.slane %v2392, 4
      %v2395 = vshll.u32 %v2170, 16
      %v2397 = vrot.slane %v2395, 5
      %v2398 = vsel %vm1245, %v2393, %v2397
      %v2399 = vshrl.u32 %v2170, 16
      %v2401 = vrot.slane %v2399, 4
      %v2402 = vor.u32 %v2401, %v2397
      %v2403 = vrot.slane %v2402, 4
      %v2405 = vshll.u32 %v2171, 16
      %v2407 = vrot.slane %v2405, 5
      %v2408 = vsel %vm1245, %v2403, %v2407
      %v2410 = vshrl.u32 %v2172, 16
      %v2412 = vrot.slane %v2410, 4
      %v2413 = vshll.u32 %v2172, 16
      %v2415 = vrot.slane %v2413, 5
      %v2416 = vor.u32 %v2412, %v2415
      %v2417 = vrot.slane %v2416, 4
      %v2419 = vshll.u32 %v2173, 16
      %v2421 = vrot.slane %v2419, 5
      %v2422 = vsel %vm1245, %v2417, %v2421
      %v2423 = vshrl.u32 %v2173, 16
      %v2425 = vrot.slane %v2423, 4
      %v2426 = vor.u32 %v2425, %v2421
      %v2427 = vrot.slane %v2426, 4
      %v2429 = vshll.u32 %v2174, 16
      %v2431 = vrot.slane %v2429, 5
      %v2432 = vsel %vm1245, %v2427, %v2431
      %v2434 = vshrl.u32 %v2175, 16
      %v2436 = vrot.slane %v2434, 4
      %v2437 = vshll.u32 %v2175, 16
      %v2439 = vrot.slane %v2437, 5
      %v2440 = vor.u32 %v2436, %v2439
      %v2441 = vrot.slane %v2440, 4
      %v2443 = vshll.u32 %v2176, 16
      %v2445 = vrot.slane %v2443, 5
      %v2446 = vsel %vm1245, %v2441, %v2445
      %v2447 = vshrl.u32 %v2176, 16
      %v2449 = vrot.slane %v2447, 4
      %v2450 = vor.u32 %v2449, %v2445
      %v2451 = vrot.slane %v2450, 4
      %v2453 = vshll.u32 %v2177, 16
      %v2455 = vrot.slane %v2453, 5
      %v2456 = vsel %vm1245, %v2451, %v2455
      %v2458 = vshrl.u32 %v2178, 16
      %v2460 = vrot.slane %v2458, 4
      %v2461 = vshll.u32 %v2178, 16
      %v2463 = vrot.slane %v2461, 5
      %v2464 = vor.u32 %v2460, %v2463
      %v2465 = vrot.slane %v2464, 4
      %v2467 = vshll.u32 %v2179, 16
      %v2469 = vrot.slane %v2467, 5
      %v2470 = vsel %vm1245, %v2465, %v2469
      %v2471 = vshrl.u32 %v2179, 16
      %v2473 = vrot.slane %v2471, 4
      %v2474 = vor.u32 %v2473, %v2469
      %v2475 = vrot.slane %v2474, 4
      %v2477 = vshll.u32 %v2180, 16
      %v2479 = vrot.slane %v2477, 5
      %v2480 = vsel %vm1245, %v2475, %v2479
      %v2482 = vshrl.u32 %v2181, 16
      %v2484 = vrot.slane %v2482, 4
      %v2485 = vshll.u32 %v2181, 16
      %v2487 = vrot.slane %v2485, 5
      %v2488 = vor.u32 %v2484, %v2487
      %v2489 = vrot.slane %v2488, 4
      %v2491 = vshll.u32 %v2182, 16
      %v2493 = vrot.slane %v2491, 5
      %v2494 = vsel %vm1245, %v2489, %v2493
      %v2495 = vshrl.u32 %v2182, 16
      %v2497 = vrot.slane %v2495, 4
      %v2498 = vor.u32 %v2497, %v2493
      %v2499 = vrot.slane %v2498, 4
      %v2501 = vshll.u32 %v2183, 16
      %v2503 = vrot.slane %v2501, 5
      %v2504 = vsel %vm1245, %v2499, %v2503
      %v2506 = vshrl.u32 %v2184, 16
      %v2508 = vrot.slane %v2506, 4
      %v2509 = vshll.u32 %v2184, 16
      %v2511 = vrot.slane %v2509, 5
      %v2512 = vor.u32 %v2508, %v2511
      %v2513 = vrot.slane %v2512, 4
      %v2515 = vshll.u32 %v2185, 16
      %v2517 = vrot.slane %v2515, 5
      %v2518 = vsel %vm1245, %v2513, %v2517
      %v2519 = vshrl.u32 %v2185, 16
      %v2521 = vrot.slane %v2519, 4
      %v2522 = vor.u32 %v2521, %v2517
      %v2523 = vrot.slane %v2522, 4
      %v2525 = vshll.u32 %v2186, 16
      %v2527 = vrot.slane %v2525, 5
      %v2528 = vsel %vm1245, %v2523, %v2527
      %v2530 = vshrl.u32 %v2187, 16
      %v2532 = vrot.slane %v2530, 4
      %v2533 = vshll.u32 %v2187, 16
      %v2535 = vrot.slane %v2533, 5
      %v2536 = vor.u32 %v2532, %v2535
      %v2537 = vrot.slane %v2536, 4
      %v2539 = vshll.u32 %v2188, 16
      %v2541 = vrot.slane %v2539, 5
      %v2542 = vsel %vm1245, %v2537, %v2541
      %v2543 = vshrl.u32 %v2188, 16
      %v2545 = vrot.slane %v2543, 4
      %v2546 = vor.u32 %v2545, %v2541
      %v2547 = vrot.slane %v2546, 4
      %v2549 = vshll.u32 %v2189, 16
      %v2551 = vrot.slane %v2549, 5
      %v2552 = vsel %vm1245, %v2547, %v2551
      %v2554 = vshrl.u32 %v2190, 16
      %v2556 = vrot.slane %v2554, 4
      %v2557 = vshll.u32 %v2190, 16
      %v2559 = vrot.slane %v2557, 5
      %v2560 = vor.u32 %v2556, %v2559
      %v2561 = vrot.slane %v2560, 4
      %v2563 = vshll.u32 %v2191, 16
      %v2565 = vrot.slane %v2563, 5
      %v2566 = vsel %vm1245, %v2561, %v2565
      %v2567 = vshrl.u32 %v2191, 16
      %v2569 = vrot.slane %v2567, 4
      %v2570 = vor.u32 %v2569, %v2565
      %v2571 = vrot.slane %v2570, 4
      %v2573 = vshll.u32 %v2192, 16
      %v2575 = vrot.slane %v2573, 5
      %v2576 = vsel %vm1245, %v2571, %v2575
      %v2577 = vunpack.c.l.b16 %v2206
      %v2578 = vunpack.c.l.b16 %v2216
      %v2579 = vunpack.c.l.b16 %v2230
      %v2580 = vunpack.c.l.b16 %v2240
      %v2581 = vunpack.c.l.b16 %v2254
      %v2582 = vunpack.c.l.b16 %v2264
      %v2583 = vunpack.c.l.b16 %v2278
      %v2584 = vunpack.c.l.b16 %v2288
      %v2585 = vunpack.c.l.b16 %v2302
      %v2586 = vunpack.c.l.b16 %v2312
      %v2587 = vunpack.c.l.b16 %v2326
      %v2588 = vunpack.c.l.b16 %v2336
      %v2589 = vunpack.c.l.b16 %v2350
      %v2590 = vunpack.c.l.b16 %v2360
      %v2591 = vunpack.c.l.b16 %v2374
      %v2592 = vunpack.c.l.b16 %v2384
      %v2593 = vunpack.c.l.b16 %v2398
      %v2594 = vunpack.c.l.b16 %v2408
      %v2595 = vunpack.c.l.b16 %v2422
      %v2596 = vunpack.c.l.b16 %v2432
      %v2597 = vunpack.c.l.b16 %v2446
      %v2598 = vunpack.c.l.b16 %v2456
      %v2599 = vunpack.c.l.b16 %v2470
      %v2600 = vunpack.c.l.b16 %v2480
      %v2601 = vunpack.c.l.b16 %v2494
      %v2602 = vunpack.c.l.b16 %v2504
      %v2603 = vunpack.c.l.b16 %v2518
      %v2604 = vunpack.c.l.b16 %v2528
      %v2605 = vunpack.c.l.b16 %v2542
      %v2606 = vunpack.c.l.b16 %v2552
      %v2607 = vunpack.c.l.b16 %v2566
      %v2608 = vunpack.c.l.b16 %v2576
      %v2609 = vpack.c.b16 %v2578, %v2577
      %v2610 = vpack.c.b16 %v2580, %v2579
      %v2611 = vpack.c.b16 %v2582, %v2581
      %v2612 = vpack.c.b16 %v2584, %v2583
      %v2613 = vpack.c.b16 %v2586, %v2585
      %v2614 = vpack.c.b16 %v2588, %v2587
      %v2615 = vpack.c.b16 %v2590, %v2589
      %v2616 = vpack.c.b16 %v2592, %v2591
      %v2617 = vpack.c.b16 %v2594, %v2593
      %v2618 = vpack.c.b16 %v2596, %v2595
      %v2619 = vpack.c.b16 %v2598, %v2597
      %v2620 = vpack.c.b16 %v2600, %v2599
      %v2621 = vpack.c.b16 %v2602, %v2601
      %v2622 = vpack.c.b16 %v2604, %v2603
      %v2623 = vpack.c.b16 %v2606, %v2605
      %v2624 = vpack.c.b16 %v2608, %v2607
      %2641 = vst [vmem:[#allocation3 + $0x20] sm:$0xff] %v2609
      %2642 = vst [vmem:[#allocation3 + $0x68] sm:$0xff] %v2610
      %2643 = vst [vmem:[#allocation3 + $0xb0] sm:$0xff] %v2611
      %2644 = vst [vmem:[#allocation3 + $0xf8] sm:$0xff] %v2612
      %2645 = vst [vmem:[#allocation3 + $0x140] sm:$0xff] %v2613
      %2646 = vst [vmem:[#allocation3 + $0x188] sm:$0xff] %v2614
      %2647 = vst [vmem:[#allocation3 + $0x1d0] sm:$0xff] %v2615
      %2648 = vst [vmem:[#allocation3 + $0x218] sm:$0xff] %v2616
      %2649 = vst [vmem:[#allocation3 + $0x260] sm:$0xff] %v2617
      %2650 = vst [vmem:[#allocation3 + $0x2a8] sm:$0xff] %v2618
      %2651 = vst [vmem:[#allocation3 + $0x2f0] sm:$0xff] %v2619
      %2652 = vst [vmem:[#allocation3 + $0x338] sm:$0xff] %v2620
      %2653 = vst [vmem:[#allocation3 + $0x380] sm:$0xff] %v2621
      %2654 = vst [vmem:[#allocation3 + $0x3c8] sm:$0xff] %v2622
      %2655 = vst [vmem:[#allocation3 + $0x410] sm:$0xff] %v2623
      %2656 = vst [vmem:[#allocation3 + $0x458] sm:$0xff] %v2624
      %v2657 = vld [vmem:[%s434] sm:$0xe]
      %v2658 = vld [vmem:[%s434 + $0x4] sm:$0xf]
      %v2659 = vld [vmem:[%s434 + $0x8] sm:$0x1]
      %v2660 = vld [vmem:[%s434 + $0xc] sm:$0xe]
      %v2661 = vld [vmem:[%s434 + $0x10] sm:$0xf]
      %v2662 = vld [vmem:[%s434 + $0x14] sm:$0x1]
      %v2663 = vld [vmem:[%s434 + $0x18] sm:$0xe]
      %v2664 = vld [vmem:[%s434 + $0x1c] sm:$0xf]
      %v2665 = vld [vmem:[%s434 + $0x20] sm:$0x1]
      %v2666 = vld [vmem:[%s434 + $0x24] sm:$0xe]
      %v2667 = vld [vmem:[%s434 + $0x28] sm:$0xf]
      %v2668 = vld [vmem:[%s434 + $0x2c] sm:$0x1]
      %v2669 = vld [vmem:[%s434 + $0x30] sm:$0xe]
      %v2670 = vld [vmem:[%s434 + $0x34] sm:$0xf]
      %v2671 = vld [vmem:[%s434 + $0x38] sm:$0x1]
      %v2672 = vld [vmem:[%s434 + $0x3c] sm:$0xe]
      %v2673 = vld [vmem:[%s434 + $0x40] sm:$0xf]
      %v2674 = vld [vmem:[%s434 + $0x44] sm:$0x1]
      %v2675 = vld [vmem:[%s434 + $0x48] sm:$0xe]
      %v2676 = vld [vmem:[%s434 + $0x4c] sm:$0xf]
      %v2677 = vld [vmem:[%s434 + $0x50] sm:$0x1]
      %v2678 = vld [vmem:[%s434 + $0x54] sm:$0xe]
      %v2679 = vld [vmem:[%s434 + $0x58] sm:$0xf]
      %v2680 = vld [vmem:[%s434 + $0x5c] sm:$0x1]
      %v2681 = vld [vmem:[%s434 + $0x60] sm:$0xe]
      %v2682 = vld [vmem:[%s434 + $0x64] sm:$0xf]
      %v2683 = vld [vmem:[%s434 + $0x68] sm:$0x1]
      %v2684 = vld [vmem:[%s434 + $0x6c] sm:$0xe]
      %v2685 = vld [vmem:[%s434 + $0x70] sm:$0xf]
      %v2686 = vld [vmem:[%s434 + $0x74] sm:$0x1]
      %v2687 = vld [vmem:[%s434 + $0x78] sm:$0xe]
      %v2688 = vld [vmem:[%s434 + $0x7c] sm:$0xf]
      %v2689 = vld [vmem:[%s434 + $0x80] sm:$0x1]
      %v2690 = vld [vmem:[%s434 + $0x84] sm:$0xe]
      %v2691 = vld [vmem:[%s434 + $0x88] sm:$0xf]
      %v2692 = vld [vmem:[%s434 + $0x8c] sm:$0x1]
      %v2693 = vld [vmem:[%s434 + $0x90] sm:$0xe]
      %v2694 = vld [vmem:[%s434 + $0x94] sm:$0xf]
      %v2695 = vld [vmem:[%s434 + $0x98] sm:$0x1]
      %v2696 = vld [vmem:[%s434 + $0x9c] sm:$0xe]
      %v2697 = vld [vmem:[%s434 + $0xa0] sm:$0xf]
      %v2698 = vld [vmem:[%s434 + $0xa4] sm:$0x1]
      %v2699 = vld [vmem:[%s434 + $0xa8] sm:$0xe]
      %v2700 = vld [vmem:[%s434 + $0xac] sm:$0xf]
      %v2701 = vld [vmem:[%s434 + $0xb0] sm:$0x1]
      %v2702 = vld [vmem:[%s434 + $0xb4] sm:$0xe]
      %v2703 = vld [vmem:[%s434 + $0xb8] sm:$0xf]
      %v2704 = vld [vmem:[%s434 + $0xbc] sm:$0x1]
      %v2753 = vrot.slane %v2657, 5
      %v2754 = vrot.slane %v2753, 4
      %v2755 = vrot.slane %v2658, 5
      %v2756 = vsel %vm1808, %v2754, %v2755
      %v2757 = vrot.slane %v2755, 4
      %v2758 = vrot.slane %v2659, 5
      %v2759 = vsel %vm1808, %v2757, %v2758
      %v2760 = vrot.slane %v2660, 5
      %v2761 = vrot.slane %v2760, 4
      %v2762 = vrot.slane %v2661, 5
      %v2763 = vsel %vm1808, %v2761, %v2762
      %v2764 = vrot.slane %v2762, 4
      %v2765 = vrot.slane %v2662, 5
      %v2766 = vsel %vm1808, %v2764, %v2765
      %v2767 = vrot.slane %v2663, 5
      %v2768 = vrot.slane %v2767, 4
      %v2769 = vrot.slane %v2664, 5
      %v2770 = vsel %vm1808, %v2768, %v2769
      %v2771 = vrot.slane %v2769, 4
      %v2772 = vrot.slane %v2665, 5
      %v2773 = vsel %vm1808, %v2771, %v2772
      %v2774 = vrot.slane %v2666, 5
      %v2775 = vrot.slane %v2774, 4
      %v2776 = vrot.slane %v2667, 5
      %v2777 = vsel %vm1808, %v2775, %v2776
      %v2778 = vrot.slane %v2776, 4
      %v2779 = vrot.slane %v2668, 5
      %v2780 = vsel %vm1808, %v2778, %v2779
      %v2781 = vrot.slane %v2669, 5
      %v2782 = vrot.slane %v2781, 4
      %v2783 = vrot.slane %v2670, 5
      %v2784 = vsel %vm1808, %v2782, %v2783
      %v2785 = vrot.slane %v2783, 4
      %v2786 = vrot.slane %v2671, 5
      %v2787 = vsel %vm1808, %v2785, %v2786
      %v2788 = vrot.slane %v2672, 5
      %v2789 = vrot.slane %v2788, 4
      %v2790 = vrot.slane %v2673, 5
      %v2791 = vsel %vm1808, %v2789, %v2790
      %v2792 = vrot.slane %v2790, 4
      %v2793 = vrot.slane %v2674, 5
      %v2794 = vsel %vm1808, %v2792, %v2793
      %v2795 = vrot.slane %v2675, 5
      %v2796 = vrot.slane %v2795, 4
      %v2797 = vrot.slane %v2676, 5
      %v2798 = vsel %vm1808, %v2796, %v2797
      %v2799 = vrot.slane %v2797, 4
      %v2800 = vrot.slane %v2677, 5
      %v2801 = vsel %vm1808, %v2799, %v2800
      %v2802 = vrot.slane %v2678, 5
      %v2803 = vrot.slane %v2802, 4
      %v2804 = vrot.slane %v2679, 5
      %v2805 = vsel %vm1808, %v2803, %v2804
      %v2806 = vrot.slane %v2804, 4
      %v2807 = vrot.slane %v2680, 5
      %v2808 = vsel %vm1808, %v2806, %v2807
      %v2809 = vrot.slane %v2681, 5
      %v2810 = vrot.slane %v2809, 4
      %v2811 = vrot.slane %v2682, 5
      %v2812 = vsel %vm1808, %v2810, %v2811
      %v2813 = vrot.slane %v2811, 4
      %v2814 = vrot.slane %v2683, 5
      %v2815 = vsel %vm1808, %v2813, %v2814
      %v2816 = vrot.slane %v2684, 5
      %v2817 = vrot.slane %v2816, 4
      %v2818 = vrot.slane %v2685, 5
      %v2819 = vsel %vm1808, %v2817, %v2818
      %v2820 = vrot.slane %v2818, 4
      %v2821 = vrot.slane %v2686, 5
      %v2822 = vsel %vm1808, %v2820, %v2821
      %v2823 = vrot.slane %v2687, 5
      %v2824 = vrot.slane %v2823, 4
      %v2825 = vrot.slane %v2688, 5
      %v2826 = vsel %vm1808, %v2824, %v2825
      %v2827 = vrot.slane %v2825, 4
      %v2828 = vrot.slane %v2689, 5
      %v2829 = vsel %vm1808, %v2827, %v2828
      %v2830 = vrot.slane %v2690, 5
      %v2831 = vrot.slane %v2830, 4
      %v2832 = vrot.slane %v2691, 5
      %v2833 = vsel %vm1808, %v2831, %v2832
      %v2834 = vrot.slane %v2832, 4
      %v2835 = vrot.slane %v2692, 5
      %v2836 = vsel %vm1808, %v2834, %v2835
      %v2837 = vrot.slane %v2693, 5
      %v2838 = vrot.slane %v2837, 4
      %v2839 = vrot.slane %v2694, 5
      %v2840 = vsel %vm1808, %v2838, %v2839
      %v2841 = vrot.slane %v2839, 4
      %v2842 = vrot.slane %v2695, 5
      %v2843 = vsel %vm1808, %v2841, %v2842
      %v2844 = vrot.slane %v2696, 5
      %v2845 = vrot.slane %v2844, 4
      %v2846 = vrot.slane %v2697, 5
      %v2847 = vsel %vm1808, %v2845, %v2846
      %v2848 = vrot.slane %v2846, 4
      %v2849 = vrot.slane %v2698, 5
      %v2850 = vsel %vm1808, %v2848, %v2849
      %v2851 = vrot.slane %v2699, 5
      %v2852 = vrot.slane %v2851, 4
      %v2853 = vrot.slane %v2700, 5
      %v2854 = vsel %vm1808, %v2852, %v2853
      %v2855 = vrot.slane %v2853, 4
      %v2856 = vrot.slane %v2701, 5
      %v2857 = vsel %vm1808, %v2855, %v2856
      %v2858 = vrot.slane %v2702, 5
      %v2859 = vrot.slane %v2858, 4
      %v2860 = vrot.slane %v2703, 5
      %v2861 = vsel %vm1808, %v2859, %v2860
      %v2862 = vrot.slane %v2860, 4
      %v2863 = vrot.slane %v2704, 5
      %v2864 = vsel %vm1808, %v2862, %v2863
      %v2865 = vunpack.c.l.b16 %v2756
      %v2866 = vunpack.c.l.b16 %v2759
      %v2867 = vunpack.c.l.b16 %v2763
      %v2868 = vunpack.c.l.b16 %v2766
      %v2869 = vunpack.c.l.b16 %v2770
      %v2870 = vunpack.c.l.b16 %v2773
      %v2871 = vunpack.c.l.b16 %v2777
      %v2872 = vunpack.c.l.b16 %v2780
      %v2873 = vunpack.c.l.b16 %v2784
      %v2874 = vunpack.c.l.b16 %v2787
      %v2875 = vunpack.c.l.b16 %v2791
      %v2876 = vunpack.c.l.b16 %v2794
      %v2877 = vunpack.c.l.b16 %v2798
      %v2878 = vunpack.c.l.b16 %v2801
      %v2879 = vunpack.c.l.b16 %v2805
      %v2880 = vunpack.c.l.b16 %v2808
      %v2881 = vunpack.c.l.b16 %v2812
      %v2882 = vunpack.c.l.b16 %v2815
      %v2883 = vunpack.c.l.b16 %v2819
      %v2884 = vunpack.c.l.b16 %v2822
      %v2885 = vunpack.c.l.b16 %v2826
      %v2886 = vunpack.c.l.b16 %v2829
      %v2887 = vunpack.c.l.b16 %v2833
      %v2888 = vunpack.c.l.b16 %v2836
      %v2889 = vunpack.c.l.b16 %v2840
      %v2890 = vunpack.c.l.b16 %v2843
      %v2891 = vunpack.c.l.b16 %v2847
      %v2892 = vunpack.c.l.b16 %v2850
      %v2893 = vunpack.c.l.b16 %v2854
      %v2894 = vunpack.c.l.b16 %v2857
      %v2895 = vunpack.c.l.b16 %v2861
      %v2896 = vunpack.c.l.b16 %v2864
      %v2897 = vpack.c.b16 %v2866, %v2865
      %v2898 = vpack.c.b16 %v2868, %v2867
      %v2899 = vpack.c.b16 %v2870, %v2869
      %v2900 = vpack.c.b16 %v2872, %v2871
      %v2901 = vpack.c.b16 %v2874, %v2873
      %v2902 = vpack.c.b16 %v2876, %v2875
      %v2903 = vpack.c.b16 %v2878, %v2877
      %v2904 = vpack.c.b16 %v2880, %v2879
      %v2905 = vpack.c.b16 %v2882, %v2881
      %v2906 = vpack.c.b16 %v2884, %v2883
      %v2907 = vpack.c.b16 %v2886, %v2885
      %v2908 = vpack.c.b16 %v2888, %v2887
      %v2909 = vpack.c.b16 %v2890, %v2889
      %v2910 = vpack.c.b16 %v2892, %v2891
      %v2911 = vpack.c.b16 %v2894, %v2893
      %v2912 = vpack.c.b16 %v2896, %v2895
      %2929 = vst [vmem:[#allocation3 + $0x28] sm:$0xff] %v2897
      %2930 = vst [vmem:[#allocation3 + $0x70] sm:$0xff] %v2898
      %2931 = vst [vmem:[#allocation3 + $0xb8] sm:$0xff] %v2899
      %2932 = vst [vmem:[#allocation3 + $0x100] sm:$0xff] %v2900
      %2933 = vst [vmem:[#allocation3 + $0x148] sm:$0xff] %v2901
      %2934 = vst [vmem:[#allocation3 + $0x190] sm:$0xff] %v2902
      %2935 = vst [vmem:[#allocation3 + $0x1d8] sm:$0xff] %v2903
      %2936 = vst [vmem:[#allocation3 + $0x220] sm:$0xff] %v2904
      %2937 = vst [vmem:[#allocation3 + $0x268] sm:$0xff] %v2905
      %2938 = vst [vmem:[#allocation3 + $0x2b0] sm:$0xff] %v2906
      %2939 = vst [vmem:[#allocation3 + $0x2f8] sm:$0xff] %v2907
      %2940 = vst [vmem:[#allocation3 + $0x340] sm:$0xff] %v2908
      %2941 = vst [vmem:[#allocation3 + $0x388] sm:$0xff] %v2909
      %2942 = vst [vmem:[#allocation3 + $0x3d0] sm:$0xff] %v2910
      %2943 = vst [vmem:[#allocation3 + $0x418] sm:$0xff] %v2911
      %2944 = vst [vmem:[#allocation3 + $0x460] sm:$0xff] %v2912
      %s2945 = scalar_lea.vmem [#allocation2], 24
      %v2946 = vld [vmem:[%s2945] sm:$0xf]
      %v2947 = vld [vmem:[%s2945 + $0x4] sm:$0xf]
      %v2948 = vld [vmem:[%s2945 + $0xc] sm:$0xf]
      %v2949 = vld [vmem:[%s2945 + $0x10] sm:$0xf]
      %v2950 = vld [vmem:[%s2945 + $0x18] sm:$0xf]
      %v2951 = vld [vmem:[%s2945 + $0x1c] sm:$0xf]
      %v2952 = vld [vmem:[%s2945 + $0x24] sm:$0xf]
      %v2953 = vld [vmem:[%s2945 + $0x28] sm:$0xf]
      %v2954 = vld [vmem:[%s2945 + $0x30] sm:$0xf]
      %v2955 = vld [vmem:[%s2945 + $0x34] sm:$0xf]
      %v2956 = vld [vmem:[%s2945 + $0x3c] sm:$0xf]
      %v2957 = vld [vmem:[%s2945 + $0x40] sm:$0xf]
      %v2958 = vld [vmem:[%s2945 + $0x48] sm:$0xf]
      %v2959 = vld [vmem:[%s2945 + $0x4c] sm:$0xf]
      %v2960 = vld [vmem:[%s2945 + $0x54] sm:$0xf]
      %v2961 = vld [vmem:[%s2945 + $0x58] sm:$0xf]
      %v2962 = vld [vmem:[%s2945 + $0x60] sm:$0xf]
      %v2963 = vld [vmem:[%s2945 + $0x64] sm:$0xf]
      %v2964 = vld [vmem:[%s2945 + $0x6c] sm:$0xf]
      %v2965 = vld [vmem:[%s2945 + $0x70] sm:$0xf]
      %v2966 = vld [vmem:[%s2945 + $0x78] sm:$0xf]
      %v2967 = vld [vmem:[%s2945 + $0x7c] sm:$0xf]
      %v2968 = vld [vmem:[%s2945 + $0x84] sm:$0xf]
      %v2969 = vld [vmem:[%s2945 + $0x88] sm:$0xf]
      %v2970 = vld [vmem:[%s2945 + $0x90] sm:$0xf]
      %v2971 = vld [vmem:[%s2945 + $0x94] sm:$0xf]
      %v2972 = vld [vmem:[%s2945 + $0x9c] sm:$0xf]
      %v2973 = vld [vmem:[%s2945 + $0xa0] sm:$0xf]
      %v2974 = vld [vmem:[%s2945 + $0xa8] sm:$0xf]
      %v2975 = vld [vmem:[%s2945 + $0xac] sm:$0xf]
      %v2976 = vld [vmem:[%s2945 + $0xb4] sm:$0xf]
      %v2977 = vld [vmem:[%s2945 + $0xb8] sm:$0xf]
      %v3010 = vunpack.c.l.b16 %v2946
      %v3011 = vunpack.c.l.b16 %v2947
      %v3012 = vunpack.c.l.b16 %v2948
      %v3013 = vunpack.c.l.b16 %v2949
      %v3014 = vunpack.c.l.b16 %v2950
      %v3015 = vunpack.c.l.b16 %v2951
      %v3016 = vunpack.c.l.b16 %v2952
      %v3017 = vunpack.c.l.b16 %v2953
      %v3018 = vunpack.c.l.b16 %v2954
      %v3019 = vunpack.c.l.b16 %v2955
      %v3020 = vunpack.c.l.b16 %v2956
      %v3021 = vunpack.c.l.b16 %v2957
      %v3022 = vunpack.c.l.b16 %v2958
      %v3023 = vunpack.c.l.b16 %v2959
      %v3024 = vunpack.c.l.b16 %v2960
      %v3025 = vunpack.c.l.b16 %v2961
      %v3026 = vunpack.c.l.b16 %v2962
      %v3027 = vunpack.c.l.b16 %v2963
      %v3028 = vunpack.c.l.b16 %v2964
      %v3029 = vunpack.c.l.b16 %v2965
      %v3030 = vunpack.c.l.b16 %v2966
      %v3031 = vunpack.c.l.b16 %v2967
      %v3032 = vunpack.c.l.b16 %v2968
      %v3033 = vunpack.c.l.b16 %v2969
      %v3034 = vunpack.c.l.b16 %v2970
      %v3035 = vunpack.c.l.b16 %v2971
      %v3036 = vunpack.c.l.b16 %v2972
      %v3037 = vunpack.c.l.b16 %v2973
      %v3038 = vunpack.c.l.b16 %v2974
      %v3039 = vunpack.c.l.b16 %v2975
      %v3040 = vunpack.c.l.b16 %v2976
      %v3041 = vunpack.c.l.b16 %v2977
      %v3042 = vpack.c.b16 %v3011, %v3010
      %v3043 = vpack.c.b16 %v3013, %v3012
      %v3044 = vpack.c.b16 %v3015, %v3014
      %v3045 = vpack.c.b16 %v3017, %v3016
      %v3046 = vpack.c.b16 %v3019, %v3018
      %v3047 = vpack.c.b16 %v3021, %v3020
      %v3048 = vpack.c.b16 %v3023, %v3022
      %v3049 = vpack.c.b16 %v3025, %v3024
      %v3050 = vpack.c.b16 %v3027, %v3026
      %v3051 = vpack.c.b16 %v3029, %v3028
      %v3052 = vpack.c.b16 %v3031, %v3030
      %v3053 = vpack.c.b16 %v3033, %v3032
      %v3054 = vpack.c.b16 %v3035, %v3034
      %v3055 = vpack.c.b16 %v3037, %v3036
      %v3056 = vpack.c.b16 %v3039, %v3038
      %v3057 = vpack.c.b16 %v3041, %v3040
      %3074 = vst [vmem:[#allocation3 + $0x30] sm:$0xff] %v3042
      %3075 = vst [vmem:[#allocation3 + $0x78] sm:$0xff] %v3043
      %3076 = vst [vmem:[#allocation3 + $0xc0] sm:$0xff] %v3044
      %3077 = vst [vmem:[#allocation3 + $0x108] sm:$0xff] %v3045
      %3078 = vst [vmem:[#allocation3 + $0x150] sm:$0xff] %v3046
      %3079 = vst [vmem:[#allocation3 + $0x198] sm:$0xff] %v3047
      %3080 = vst [vmem:[#allocation3 + $0x1e0] sm:$0xff] %v3048
      %3081 = vst [vmem:[#allocation3 + $0x228] sm:$0xff] %v3049
      %3082 = vst [vmem:[#allocation3 + $0x270] sm:$0xff] %v3050
      %3083 = vst [vmem:[#allocation3 + $0x2b8] sm:$0xff] %v3051
      %3084 = vst [vmem:[#allocation3 + $0x300] sm:$0xff] %v3052
      %3085 = vst [vmem:[#allocation3 + $0x348] sm:$0xff] %v3053
      %3086 = vst [vmem:[#allocation3 + $0x390] sm:$0xff] %v3054
      %3087 = vst [vmem:[#allocation3 + $0x3d8] sm:$0xff] %v3055
      %3088 = vst [vmem:[#allocation3 + $0x420] sm:$0xff] %v3056
      %3089 = vst [vmem:[#allocation3 + $0x468] sm:$0xff] %v3057
      %v3090 = vld [vmem:[%s2945] sm:$0xf]
      %v3091 = vld [vmem:[%s2945 + $0x4] sm:$0xf]
      %v3092 = vld [vmem:[%s2945 + $0x8] sm:$0x1]
      %v3093 = vld [vmem:[%s2945 + $0xc] sm:$0xf]
      %v3094 = vld [vmem:[%s2945 + $0x10] sm:$0xf]
      %v3095 = vld [vmem:[%s2945 + $0x14] sm:$0x1]
      %v3096 = vld [vmem:[%s2945 + $0x18] sm:$0xf]
      %v3097 = vld [vmem:[%s2945 + $0x1c] sm:$0xf]
      %v3098 = vld [vmem:[%s2945 + $0x20] sm:$0x1]
      %v3099 = vld [vmem:[%s2945 + $0x24] sm:$0xf]
      %v3100 = vld [vmem:[%s2945 + $0x28] sm:$0xf]
      %v3101 = vld [vmem:[%s2945 + $0x2c] sm:$0x1]
      %v3102 = vld [vmem:[%s2945 + $0x30] sm:$0xf]
      %v3103 = vld [vmem:[%s2945 + $0x34] sm:$0xf]
      %v3104 = vld [vmem:[%s2945 + $0x38] sm:$0x1]
      %v3105 = vld [vmem:[%s2945 + $0x3c] sm:$0xf]
      %v3106 = vld [vmem:[%s2945 + $0x40] sm:$0xf]
      %v3107 = vld [vmem:[%s2945 + $0x44] sm:$0x1]
      %v3108 = vld [vmem:[%s2945 + $0x48] sm:$0xf]
      %v3109 = vld [vmem:[%s2945 + $0x4c] sm:$0xf]
      %v3110 = vld [vmem:[%s2945 + $0x50] sm:$0x1]
      %v3111 = vld [vmem:[%s2945 + $0x54] sm:$0xf]
      %v3112 = vld [vmem:[%s2945 + $0x58] sm:$0xf]
      %v3113 = vld [vmem:[%s2945 + $0x5c] sm:$0x1]
      %v3114 = vld [vmem:[%s2945 + $0x60] sm:$0xf]
      %v3115 = vld [vmem:[%s2945 + $0x64] sm:$0xf]
      %v3116 = vld [vmem:[%s2945 + $0x68] sm:$0x1]
      %v3117 = vld [vmem:[%s2945 + $0x6c] sm:$0xf]
      %v3118 = vld [vmem:[%s2945 + $0x70] sm:$0xf]
      %v3119 = vld [vmem:[%s2945 + $0x74] sm:$0x1]
      %v3120 = vld [vmem:[%s2945 + $0x78] sm:$0xf]
      %v3121 = vld [vmem:[%s2945 + $0x7c] sm:$0xf]
      %v3122 = vld [vmem:[%s2945 + $0x80] sm:$0x1]
      %v3123 = vld [vmem:[%s2945 + $0x84] sm:$0xf]
      %v3124 = vld [vmem:[%s2945 + $0x88] sm:$0xf]
      %v3125 = vld [vmem:[%s2945 + $0x8c] sm:$0x1]
      %v3126 = vld [vmem:[%s2945 + $0x90] sm:$0xf]
      %v3127 = vld [vmem:[%s2945 + $0x94] sm:$0xf]
      %v3128 = vld [vmem:[%s2945 + $0x98] sm:$0x1]
      %v3129 = vld [vmem:[%s2945 + $0x9c] sm:$0xf]
      %v3130 = vld [vmem:[%s2945 + $0xa0] sm:$0xf]
      %v3131 = vld [vmem:[%s2945 + $0xa4] sm:$0x1]
      %v3132 = vld [vmem:[%s2945 + $0xa8] sm:$0xf]
      %v3133 = vld [vmem:[%s2945 + $0xac] sm:$0xf]
      %v3134 = vld [vmem:[%s2945 + $0xb0] sm:$0x1]
      %v3135 = vld [vmem:[%s2945 + $0xb4] sm:$0xf]
      %v3136 = vld [vmem:[%s2945 + $0xb8] sm:$0xf]
      %v3137 = vld [vmem:[%s2945 + $0xbc] sm:$0x1]
      %v3139 = vshrl.u32 %v3090, 16
      %v3141 = vrot.slane %v3139, 4
      %v3142 = vshll.u32 %v3090, 16
      %v3144 = vrot.slane %v3142, 5
      %v3145 = vor.u32 %v3141, %v3144
      %v3146 = vrot.slane %v3145, 4
      %v3148 = vshll.u32 %v3091, 16
      %v3150 = vrot.slane %v3148, 5
      %v3151 = vsel %vm1245, %v3146, %v3150
      %v3152 = vshrl.u32 %v3091, 16
      %v3154 = vrot.slane %v3152, 4
      %v3155 = vor.u32 %v3154, %v3150
      %v3156 = vrot.slane %v3155, 4
      %v3158 = vshll.u32 %v3092, 16
      %v3160 = vrot.slane %v3158, 5
      %v3161 = vsel %vm1245, %v3156, %v3160
      %v3163 = vshrl.u32 %v3093, 16
      %v3165 = vrot.slane %v3163, 4
      %v3166 = vshll.u32 %v3093, 16
      %v3168 = vrot.slane %v3166, 5
      %v3169 = vor.u32 %v3165, %v3168
      %v3170 = vrot.slane %v3169, 4
      %v3172 = vshll.u32 %v3094, 16
      %v3174 = vrot.slane %v3172, 5
      %v3175 = vsel %vm1245, %v3170, %v3174
      %v3176 = vshrl.u32 %v3094, 16
      %v3178 = vrot.slane %v3176, 4
      %v3179 = vor.u32 %v3178, %v3174
      %v3180 = vrot.slane %v3179, 4
      %v3182 = vshll.u32 %v3095, 16
      %v3184 = vrot.slane %v3182, 5
      %v3185 = vsel %vm1245, %v3180, %v3184
      %v3187 = vshrl.u32 %v3096, 16
      %v3189 = vrot.slane %v3187, 4
      %v3190 = vshll.u32 %v3096, 16
      %v3192 = vrot.slane %v3190, 5
      %v3193 = vor.u32 %v3189, %v3192
      %v3194 = vrot.slane %v3193, 4
      %v3196 = vshll.u32 %v3097, 16
      %v3198 = vrot.slane %v3196, 5
      %v3199 = vsel %vm1245, %v3194, %v3198
      %v3200 = vshrl.u32 %v3097, 16
      %v3202 = vrot.slane %v3200, 4
      %v3203 = vor.u32 %v3202, %v3198
      %v3204 = vrot.slane %v3203, 4
      %v3206 = vshll.u32 %v3098, 16
      %v3208 = vrot.slane %v3206, 5
      %v3209 = vsel %vm1245, %v3204, %v3208
      %v3211 = vshrl.u32 %v3099, 16
      %v3213 = vrot.slane %v3211, 4
      %v3214 = vshll.u32 %v3099, 16
      %v3216 = vrot.slane %v3214, 5
      %v3217 = vor.u32 %v3213, %v3216
      %v3218 = vrot.slane %v3217, 4
      %v3220 = vshll.u32 %v3100, 16
      %v3222 = vrot.slane %v3220, 5
      %v3223 = vsel %vm1245, %v3218, %v3222
      %v3224 = vshrl.u32 %v3100, 16
      %v3226 = vrot.slane %v3224, 4
      %v3227 = vor.u32 %v3226, %v3222
      %v3228 = vrot.slane %v3227, 4
      %v3230 = vshll.u32 %v3101, 16
      %v3232 = vrot.slane %v3230, 5
      %v3233 = vsel %vm1245, %v3228, %v3232
      %v3235 = vshrl.u32 %v3102, 16
      %v3237 = vrot.slane %v3235, 4
      %v3238 = vshll.u32 %v3102, 16
      %v3240 = vrot.slane %v3238, 5
      %v3241 = vor.u32 %v3237, %v3240
      %v3242 = vrot.slane %v3241, 4
      %v3244 = vshll.u32 %v3103, 16
      %v3246 = vrot.slane %v3244, 5
      %v3247 = vsel %vm1245, %v3242, %v3246
      %v3248 = vshrl.u32 %v3103, 16
      %v3250 = vrot.slane %v3248, 4
      %v3251 = vor.u32 %v3250, %v3246
      %v3252 = vrot.slane %v3251, 4
      %v3254 = vshll.u32 %v3104, 16
      %v3256 = vrot.slane %v3254, 5
      %v3257 = vsel %vm1245, %v3252, %v3256
      %v3259 = vshrl.u32 %v3105, 16
      %v3261 = vrot.slane %v3259, 4
      %v3262 = vshll.u32 %v3105, 16
      %v3264 = vrot.slane %v3262, 5
      %v3265 = vor.u32 %v3261, %v3264
      %v3266 = vrot.slane %v3265, 4
      %v3268 = vshll.u32 %v3106, 16
      %v3270 = vrot.slane %v3268, 5
      %v3271 = vsel %vm1245, %v3266, %v3270
      %v3272 = vshrl.u32 %v3106, 16
      %v3274 = vrot.slane %v3272, 4
      %v3275 = vor.u32 %v3274, %v3270
      %v3276 = vrot.slane %v3275, 4
      %v3278 = vshll.u32 %v3107, 16
      %v3280 = vrot.slane %v3278, 5
      %v3281 = vsel %vm1245, %v3276, %v3280
      %v3283 = vshrl.u32 %v3108, 16
      %v3285 = vrot.slane %v3283, 4
      %v3286 = vshll.u32 %v3108, 16
      %v3288 = vrot.slane %v3286, 5
      %v3289 = vor.u32 %v3285, %v3288
      %v3290 = vrot.slane %v3289, 4
      %v3292 = vshll.u32 %v3109, 16
      %v3294 = vrot.slane %v3292, 5
      %v3295 = vsel %vm1245, %v3290, %v3294
      %v3296 = vshrl.u32 %v3109, 16
      %v3298 = vrot.slane %v3296, 4
      %v3299 = vor.u32 %v3298, %v3294
      %v3300 = vrot.slane %v3299, 4
      %v3302 = vshll.u32 %v3110, 16
      %v3304 = vrot.slane %v3302, 5
      %v3305 = vsel %vm1245, %v3300, %v3304
      %v3307 = vshrl.u32 %v3111, 16
      %v3309 = vrot.slane %v3307, 4
      %v3310 = vshll.u32 %v3111, 16
      %v3312 = vrot.slane %v3310, 5
      %v3313 = vor.u32 %v3309, %v3312
      %v3314 = vrot.slane %v3313, 4
      %v3316 = vshll.u32 %v3112, 16
      %v3318 = vrot.slane %v3316, 5
      %v3319 = vsel %vm1245, %v3314, %v3318
      %v3320 = vshrl.u32 %v3112, 16
      %v3322 = vrot.slane %v3320, 4
      %v3323 = vor.u32 %v3322, %v3318
      %v3324 = vrot.slane %v3323, 4
      %v3326 = vshll.u32 %v3113, 16
      %v3328 = vrot.slane %v3326, 5
      %v3329 = vsel %vm1245, %v3324, %v3328
      %v3331 = vshrl.u32 %v3114, 16
      %v3333 = vrot.slane %v3331, 4
      %v3334 = vshll.u32 %v3114, 16
      %v3336 = vrot.slane %v3334, 5
      %v3337 = vor.u32 %v3333, %v3336
      %v3338 = vrot.slane %v3337, 4
      %v3340 = vshll.u32 %v3115, 16
      %v3342 = vrot.slane %v3340, 5
      %v3343 = vsel %vm1245, %v3338, %v3342
      %v3344 = vshrl.u32 %v3115, 16
      %v3346 = vrot.slane %v3344, 4
      %v3347 = vor.u32 %v3346, %v3342
      %v3348 = vrot.slane %v3347, 4
      %v3350 = vshll.u32 %v3116, 16
      %v3352 = vrot.slane %v3350, 5
      %v3353 = vsel %vm1245, %v3348, %v3352
      %v3355 = vshrl.u32 %v3117, 16
      %v3357 = vrot.slane %v3355, 4
      %v3358 = vshll.u32 %v3117, 16
      %v3360 = vrot.slane %v3358, 5
      %v3361 = vor.u32 %v3357, %v3360
      %v3362 = vrot.slane %v3361, 4
      %v3364 = vshll.u32 %v3118, 16
      %v3366 = vrot.slane %v3364, 5
      %v3367 = vsel %vm1245, %v3362, %v3366
      %v3368 = vshrl.u32 %v3118, 16
      %v3370 = vrot.slane %v3368, 4
      %v3371 = vor.u32 %v3370, %v3366
      %v3372 = vrot.slane %v3371, 4
      %v3374 = vshll.u32 %v3119, 16
      %v3376 = vrot.slane %v3374, 5
      %v3377 = vsel %vm1245, %v3372, %v3376
      %v3379 = vshrl.u32 %v3120, 16
      %v3381 = vrot.slane %v3379, 4
      %v3382 = vshll.u32 %v3120, 16
      %v3384 = vrot.slane %v3382, 5
      %v3385 = vor.u32 %v3381, %v3384
      %v3386 = vrot.slane %v3385, 4
      %v3388 = vshll.u32 %v3121, 16
      %v3390 = vrot.slane %v3388, 5
      %v3391 = vsel %vm1245, %v3386, %v3390
      %v3392 = vshrl.u32 %v3121, 16
      %v3394 = vrot.slane %v3392, 4
      %v3395 = vor.u32 %v3394, %v3390
      %v3396 = vrot.slane %v3395, 4
      %v3398 = vshll.u32 %v3122, 16
      %v3400 = vrot.slane %v3398, 5
      %v3401 = vsel %vm1245, %v3396, %v3400
      %v3403 = vshrl.u32 %v3123, 16
      %v3405 = vrot.slane %v3403, 4
      %v3406 = vshll.u32 %v3123, 16
      %v3408 = vrot.slane %v3406, 5
      %v3409 = vor.u32 %v3405, %v3408
      %v3410 = vrot.slane %v3409, 4
      %v3412 = vshll.u32 %v3124, 16
      %v3414 = vrot.slane %v3412, 5
      %v3415 = vsel %vm1245, %v3410, %v3414
      %v3416 = vshrl.u32 %v3124, 16
      %v3418 = vrot.slane %v3416, 4
      %v3419 = vor.u32 %v3418, %v3414
      %v3420 = vrot.slane %v3419, 4
      %v3422 = vshll.u32 %v3125, 16
      %v3424 = vrot.slane %v3422, 5
      %v3425 = vsel %vm1245, %v3420, %v3424
      %v3427 = vshrl.u32 %v3126, 16
      %v3429 = vrot.slane %v3427, 4
      %v3430 = vshll.u32 %v3126, 16
      %v3432 = vrot.slane %v3430, 5
      %v3433 = vor.u32 %v3429, %v3432
      %v3434 = vrot.slane %v3433, 4
      %v3436 = vshll.u32 %v3127, 16
      %v3438 = vrot.slane %v3436, 5
      %v3439 = vsel %vm1245, %v3434, %v3438
      %v3440 = vshrl.u32 %v3127, 16
      %v3442 = vrot.slane %v3440, 4
      %v3443 = vor.u32 %v3442, %v3438
      %v3444 = vrot.slane %v3443, 4
      %v3446 = vshll.u32 %v3128, 16
      %v3448 = vrot.slane %v3446, 5
      %v3449 = vsel %vm1245, %v3444, %v3448
      %v3451 = vshrl.u32 %v3129, 16
      %v3453 = vrot.slane %v3451, 4
      %v3454 = vshll.u32 %v3129, 16
      %v3456 = vrot.slane %v3454, 5
      %v3457 = vor.u32 %v3453, %v3456
      %v3458 = vrot.slane %v3457, 4
      %v3460 = vshll.u32 %v3130, 16
      %v3462 = vrot.slane %v3460, 5
      %v3463 = vsel %vm1245, %v3458, %v3462
      %v3464 = vshrl.u32 %v3130, 16
      %v3466 = vrot.slane %v3464, 4
      %v3467 = vor.u32 %v3466, %v3462
      %v3468 = vrot.slane %v3467, 4
      %v3470 = vshll.u32 %v3131, 16
      %v3472 = vrot.slane %v3470, 5
      %v3473 = vsel %vm1245, %v3468, %v3472
      %v3475 = vshrl.u32 %v3132, 16
      %v3477 = vrot.slane %v3475, 4
      %v3478 = vshll.u32 %v3132, 16
      %v3480 = vrot.slane %v3478, 5
      %v3481 = vor.u32 %v3477, %v3480
      %v3482 = vrot.slane %v3481, 4
      %v3484 = vshll.u32 %v3133, 16
      %v3486 = vrot.slane %v3484, 5
      %v3487 = vsel %vm1245, %v3482, %v3486
      %v3488 = vshrl.u32 %v3133, 16
      %v3490 = vrot.slane %v3488, 4
      %v3491 = vor.u32 %v3490, %v3486
      %v3492 = vrot.slane %v3491, 4
      %v3494 = vshll.u32 %v3134, 16
      %v3496 = vrot.slane %v3494, 5
      %v3497 = vsel %vm1245, %v3492, %v3496
      %v3499 = vshrl.u32 %v3135, 16
      %v3501 = vrot.slane %v3499, 4
      %v3502 = vshll.u32 %v3135, 16
      %v3504 = vrot.slane %v3502, 5
      %v3505 = vor.u32 %v3501, %v3504
      %v3506 = vrot.slane %v3505, 4
      %v3508 = vshll.u32 %v3136, 16
      %v3510 = vrot.slane %v3508, 5
      %v3511 = vsel %vm1245, %v3506, %v3510
      %v3512 = vshrl.u32 %v3136, 16
      %v3514 = vrot.slane %v3512, 4
      %v3515 = vor.u32 %v3514, %v3510
      %v3516 = vrot.slane %v3515, 4
      %v3518 = vshll.u32 %v3137, 16
      %v3520 = vrot.slane %v3518, 5
      %v3521 = vsel %vm1245, %v3516, %v3520
      %v3522 = vunpack.c.l.b16 %v3151
      %v3523 = vunpack.c.l.b16 %v3161
      %v3524 = vunpack.c.l.b16 %v3175
      %v3525 = vunpack.c.l.b16 %v3185
      %v3526 = vunpack.c.l.b16 %v3199
      %v3527 = vunpack.c.l.b16 %v3209
      %v3528 = vunpack.c.l.b16 %v3223
      %v3529 = vunpack.c.l.b16 %v3233
      %v3530 = vunpack.c.l.b16 %v3247
      %v3531 = vunpack.c.l.b16 %v3257
      %v3532 = vunpack.c.l.b16 %v3271
      %v3533 = vunpack.c.l.b16 %v3281
      %v3534 = vunpack.c.l.b16 %v3295
      %v3535 = vunpack.c.l.b16 %v3305
      %v3536 = vunpack.c.l.b16 %v3319
      %v3537 = vunpack.c.l.b16 %v3329
      %v3538 = vunpack.c.l.b16 %v3343
      %v3539 = vunpack.c.l.b16 %v3353
      %v3540 = vunpack.c.l.b16 %v3367
      %v3541 = vunpack.c.l.b16 %v3377
      %v3542 = vunpack.c.l.b16 %v3391
      %v3543 = vunpack.c.l.b16 %v3401
      %v3544 = vunpack.c.l.b16 %v3415
      %v3545 = vunpack.c.l.b16 %v3425
      %v3546 = vunpack.c.l.b16 %v3439
      %v3547 = vunpack.c.l.b16 %v3449
      %v3548 = vunpack.c.l.b16 %v3463
      %v3549 = vunpack.c.l.b16 %v3473
      %v3550 = vunpack.c.l.b16 %v3487
      %v3551 = vunpack.c.l.b16 %v3497
      %v3552 = vunpack.c.l.b16 %v3511
      %v3553 = vunpack.c.l.b16 %v3521
      %v3554 = vpack.c.b16 %v3523, %v3522
      %v3555 = vpack.c.b16 %v3525, %v3524
      %v3556 = vpack.c.b16 %v3527, %v3526
      %v3557 = vpack.c.b16 %v3529, %v3528
      %v3558 = vpack.c.b16 %v3531, %v3530
      %v3559 = vpack.c.b16 %v3533, %v3532
      %v3560 = vpack.c.b16 %v3535, %v3534
      %v3561 = vpack.c.b16 %v3537, %v3536
      %v3562 = vpack.c.b16 %v3539, %v3538
      %v3563 = vpack.c.b16 %v3541, %v3540
      %v3564 = vpack.c.b16 %v3543, %v3542
      %v3565 = vpack.c.b16 %v3545, %v3544
      %v3566 = vpack.c.b16 %v3547, %v3546
      %v3567 = vpack.c.b16 %v3549, %v3548
      %v3568 = vpack.c.b16 %v3551, %v3550
      %v3569 = vpack.c.b16 %v3553, %v3552
      %3586 = vst [vmem:[#allocation3 + $0x38] sm:$0xff] %v3554
      %3587 = vst [vmem:[#allocation3 + $0x80] sm:$0xff] %v3555
      %3588 = vst [vmem:[#allocation3 + $0xc8] sm:$0xff] %v3556
      %3589 = vst [vmem:[#allocation3 + $0x110] sm:$0xff] %v3557
      %3590 = vst [vmem:[#allocation3 + $0x158] sm:$0xff] %v3558
      %3591 = vst [vmem:[#allocation3 + $0x1a0] sm:$0xff] %v3559
      %3592 = vst [vmem:[#allocation3 + $0x1e8] sm:$0xff] %v3560
      %3593 = vst [vmem:[#allocation3 + $0x230] sm:$0xff] %v3561
      %3594 = vst [vmem:[#allocation3 + $0x278] sm:$0xff] %v3562
      %3595 = vst [vmem:[#allocation3 + $0x2c0] sm:$0xff] %v3563
      %3596 = vst [vmem:[#allocation3 + $0x308] sm:$0xff] %v3564
      %3597 = vst [vmem:[#allocation3 + $0x350] sm:$0xff] %v3565
      %3598 = vst [vmem:[#allocation3 + $0x398] sm:$0xff] %v3566
      %3599 = vst [vmem:[#allocation3 + $0x3e0] sm:$0xff] %v3567
      %3600 = vst [vmem:[#allocation3 + $0x428] sm:$0xff] %v3568
      %3601 = vst [vmem:[#allocation3 + $0x470] sm:$0xff] %v3569
      %v3602 = vld [vmem:[%s2945] sm:$0xe]
      %v3603 = vld [vmem:[%s2945 + $0x4] sm:$0xf]
      %v3604 = vld [vmem:[%s2945 + $0x8] sm:$0x1]
      %v3605 = vld [vmem:[%s2945 + $0xc] sm:$0xe]
      %v3606 = vld [vmem:[%s2945 + $0x10] sm:$0xf]
      %v3607 = vld [vmem:[%s2945 + $0x14] sm:$0x1]
      %v3608 = vld [vmem:[%s2945 + $0x18] sm:$0xe]
      %v3609 = vld [vmem:[%s2945 + $0x1c] sm:$0xf]
      %v3610 = vld [vmem:[%s2945 + $0x20] sm:$0x1]
      %v3611 = vld [vmem:[%s2945 + $0x24] sm:$0xe]
      %v3612 = vld [vmem:[%s2945 + $0x28] sm:$0xf]
      %v3613 = vld [vmem:[%s2945 + $0x2c] sm:$0x1]
      %v3614 = vld [vmem:[%s2945 + $0x30] sm:$0xe]
      %v3615 = vld [vmem:[%s2945 + $0x34] sm:$0xf]
      %v3616 = vld [vmem:[%s2945 + $0x38] sm:$0x1]
      %v3617 = vld [vmem:[%s2945 + $0x3c] sm:$0xe]
      %v3618 = vld [vmem:[%s2945 + $0x40] sm:$0xf]
      %v3619 = vld [vmem:[%s2945 + $0x44] sm:$0x1]
      %v3620 = vld [vmem:[%s2945 + $0x48] sm:$0xe]
      %v3621 = vld [vmem:[%s2945 + $0x4c] sm:$0xf]
      %v3622 = vld [vmem:[%s2945 + $0x50] sm:$0x1]
      %v3623 = vld [vmem:[%s2945 + $0x54] sm:$0xe]
      %v3624 = vld [vmem:[%s2945 + $0x58] sm:$0xf]
      %v3625 = vld [vmem:[%s2945 + $0x5c] sm:$0x1]
      %v3626 = vld [vmem:[%s2945 + $0x60] sm:$0xe]
      %v3627 = vld [vmem:[%s2945 + $0x64] sm:$0xf]
      %v3628 = vld [vmem:[%s2945 + $0x68] sm:$0x1]
      %v3629 = vld [vmem:[%s2945 + $0x6c] sm:$0xe]
      %v3630 = vld [vmem:[%s2945 + $0x70] sm:$0xf]
      %v3631 = vld [vmem:[%s2945 + $0x74] sm:$0x1]
      %v3632 = vld [vmem:[%s2945 + $0x78] sm:$0xe]
      %v3633 = vld [vmem:[%s2945 + $0x7c] sm:$0xf]
      %v3634 = vld [vmem:[%s2945 + $0x80] sm:$0x1]
      %v3635 = vld [vmem:[%s2945 + $0x84] sm:$0xe]
      %v3636 = vld [vmem:[%s2945 + $0x88] sm:$0xf]
      %v3637 = vld [vmem:[%s2945 + $0x8c] sm:$0x1]
      %v3638 = vld [vmem:[%s2945 + $0x90] sm:$0xe]
      %v3639 = vld [vmem:[%s2945 + $0x94] sm:$0xf]
      %v3640 = vld [vmem:[%s2945 + $0x98] sm:$0x1]
      %v3641 = vld [vmem:[%s2945 + $0x9c] sm:$0xe]
      %v3642 = vld [vmem:[%s2945 + $0xa0] sm:$0xf]
      %v3643 = vld [vmem:[%s2945 + $0xa4] sm:$0x1]
      %v3644 = vld [vmem:[%s2945 + $0xa8] sm:$0xe]
      %v3645 = vld [vmem:[%s2945 + $0xac] sm:$0xf]
      %v3646 = vld [vmem:[%s2945 + $0xb0] sm:$0x1]
      %v3647 = vld [vmem:[%s2945 + $0xb4] sm:$0xe]
      %v3648 = vld [vmem:[%s2945 + $0xb8] sm:$0xf]
      %v3649 = vld [vmem:[%s2945 + $0xbc] sm:$0x1]
      %v3698 = vrot.slane %v3602, 5
      %v3699 = vrot.slane %v3698, 4
      %v3700 = vrot.slane %v3603, 5
      %v3701 = vsel %vm1808, %v3699, %v3700
      %v3702 = vrot.slane %v3700, 4
      %v3703 = vrot.slane %v3604, 5
      %v3704 = vsel %vm1808, %v3702, %v3703
      %v3705 = vrot.slane %v3605, 5
      %v3706 = vrot.slane %v3705, 4
      %v3707 = vrot.slane %v3606, 5
      %v3708 = vsel %vm1808, %v3706, %v3707
      %v3709 = vrot.slane %v3707, 4
      %v3710 = vrot.slane %v3607, 5
      %v3711 = vsel %vm1808, %v3709, %v3710
      %v3712 = vrot.slane %v3608, 5
      %v3713 = vrot.slane %v3712, 4
      %v3714 = vrot.slane %v3609, 5
      %v3715 = vsel %vm1808, %v3713, %v3714
      %v3716 = vrot.slane %v3714, 4
      %v3717 = vrot.slane %v3610, 5
      %v3718 = vsel %vm1808, %v3716, %v3717
      %v3719 = vrot.slane %v3611, 5
      %v3720 = vrot.slane %v3719, 4
      %v3721 = vrot.slane %v3612, 5
      %v3722 = vsel %vm1808, %v3720, %v3721
      %v3723 = vrot.slane %v3721, 4
      %v3724 = vrot.slane %v3613, 5
      %v3725 = vsel %vm1808, %v3723, %v3724
      %v3726 = vrot.slane %v3614, 5
      %v3727 = vrot.slane %v3726, 4
      %v3728 = vrot.slane %v3615, 5
      %v3729 = vsel %vm1808, %v3727, %v3728
      %v3730 = vrot.slane %v3728, 4
      %v3731 = vrot.slane %v3616, 5
      %v3732 = vsel %vm1808, %v3730, %v3731
      %v3733 = vrot.slane %v3617, 5
      %v3734 = vrot.slane %v3733, 4
      %v3735 = vrot.slane %v3618, 5
      %v3736 = vsel %vm1808, %v3734, %v3735
      %v3737 = vrot.slane %v3735, 4
      %v3738 = vrot.slane %v3619, 5
      %v3739 = vsel %vm1808, %v3737, %v3738
      %v3740 = vrot.slane %v3620, 5
      %v3741 = vrot.slane %v3740, 4
      %v3742 = vrot.slane %v3621, 5
      %v3743 = vsel %vm1808, %v3741, %v3742
      %v3744 = vrot.slane %v3742, 4
      %v3745 = vrot.slane %v3622, 5
      %v3746 = vsel %vm1808, %v3744, %v3745
      %v3747 = vrot.slane %v3623, 5
      %v3748 = vrot.slane %v3747, 4
      %v3749 = vrot.slane %v3624, 5
      %v3750 = vsel %vm1808, %v3748, %v3749
      %v3751 = vrot.slane %v3749, 4
      %v3752 = vrot.slane %v3625, 5
      %v3753 = vsel %vm1808, %v3751, %v3752
      %v3754 = vrot.slane %v3626, 5
      %v3755 = vrot.slane %v3754, 4
      %v3756 = vrot.slane %v3627, 5
      %v3757 = vsel %vm1808, %v3755, %v3756
      %v3758 = vrot.slane %v3756, 4
      %v3759 = vrot.slane %v3628, 5
      %v3760 = vsel %vm1808, %v3758, %v3759
      %v3761 = vrot.slane %v3629, 5
      %v3762 = vrot.slane %v3761, 4
      %v3763 = vrot.slane %v3630, 5
      %v3764 = vsel %vm1808, %v3762, %v3763
      %v3765 = vrot.slane %v3763, 4
      %v3766 = vrot.slane %v3631, 5
      %v3767 = vsel %vm1808, %v3765, %v3766
      %v3768 = vrot.slane %v3632, 5
      %v3769 = vrot.slane %v3768, 4
      %v3770 = vrot.slane %v3633, 5
      %v3771 = vsel %vm1808, %v3769, %v3770
      %v3772 = vrot.slane %v3770, 4
      %v3773 = vrot.slane %v3634, 5
      %v3774 = vsel %vm1808, %v3772, %v3773
      %v3775 = vrot.slane %v3635, 5
      %v3776 = vrot.slane %v3775, 4
      %v3777 = vrot.slane %v3636, 5
      %v3778 = vsel %vm1808, %v3776, %v3777
      %v3779 = vrot.slane %v3777, 4
      %v3780 = vrot.slane %v3637, 5
      %v3781 = vsel %vm1808, %v3779, %v3780
      %v3782 = vrot.slane %v3638, 5
      %v3783 = vrot.slane %v3782, 4
      %v3784 = vrot.slane %v3639, 5
      %v3785 = vsel %vm1808, %v3783, %v3784
      %v3786 = vrot.slane %v3784, 4
      %v3787 = vrot.slane %v3640, 5
      %v3788 = vsel %vm1808, %v3786, %v3787
      %v3789 = vrot.slane %v3641, 5
      %v3790 = vrot.slane %v3789, 4
      %v3791 = vrot.slane %v3642, 5
      %v3792 = vsel %vm1808, %v3790, %v3791
      %v3793 = vrot.slane %v3791, 4
      %v3794 = vrot.slane %v3643, 5
      %v3795 = vsel %vm1808, %v3793, %v3794
      %v3796 = vrot.slane %v3644, 5
      %v3797 = vrot.slane %v3796, 4
      %v3798 = vrot.slane %v3645, 5
      %v3799 = vsel %vm1808, %v3797, %v3798
      %v3800 = vrot.slane %v3798, 4
      %v3801 = vrot.slane %v3646, 5
      %v3802 = vsel %vm1808, %v3800, %v3801
      %v3803 = vrot.slane %v3647, 5
      %v3804 = vrot.slane %v3803, 4
      %v3805 = vrot.slane %v3648, 5
      %v3806 = vsel %vm1808, %v3804, %v3805
      %v3807 = vrot.slane %v3805, 4
      %v3808 = vrot.slane %v3649, 5
      %v3809 = vsel %vm1808, %v3807, %v3808
      %v3810 = vunpack.c.l.b16 %v3701
      %v3811 = vunpack.c.l.b16 %v3704
      %v3812 = vunpack.c.l.b16 %v3708
      %v3813 = vunpack.c.l.b16 %v3711
      %v3814 = vunpack.c.l.b16 %v3715
      %v3815 = vunpack.c.l.b16 %v3718
      %v3816 = vunpack.c.l.b16 %v3722
      %v3817 = vunpack.c.l.b16 %v3725
      %v3818 = vunpack.c.l.b16 %v3729
      %v3819 = vunpack.c.l.b16 %v3732
      %v3820 = vunpack.c.l.b16 %v3736
      %v3821 = vunpack.c.l.b16 %v3739
      %v3822 = vunpack.c.l.b16 %v3743
      %v3823 = vunpack.c.l.b16 %v3746
      %v3824 = vunpack.c.l.b16 %v3750
      %v3825 = vunpack.c.l.b16 %v3753
      %v3826 = vunpack.c.l.b16 %v3757
      %v3827 = vunpack.c.l.b16 %v3760
      %v3828 = vunpack.c.l.b16 %v3764
      %v3829 = vunpack.c.l.b16 %v3767
      %v3830 = vunpack.c.l.b16 %v3771
      %v3831 = vunpack.c.l.b16 %v3774
      %v3832 = vunpack.c.l.b16 %v3778
      %v3833 = vunpack.c.l.b16 %v3781
      %v3834 = vunpack.c.l.b16 %v3785
      %v3835 = vunpack.c.l.b16 %v3788
      %v3836 = vunpack.c.l.b16 %v3792
      %v3837 = vunpack.c.l.b16 %v3795
      %v3838 = vunpack.c.l.b16 %v3799
      %v3839 = vunpack.c.l.b16 %v3802
      %v3840 = vunpack.c.l.b16 %v3806
      %v3841 = vunpack.c.l.b16 %v3809
      %v3842 = vpack.c.b16 %v3811, %v3810
      %v3843 = vpack.c.b16 %v3813, %v3812
      %v3844 = vpack.c.b16 %v3815, %v3814
      %v3845 = vpack.c.b16 %v3817, %v3816
      %v3846 = vpack.c.b16 %v3819, %v3818
      %v3847 = vpack.c.b16 %v3821, %v3820
      %v3848 = vpack.c.b16 %v3823, %v3822
      %v3849 = vpack.c.b16 %v3825, %v3824
      %v3850 = vpack.c.b16 %v3827, %v3826
      %v3851 = vpack.c.b16 %v3829, %v3828
      %v3852 = vpack.c.b16 %v3831, %v3830
      %v3853 = vpack.c.b16 %v3833, %v3832
      %v3854 = vpack.c.b16 %v3835, %v3834
      %v3855 = vpack.c.b16 %v3837, %v3836
      %v3856 = vpack.c.b16 %v3839, %v3838
      %v3857 = vpack.c.b16 %v3841, %v3840
      %3874 = vst [vmem:[#allocation3 + $0x40] sm:$0xff] %v3842
      %3875 = vst [vmem:[#allocation3 + $0x88] sm:$0xff] %v3843
      %3876 = vst [vmem:[#allocation3 + $0xd0] sm:$0xff] %v3844
      %3877 = vst [vmem:[#allocation3 + $0x118] sm:$0xff] %v3845
      %3878 = vst [vmem:[#allocation3 + $0x160] sm:$0xff] %v3846
      %3879 = vst [vmem:[#allocation3 + $0x1a8] sm:$0xff] %v3847
      %3880 = vst [vmem:[#allocation3 + $0x1f0] sm:$0xff] %v3848
      %3881 = vst [vmem:[#allocation3 + $0x238] sm:$0xff] %v3849
      %3882 = vst [vmem:[#allocation3 + $0x280] sm:$0xff] %v3850
      %3883 = vst [vmem:[#allocation3 + $0x2c8] sm:$0xff] %v3851
      %3884 = vst [vmem:[#allocation3 + $0x310] sm:$0xff] %v3852
      %3885 = vst [vmem:[#allocation3 + $0x358] sm:$0xff] %v3853
      %3886 = vst [vmem:[#allocation3 + $0x3a0] sm:$0xff] %v3854
      %3887 = vst [vmem:[#allocation3 + $0x3e8] sm:$0xff] %v3855
      %3888 = vst [vmem:[#allocation3 + $0x430] sm:$0xff] %v3856
      %3889 = vst [vmem:[#allocation3 + $0x478] sm:$0xff] %v3857
      %v3890 = vld [vmem:[#allocation3] sm:$0xff]
      %v3891 = vld [vmem:[#allocation3 + $0x8] sm:$0xff]
      %v3892 = vld [vmem:[#allocation3 + $0x10] sm:$0xff]
      %v3893 = vld [vmem:[#allocation3 + $0x18] sm:$0xff]
      %v3894 = vld [vmem:[#allocation3 + $0x20] sm:$0xff]
      %v3895 = vld [vmem:[#allocation3 + $0x28] sm:$0xff]
      %v3896 = vld [vmem:[#allocation3 + $0x30] sm:$0xff]
      %v3897 = vld [vmem:[#allocation3 + $0x38] sm:$0xff]
      %v3898 = vld [vmem:[#allocation3 + $0x40] sm:$0xff]
      %v3899 = vld [vmem:[#allocation3 + $0x48] sm:$0xff]
      %v3900 = vld [vmem:[#allocation3 + $0x50] sm:$0xff]
      %v3901 = vld [vmem:[#allocation3 + $0x58] sm:$0xff]
      %v3902 = vld [vmem:[#allocation3 + $0x60] sm:$0xff]
      %v3903 = vld [vmem:[#allocation3 + $0x68] sm:$0xff]
      %v3904 = vld [vmem:[#allocation3 + $0x70] sm:$0xff]
      %v3905 = vld [vmem:[#allocation3 + $0x78] sm:$0xff]
      %v3906 = vld [vmem:[#allocation3 + $0x80] sm:$0xff]
      %v3907 = vld [vmem:[#allocation3 + $0x88] sm:$0xff]
      %v3908 = vld [vmem:[#allocation3 + $0x90] sm:$0xff]
      %v3909 = vld [vmem:[#allocation3 + $0x98] sm:$0xff]
      %v3910 = vld [vmem:[#allocation3 + $0xa0] sm:$0xff]
      %v3911 = vld [vmem:[#allocation3 + $0xa8] sm:$0xff]
      %v3912 = vld [vmem:[#allocation3 + $0xb0] sm:$0xff]
      %v3913 = vld [vmem:[#allocation3 + $0xb8] sm:$0xff]
      %v3914 = vld [vmem:[#allocation3 + $0xc0] sm:$0xff]
      %v3915 = vld [vmem:[#allocation3 + $0xc8] sm:$0xff]
      %v3916 = vld [vmem:[#allocation3 + $0xd0] sm:$0xff]
      %v3917 = vld [vmem:[#allocation3 + $0xd8] sm:$0xff]
      %v3918 = vld [vmem:[#allocation3 + $0xe0] sm:$0xff]
      %v3919 = vld [vmem:[#allocation3 + $0xe8] sm:$0xff]
      %v3920 = vld [vmem:[#allocation3 + $0xf0] sm:$0xff]
      %v3921 = vld [vmem:[#allocation3 + $0xf8] sm:$0xff]
      %v3922 = vld [vmem:[#allocation3 + $0x100] sm:$0xff]
      %v3923 = vld [vmem:[#allocation3 + $0x108] sm:$0xff]
      %v3924 = vld [vmem:[#allocation3 + $0x110] sm:$0xff]
      %v3925 = vld [vmem:[#allocation3 + $0x118] sm:$0xff]
      %v3926 = vld [vmem:[#allocation3 + $0x120] sm:$0xff]
      %v3927 = vld [vmem:[#allocation3 + $0x128] sm:$0xff]
      %v3928 = vld [vmem:[#allocation3 + $0x130] sm:$0xff]
      %v3929 = vld [vmem:[#allocation3 + $0x138] sm:$0xff]
      %v3930 = vld [vmem:[#allocation3 + $0x140] sm:$0xff]
      %v3931 = vld [vmem:[#allocation3 + $0x148] sm:$0xff]
      %v3932 = vld [vmem:[#allocation3 + $0x150] sm:$0xff]
      %v3933 = vld [vmem:[#allocation3 + $0x158] sm:$0xff]
      %v3934 = vld [vmem:[#allocation3 + $0x160] sm:$0xff]
      %v3935 = vld [vmem:[#allocation3 + $0x168] sm:$0xff]
      %v3936 = vld [vmem:[#allocation3 + $0x170] sm:$0xff]
      %v3937 = vld [vmem:[#allocation3 + $0x178] sm:$0xff]
      %v3938 = vld [vmem:[#allocation3 + $0x180] sm:$0xff]
      %v3939 = vld [vmem:[#allocation3 + $0x188] sm:$0xff]
      %v3940 = vld [vmem:[#allocation3 + $0x190] sm:$0xff]
      %v3941 = vld [vmem:[#allocation3 + $0x198] sm:$0xff]
      %v3942 = vld [vmem:[#allocation3 + $0x1a0] sm:$0xff]
      %v3943 = vld [vmem:[#allocation3 + $0x1a8] sm:$0xff]
      %v3944 = vld [vmem:[#allocation3 + $0x1b0] sm:$0xff]
      %v3945 = vld [vmem:[#allocation3 + $0x1b8] sm:$0xff]
      %v3946 = vld [vmem:[#allocation3 + $0x1c0] sm:$0xff]
      %v3947 = vld [vmem:[#allocation3 + $0x1c8] sm:$0xff]
      %v3948 = vld [vmem:[#allocation3 + $0x1d0] sm:$0xff]
      %v3949 = vld [vmem:[#allocation3 + $0x1d8] sm:$0xff]
      %v3950 = vld [vmem:[#allocation3 + $0x1e0] sm:$0xff]
      %v3951 = vld [vmem:[#allocation3 + $0x1e8] sm:$0xff]
      %v3952 = vld [vmem:[#allocation3 + $0x1f0] sm:$0xff]
      %v3953 = vld [vmem:[#allocation3 + $0x1f8] sm:$0xff]
      %v3954 = vld [vmem:[#allocation3 + $0x200] sm:$0xff]
      %v3955 = vld [vmem:[#allocation3 + $0x208] sm:$0xff]
      %v3956 = vld [vmem:[#allocation3 + $0x210] sm:$0xff]
      %v3957 = vld [vmem:[#allocation3 + $0x218] sm:$0xff]
      %v3958 = vld [vmem:[#allocation3 + $0x220] sm:$0xff]
      %v3959 = vld [vmem:[#allocation3 + $0x228] sm:$0xff]
      %v3960 = vld [vmem:[#allocation3 + $0x230] sm:$0xff]
      %v3961 = vld [vmem:[#allocation3 + $0x238] sm:$0xff]
      %v3962 = vld [vmem:[#allocation3 + $0x240] sm:$0xff]
      %v3963 = vld [vmem:[#allocation3 + $0x248] sm:$0xff]
      %v3964 = vld [vmem:[#allocation3 + $0x250] sm:$0xff]
      %v3965 = vld [vmem:[#allocation3 + $0x258] sm:$0xff]
      %v3966 = vld [vmem:[#allocation3 + $0x260] sm:$0xff]
      %v3967 = vld [vmem:[#allocation3 + $0x268] sm:$0xff]
      %v3968 = vld [vmem:[#allocation3 + $0x270] sm:$0xff]
      %v3969 = vld [vmem:[#allocation3 + $0x278] sm:$0xff]
      %v3970 = vld [vmem:[#allocation3 + $0x280] sm:$0xff]
      %v3971 = vld [vmem:[#allocation3 + $0x288] sm:$0xff]
      %v3972 = vld [vmem:[#allocation3 + $0x290] sm:$0xff]
      %v3973 = vld [vmem:[#allocation3 + $0x298] sm:$0xff]
      %v3974 = vld [vmem:[#allocation3 + $0x2a0] sm:$0xff]
      %v3975 = vld [vmem:[#allocation3 + $0x2a8] sm:$0xff]
      %v3976 = vld [vmem:[#allocation3 + $0x2b0] sm:$0xff]
      %v3977 = vld [vmem:[#allocation3 + $0x2b8] sm:$0xff]
      %v3978 = vld [vmem:[#allocation3 + $0x2c0] sm:$0xff]
      %v3979 = vld [vmem:[#allocation3 + $0x2c8] sm:$0xff]
      %v3980 = vld [vmem:[#allocation3 + $0x2d0] sm:$0xff]
      %v3981 = vld [vmem:[#allocation3 + $0x2d8] sm:$0xff]
      %v3982 = vld [vmem:[#allocation3 + $0x2e0] sm:$0xff]
      %v3983 = vld [vmem:[#allocation3 + $0x2e8] sm:$0xff]
      %v3984 = vld [vmem:[#allocation3 + $0x2f0] sm:$0xff]
      %v3985 = vld [vmem:[#allocation3 + $0x2f8] sm:$0xff]
      %v3986 = vld [vmem:[#allocation3 + $0x300] sm:$0xff]
      %v3987 = vld [vmem:[#allocation3 + $0x308] sm:$0xff]
      %v3988 = vld [vmem:[#allocation3 + $0x310] sm:$0xff]
      %v3989 = vld [vmem:[#allocation3 + $0x318] sm:$0xff]
      %v3990 = vld [vmem:[#allocation3 + $0x320] sm:$0xff]
      %v3991 = vld [vmem:[#allocation3 + $0x328] sm:$0xff]
      %v3992 = vld [vmem:[#allocation3 + $0x330] sm:$0xff]
      %v3993 = vld [vmem:[#allocation3 + $0x338] sm:$0xff]
      %v3994 = vld [vmem:[#allocation3 + $0x340] sm:$0xff]
      %v3995 = vld [vmem:[#allocation3 + $0x348] sm:$0xff]
      %v3996 = vld [vmem:[#allocation3 + $0x350] sm:$0xff]
      %v3997 = vld [vmem:[#allocation3 + $0x358] sm:$0xff]
      %v3998 = vld [vmem:[#allocation3 + $0x360] sm:$0xff]
      %v3999 = vld [vmem:[#allocation3 + $0x368] sm:$0xff]
      %v4000 = vld [vmem:[#allocation3 + $0x370] sm:$0xff]
      %v4001 = vld [vmem:[#allocation3 + $0x378] sm:$0xff]
      %v4002 = vld [vmem:[#allocation3 + $0x380] sm:$0xff]
      %v4003 = vld [vmem:[#allocation3 + $0x388] sm:$0xff]
      %v4004 = vld [vmem:[#allocation3 + $0x390] sm:$0xff]
      %v4005 = vld [vmem:[#allocation3 + $0x398] sm:$0xff]
      %v4006 = vld [vmem:[#allocation3 + $0x3a0] sm:$0xff]
      %v4007 = vld [vmem:[#allocation3 + $0x3a8] sm:$0xff]
      %v4008 = vld [vmem:[#allocation3 + $0x3b0] sm:$0xff]
      %v4009 = vld [vmem:[#allocation3 + $0x3b8] sm:$0xff]
      %v4010 = vld [vmem:[#allocation3 + $0x3c0] sm:$0xff]
      %v4011 = vld [vmem:[#allocation3 + $0x3c8] sm:$0xff]
      %v4012 = vld [vmem:[#allocation3 + $0x3d0] sm:$0xff]
      %v4013 = vld [vmem:[#allocation3 + $0x3d8] sm:$0xff]
      %v4014 = vld [vmem:[#allocation3 + $0x3e0] sm:$0xff]
      %v4015 = vld [vmem:[#allocation3 + $0x3e8] sm:$0xff]
      %v4016 = vld [vmem:[#allocation3 + $0x3f0] sm:$0xff]
      %v4017 = vld [vmem:[#allocation3 + $0x3f8] sm:$0xff]
      %v4018 = vld [vmem:[#allocation3 + $0x400] sm:$0xff]
      %v4019 = vld [vmem:[#allocation3 + $0x408] sm:$0xff]
      %v4020 = vld [vmem:[#allocation3 + $0x410] sm:$0xff]
      %v4021 = vld [vmem:[#allocation3 + $0x418] sm:$0xff]
      %v4022 = vld [vmem:[#allocation3 + $0x420] sm:$0xff]
      %v4023 = vld [vmem:[#allocation3 + $0x428] sm:$0xff]
      %v4024 = vld [vmem:[#allocation3 + $0x430] sm:$0xff]
      %v4025 = vld [vmem:[#allocation3 + $0x438] sm:$0xff]
      %v4026 = vld [vmem:[#allocation3 + $0x440] sm:$0xff]
      %v4027 = vld [vmem:[#allocation3 + $0x448] sm:$0xff]
      %v4028 = vld [vmem:[#allocation3 + $0x450] sm:$0xff]
      %v4029 = vld [vmem:[#allocation3 + $0x458] sm:$0xff]
      %v4030 = vld [vmem:[#allocation3 + $0x460] sm:$0xff]
      %v4031 = vld [vmem:[#allocation3 + $0x468] sm:$0xff]
      %v4032 = vld [vmem:[#allocation3 + $0x470] sm:$0xff]
      %v4033 = vld [vmem:[#allocation3 + $0x478] sm:$0xff]
      %v4034 = vld [vmem:[%s3] sm:$0xf]
      %v4035 = vld [vmem:[%s3 + $0x4] sm:$0xf]
      %v4036 = vld [vmem:[%s3 + $0x8] sm:$0xf]
      %v4037 = vld [vmem:[%s3 + $0xc] sm:$0xf]
      %v4038 = vld [vmem:[%s3 + $0x10] sm:$0xf]
      %v4039 = vld [vmem:[%s3 + $0x14] sm:$0xf]
      %v4040 = vld [vmem:[%s3 + $0x18] sm:$0xf]
      %v4041 = vld [vmem:[%s3 + $0x1c] sm:$0xf]
      %v4042 = vld [vmem:[%s3 + $0x20] sm:$0xf]
      %v4043 = vld [vmem:[%s3 + $0x24] sm:$0xf]
      %v4044 = vld [vmem:[%s3 + $0x28] sm:$0xf]
      %v4045 = vld [vmem:[%s3 + $0x2c] sm:$0xf]
      %v4046 = vld [vmem:[%s3 + $0x30] sm:$0xf]
      %v4047 = vld [vmem:[%s3 + $0x34] sm:$0xf]
      %v4048 = vld [vmem:[%s3 + $0x38] sm:$0xf]
      %v4049 = vld [vmem:[%s3 + $0x3c] sm:$0xf]
      %v4050 = vld [vmem:[%s3 + $0x40] sm:$0xf]
      %v4051 = vld [vmem:[%s3 + $0x44] sm:$0xf]
      %v4052 = vld [vmem:[%s3 + $0x48] sm:$0xf]
      %v4053 = vld [vmem:[%s3 + $0x4c] sm:$0xf]
      %v4054 = vld [vmem:[%s3 + $0x50] sm:$0xf]
      %v4055 = vld [vmem:[%s3 + $0x54] sm:$0xf]
      %v4056 = vld [vmem:[%s3 + $0x58] sm:$0xf]
      %v4057 = vld [vmem:[%s3 + $0x5c] sm:$0xf]
      %v4058 = vld [vmem:[%s3 + $0x60] sm:$0xf]
      %v4059 = vld [vmem:[%s3 + $0x64] sm:$0xf]
      %v4060 = vld [vmem:[%s3 + $0x68] sm:$0xf]
      %v4061 = vld [vmem:[%s3 + $0x6c] sm:$0xf]
      %v4062 = vld [vmem:[%s3 + $0x70] sm:$0xf]
      %v4063 = vld [vmem:[%s3 + $0x74] sm:$0xf]
      %v4064 = vld [vmem:[%s3 + $0x78] sm:$0xf]
      %v4065 = vld [vmem:[%s3 + $0x7c] sm:$0xf]
      %v4066 = vld [vmem:[%s3 + $0x80] sm:$0xf]
      %v4067 = vld [vmem:[%s3 + $0x84] sm:$0xf]
      %v4068 = vld [vmem:[%s3 + $0x88] sm:$0xf]
      %v4069 = vld [vmem:[%s3 + $0x8c] sm:$0xf]
      %v4070 = vld [vmem:[%s3 + $0x90] sm:$0xf]
      %v4071 = vld [vmem:[%s3 + $0x94] sm:$0xf]
      %v4072 = vld [vmem:[%s3 + $0x98] sm:$0xf]
      %v4073 = vld [vmem:[%s3 + $0x9c] sm:$0xf]
      %v4074 = vld [vmem:[%s3 + $0xa0] sm:$0xf]
      %v4075 = vld [vmem:[%s3 + $0xa4] sm:$0xf]
      %v4076 = vld [vmem:[%s3 + $0xa8] sm:$0xf]
      %v4077 = vld [vmem:[%s3 + $0xac] sm:$0xf]
      %v4078 = vld [vmem:[%s3 + $0xb0] sm:$0xf]
      %v4079 = vld [vmem:[%s3 + $0xb4] sm:$0xf]
      %v4080 = vld [vmem:[%s3 + $0xb8] sm:$0xf]
      %v4081 = vld [vmem:[%s3 + $0xbc] sm:$0xf]
      %v4082 = vld [vmem:[%s3 + $0xc0] sm:$0xf]
      %v4083 = vld [vmem:[%s3 + $0xc4] sm:$0xf]
      %v4084 = vld [vmem:[%s3 + $0xc8] sm:$0xf]
      %v4085 = vld [vmem:[%s3 + $0xcc] sm:$0xf]
      %v4086 = vld [vmem:[%s3 + $0xd0] sm:$0xf]
      %v4087 = vld [vmem:[%s3 + $0xd4] sm:$0xf]
      %v4088 = vld [vmem:[%s3 + $0xd8] sm:$0xf]
      %v4089 = vld [vmem:[%s3 + $0xdc] sm:$0xf]
      %v4090 = vld [vmem:[%s3 + $0xe0] sm:$0xf]
      %v4091 = vld [vmem:[%s3 + $0xe4] sm:$0xf]
      %v4092 = vld [vmem:[%s3 + $0xe8] sm:$0xf]
      %v4093 = vld [vmem:[%s3 + $0xec] sm:$0xf]
      %v4094 = vld [vmem:[%s3 + $0xf0] sm:$0xf]
      %v4095 = vld [vmem:[%s3 + $0xf4] sm:$0xf]
      %v4096 = vld [vmem:[%s3 + $0xf8] sm:$0xf]
      %v4097 = vld [vmem:[%s3 + $0xfc] sm:$0xf]
      %v4098 = vld [vmem:[%s3 + $0x100] sm:$0xf]
      %v4099 = vld [vmem:[%s3 + $0x104] sm:$0xf]
      %v4100 = vld [vmem:[%s3 + $0x108] sm:$0xf]
      %v4101 = vld [vmem:[%s3 + $0x10c] sm:$0xf]
      %v4102 = vld [vmem:[%s3 + $0x110] sm:$0xf]
      %v4103 = vld [vmem:[%s3 + $0x114] sm:$0xf]
      %v4104 = vld [vmem:[%s3 + $0x118] sm:$0xf]
      %v4105 = vld [vmem:[%s3 + $0x11c] sm:$0xf]
      %v4106 = vld [vmem:[%s3 + $0x120] sm:$0xf]
      %v4107 = vld [vmem:[%s3 + $0x124] sm:$0xf]
      %v4108 = vld [vmem:[%s3 + $0x128] sm:$0xf]
      %v4109 = vld [vmem:[%s3 + $0x12c] sm:$0xf]
      %v4110 = vld [vmem:[%s3 + $0x130] sm:$0xf]
      %v4111 = vld [vmem:[%s3 + $0x134] sm:$0xf]
      %v4112 = vld [vmem:[%s3 + $0x138] sm:$0xf]
      %v4113 = vld [vmem:[%s3 + $0x13c] sm:$0xf]
      %v4114 = vld [vmem:[%s3 + $0x140] sm:$0xf]
      %v4115 = vld [vmem:[%s3 + $0x144] sm:$0xf]
      %v4116 = vld [vmem:[%s3 + $0x148] sm:$0xf]
      %v4117 = vld [vmem:[%s3 + $0x14c] sm:$0xf]
      %v4118 = vld [vmem:[%s3 + $0x150] sm:$0xf]
      %v4119 = vld [vmem:[%s3 + $0x154] sm:$0xf]
      %v4120 = vld [vmem:[%s3 + $0x158] sm:$0xf]
      %v4121 = vld [vmem:[%s3 + $0x15c] sm:$0xf]
      %v4122 = vld [vmem:[%s3 + $0x160] sm:$0xf]
      %v4123 = vld [vmem:[%s3 + $0x164] sm:$0xf]
      %v4124 = vld [vmem:[%s3 + $0x168] sm:$0xf]
      %v4125 = vld [vmem:[%s3 + $0x16c] sm:$0xf]
      %v4126 = vld [vmem:[%s3 + $0x170] sm:$0xf]
      %v4127 = vld [vmem:[%s3 + $0x174] sm:$0xf]
      %v4128 = vld [vmem:[%s3 + $0x178] sm:$0xf]
      %v4129 = vld [vmem:[%s3 + $0x17c] sm:$0xf]
      %v4130 = vld [vmem:[%s3 + $0x180] sm:$0xf]
      %v4131 = vld [vmem:[%s3 + $0x184] sm:$0xf]
      %v4132 = vld [vmem:[%s3 + $0x188] sm:$0xf]
      %v4133 = vld [vmem:[%s3 + $0x18c] sm:$0xf]
      %v4134 = vld [vmem:[%s3 + $0x190] sm:$0xf]
      %v4135 = vld [vmem:[%s3 + $0x194] sm:$0xf]
      %v4136 = vld [vmem:[%s3 + $0x198] sm:$0xf]
      %v4137 = vld [vmem:[%s3 + $0x19c] sm:$0xf]
      %v4138 = vld [vmem:[%s3 + $0x1a0] sm:$0xf]
      %v4139 = vld [vmem:[%s3 + $0x1a4] sm:$0xf]
      %v4140 = vld [vmem:[%s3 + $0x1a8] sm:$0xf]
      %v4141 = vld [vmem:[%s3 + $0x1ac] sm:$0xf]
      %v4142 = vld [vmem:[%s3 + $0x1b0] sm:$0xf]
      %v4143 = vld [vmem:[%s3 + $0x1b4] sm:$0xf]
      %v4144 = vld [vmem:[%s3 + $0x1b8] sm:$0xf]
      %v4145 = vld [vmem:[%s3 + $0x1bc] sm:$0xf]
      %v4146 = vld [vmem:[%s3 + $0x1c0] sm:$0xf]
      %v4147 = vld [vmem:[%s3 + $0x1c4] sm:$0xf]
      %v4148 = vld [vmem:[%s3 + $0x1c8] sm:$0xf]
      %v4149 = vld [vmem:[%s3 + $0x1cc] sm:$0xf]
      %v4150 = vld [vmem:[%s3 + $0x1d0] sm:$0xf]
      %v4151 = vld [vmem:[%s3 + $0x1d4] sm:$0xf]
      %v4152 = vld [vmem:[%s3 + $0x1d8] sm:$0xf]
      %v4153 = vld [vmem:[%s3 + $0x1dc] sm:$0xf]
      %v4154 = vld [vmem:[%s3 + $0x1e0] sm:$0xf]
      %v4155 = vld [vmem:[%s3 + $0x1e4] sm:$0xf]
      %v4156 = vld [vmem:[%s3 + $0x1e8] sm:$0xf]
      %v4157 = vld [vmem:[%s3 + $0x1ec] sm:$0xf]
      %v4158 = vld [vmem:[%s3 + $0x1f0] sm:$0xf]
      %v4159 = vld [vmem:[%s3 + $0x1f4] sm:$0xf]
      %v4160 = vld [vmem:[%s3 + $0x1f8] sm:$0xf]
      %v4161 = vld [vmem:[%s3 + $0x1fc] sm:$0xf]
      %v4162 = vld [vmem:[%s3 + $0x200] sm:$0xf]
      %v4163 = vld [vmem:[%s3 + $0x204] sm:$0xf]
      %v4164 = vld [vmem:[%s3 + $0x208] sm:$0xf]
      %v4165 = vld [vmem:[%s3 + $0x20c] sm:$0xf]
      %v4166 = vld [vmem:[%s3 + $0x210] sm:$0xf]
      %v4167 = vld [vmem:[%s3 + $0x214] sm:$0xf]
      %v4168 = vld [vmem:[%s3 + $0x218] sm:$0xf]
      %v4169 = vld [vmem:[%s3 + $0x21c] sm:$0xf]
      %v4170 = vld [vmem:[%s3 + $0x220] sm:$0xf]
      %v4171 = vld [vmem:[%s3 + $0x224] sm:$0xf]
      %v4172 = vld [vmem:[%s3 + $0x228] sm:$0xf]
      %v4173 = vld [vmem:[%s3 + $0x22c] sm:$0xf]
      %v4174 = vld [vmem:[%s3 + $0x230] sm:$0xf]
      %v4175 = vld [vmem:[%s3 + $0x234] sm:$0xf]
      %v4176 = vld [vmem:[%s3 + $0x238] sm:$0xf]
      %v4177 = vld [vmem:[%s3 + $0x23c] sm:$0xf]
      %v4322 = vunpack.c.l.b16 %v4034
      %v4323 = vunpack.c.l.b16 %v4035
      %v4324 = vunpack.c.l.b16 %v4036
      %v4325 = vunpack.c.l.b16 %v4037
      %v4326 = vunpack.c.l.b16 %v4038
      %v4327 = vunpack.c.l.b16 %v4039
      %v4328 = vunpack.c.l.b16 %v4040
      %v4329 = vunpack.c.l.b16 %v4041
      %v4330 = vunpack.c.l.b16 %v4042
      %v4331 = vunpack.c.l.b16 %v4043
      %v4332 = vunpack.c.l.b16 %v4044
      %v4333 = vunpack.c.l.b16 %v4045
      %v4334 = vunpack.c.l.b16 %v4046
      %v4335 = vunpack.c.l.b16 %v4047
      %v4336 = vunpack.c.l.b16 %v4048
      %v4337 = vunpack.c.l.b16 %v4049
      %v4338 = vunpack.c.l.b16 %v4050
      %v4339 = vunpack.c.l.b16 %v4051
      %v4340 = vunpack.c.l.b16 %v4052
      %v4341 = vunpack.c.l.b16 %v4053
      %v4342 = vunpack.c.l.b16 %v4054
      %v4343 = vunpack.c.l.b16 %v4055
      %v4344 = vunpack.c.l.b16 %v4056
      %v4345 = vunpack.c.l.b16 %v4057
      %v4346 = vunpack.c.l.b16 %v4058
      %v4347 = vunpack.c.l.b16 %v4059
      %v4348 = vunpack.c.l.b16 %v4060
      %v4349 = vunpack.c.l.b16 %v4061
      %v4350 = vunpack.c.l.b16 %v4062
      %v4351 = vunpack.c.l.b16 %v4063
      %v4352 = vunpack.c.l.b16 %v4064
      %v4353 = vunpack.c.l.b16 %v4065
      %v4354 = vunpack.c.l.b16 %v4066
      %v4355 = vunpack.c.l.b16 %v4067
      %v4356 = vunpack.c.l.b16 %v4068
      %v4357 = vunpack.c.l.b16 %v4069
      %v4358 = vunpack.c.l.b16 %v4070
      %v4359 = vunpack.c.l.b16 %v4071
      %v4360 = vunpack.c.l.b16 %v4072
      %v4361 = vunpack.c.l.b16 %v4073
      %v4362 = vunpack.c.l.b16 %v4074
      %v4363 = vunpack.c.l.b16 %v4075
      %v4364 = vunpack.c.l.b16 %v4076
      %v4365 = vunpack.c.l.b16 %v4077
      %v4366 = vunpack.c.l.b16 %v4078
      %v4367 = vunpack.c.l.b16 %v4079
      %v4368 = vunpack.c.l.b16 %v4080
      %v4369 = vunpack.c.l.b16 %v4081
      %v4370 = vunpack.c.l.b16 %v4082
      %v4371 = vunpack.c.l.b16 %v4083
      %v4372 = vunpack.c.l.b16 %v4084
      %v4373 = vunpack.c.l.b16 %v4085
      %v4374 = vunpack.c.l.b16 %v4086
      %v4375 = vunpack.c.l.b16 %v4087
      %v4376 = vunpack.c.l.b16 %v4088
      %v4377 = vunpack.c.l.b16 %v4089
      %v4378 = vunpack.c.l.b16 %v4090
      %v4379 = vunpack.c.l.b16 %v4091
      %v4380 = vunpack.c.l.b16 %v4092
      %v4381 = vunpack.c.l.b16 %v4093
      %v4382 = vunpack.c.l.b16 %v4094
      %v4383 = vunpack.c.l.b16 %v4095
      %v4384 = vunpack.c.l.b16 %v4096
      %v4385 = vunpack.c.l.b16 %v4097
      %v4386 = vunpack.c.l.b16 %v4098
      %v4387 = vunpack.c.l.b16 %v4099
      %v4388 = vunpack.c.l.b16 %v4100
      %v4389 = vunpack.c.l.b16 %v4101
      %v4390 = vunpack.c.l.b16 %v4102
      %v4391 = vunpack.c.l.b16 %v4103
      %v4392 = vunpack.c.l.b16 %v4104
      %v4393 = vunpack.c.l.b16 %v4105
      %v4394 = vunpack.c.l.b16 %v4106
      %v4395 = vunpack.c.l.b16 %v4107
      %v4396 = vunpack.c.l.b16 %v4108
      %v4397 = vunpack.c.l.b16 %v4109
      %v4398 = vunpack.c.l.b16 %v4110
      %v4399 = vunpack.c.l.b16 %v4111
      %v4400 = vunpack.c.l.b16 %v4112
      %v4401 = vunpack.c.l.b16 %v4113
      %v4402 = vunpack.c.l.b16 %v4114
      %v4403 = vunpack.c.l.b16 %v4115
      %v4404 = vunpack.c.l.b16 %v4116
      %v4405 = vunpack.c.l.b16 %v4117
      %v4406 = vunpack.c.l.b16 %v4118
      %v4407 = vunpack.c.l.b16 %v4119
      %v4408 = vunpack.c.l.b16 %v4120
      %v4409 = vunpack.c.l.b16 %v4121
      %v4410 = vunpack.c.l.b16 %v4122
      %v4411 = vunpack.c.l.b16 %v4123
      %v4412 = vunpack.c.l.b16 %v4124
      %v4413 = vunpack.c.l.b16 %v4125
      %v4414 = vunpack.c.l.b16 %v4126
      %v4415 = vunpack.c.l.b16 %v4127
      %v4416 = vunpack.c.l.b16 %v4128
      %v4417 = vunpack.c.l.b16 %v4129
      %v4418 = vunpack.c.l.b16 %v4130
      %v4419 = vunpack.c.l.b16 %v4131
      %v4420 = vunpack.c.l.b16 %v4132
      %v4421 = vunpack.c.l.b16 %v4133
      %v4422 = vunpack.c.l.b16 %v4134
      %v4423 = vunpack.c.l.b16 %v4135
      %v4424 = vunpack.c.l.b16 %v4136
      %v4425 = vunpack.c.l.b16 %v4137
      %v4426 = vunpack.c.l.b16 %v4138
      %v4427 = vunpack.c.l.b16 %v4139
      %v4428 = vunpack.c.l.b16 %v4140
      %v4429 = vunpack.c.l.b16 %v4141
      %v4430 = vunpack.c.l.b16 %v4142
      %v4431 = vunpack.c.l.b16 %v4143
      %v4432 = vunpack.c.l.b16 %v4144
      %v4433 = vunpack.c.l.b16 %v4145
      %v4434 = vunpack.c.l.b16 %v4146
      %v4435 = vunpack.c.l.b16 %v4147
      %v4436 = vunpack.c.l.b16 %v4148
      %v4437 = vunpack.c.l.b16 %v4149
      %v4438 = vunpack.c.l.b16 %v4150
      %v4439 = vunpack.c.l.b16 %v4151
      %v4440 = vunpack.c.l.b16 %v4152
      %v4441 = vunpack.c.l.b16 %v4153
      %v4442 = vunpack.c.l.b16 %v4154
      %v4443 = vunpack.c.l.b16 %v4155
      %v4444 = vunpack.c.l.b16 %v4156
      %v4445 = vunpack.c.l.b16 %v4157
      %v4446 = vunpack.c.l.b16 %v4158
      %v4447 = vunpack.c.l.b16 %v4159
      %v4448 = vunpack.c.l.b16 %v4160
      %v4449 = vunpack.c.l.b16 %v4161
      %v4450 = vunpack.c.l.b16 %v4162
      %v4451 = vunpack.c.l.b16 %v4163
      %v4452 = vunpack.c.l.b16 %v4164
      %v4453 = vunpack.c.l.b16 %v4165
      %v4454 = vunpack.c.l.b16 %v4166
      %v4455 = vunpack.c.l.b16 %v4167
      %v4456 = vunpack.c.l.b16 %v4168
      %v4457 = vunpack.c.l.b16 %v4169
      %v4458 = vunpack.c.l.b16 %v4170
      %v4459 = vunpack.c.l.b16 %v4171
      %v4460 = vunpack.c.l.b16 %v4172
      %v4461 = vunpack.c.l.b16 %v4173
      %v4462 = vunpack.c.l.b16 %v4174
      %v4463 = vunpack.c.l.b16 %v4175
      %v4464 = vunpack.c.l.b16 %v4176
      %v4465 = vunpack.c.l.b16 %v4177
      %v4466 = vpack.c.b16 %v4323, %v4322
      %v4467 = vpack.c.b16 %v4325, %v4324
      %v4468 = vpack.c.b16 %v4327, %v4326
      %v4469 = vpack.c.b16 %v4329, %v4328
      %v4470 = vpack.c.b16 %v4331, %v4330
      %v4471 = vpack.c.b16 %v4333, %v4332
      %v4472 = vpack.c.b16 %v4335, %v4334
      %v4473 = vpack.c.b16 %v4337, %v4336
      %v4474 = vpack.c.b16 %v4339, %v4338
      %v4475 = vpack.c.b16 %v4341, %v4340
      %v4476 = vpack.c.b16 %v4343, %v4342
      %v4477 = vpack.c.b16 %v4345, %v4344
      %v4478 = vpack.c.b16 %v4347, %v4346
      %v4479 = vpack.c.b16 %v4349, %v4348
      %v4480 = vpack.c.b16 %v4351, %v4350
      %v4481 = vpack.c.b16 %v4353, %v4352
      %v4482 = vpack.c.b16 %v4355, %v4354
      %v4483 = vpack.c.b16 %v4357, %v4356
      %v4484 = vpack.c.b16 %v4359, %v4358
      %v4485 = vpack.c.b16 %v4361, %v4360
      %v4486 = vpack.c.b16 %v4363, %v4362
      %v4487 = vpack.c.b16 %v4365, %v4364
      %v4488 = vpack.c.b16 %v4367, %v4366
      %v4489 = vpack.c.b16 %v4369, %v4368
      %v4490 = vpack.c.b16 %v4371, %v4370
      %v4491 = vpack.c.b16 %v4373, %v4372
      %v4492 = vpack.c.b16 %v4375, %v4374
      %v4493 = vpack.c.b16 %v4377, %v4376
      %v4494 = vpack.c.b16 %v4379, %v4378
      %v4495 = vpack.c.b16 %v4381, %v4380
      %v4496 = vpack.c.b16 %v4383, %v4382
      %v4497 = vpack.c.b16 %v4385, %v4384
      %v4498 = vpack.c.b16 %v4387, %v4386
      %v4499 = vpack.c.b16 %v4389, %v4388
      %v4500 = vpack.c.b16 %v4391, %v4390
      %v4501 = vpack.c.b16 %v4393, %v4392
      %v4502 = vpack.c.b16 %v4395, %v4394
      %v4503 = vpack.c.b16 %v4397, %v4396
      %v4504 = vpack.c.b16 %v4399, %v4398
      %v4505 = vpack.c.b16 %v4401, %v4400
      %v4506 = vpack.c.b16 %v4403, %v4402
      %v4507 = vpack.c.b16 %v4405, %v4404
      %v4508 = vpack.c.b16 %v4407, %v4406
      %v4509 = vpack.c.b16 %v4409, %v4408
      %v4510 = vpack.c.b16 %v4411, %v4410
      %v4511 = vpack.c.b16 %v4413, %v4412
      %v4512 = vpack.c.b16 %v4415, %v4414
      %v4513 = vpack.c.b16 %v4417, %v4416
      %v4514 = vpack.c.b16 %v4419, %v4418
      %v4515 = vpack.c.b16 %v4421, %v4420
      %v4516 = vpack.c.b16 %v4423, %v4422
      %v4517 = vpack.c.b16 %v4425, %v4424
      %v4518 = vpack.c.b16 %v4427, %v4426
      %v4519 = vpack.c.b16 %v4429, %v4428
      %v4520 = vpack.c.b16 %v4431, %v4430
      %v4521 = vpack.c.b16 %v4433, %v4432
      %v4522 = vpack.c.b16 %v4435, %v4434
      %v4523 = vpack.c.b16 %v4437, %v4436
      %v4524 = vpack.c.b16 %v4439, %v4438
      %v4525 = vpack.c.b16 %v4441, %v4440
      %v4526 = vpack.c.b16 %v4443, %v4442
      %v4527 = vpack.c.b16 %v4445, %v4444
      %v4528 = vpack.c.b16 %v4447, %v4446
      %v4529 = vpack.c.b16 %v4449, %v4448
      %v4530 = vpack.c.b16 %v4451, %v4450
      %v4531 = vpack.c.b16 %v4453, %v4452
      %v4532 = vpack.c.b16 %v4455, %v4454
      %v4533 = vpack.c.b16 %v4457, %v4456
      %v4534 = vpack.c.b16 %v4459, %v4458
      %v4535 = vpack.c.b16 %v4461, %v4460
      %v4536 = vpack.c.b16 %v4463, %v4462
      %v4537 = vpack.c.b16 %v4465, %v4464
      %4610 = vmatprep.subr.bf16.mxu0 0
      %4611 = vmatpush1.bf16.msra.mxu0 %v4466
      %4612 = vmatprep.subr.bf16.mxu0 0
      %4613 = vmatpush1.bf16.msra.mxu0 %v4467
      %4614 = vmatprep.subr.bf16.mxu0 0
      %4615 = vmatpush1.bf16.msra.mxu0 %v4468
      %4616 = vmatprep.subr.bf16.mxu0 0
      %4617 = vmatpush1.bf16.msra.mxu0 %v4469
      %4618 = vmatprep.subr.bf16.mxu0 0
      %4619 = vmatpush1.bf16.msra.mxu0 %v4470
      %4620 = vmatprep.subr.bf16.mxu0 0
      %4621 = vmatpush1.bf16.msra.mxu0 %v4471
      %4622 = vmatprep.subr.bf16.mxu0 0
      %4623 = vmatpush1.bf16.msra.mxu0 %v4472
      %4624 = vmatprep.subr.bf16.mxu0 0
      %4625 = vmatpush1.bf16.msra.mxu0 %v4473
      %4626 = vmatprep.subr.bf16.mxu0 0
      %4627 = vmatpush1.bf16.msra.mxu0 %v4474
      %4628 = vmatprep.subr.bf16.mxu0 0
      %4629 = vmatpush1.bf16.msra.mxu0 %v4475
      %4630 = vmatprep.subr.bf16.mxu0 0
      %4631 = vmatpush1.bf16.msra.mxu0 %v4476
      %4632 = vmatprep.subr.bf16.mxu0 0
      %4633 = vmatpush1.bf16.msra.mxu0 %v4477
      %4634 = vmatprep.subr.bf16.mxu0 0
      %4635 = vmatpush1.bf16.msra.mxu0 %v4478
      %4636 = vmatprep.subr.bf16.mxu0 0
      %4637 = vmatpush1.bf16.msra.mxu0 %v4479
      %4638 = vmatprep.subr.bf16.mxu0 0
      %4639 = vmatpush1.bf16.msra.mxu0 %v4480
      %4640 = vmatprep.subr.bf16.mxu0 0
      %4641 = vmatpush1.bf16.msra.mxu0 %v4481
      %4642 = vmatprep.mubr.bf16.mxu0 %v3891
      %4643 = vmatmul.mubr.bf16.gmra.mrb[0].mxu0 %v3890
      %v4644 = vpop.f32.mrb[0].mxu0
      %v4645 = vadd.f32 0.0, %v4644
      %v4646 = vpop.f32.mrb[0].mxu0
      %v4647 = vpop.f32.mrb[0].mxu0
      %v4648 = vadd.f32 0.0, %v4647
      %v4649 = vpop.f32.mrb[0].mxu0
      %4650 = vmatprep.mubr.bf16.mxu0 %v3900
      %4651 = vmatmul.mubr.bf16.gmra.mrb[0].mxu0 %v3899
      %v4652 = vpop.f32.mrb[0].mxu0
      %v4653 = vadd.f32 0.0, %v4652
      %v4654 = vpop.f32.mrb[0].mxu0
      %v4655 = vpop.f32.mrb[0].mxu0
      %v4656 = vadd.f32 0.0, %v4655
      %v4657 = vpop.f32.mrb[0].mxu0
      %4658 = vmatprep.mubr.bf16.mxu0 %v3909
      %4659 = vmatmul.mubr.bf16.gmra.mrb[0].mxu0 %v3908
      %v4660 = vpop.f32.mrb[0].mxu0
      %v4661 = vadd.f32 0.0, %v4660
      %v4662 = vpop.f32.mrb[0].mxu0
      %v4663 = vpop.f32.mrb[0].mxu0
      %v4664 = vadd.f32 0.0, %v4663
      %v4665 = vpop.f32.mrb[0].mxu0
      %4666 = vmatprep.mubr.bf16.mxu0 %v3918
      %4667 = vmatmul.mubr.bf16.gmra.mrb[0].mxu0 %v3917
      %v4668 = vpop.f32.mrb[0].mxu0
      %v4669 = vadd.f32 0.0, %v4668
      %v4670 = vpop.f32.mrb[0].mxu0
      %v4671 = vpop.f32.mrb[0].mxu0
      %v4672 = vadd.f32 0.0, %v4671
      %v4673 = vpop.f32.mrb[0].mxu0
      %4674 = vmatprep.mubr.bf16.mxu0 %v3927
      %4675 = vmatmul.mubr.bf16.gmra.mrb[0].mxu0 %v3926
      %v4676 = vpop.f32.mrb[0].mxu0
      %v4677 = vadd.f32 0.0, %v4676
      %v4678 = vpop.f32.mrb[0].mxu0
      %v4679 = vpop.f32.mrb[0].mxu0
      %v4680 = vadd.f32 0.0, %v4679
      %v4681 = vpop.f32.mrb[0].mxu0
      %4682 = vmatprep.mubr.bf16.mxu0 %v3936
      %4683 = vmatmul.mubr.bf16.gmra.mrb[0].mxu0 %v3935
      %v4684 = vpop.f32.mrb[0].mxu0
      %v4685 = vadd.f32 0.0, %v4684
      %v4686 = vpop.f32.mrb[0].mxu0
      %v4687 = vpop.f32.mrb[0].mxu0
      %v4688 = vadd.f32 0.0, %v4687
      %v4689 = vpop.f32.mrb[0].mxu0
      %4690 = vmatprep.mubr.bf16.mxu0 %v3945
      %4691 = vmatmul.mubr.bf16.gmra.mrb[0].mxu0 %v3944
      %v4692 = vpop.f32.mrb[0].mxu0
      %v4693 = vadd.f32 0.0, %v4692
      %v4694 = vpop.f32.mrb[0].mxu0
      %v4695 = vpop.f32.mrb[0].mxu0
      %v4696 = vadd.f32 0.0, %v4695
      %v4697 = vpop.f32.mrb[0].mxu0
      %4698 = vmatprep.mubr.bf16.mxu0 %v3954
      %4699 = vmatmul.mubr.bf16.gmra.mrb[0].mxu0 %v3953
      %v4700 = vpop.f32.mrb[0].mxu0
      %v4701 = vadd.f32 0.0, %v4700
      %v4702 = vpop.f32.mrb[0].mxu0
      %v4703 = vpop.f32.mrb[0].mxu0
      %v4704 = vadd.f32 0.0, %v4703
      %v4705 = vpop.f32.mrb[0].mxu0
      %4706 = vmatprep.mubr.bf16.mxu0 %v3963
      %4707 = vmatmul.mubr.bf16.gmra.mrb[0].mxu0 %v3962
      %v4708 = vpop.f32.mrb[0].mxu0
      %v4709 = vadd.f32 0.0, %v4708
      %v4710 = vpop.f32.mrb[0].mxu0
      %v4711 = vpop.f32.mrb[0].mxu0
      %v4712 = vadd.f32 0.0, %v4711
      %v4713 = vpop.f32.mrb[0].mxu0
      %4714 = vmatprep.mubr.bf16.mxu0 %v3972
      %4715 = vmatmul.mubr.bf16.gmra.mrb[0].mxu0 %v3971
      %v4716 = vpop.f32.mrb[0].mxu0
      %v4717 = vadd.f32 0.0, %v4716
      %v4718 = vpop.f32.mrb[0].mxu0
      %v4719 = vpop.f32.mrb[0].mxu0
      %v4720 = vadd.f32 0.0, %v4719
      %v4721 = vpop.f32.mrb[0].mxu0
      %4722 = vmatprep.mubr.bf16.mxu0 %v3981
      %4723 = vmatmul.mubr.bf16.gmra.mrb[0].mxu0 %v3980
      %v4724 = vpop.f32.mrb[0].mxu0
      %v4725 = vadd.f32 0.0, %v4724
      %v4726 = vpop.f32.mrb[0].mxu0
      %v4727 = vpop.f32.mrb[0].mxu0
      %v4728 = vadd.f32 0.0, %v4727
      %v4729 = vpop.f32.mrb[0].mxu0
      %4730 = vmatprep.mubr.bf16.mxu0 %v3990
      %4731 = vmatmul.mubr.bf16.gmra.mrb[0].mxu0 %v3989
      %v4732 = vpop.f32.mrb[0].mxu0
      %v4733 = vadd.f32 0.0, %v4732
      %v4734 = vpop.f32.mrb[0].mxu0
      %v4735 = vpop.f32.mrb[0].mxu0
      %v4736 = vadd.f32 0.0, %v4735
      %v4737 = vpop.f32.mrb[0].mxu0
      %4738 = vmatprep.mubr.bf16.mxu0 %v3999
      %4739 = vmatmul.mubr.bf16.gmra.mrb[0].mxu0 %v3998
      %v4740 = vpop.f32.mrb[0].mxu0
      %v4741 = vadd.f32 0.0, %v4740
      %v4742 = vpop.f32.mrb[0].mxu0
      %v4743 = vpop.f32.mrb[0].mxu0
      %v4744 = vadd.f32 0.0, %v4743
      %v4745 = vpop.f32.mrb[0].mxu0
      %4746 = vmatprep.mubr.bf16.mxu0 %v4008
      %4747 = vmatmul.mubr.bf16.gmra.mrb[0].mxu0 %v4007
      %v4748 = vpop.f32.mrb[0].mxu0
      %v4749 = vadd.f32 0.0, %v4748
      %v4750 = vpop.f32.mrb[0].mxu0
      %v4751 = vpop.f32.mrb[0].mxu0
      %v4752 = vadd.f32 0.0, %v4751
      %v4753 = vpop.f32.mrb[0].mxu0
      %4754 = vmatprep.mubr.bf16.mxu0 %v4017
      %4755 = vmatmul.mubr.bf16.gmra.mrb[0].mxu0 %v4016
      %v4756 = vpop.f32.mrb[0].mxu0
      %v4757 = vadd.f32 0.0, %v4756
      %v4758 = vpop.f32.mrb[0].mxu0
      %v4759 = vpop.f32.mrb[0].mxu0
      %v4760 = vadd.f32 0.0, %v4759
      %v4761 = vpop.f32.mrb[0].mxu0
      %4762 = vmatprep.mubr.bf16.mxu0 %v4026
      %4763 = vmatmul.mubr.bf16.gmra.mrb[0].mxu0 %v4025
      %v4764 = vpop.f32.mrb[0].mxu0
      %v4765 = vadd.f32 0.0, %v4764
      %v4766 = vpop.f32.mrb[0].mxu0
      %v4767 = vpop.f32.mrb[0].mxu0
      %v4768 = vadd.f32 0.0, %v4767
      %v4769 = vpop.f32.mrb[0].mxu0
      %4770 = vdwg.mxu0
      %4771 = vmatprep.subr.bf16.mxu0 0
      %4772 = vmatpush1.bf16.msra.mxu0 %v4482
      %4773 = vmatprep.subr.bf16.mxu0 0
      %4774 = vmatpush1.bf16.msra.mxu0 %v4483
      %4775 = vmatprep.subr.bf16.mxu0 0
      %4776 = vmatpush1.bf16.msra.mxu0 %v4484
      %4777 = vmatprep.subr.bf16.mxu0 0
      %4778 = vmatpush1.bf16.msra.mxu0 %v4485
      %4779 = vmatprep.subr.bf16.mxu0 0
      %4780 = vmatpush1.bf16.msra.mxu0 %v4486
      %4781 = vmatprep.subr.bf16.mxu0 0
      %4782 = vmatpush1.bf16.msra.mxu0 %v4487
      %4783 = vmatprep.subr.bf16.mxu0 0
      %4784 = vmatpush1.bf16.msra.mxu0 %v4488
      %4785 = vmatprep.subr.bf16.mxu0 0
      %4786 = vmatpush1.bf16.msra.mxu0 %v4489
      %4787 = vmatprep.subr.bf16.mxu0 0
      %4788 = vmatpush1.bf16.msra.mxu0 %v4490
      %4789 = vmatprep.subr.bf16.mxu0 0
      %4790 = vmatpush1.bf16.msra.mxu0 %v4491
      %4791 = vmatprep.subr.bf16.mxu0 0
      %4792 = vmatpush1.bf16.msra.mxu0 %v4492
      %4793 = vmatprep.subr.bf16.mxu0 0
      %4794 = vmatpush1.bf16.msra.mxu0 %v4493
      %4795 = vmatprep.subr.bf16.mxu0 0
      %4796 = vmatpush1.bf16.msra.mxu0 %v4494
      %4797 = vmatprep.subr.bf16.mxu0 0
      %4798 = vmatpush1.bf16.msra.mxu0 %v4495
      %4799 = vmatprep.subr.bf16.mxu0 0
      %4800 = vmatpush1.bf16.msra.mxu0 %v4496
      %4801 = vmatprep.subr.bf16.mxu0 0
      %4802 = vmatpush1.bf16.msra.mxu0 %v4497
      %4803 = vmatprep.mubr.bf16.mxu0 %v3893
      %4804 = vmatmul.mubr.bf16.gmra.mrb[0].mxu0 %v3892
      %v4805 = vpop.f32.mrb[0].mxu0
      %v4806 = vadd.f32 %v4645, %v4805
      %v4807 = vpop.f32.mrb[0].mxu0
      %v4808 = vpop.f32.mrb[0].mxu0
      %v4809 = vadd.f32 %v4648, %v4808
      %v4810 = vpop.f32.mrb[0].mxu0
      %4811 = vmatprep.mubr.bf16.mxu0 %v3902
      %4812 = vmatmul.mubr.bf16.gmra.mrb[0].mxu0 %v3901
      %v4813 = vpop.f32.mrb[0].mxu0
      %v4814 = vadd.f32 %v4653, %v4813
      %v4815 = vpop.f32.mrb[0].mxu0
      %v4816 = vpop.f32.mrb[0].mxu0
      %v4817 = vadd.f32 %v4656, %v4816
      %v4818 = vpop.f32.mrb[0].mxu0
      %4819 = vmatprep.mubr.bf16.mxu0 %v3911
      %4820 = vmatmul.mubr.bf16.gmra.mrb[0].mxu0 %v3910
      %v4821 = vpop.f32.mrb[0].mxu0
      %v4822 = vadd.f32 %v4661, %v4821
      %v4823 = vpop.f32.mrb[0].mxu0
      %v4824 = vpop.f32.mrb[0].mxu0
      %v4825 = vadd.f32 %v4664, %v4824
      %v4826 = vpop.f32.mrb[0].mxu0
      %4827 = vmatprep.mubr.bf16.mxu0 %v3920
      %4828 = vmatmul.mubr.bf16.gmra.mrb[0].mxu0 %v3919
      %v4829 = vpop.f32.mrb[0].mxu0
      %v4830 = vadd.f32 %v4669, %v4829
      %v4831 = vpop.f32.mrb[0].mxu0
      %v4832 = vpop.f32.mrb[0].mxu0
      %v4833 = vadd.f32 %v4672, %v4832
      %v4834 = vpop.f32.mrb[0].mxu0
      %4835 = vmatprep.mubr.bf16.mxu0 %v3929
      %4836 = vmatmul.mubr.bf16.gmra.mrb[0].mxu0 %v3928
      %v4837 = vpop.f32.mrb[0].mxu0
      %v4838 = vadd.f32 %v4677, %v4837
      %v4839 = vpop.f32.mrb[0].mxu0
      %v4840 = vpop.f32.mrb[0].mxu0
      %v4841 = vadd.f32 %v4680, %v4840
      %v4842 = vpop.f32.mrb[0].mxu0
      %4843 = vmatprep.mubr.bf16.mxu0 %v3938
      %4844 = vmatmul.mubr.bf16.gmra.mrb[0].mxu0 %v3937
      %v4845 = vpop.f32.mrb[0].mxu0
      %v4846 = vadd.f32 %v4685, %v4845
      %v4847 = vpop.f32.mrb[0].mxu0
      %v4848 = vpop.f32.mrb[0].mxu0
      %v4849 = vadd.f32 %v4688, %v4848
      %v4850 = vpop.f32.mrb[0].mxu0
      %4851 = vmatprep.mubr.bf16.mxu0 %v3947
      %4852 = vmatmul.mubr.bf16.gmra.mrb[0].mxu0 %v3946
      %v4853 = vpop.f32.mrb[0].mxu0
      %v4854 = vadd.f32 %v4693, %v4853
      %v4855 = vpop.f32.mrb[0].mxu0
      %v4856 = vpop.f32.mrb[0].mxu0
      %v4857 = vadd.f32 %v4696, %v4856
      %v4858 = vpop.f32.mrb[0].mxu0
      %4859 = vmatprep.mubr.bf16.mxu0 %v3956
      %4860 = vmatmul.mubr.bf16.gmra.mrb[0].mxu0 %v3955
      %v4861 = vpop.f32.mrb[0].mxu0
      %v4862 = vadd.f32 %v4701, %v4861
      %v4863 = vpop.f32.mrb[0].mxu0
      %v4864 = vpop.f32.mrb[0].mxu0
      %v4865 = vadd.f32 %v4704, %v4864
      %v4866 = vpop.f32.mrb[0].mxu0
      %4867 = vmatprep.mubr.bf16.mxu0 %v3965
      %4868 = vmatmul.mubr.bf16.gmra.mrb[0].mxu0 %v3964
      %v4869 = vpop.f32.mrb[0].mxu0
      %v4870 = vadd.f32 %v4709, %v4869
      %v4871 = vpop.f32.mrb[0].mxu0
      %v4872 = vpop.f32.mrb[0].mxu0
      %v4873 = vadd.f32 %v4712, %v4872
      %v4874 = vpop.f32.mrb[0].mxu0
      %4875 = vmatprep.mubr.bf16.mxu0 %v3974
      %4876 = vmatmul.mubr.bf16.gmra.mrb[0].mxu0 %v3973
      %v4877 = vpop.f32.mrb[0].mxu0
      %v4878 = vadd.f32 %v4717, %v4877
      %v4879 = vpop.f32.mrb[0].mxu0
      %v4880 = vpop.f32.mrb[0].mxu0
      %v4881 = vadd.f32 %v4720, %v4880
      %v4882 = vpop.f32.mrb[0].mxu0
      %4883 = vmatprep.mubr.bf16.mxu0 %v3983
      %4884 = vmatmul.mubr.bf16.gmra.mrb[0].mxu0 %v3982
      %v4885 = vpop.f32.mrb[0].mxu0
      %v4886 = vadd.f32 %v4725, %v4885
      %v4887 = vpop.f32.mrb[0].mxu0
      %v4888 = vpop.f32.mrb[0].mxu0
      %v4889 = vadd.f32 %v4728, %v4888
      %v4890 = vpop.f32.mrb[0].mxu0
      %4891 = vmatprep.mubr.bf16.mxu0 %v3992
      %4892 = vmatmul.mubr.bf16.gmra.mrb[0].mxu0 %v3991
      %v4893 = vpop.f32.mrb[0].mxu0
      %v4894 = vadd.f32 %v4733, %v4893
      %v4895 = vpop.f32.mrb[0].mxu0
      %v4896 = vpop.f32.mrb[0].mxu0
      %v4897 = vadd.f32 %v4736, %v4896
      %v4898 = vpop.f32.mrb[0].mxu0
      %4899 = vmatprep.mubr.bf16.mxu0 %v4001
      %4900 = vmatmul.mubr.bf16.gmra.mrb[0].mxu0 %v4000
      %v4901 = vpop.f32.mrb[0].mxu0
      %v4902 = vadd.f32 %v4741, %v4901
      %v4903 = vpop.f32.mrb[0].mxu0
      %v4904 = vpop.f32.mrb[0].mxu0
      %v4905 = vadd.f32 %v4744, %v4904
      %v4906 = vpop.f32.mrb[0].mxu0
      %4907 = vmatprep.mubr.bf16.mxu0 %v4010
      %4908 = vmatmul.mubr.bf16.gmra.mrb[0].mxu0 %v4009
      %v4909 = vpop.f32.mrb[0].mxu0
      %v4910 = vadd.f32 %v4749, %v4909
      %v4911 = vpop.f32.mrb[0].mxu0
      %v4912 = vpop.f32.mrb[0].mxu0
      %v4913 = vadd.f32 %v4752, %v4912
      %v4914 = vpop.f32.mrb[0].mxu0
      %4915 = vmatprep.mubr.bf16.mxu0 %v4019
      %4916 = vmatmul.mubr.bf16.gmra.mrb[0].mxu0 %v4018
      %v4917 = vpop.f32.mrb[0].mxu0
      %v4918 = vadd.f32 %v4757, %v4917
      %v4919 = vpop.f32.mrb[0].mxu0
      %v4920 = vpop.f32.mrb[0].mxu0
      %v4921 = vadd.f32 %v4760, %v4920
      %v4922 = vpop.f32.mrb[0].mxu0
      %4923 = vmatprep.mubr.bf16.mxu0 %v4028
      %4924 = vmatmul.mubr.bf16.gmra.mrb[0].mxu0 %v4027
      %v4925 = vpop.f32.mrb[0].mxu0
      %v4926 = vadd.f32 %v4765, %v4925
      %v4927 = vpop.f32.mrb[0].mxu0
      %v4928 = vpop.f32.mrb[0].mxu0
      %v4929 = vadd.f32 %v4768, %v4928
      %v4930 = vpop.f32.mrb[0].mxu0
      %4931 = vdwg.mxu0
      %4932 = vmatprep.subr.bf16.mxu0 0
      %4933 = vmatpush1.bf16.msra.mxu0 %v4498
      %4934 = vmatprep.subr.bf16.mxu0 0
      %4935 = vmatpush1.bf16.msra.mxu0 %v4499
      %4936 = vmatprep.subr.bf16.mxu0 0
      %4937 = vmatpush1.bf16.msra.mxu0 %v4500
      %4938 = vmatprep.subr.bf16.mxu0 0
      %4939 = vmatpush1.bf16.msra.mxu0 %v4501
      %4940 = vmatprep.subr.bf16.mxu0 0
      %4941 = vmatpush1.bf16.msra.mxu0 %v4502
      %4942 = vmatprep.subr.bf16.mxu0 0
      %4943 = vmatpush1.bf16.msra.mxu0 %v4503
      %4944 = vmatprep.subr.bf16.mxu0 0
      %4945 = vmatpush1.bf16.msra.mxu0 %v4504
      %4946 = vmatprep.subr.bf16.mxu0 0
      %4947 = vmatpush1.bf16.msra.mxu0 %v4505
      %4948 = vmatprep.subr.bf16.mxu0 0
      %4949 = vmatpush1.bf16.msra.mxu0 %v4506
      %4950 = vmatprep.subr.bf16.mxu0 0
      %4951 = vmatpush1.bf16.msra.mxu0 %v4507
      %4952 = vmatprep.subr.bf16.mxu0 0
      %4953 = vmatpush1.bf16.msra.mxu0 %v4508
      %4954 = vmatprep.subr.bf16.mxu0 0
      %4955 = vmatpush1.bf16.msra.mxu0 %v4509
      %4956 = vmatprep.subr.bf16.mxu0 0
      %4957 = vmatpush1.bf16.msra.mxu0 %v4510
      %4958 = vmatprep.subr.bf16.mxu0 0
      %4959 = vmatpush1.bf16.msra.mxu0 %v4511
      %4960 = vmatprep.subr.bf16.mxu0 0
      %4961 = vmatpush1.bf16.msra.mxu0 %v4512
      %4962 = vmatprep.subr.bf16.mxu0 0
      %4963 = vmatpush1.bf16.msra.mxu0 %v4513
      %4964 = vmatprep.mubr.bf16.mxu0 %v3895
      %4965 = vmatmul.mubr.bf16.gmra.mrb[0].mxu0 %v3894
      %v4966 = vpop.f32.mrb[0].mxu0
      %v4967 = vadd.f32 %v4806, %v4966
      %v4968 = vpop.f32.mrb[0].mxu0
      %v4969 = vpop.f32.mrb[0].mxu0
      %v4970 = vadd.f32 %v4809, %v4969
      %v4971 = vpop.f32.mrb[0].mxu0
      %4972 = vmatprep.mubr.bf16.mxu0 %v3904
      %4973 = vmatmul.mubr.bf16.gmra.mrb[0].mxu0 %v3903
      %v4974 = vpop.f32.mrb[0].mxu0
      %v4975 = vadd.f32 %v4814, %v4974
      %v4976 = vpop.f32.mrb[0].mxu0
      %v4977 = vpop.f32.mrb[0].mxu0
      %v4978 = vadd.f32 %v4817, %v4977
      %v4979 = vpop.f32.mrb[0].mxu0
      %4980 = vmatprep.mubr.bf16.mxu0 %v3913
      %4981 = vmatmul.mubr.bf16.gmra.mrb[0].mxu0 %v3912
      %v4982 = vpop.f32.mrb[0].mxu0
      %v4983 = vadd.f32 %v4822, %v4982
      %v4984 = vpop.f32.mrb[0].mxu0
      %v4985 = vpop.f32.mrb[0].mxu0
      %v4986 = vadd.f32 %v4825, %v4985
      %v4987 = vpop.f32.mrb[0].mxu0
      %4988 = vmatprep.mubr.bf16.mxu0 %v3922
      %4989 = vmatmul.mubr.bf16.gmra.mrb[0].mxu0 %v3921
      %v4990 = vpop.f32.mrb[0].mxu0
      %v4991 = vadd.f32 %v4830, %v4990
      %v4992 = vpop.f32.mrb[0].mxu0
      %v4993 = vpop.f32.mrb[0].mxu0
      %v4994 = vadd.f32 %v4833, %v4993
      %v4995 = vpop.f32.mrb[0].mxu0
      %4996 = vmatprep.mubr.bf16.mxu0 %v3931
      %4997 = vmatmul.mubr.bf16.gmra.mrb[0].mxu0 %v3930
      %v4998 = vpop.f32.mrb[0].mxu0
      %v4999 = vadd.f32 %v4838, %v4998
      %v5000 = vpop.f32.mrb[0].mxu0
      %v5001 = vpop.f32.mrb[0].mxu0
      %v5002 = vadd.f32 %v4841, %v5001
      %v5003 = vpop.f32.mrb[0].mxu0
      %5004 = vmatprep.mubr.bf16.mxu0 %v3940
      %5005 = vmatmul.mubr.bf16.gmra.mrb[0].mxu0 %v3939
      %v5006 = vpop.f32.mrb[0].mxu0
      %v5007 = vadd.f32 %v4846, %v5006
      %v5008 = vpop.f32.mrb[0].mxu0
      %v5009 = vpop.f32.mrb[0].mxu0
      %v5010 = vadd.f32 %v4849, %v5009
      %v5011 = vpop.f32.mrb[0].mxu0
      %5012 = vmatprep.mubr.bf16.mxu0 %v3949
      %5013 = vmatmul.mubr.bf16.gmra.mrb[0].mxu0 %v3948
      %v5014 = vpop.f32.mrb[0].mxu0
      %v5015 = vadd.f32 %v4854, %v5014
      %v5016 = vpop.f32.mrb[0].mxu0
      %v5017 = vpop.f32.mrb[0].mxu0
      %v5018 = vadd.f32 %v4857, %v5017
      %v5019 = vpop.f32.mrb[0].mxu0
      %5020 = vmatprep.mubr.bf16.mxu0 %v3958
      %5021 = vmatmul.mubr.bf16.gmra.mrb[0].mxu0 %v3957
      %v5022 = vpop.f32.mrb[0].mxu0
      %v5023 = vadd.f32 %v4862, %v5022
      %v5024 = vpop.f32.mrb[0].mxu0
      %v5025 = vpop.f32.mrb[0].mxu0
      %v5026 = vadd.f32 %v4865, %v5025
      %v5027 = vpop.f32.mrb[0].mxu0
      %5028 = vmatprep.mubr.bf16.mxu0 %v3967
      %5029 = vmatmul.mubr.bf16.gmra.mrb[0].mxu0 %v3966
      %v5030 = vpop.f32.mrb[0].mxu0
      %v5031 = vadd.f32 %v4870, %v5030
      %v5032 = vpop.f32.mrb[0].mxu0
      %v5033 = vpop.f32.mrb[0].mxu0
      %v5034 = vadd.f32 %v4873, %v5033
      %v5035 = vpop.f32.mrb[0].mxu0
      %5036 = vmatprep.mubr.bf16.mxu0 %v3976
      %5037 = vmatmul.mubr.bf16.gmra.mrb[0].mxu0 %v3975
      %v5038 = vpop.f32.mrb[0].mxu0
      %v5039 = vadd.f32 %v4878, %v5038
      %v5040 = vpop.f32.mrb[0].mxu0
      %v5041 = vpop.f32.mrb[0].mxu0
      %v5042 = vadd.f32 %v4881, %v5041
      %v5043 = vpop.f32.mrb[0].mxu0
      %5044 = vmatprep.mubr.bf16.mxu0 %v3985
      %5045 = vmatmul.mubr.bf16.gmra.mrb[0].mxu0 %v3984
      %v5046 = vpop.f32.mrb[0].mxu0
      %v5047 = vadd.f32 %v4886, %v5046
      %v5048 = vpop.f32.mrb[0].mxu0
      %v5049 = vpop.f32.mrb[0].mxu0
      %v5050 = vadd.f32 %v4889, %v5049
      %v5051 = vpop.f32.mrb[0].mxu0
      %5052 = vmatprep.mubr.bf16.mxu0 %v3994
      %5053 = vmatmul.mubr.bf16.gmra.mrb[0].mxu0 %v3993
      %v5054 = vpop.f32.mrb[0].mxu0
      %v5055 = vadd.f32 %v4894, %v5054
      %v5056 = vpop.f32.mrb[0].mxu0
      %v5057 = vpop.f32.mrb[0].mxu0
      %v5058 = vadd.f32 %v4897, %v5057
      %v5059 = vpop.f32.mrb[0].mxu0
      %5060 = vmatprep.mubr.bf16.mxu0 %v4003
      %5061 = vmatmul.mubr.bf16.gmra.mrb[0].mxu0 %v4002
      %v5062 = vpop.f32.mrb[0].mxu0
      %v5063 = vadd.f32 %v4902, %v5062
      %v5064 = vpop.f32.mrb[0].mxu0
      %v5065 = vpop.f32.mrb[0].mxu0
      %v5066 = vadd.f32 %v4905, %v5065
      %v5067 = vpop.f32.mrb[0].mxu0
      %5068 = vmatprep.mubr.bf16.mxu0 %v4012
      %5069 = vmatmul.mubr.bf16.gmra.mrb[0].mxu0 %v4011
      %v5070 = vpop.f32.mrb[0].mxu0
      %v5071 = vadd.f32 %v4910, %v5070
      %v5072 = vpop.f32.mrb[0].mxu0
      %v5073 = vpop.f32.mrb[0].mxu0
      %v5074 = vadd.f32 %v4913, %v5073
      %v5075 = vpop.f32.mrb[0].mxu0
      %5076 = vmatprep.mubr.bf16.mxu0 %v4021
      %5077 = vmatmul.mubr.bf16.gmra.mrb[0].mxu0 %v4020
      %v5078 = vpop.f32.mrb[0].mxu0
      %v5079 = vadd.f32 %v4918, %v5078
      %v5080 = vpop.f32.mrb[0].mxu0
      %v5081 = vpop.f32.mrb[0].mxu0
      %v5082 = vadd.f32 %v4921, %v5081
      %v5083 = vpop.f32.mrb[0].mxu0
      %5084 = vmatprep.mubr.bf16.mxu0 %v4030
      %5085 = vmatmul.mubr.bf16.gmra.mrb[0].mxu0 %v4029
      %v5086 = vpop.f32.mrb[0].mxu0
      %v5087 = vadd.f32 %v4926, %v5086
      %v5088 = vpop.f32.mrb[0].mxu0
      %v5089 = vpop.f32.mrb[0].mxu0
      %v5090 = vadd.f32 %v4929, %v5089
      %v5091 = vpop.f32.mrb[0].mxu0
      %5092 = vdwg.mxu0
      %5093 = vmatprep.subr.bf16.mxu0 0
      %5094 = vmatpush1.bf16.msra.mxu0 %v4514
      %5095 = vmatprep.subr.bf16.mxu0 0
      %5096 = vmatpush1.bf16.msra.mxu0 %v4515
      %5097 = vmatprep.subr.bf16.mxu0 0
      %5098 = vmatpush1.bf16.msra.mxu0 %v4516
      %5099 = vmatprep.subr.bf16.mxu0 0
      %5100 = vmatpush1.bf16.msra.mxu0 %v4517
      %5101 = vmatprep.subr.bf16.mxu0 0
      %5102 = vmatpush1.bf16.msra.mxu0 %v4518
      %5103 = vmatprep.subr.bf16.mxu0 0
      %5104 = vmatpush1.bf16.msra.mxu0 %v4519
      %5105 = vmatprep.subr.bf16.mxu0 0
      %5106 = vmatpush1.bf16.msra.mxu0 %v4520
      %5107 = vmatprep.subr.bf16.mxu0 0
      %5108 = vmatpush1.bf16.msra.mxu0 %v4521
      %5109 = vmatprep.subr.bf16.mxu0 0
      %5110 = vmatpush1.bf16.msra.mxu0 %v4522
      %5111 = vmatprep.subr.bf16.mxu0 0
      %5112 = vmatpush1.bf16.msra.mxu0 %v4523
      %5113 = vmatprep.subr.bf16.mxu0 0
      %5114 = vmatpush1.bf16.msra.mxu0 %v4524
      %5115 = vmatprep.subr.bf16.mxu0 0
      %5116 = vmatpush1.bf16.msra.mxu0 %v4525
      %5117 = vmatprep.subr.bf16.mxu0 0
      %5118 = vmatpush1.bf16.msra.mxu0 %v4526
      %5119 = vmatprep.subr.bf16.mxu0 0
      %5120 = vmatpush1.bf16.msra.mxu0 %v4527
      %5121 = vmatprep.subr.bf16.mxu0 0
      %5122 = vmatpush1.bf16.msra.mxu0 %v4528
      %5123 = vmatprep.subr.bf16.mxu0 0
      %5124 = vmatpush1.bf16.msra.mxu0 %v4529
      %5125 = vmatprep.mubr.bf16.mxu0 %v3897
      %5126 = vmatmul.mubr.bf16.gmra.mrb[0].mxu0 %v3896
      %v5127 = vpop.f32.mrb[0].mxu0
      %v5128 = vadd.f32 %v4967, %v5127
      %v5129 = vpop.f32.mrb[0].mxu0
      %v5130 = vpop.f32.mrb[0].mxu0
      %v5131 = vadd.f32 %v4970, %v5130
      %v5132 = vpop.f32.mrb[0].mxu0
      %5133 = vmatprep.mubr.bf16.mxu0 %v3906
      %5134 = vmatmul.mubr.bf16.gmra.mrb[0].mxu0 %v3905
      %v5135 = vpop.f32.mrb[0].mxu0
      %v5136 = vadd.f32 %v4975, %v5135
      %v5137 = vpop.f32.mrb[0].mxu0
      %v5138 = vpop.f32.mrb[0].mxu0
      %v5139 = vadd.f32 %v4978, %v5138
      %v5140 = vpop.f32.mrb[0].mxu0
      %5141 = vmatprep.mubr.bf16.mxu0 %v3915
      %5142 = vmatmul.mubr.bf16.gmra.mrb[0].mxu0 %v3914
      %v5143 = vpop.f32.mrb[0].mxu0
      %v5144 = vadd.f32 %v4983, %v5143
      %v5145 = vpop.f32.mrb[0].mxu0
      %v5146 = vpop.f32.mrb[0].mxu0
      %v5147 = vadd.f32 %v4986, %v5146
      %v5148 = vpop.f32.mrb[0].mxu0
      %5149 = vmatprep.mubr.bf16.mxu0 %v3924
      %5150 = vmatmul.mubr.bf16.gmra.mrb[0].mxu0 %v3923
      %v5151 = vpop.f32.mrb[0].mxu0
      %v5152 = vadd.f32 %v4991, %v5151
      %v5153 = vpop.f32.mrb[0].mxu0
      %v5154 = vpop.f32.mrb[0].mxu0
      %v5155 = vadd.f32 %v4994, %v5154
      %v5156 = vpop.f32.mrb[0].mxu0
      %5157 = vmatprep.mubr.bf16.mxu0 %v3933
      %5158 = vmatmul.mubr.bf16.gmra.mrb[0].mxu0 %v3932
      %v5159 = vpop.f32.mrb[0].mxu0
      %v5160 = vadd.f32 %v4999, %v5159
      %v5161 = vpop.f32.mrb[0].mxu0
      %v5162 = vpop.f32.mrb[0].mxu0
      %v5163 = vadd.f32 %v5002, %v5162
      %v5164 = vpop.f32.mrb[0].mxu0
      %5165 = vmatprep.mubr.bf16.mxu0 %v3942
      %5166 = vmatmul.mubr.bf16.gmra.mrb[0].mxu0 %v3941
      %v5167 = vpop.f32.mrb[0].mxu0
      %v5168 = vadd.f32 %v5007, %v5167
      %v5169 = vpop.f32.mrb[0].mxu0
      %v5170 = vpop.f32.mrb[0].mxu0
      %v5171 = vadd.f32 %v5010, %v5170
      %v5172 = vpop.f32.mrb[0].mxu0
      %5173 = vmatprep.mubr.bf16.mxu0 %v3951
      %5174 = vmatmul.mubr.bf16.gmra.mrb[0].mxu0 %v3950
      %v5175 = vpop.f32.mrb[0].mxu0
      %v5176 = vadd.f32 %v5015, %v5175
      %v5177 = vpop.f32.mrb[0].mxu0
      %v5178 = vpop.f32.mrb[0].mxu0
      %v5179 = vadd.f32 %v5018, %v5178
      %v5180 = vpop.f32.mrb[0].mxu0
      %5181 = vmatprep.mubr.bf16.mxu0 %v3960
      %5182 = vmatmul.mubr.bf16.gmra.mrb[0].mxu0 %v3959
      %v5183 = vpop.f32.mrb[0].mxu0
      %v5184 = vadd.f32 %v5023, %v5183
      %v5185 = vpop.f32.mrb[0].mxu0
      %v5186 = vpop.f32.mrb[0].mxu0
      %v5187 = vadd.f32 %v5026, %v5186
      %v5188 = vpop.f32.mrb[0].mxu0
      %5189 = vmatprep.mubr.bf16.mxu0 %v3969
      %5190 = vmatmul.mubr.bf16.gmra.mrb[0].mxu0 %v3968
      %v5191 = vpop.f32.mrb[0].mxu0
      %v5192 = vadd.f32 %v5031, %v5191
      %v5193 = vpop.f32.mrb[0].mxu0
      %v5194 = vpop.f32.mrb[0].mxu0
      %v5195 = vadd.f32 %v5034, %v5194
      %v5196 = vpop.f32.mrb[0].mxu0
      %5197 = vmatprep.mubr.bf16.mxu0 %v3978
      %5198 = vmatmul.mubr.bf16.gmra.mrb[0].mxu0 %v3977
      %v5199 = vpop.f32.mrb[0].mxu0
      %v5200 = vadd.f32 %v5039, %v5199
      %v5201 = vpop.f32.mrb[0].mxu0
      %v5202 = vpop.f32.mrb[0].mxu0
      %v5203 = vadd.f32 %v5042, %v5202
      %v5204 = vpop.f32.mrb[0].mxu0
      %5205 = vmatprep.mubr.bf16.mxu0 %v3987
      %5206 = vmatmul.mubr.bf16.gmra.mrb[0].mxu0 %v3986
      %v5207 = vpop.f32.mrb[0].mxu0
      %v5208 = vadd.f32 %v5047, %v5207
      %v5209 = vpop.f32.mrb[0].mxu0
      %v5210 = vpop.f32.mrb[0].mxu0
      %v5211 = vadd.f32 %v5050, %v5210
      %v5212 = vpop.f32.mrb[0].mxu0
      %5213 = vmatprep.mubr.bf16.mxu0 %v3996
      %5214 = vmatmul.mubr.bf16.gmra.mrb[0].mxu0 %v3995
      %v5215 = vpop.f32.mrb[0].mxu0
      %v5216 = vadd.f32 %v5055, %v5215
      %v5217 = vpop.f32.mrb[0].mxu0
      %v5218 = vpop.f32.mrb[0].mxu0
      %v5219 = vadd.f32 %v5058, %v5218
      %v5220 = vpop.f32.mrb[0].mxu0
      %5221 = vmatprep.mubr.bf16.mxu0 %v4005
      %5222 = vmatmul.mubr.bf16.gmra.mrb[0].mxu0 %v4004
      %v5223 = vpop.f32.mrb[0].mxu0
      %v5224 = vadd.f32 %v5063, %v5223
      %v5225 = vpop.f32.mrb[0].mxu0
      %v5226 = vpop.f32.mrb[0].mxu0
      %v5227 = vadd.f32 %v5066, %v5226
      %v5228 = vpop.f32.mrb[0].mxu0
      %5229 = vmatprep.mubr.bf16.mxu0 %v4014
      %5230 = vmatmul.mubr.bf16.gmra.mrb[0].mxu0 %v4013
      %v5231 = vpop.f32.mrb[0].mxu0
      %v5232 = vadd.f32 %v5071, %v5231
      %v5233 = vpop.f32.mrb[0].mxu0
      %v5234 = vpop.f32.mrb[0].mxu0
      %v5235 = vadd.f32 %v5074, %v5234
      %v5236 = vpop.f32.mrb[0].mxu0
      %5237 = vmatprep.mubr.bf16.mxu0 %v4023
      %5238 = vmatmul.mubr.bf16.gmra.mrb[0].mxu0 %v4022
      %v5239 = vpop.f32.mrb[0].mxu0
      %v5240 = vadd.f32 %v5079, %v5239
      %v5241 = vpop.f32.mrb[0].mxu0
      %v5242 = vpop.f32.mrb[0].mxu0
      %v5243 = vadd.f32 %v5082, %v5242
      %v5244 = vpop.f32.mrb[0].mxu0
      %5245 = vmatprep.mubr.bf16.mxu0 %v4032
      %5246 = vmatmul.mubr.bf16.gmra.mrb[0].mxu0 %v4031
      %v5247 = vpop.f32.mrb[0].mxu0
      %v5248 = vadd.f32 %v5087, %v5247
      %v5249 = vpop.f32.mrb[0].mxu0
      %v5250 = vpop.f32.mrb[0].mxu0
      %v5251 = vadd.f32 %v5090, %v5250
      %v5252 = vpop.f32.mrb[0].mxu0
      %5253 = vdwg.mxu0
      %5254 = vmatprep.subr.bf16.mxu0 0
      %5255 = vmatpush1.bf16.msra.mxu0 %v4530
      %5256 = vmatprep.subr.bf16.mxu0 0
      %5257 = vmatpush1.bf16.msra.mxu0 %v4531
      %5258 = vmatprep.subr.bf16.mxu0 0
      %5259 = vmatpush1.bf16.msra.mxu0 %v4532
      %5260 = vmatprep.subr.bf16.mxu0 0
      %5261 = vmatpush1.bf16.msra.mxu0 %v4533
      %5262 = vmatprep.subr.bf16.mxu0 0
      %5263 = vmatpush1.bf16.msra.mxu0 %v4534
      %5264 = vmatprep.subr.bf16.mxu0 0
      %5265 = vmatpush1.bf16.msra.mxu0 %v4535
      %5266 = vmatprep.subr.bf16.mxu0 0
      %5267 = vmatpush1.bf16.msra.mxu0 %v4536
      %5268 = vmatprep.subr.bf16.mxu0 0
      %5269 = vmatpush1.bf16.msra.mxu0 %v4537
      %5270 = vmatprep.subr.bf16.mxu0 0
      %5271 = vmatpush1.bf16.msra.mxu0 0
      %5272 = vmatprep.subr.bf16.mxu0 0
      %5273 = vmatpush1.bf16.msra.mxu0 0
      %5274 = vmatprep.subr.bf16.mxu0 0
      %5275 = vmatpush1.bf16.msra.mxu0 0
      %5276 = vmatprep.subr.bf16.mxu0 0
      %5277 = vmatpush1.bf16.msra.mxu0 0
      %5278 = vmatprep.subr.bf16.mxu0 0
      %5279 = vmatpush1.bf16.msra.mxu0 0
      %5280 = vmatprep.subr.bf16.mxu0 0
      %5281 = vmatpush1.bf16.msra.mxu0 0
      %5282 = vmatprep.subr.bf16.mxu0 0
      %5283 = vmatpush1.bf16.msra.mxu0 0
      %5284 = vmatprep.subr.bf16.mxu0 0
      %5285 = vmatpush1.bf16.msra.mxu0 0
      %5286 = vmatprep.mubr.bf16.mxu0 0
      %5287 = vmatmul.mubr.bf16.gmra.mrb[0].mxu0 %v3898
      %v5288 = vpop.f32.mrb[0].mxu0
      %v5289 = vadd.f32 %v5128, %v5288
      %v5290 = vpop.f32.mrb[0].mxu0
      %v5291 = vpop.f32.mrb[0].mxu0
      %v5292 = vadd.f32 %v5131, %v5291
      %v5293 = vpop.f32.mrb[0].mxu0
      %5294 = vmatprep.mubr.bf16.mxu0 0
      %5295 = vmatmul.mubr.bf16.gmra.mrb[0].mxu0 %v3907
      %v5296 = vpop.f32.mrb[0].mxu0
      %v5297 = vadd.f32 %v5136, %v5296
      %v5298 = vpop.f32.mrb[0].mxu0
      %v5299 = vpop.f32.mrb[0].mxu0
      %v5300 = vadd.f32 %v5139, %v5299
      %v5301 = vpop.f32.mrb[0].mxu0
      %5302 = vmatprep.mubr.bf16.mxu0 0
      %5303 = vmatmul.mubr.bf16.gmra.mrb[0].mxu0 %v3916
      %v5304 = vpop.f32.mrb[0].mxu0
      %v5305 = vadd.f32 %v5144, %v5304
      %v5306 = vpop.f32.mrb[0].mxu0
      %v5307 = vpop.f32.mrb[0].mxu0
      %v5308 = vadd.f32 %v5147, %v5307
      %v5309 = vpop.f32.mrb[0].mxu0
      %5310 = vmatprep.mubr.bf16.mxu0 0
      %5311 = vmatmul.mubr.bf16.gmra.mrb[0].mxu0 %v3925
      %v5312 = vpop.f32.mrb[0].mxu0
      %v5313 = vadd.f32 %v5152, %v5312
      %v5314 = vpop.f32.mrb[0].mxu0
      %v5315 = vpop.f32.mrb[0].mxu0
      %v5316 = vadd.f32 %v5155, %v5315
      %v5317 = vpop.f32.mrb[0].mxu0
      %5318 = vmatprep.mubr.bf16.mxu0 0
      %5319 = vmatmul.mubr.bf16.gmra.mrb[0].mxu0 %v3934
      %v5320 = vpop.f32.mrb[0].mxu0
      %v5321 = vadd.f32 %v5160, %v5320
      %v5322 = vpop.f32.mrb[0].mxu0
      %v5323 = vpop.f32.mrb[0].mxu0
      %v5324 = vadd.f32 %v5163, %v5323
      %v5325 = vpop.f32.mrb[0].mxu0
      %5326 = vmatprep.mubr.bf16.mxu0 0
      %5327 = vmatmul.mubr.bf16.gmra.mrb[0].mxu0 %v3943
      %v5328 = vpop.f32.mrb[0].mxu0
      %v5329 = vadd.f32 %v5168, %v5328
      %v5330 = vpop.f32.mrb[0].mxu0
      %v5331 = vpop.f32.mrb[0].mxu0
      %v5332 = vadd.f32 %v5171, %v5331
      %v5333 = vpop.f32.mrb[0].mxu0
      %5334 = vmatprep.mubr.bf16.mxu0 0
      %5335 = vmatmul.mubr.bf16.gmra.mrb[0].mxu0 %v3952
      %v5336 = vpop.f32.mrb[0].mxu0
      %v5337 = vadd.f32 %v5176, %v5336
      %v5338 = vpop.f32.mrb[0].mxu0
      %v5339 = vpop.f32.mrb[0].mxu0
      %v5340 = vadd.f32 %v5179, %v5339
      %v5341 = vpop.f32.mrb[0].mxu0
      %5342 = vmatprep.mubr.bf16.mxu0 0
      %5343 = vmatmul.mubr.bf16.gmra.mrb[0].mxu0 %v3961
      %v5344 = vpop.f32.mrb[0].mxu0
      %v5345 = vadd.f32 %v5184, %v5344
      %v5346 = vpop.f32.mrb[0].mxu0
      %v5347 = vpop.f32.mrb[0].mxu0
      %v5348 = vadd.f32 %v5187, %v5347
      %v5349 = vpop.f32.mrb[0].mxu0
      %5350 = vmatprep.mubr.bf16.mxu0 0
      %5351 = vmatmul.mubr.bf16.gmra.mrb[0].mxu0 %v3970
      %v5352 = vpop.f32.mrb[0].mxu0
      %v5353 = vadd.f32 %v5192, %v5352
      %v5354 = vpop.f32.mrb[0].mxu0
      %v5355 = vpop.f32.mrb[0].mxu0
      %v5356 = vadd.f32 %v5195, %v5355
      %v5357 = vpop.f32.mrb[0].mxu0
      %5358 = vmatprep.mubr.bf16.mxu0 0
      %5359 = vmatmul.mubr.bf16.gmra.mrb[0].mxu0 %v3979
      %v5360 = vpop.f32.mrb[0].mxu0
      %v5361 = vadd.f32 %v5200, %v5360
      %v5362 = vpop.f32.mrb[0].mxu0
      %v5363 = vpop.f32.mrb[0].mxu0
      %v5364 = vadd.f32 %v5203, %v5363
      %v5365 = vpop.f32.mrb[0].mxu0
      %5366 = vmatprep.mubr.bf16.mxu0 0
      %5367 = vmatmul.mubr.bf16.gmra.mrb[0].mxu0 %v3988
      %v5368 = vpop.f32.mrb[0].mxu0
      %v5369 = vadd.f32 %v5208, %v5368
      %v5370 = vpop.f32.mrb[0].mxu0
      %v5371 = vpop.f32.mrb[0].mxu0
      %v5372 = vadd.f32 %v5211, %v5371
      %v5373 = vpop.f32.mrb[0].mxu0
      %5374 = vmatprep.mubr.bf16.mxu0 0
      %5375 = vmatmul.mubr.bf16.gmra.mrb[0].mxu0 %v3997
      %v5376 = vpop.f32.mrb[0].mxu0
      %v5377 = vadd.f32 %v5216, %v5376
      %v5378 = vpop.f32.mrb[0].mxu0
      %v5379 = vpop.f32.mrb[0].mxu0
      %v5380 = vadd.f32 %v5219, %v5379
      %v5381 = vpop.f32.mrb[0].mxu0
      %5382 = vmatprep.mubr.bf16.mxu0 0
      %5383 = vmatmul.mubr.bf16.gmra.mrb[0].mxu0 %v4006
      %v5384 = vpop.f32.mrb[0].mxu0
      %v5385 = vadd.f32 %v5224, %v5384
      %v5386 = vpop.f32.mrb[0].mxu0
      %v5387 = vpop.f32.mrb[0].mxu0
      %v5388 = vadd.f32 %v5227, %v5387
      %v5389 = vpop.f32.mrb[0].mxu0
      %5390 = vmatprep.mubr.bf16.mxu0 0
      %5391 = vmatmul.mubr.bf16.gmra.mrb[0].mxu0 %v4015
      %v5392 = vpop.f32.mrb[0].mxu0
      %v5393 = vadd.f32 %v5232, %v5392
      %v5394 = vpop.f32.mrb[0].mxu0
      %v5395 = vpop.f32.mrb[0].mxu0
      %v5396 = vadd.f32 %v5235, %v5395
      %v5397 = vpop.f32.mrb[0].mxu0
      %5398 = vmatprep.mubr.bf16.mxu0 0
      %5399 = vmatmul.mubr.bf16.gmra.mrb[0].mxu0 %v4024
      %v5400 = vpop.f32.mrb[0].mxu0
      %v5401 = vadd.f32 %v5240, %v5400
      %v5402 = vpop.f32.mrb[0].mxu0
      %v5403 = vpop.f32.mrb[0].mxu0
      %v5404 = vadd.f32 %v5243, %v5403
      %v5405 = vpop.f32.mrb[0].mxu0
      %5406 = vmatprep.mubr.bf16.mxu0 0
      %5407 = vmatmul.mubr.bf16.gmra.mrb[0].mxu0 %v4033
      %v5408 = vpop.f32.mrb[0].mxu0
      %v5409 = vadd.f32 %v5248, %v5408
      %v5410 = vpop.f32.mrb[0].mxu0
      %v5411 = vpop.f32.mrb[0].mxu0
      %v5412 = vadd.f32 %v5251, %v5411
      %v5413 = vpop.f32.mrb[0].mxu0
      %5414 = vdwg.mxu0
      %v5415 = vadd.f32 %v5289, %v5292
      %v5416 = vadd.f32 %v5415, %v5297
      %v5417 = vadd.f32 %v5416, %v5300
      %v5418 = vadd.f32 %v5417, %v5305
      %v5419 = vadd.f32 %v5418, %v5308
      %v5420 = vadd.f32 %v5419, %v5313
      %v5421 = vadd.f32 %v5420, %v5316
      %v5422 = vadd.f32 %v5421, %v5321
      %v5423 = vadd.f32 %v5422, %v5324
      %v5424 = vadd.f32 %v5423, %v5329
      %v5425 = vadd.f32 %v5424, %v5332
      %v5426 = vadd.f32 %v5425, %v5337
      %v5427 = vadd.f32 %v5426, %v5340
      %v5428 = vadd.f32 %v5427, %v5345
      %v5429 = vadd.f32 %v5428, %v5348
      %v5430 = vadd.f32 %v5429, %v5353
      %v5431 = vadd.f32 %v5430, %v5356
      %v5432 = vadd.f32 %v5431, %v5361
      %v5433 = vadd.f32 %v5432, %v5364
      %v5434 = vadd.f32 %v5433, %v5369
      %v5435 = vadd.f32 %v5434, %v5372
      %v5436 = vadd.f32 %v5435, %v5377
      %v5437 = vadd.f32 %v5436, %v5380
      %v5438 = vadd.f32 %v5437, %v5385
      %v5439 = vadd.f32 %v5438, %v5388
      %v5440 = vadd.f32 %v5439, %v5393
      %v5441 = vadd.f32 %v5440, %v5396
      %v5442 = vadd.f32 %v5441, %v5401
      %v5443 = vadd.f32 %v5442, %v5404
      %v5444 = vadd.f32 %v5443, %v5409
      %v5445 = vadd.f32 %v5444, %v5412
      %v5446 = vrot.slane %v5445, 4
      %v5447 = vadd.f32 %v5445, %v5446
      %v5448 = vrot.slane %v5447, 2
      %v5449 = vadd.f32 %v5447, %v5448
      %v5450 = vrot.slane %v5449, 1
      %v5451 = vadd.f32 %v5449, %v5450
      %5452 = vst [vmem:[%s235] sm:$0x1] %v5451
      %v5453 = vmul.f32 %v5289, %v5289
      %v5454 = vmul.f32 %v5292, %v5292
      %v5455 = vmul.f32 %v5297, %v5297
      %v5456 = vmul.f32 %v5300, %v5300
      %v5457 = vmul.f32 %v5305, %v5305
      %v5458 = vmul.f32 %v5308, %v5308
      %v5459 = vmul.f32 %v5313, %v5313
      %v5460 = vmul.f32 %v5316, %v5316
      %v5461 = vmul.f32 %v5321, %v5321
      %v5462 = vmul.f32 %v5324, %v5324
      %v5463 = vmul.f32 %v5329, %v5329
      %v5464 = vmul.f32 %v5332, %v5332
      %v5465 = vmul.f32 %v5337, %v5337
      %v5466 = vmul.f32 %v5340, %v5340
      %v5467 = vmul.f32 %v5345, %v5345
      %v5468 = vmul.f32 %v5348, %v5348
      %v5469 = vmul.f32 %v5353, %v5353
      %v5470 = vmul.f32 %v5356, %v5356
      %v5471 = vmul.f32 %v5361, %v5361
      %v5472 = vmul.f32 %v5364, %v5364
      %v5473 = vmul.f32 %v5369, %v5369
      %v5474 = vmul.f32 %v5372, %v5372
      %v5475 = vmul.f32 %v5377, %v5377
      %v5476 = vmul.f32 %v5380, %v5380
      %v5477 = vmul.f32 %v5385, %v5385
      %v5478 = vmul.f32 %v5388, %v5388
      %v5479 = vmul.f32 %v5393, %v5393
      %v5480 = vmul.f32 %v5396, %v5396
      %v5481 = vmul.f32 %v5401, %v5401
      %v5482 = vmul.f32 %v5404, %v5404
      %v5483 = vmul.f32 %v5409, %v5409
      %v5484 = vmul.f32 %v5412, %v5412
      %v5485 = vadd.f32 %v5453, %v5454
      %v5486 = vadd.f32 %v5485, %v5455
      %v5487 = vadd.f32 %v5486, %v5456
      %v5488 = vadd.f32 %v5487, %v5457
      %v5489 = vadd.f32 %v5488, %v5458
      %v5490 = vadd.f32 %v5489, %v5459
      %v5491 = vadd.f32 %v5490, %v5460
      %v5492 = vadd.f32 %v5491, %v5461
      %v5493 = vadd.f32 %v5492, %v5462
      %v5494 = vadd.f32 %v5493, %v5463
      %v5495 = vadd.f32 %v5494, %v5464
      %v5496 = vadd.f32 %v5495, %v5465
      %v5497 = vadd.f32 %v5496, %v5466
      %v5498 = vadd.f32 %v5497, %v5467
      %v5499 = vadd.f32 %v5498, %v5468
      %v5500 = vadd.f32 %v5499, %v5469
      %v5501 = vadd.f32 %v5500, %v5470
      %v5502 = vadd.f32 %v5501, %v5471
      %v5503 = vadd.f32 %v5502, %v5472
      %v5504 = vadd.f32 %v5503, %v5473
      %v5505 = vadd.f32 %v5504, %v5474
      %v5506 = vadd.f32 %v5505, %v5475
      %v5507 = vadd.f32 %v5506, %v5476
      %v5508 = vadd.f32 %v5507, %v5477
      %v5509 = vadd.f32 %v5508, %v5478
      %v5510 = vadd.f32 %v5509, %v5479
      %v5511 = vadd.f32 %v5510, %v5480
      %v5512 = vadd.f32 %v5511, %v5481
      %v5513 = vadd.f32 %v5512, %v5482
      %v5514 = vadd.f32 %v5513, %v5483
      %v5515 = vadd.f32 %v5514, %v5484
      %v5516 = vrot.slane %v5515, 4
      %v5517 = vadd.f32 %v5515, %v5516
      %v5518 = vrot.slane %v5517, 2
      %v5519 = vadd.f32 %v5517, %v5518
      %v5520 = vrot.slane %v5519, 1
      %v5521 = vadd.f32 %v5519, %v5520
      %5522 = vst [vmem:[%s235 + $0x1] sm:$0x1] %v5521
      %v5523 = vpack.c.bf16 %v5292, %v5289
      %v5524 = vpack.c.bf16 %v5300, %v5297
      %v5525 = vpack.c.bf16 %v5308, %v5305
      %v5526 = vpack.c.bf16 %v5316, %v5313
      %v5527 = vpack.c.bf16 %v5324, %v5321
      %v5528 = vpack.c.bf16 %v5332, %v5329
      %v5529 = vpack.c.bf16 %v5340, %v5337
      %v5530 = vpack.c.bf16 %v5348, %v5345
      %v5531 = vpack.c.bf16 %v5356, %v5353
      %v5532 = vpack.c.bf16 %v5364, %v5361
      %v5533 = vpack.c.bf16 %v5372, %v5369
      %v5534 = vpack.c.bf16 %v5380, %v5377
      %v5535 = vpack.c.bf16 %v5388, %v5385
      %v5536 = vpack.c.bf16 %v5396, %v5393
      %v5537 = vpack.c.bf16 %v5404, %v5401
      %v5538 = vpack.c.bf16 %v5412, %v5409
      %v5555 = vunpack.c.l.b16 %v5523
      %v5556 = vunpack.c.h.b16 %v5523
      %v5557 = vunpack.c.l.b16 %v5524
      %v5558 = vunpack.c.h.b16 %v5524
      %v5559 = vunpack.c.l.b16 %v5525
      %v5560 = vunpack.c.h.b16 %v5525
      %v5561 = vunpack.c.l.b16 %v5526
      %v5562 = vunpack.c.h.b16 %v5526
      %v5563 = vunpack.c.l.b16 %v5527
      %v5564 = vunpack.c.h.b16 %v5527
      %v5565 = vunpack.c.l.b16 %v5528
      %v5566 = vunpack.c.h.b16 %v5528
      %v5567 = vunpack.c.l.b16 %v5529
      %v5568 = vunpack.c.h.b16 %v5529
      %v5569 = vunpack.c.l.b16 %v5530
      %v5570 = vunpack.c.h.b16 %v5530
      %v5571 = vunpack.c.l.b16 %v5531
      %v5572 = vunpack.c.h.b16 %v5531
      %v5573 = vunpack.c.l.b16 %v5532
      %v5574 = vunpack.c.h.b16 %v5532
      %v5575 = vunpack.c.l.b16 %v5533
      %v5576 = vunpack.c.h.b16 %v5533
      %v5577 = vunpack.c.l.b16 %v5534
      %v5578 = vunpack.c.h.b16 %v5534
      %v5579 = vunpack.c.l.b16 %v5535
      %v5580 = vunpack.c.h.b16 %v5535
      %v5581 = vunpack.c.l.b16 %v5536
      %v5582 = vunpack.c.h.b16 %v5536
      %v5583 = vunpack.c.l.b16 %v5537
      %v5584 = vunpack.c.h.b16 %v5537
      %v5585 = vunpack.c.l.b16 %v5538
      %v5586 = vunpack.c.h.b16 %v5538
      %v5587 = vpack.c.b16 %v5555, %v5555
      %v5588 = vpack.c.b16 %v5556, %v5556
      %v5589 = vpack.c.b16 %v5557, %v5557
      %v5590 = vpack.c.b16 %v5558, %v5558
      %v5591 = vpack.c.b16 %v5559, %v5559
      %v5592 = vpack.c.b16 %v5560, %v5560
      %v5593 = vpack.c.b16 %v5561, %v5561
      %v5594 = vpack.c.b16 %v5562, %v5562
      %v5595 = vpack.c.b16 %v5563, %v5563
      %v5596 = vpack.c.b16 %v5564, %v5564
      %v5597 = vpack.c.b16 %v5565, %v5565
      %v5598 = vpack.c.b16 %v5566, %v5566
      %v5599 = vpack.c.b16 %v5567, %v5567
      %v5600 = vpack.c.b16 %v5568, %v5568
      %v5601 = vpack.c.b16 %v5569, %v5569
      %v5602 = vpack.c.b16 %v5570, %v5570
      %v5603 = vpack.c.b16 %v5571, %v5571
      %v5604 = vpack.c.b16 %v5572, %v5572
      %v5605 = vpack.c.b16 %v5573, %v5573
      %v5606 = vpack.c.b16 %v5574, %v5574
      %v5607 = vpack.c.b16 %v5575, %v5575
      %v5608 = vpack.c.b16 %v5576, %v5576
      %v5609 = vpack.c.b16 %v5577, %v5577
      %v5610 = vpack.c.b16 %v5578, %v5578
      %v5611 = vpack.c.b16 %v5579, %v5579
      %v5612 = vpack.c.b16 %v5580, %v5580
      %v5613 = vpack.c.b16 %v5581, %v5581
      %v5614 = vpack.c.b16 %v5582, %v5582
      %v5615 = vpack.c.b16 %v5583, %v5583
      %v5616 = vpack.c.b16 %v5584, %v5584
      %v5617 = vpack.c.b16 %v5585, %v5585
      %v5618 = vpack.c.b16 %v5586, %v5586
      %5651 = vst [vmem:[%s231] sm:$0xf] %v5587
      %5652 = vst [vmem:[%s231 + $0x4] sm:$0xf] %v5588
      %5653 = vst [vmem:[%s231 + $0x8] sm:$0xf] %v5589
      %5654 = vst [vmem:[%s231 + $0xc] sm:$0xf] %v5590
      %5655 = vst [vmem:[%s231 + $0x10] sm:$0xf] %v5591
      %5656 = vst [vmem:[%s231 + $0x14] sm:$0xf] %v5592
      %5657 = vst [vmem:[%s231 + $0x18] sm:$0xf] %v5593
      %5658 = vst [vmem:[%s231 + $0x1c] sm:$0xf] %v5594
      %5659 = vst [vmem:[%s231 + $0x20] sm:$0xf] %v5595
      %5660 = vst [vmem:[%s231 + $0x24] sm:$0xf] %v5596
      %5661 = vst [vmem:[%s231 + $0x28] sm:$0xf] %v5597
      %5662 = vst [vmem:[%s231 + $0x2c] sm:$0xf] %v5598
      %5663 = vst [vmem:[%s231 + $0x30] sm:$0xf] %v5599
      %5664 = vst [vmem:[%s231 + $0x34] sm:$0xf] %v5600
      %5665 = vst [vmem:[%s231 + $0x38] sm:$0xf] %v5601
      %5666 = vst [vmem:[%s231 + $0x3c] sm:$0xf] %v5602
      %5667 = vst [vmem:[%s231 + $0x40] sm:$0xf] %v5603
      %5668 = vst [vmem:[%s231 + $0x44] sm:$0xf] %v5604
      %5669 = vst [vmem:[%s231 + $0x48] sm:$0xf] %v5605
      %5670 = vst [vmem:[%s231 + $0x4c] sm:$0xf] %v5606
      %5671 = vst [vmem:[%s231 + $0x50] sm:$0xf] %v5607
      %5672 = vst [vmem:[%s231 + $0x54] sm:$0xf] %v5608
      %5673 = vst [vmem:[%s231 + $0x58] sm:$0xf] %v5609
      %5674 = vst [vmem:[%s231 + $0x5c] sm:$0xf] %v5610
      %5675 = vst [vmem:[%s231 + $0x60] sm:$0xf] %v5611
      %5676 = vst [vmem:[%s231 + $0x64] sm:$0xf] %v5612
      %5677 = vst [vmem:[%s231 + $0x68] sm:$0xf] %v5613
      %5678 = vst [vmem:[%s231 + $0x6c] sm:$0xf] %v5614
      %5679 = vst [vmem:[%s231 + $0x70] sm:$0xf] %v5615
      %5680 = vst [vmem:[%s231 + $0x74] sm:$0xf] %v5616
      %5681 = vst [vmem:[%s231 + $0x78] sm:$0xf] %v5617
      %5682 = vst [vmem:[%s231 + $0x7c] sm:$0xf] %v5618
      %p5683 = scmp.lt.s32.totalorder %s17, 1
      %s5684 = scalar_select %p5683, %s17, 1
      %s5685 = smul.addr %s5684, 32
      %s5686 = smul.addr %s5685, 4
      %s5687 = scalar_lea.vmem %s4, %s5686
      %p5688 = scmp.lt.s32.totalorder %s17, 1
      %s5689 = scalar_select %p5688, %s17, 1
      %s5690 = smul.addr %s5689, 2
      %s5691 = scalar_lea.vmem %s5, %s5690
      // Predicated region
      $region37: #{tresblock_forward.4} parent=35 // pred_check
        %p5692 = pneg %p124
      $region38: #{tresblock_forward.4} parent=35 // pred_check_branch
        %5694 = sbr.rel (%p5692) target = $region40
      $region39: #{tresblock_forward.4} parent=35 // pred_region
        _
      $region40: #{tresblock_forward.4} parent=35 // pred_fallthru
        _
      // Predicated region
      $region41: #{tresblock_forward.4} parent=35 // pred_check
        %p5695 = pneg %p150
      $region42: #{tresblock_forward.4} parent=35 // pred_check_branch
        %5697 = sbr.rel (%p5695) target = $region44
      $region43: #{tresblock_forward.4} parent=35 // pred_region
        _
      $region44: #{tresblock_forward.4} parent=35 // pred_fallthru
        _
    $region36: #{tresblock_forward.4} parent=5 // pred_fallthru
      _
    %p5698 = scmp.le.s32.totalorder 2, %s12
    // Predicated region
    $region45: #{tresblock_forward.4} parent=5 // pred_check
      %p5699 = pneg %p5698
    $region46: #{tresblock_forward.4} parent=5 // pred_check_branch
      %5701 = sbr.rel (%p5699) target = $region48
    $region47: #{tresblock_forward.4} parent=5 // pred_region
      %s5702 = ssub.s32 %s12, 2
      // Predicated region
      $region49: #{tresblock_forward.4} parent=47 // pred_check
        %p5703 = pneg %p130
      $region50: #{tresblock_forward.4} parent=47 // pred_check_branch
        %5705 = sbr.rel (%p5703) target = $region52
      $region51: #{tresblock_forward.4} parent=47 // pred_region
        %p5706 = scmp.lt.s32.totalorder %s18, 1
        %s5707 = scalar_select %p5706, %s18, 1
        %s5708 = smul.addr %s5707, 32
        %s5709 = smul.addr %s5708, 4
        %s5710 = scalar_lea.vmem %s4, %s5709
      $region52: #{tresblock_forward.4} parent=47 // pred_fallthru
        _
      // Predicated region
      $region53: #{tresblock_forward.4} parent=47 // pred_check
        %p5711 = pneg %p156
      $region54: #{tresblock_forward.4} parent=47 // pred_check_branch
        %5713 = sbr.rel (%p5711) target = $region56
      $region55: #{tresblock_forward.4} parent=47 // pred_region
        %p5714 = scmp.lt.s32.totalorder %s18, 1
        %s5715 = scalar_select %p5714, %s18, 1
        %s5716 = smul.addr %s5715, 2
        %s5717 = scalar_lea.vmem %s5, %s5716
      $region56: #{tresblock_forward.4} parent=47 // pred_fallthru
        _
    $region48: #{tresblock_forward.4} parent=5 // pred_fallthru
      _
  $region6: #{tresblock_forward.4} parent=0 // loop_footer
    %s16 = sadd.s32 1, %s12
  $region7: #{tresblock_forward.4} parent=0 // loop_footer_branch
    %11 = sbr.rel target = $region3
  $region8: #{tresblock_forward.4} parent=0 // loop_exit
    _

</llo_original>
